<compile_context>
chip_gen: v6e
topology: v6e:2x2x1
jax: 0.10.0
libtpu: 0.0.40
codegen_flags: <defaults>
</compile_context>

<pallas_src>
import jax
import jax.numpy as jnp
from jax import lax
from jax.experimental import pallas as pl
from jax.experimental.pallas import tpu as pltpu

# bf16 MXU inputs on all of v5e/v6e/v7x; accumulation stays f32.
MXU_DTYPE = jnp.bfloat16

_DATA_COL = 16  # first data column inside the padded scratch (16-aligned: bf16 sublane tile)


# ----------------------------------------------------------------------------
# Fused kernel: [halo-pad -> im2col -> MXU dot -> BN+ReLU] x2 -> 2x2 maxpool(+indices)
# ----------------------------------------------------------------------------
def _fused_down2_kernel(x_ref, w1_ref, s1_ref, b1_ref, w2_ref, s2_ref, b2_ref,
                        out_ref, idx_ref,
                        pad1_ref, col1_ref, pad2_ref, col2_ref, a2_ref):
    """One batch element per grid step; inter-layer activations never leave VMEM.

       x_ref   : (1, H, W, Cin)        f32   NHWC input block
       w1_ref  : (9*Cin,  Cout)        bf16  im2col weights, rows ordered (ky, kx, ci)
       w2_ref  : (9*Cout, Cout)        bf16
       s*_ref  : (1, Cout)             f32   folded BN scale (gamma / sqrt(var+eps))
       b*_ref  : (1, Cout)             f32   folded conv-bias + BN shift
       out_ref : (1, Hp, Wp, Cout)     f32   pooled activations
       idx_ref : (1, Hp, Wp, Cout)     i32   PyTorch-style flattened (h*W + w) argmax
       pad1/2  : (H+2, W+2*_DATA_COL, C)  bf16  zero-halo activation scratch (VMEM)
       col1/2  : (H, W, 9*C)           bf16  im2col slabs (VMEM)
       a2_ref  : (H*W, Cout)           f32   conv2 output staged for strided pooling reads
    """
    _, Hp, Wp, Cout = out_ref.shape
    H, W = 2 * Hp, 2 * Wp
    Cin = pad1_ref.shape[-1]
    c0 = _DATA_COL

    def zero_halo(pad_ref):
        # Only the halo border is ever read without being overwritten: zero just that.
        c = pad_ref.shape[-1]
        row = jnp.zeros((1, pad_ref.shape[1], c), pad_ref.dtype)
        col = jnp.zeros((H + 2, 1, c), pad_ref.dtype)
        pad_ref[0:1, :, :] = row                    # top halo row
        pad_ref[H + 1:H + 2, :, :] = row            # bottom halo row
        pad_ref[:, c0 - 1:c0, :] = col              # left halo column
        pad_ref[:, c0 + W:c0 + W + 1, :] = col      # right halo column

    def conv_bn_relu(pad_ref, col_ref, cin, w_ref, s_ref, b_ref):
        # im2col: each of the 9 taps is a direct 3-D slice->slice bf16 copy (no
        # per-tap reshape).  One MXU matmul with K = 9*cin, f32 accumulation.
        # TODO(synk): 128-lane-align the per-tap column offsets when cin < 128.
        for dy in range(3):
            for dx in range(3):
                k = dy * 3 + dx
                col_ref[:, :, k * cin:(k + 1) * cin] = \
                    pad_ref[dy:dy + H, c0 - 1 + dx:c0 - 1 + dx + W, :]
        cols = col_ref[...].reshape(H * W, 9 * cin)   # layout-trivial (W % 16 == 0)
        acc = jnp.dot(cols, w_ref[...], preferred_element_type=jnp.float32)
        return jnp.maximum(acc * s_ref[...] + b_ref[...], 0.0)   # folded BN + ReLU (f32)

    # ---- layer 1 (halo pad in VMEM; no jnp.pad / HBM round trip) ----
    zero_halo(pad1_ref)
    pad1_ref[1:H + 1, c0:c0 + W, :] = x_ref[0].astype(pad1_ref.dtype)
    a1 = conv_bn_relu(pad1_ref, col1_ref, Cin, w1_ref, s1_ref, b1_ref)      # (H*W, Cout) f32

    # ---- layer 2 (input is the VMEM-resident layer-1 activation) ----
    zero_halo(pad2_ref)
    pad2_ref[1:H + 1, c0:c0 + W, :] = a1.reshape(H, W, Cout).astype(pad2_ref.dtype)
    a2_ref[...] = conv_bn_relu(pad2_ref, col2_ref, Cout, w2_ref, s2_ref, b2_ref)

    # ---- 2x2 / stride-2 max-pool with PyTorch-style flattened (h*W + w) indices ----
    # Row p of a2_ref is (h, w) = (p // W, p % W).  With W even, even/odd p <=> even/odd w,
    # so strided sublane reads split the w-pairs.
    HWp = (H * W) // 2
    e_w = a2_ref[pl.ds(0, HWp, stride=2), :].reshape(H, Wp, Cout)   # (h, wp) -> w = 2*wp
    o_w = a2_ref[pl.ds(1, HWp, stride=2), :].reshape(H, Wp, Cout)   # (h, wp) -> w = 2*wp + 1
    ih = lax.broadcasted_iota(jnp.int32, (H, Wp, Cout), 0)
    iw = lax.broadcasted_iota(jnp.int32, (H, Wp, Cout), 1)
    base = ih * W + 2 * iw                                  # flat index of (h, 2*wp)
    pick_w = o_w > e_w                                      # strict '>' == first-max on ties
    m1 = jnp.where(pick_w, o_w, e_w).reshape(Hp, 2, Wp, Cout)
    i1 = jnp.where(pick_w, base + 1, base).reshape(Hp, 2, Wp, Cout)
    pick_h = m1[:, 1] > m1[:, 0]                            # prefer even h on ties
    # TODO(synk): present a lane-dense (>=128-wide) output slab; Cout < 128 here means
    # masked vst for these two stores.
    out_ref[0] = jnp.where(pick_h, m1[:, 1], m1[:, 0])
    idx_ref[0] = jnp.where(pick_h, i1[:, 1], i1[:, 0])


# ----------------------------------------------------------------------------
# NHWC-native forward (preferred entry point: no interface transposes)
# ----------------------------------------------------------------------------
def segnet_down2_forward_nhwc(x_nhwc, params):
    """Returns (pooled NHWC, pool_indices NHWC (h*W + w), NHWC unpool shape)."""
    N, H, W, Cin = x_nhwc.shape
    w1, s1, b1 = params["conv1"]
    w2, s2, b2 = params["conv2"]
    Cout = w1.shape[-1]
    assert w1.shape[0] == 9 * Cin and w2.shape[0] == 9 * Cout
    assert W % 16 == 0 and H % 2 == 0, "kernel assumes W % 16 == 0 and H even"
    Hp, Wp = H // 2, W // 2
    pad_cols = W + 2 * _DATA_COL

    # TODO(synk): tile H inside the grid with a 1-row halo at production SegNet sizes
    # (sized for v7x's 64 MiB VMEM), marking that axis "parallel" alongside batch.
    pooled, idx = pl.pallas_call(
        _fused_down2_kernel,
        out_shape=(jax.ShapeDtypeStruct((N, Hp, Wp, Cout), jnp.float32),
                   jax.ShapeDtypeStruct((N, Hp, Wp, Cout), jnp.int32)),
        grid=(N,),
        in_specs=[
            pl.BlockSpec((1, H, W, Cin), lambda n: (n, 0, 0, 0)),
            pl.BlockSpec((9 * Cin, Cout), lambda n: (0, 0)),
            pl.BlockSpec((1, Cout), lambda n: (0, 0)),
            pl.BlockSpec((1, Cout), lambda n: (0, 0)),
            pl.BlockSpec((9 * Cout, Cout), lambda n: (0, 0)),
            pl.BlockSpec((1, Cout), lambda n: (0, 0)),
            pl.BlockSpec((1, Cout), lambda n: (0, 0)),
        ],
        out_specs=(pl.BlockSpec((1, Hp, Wp, Cout), lambda n: (n, 0, 0, 0)),
                   pl.BlockSpec((1, Hp, Wp, Cout), lambda n: (n, 0, 0, 0))),
        scratch_shapes=[
            pltpu.VMEM((H + 2, pad_cols, Cin), MXU_DTYPE),    # pad1 (bf16)
            pltpu.VMEM((H, W, 9 * Cin), MXU_DTYPE),           # col1 (bf16)
            pltpu.VMEM((H + 2, pad_cols, Cout), MXU_DTYPE),   # pad2 (bf16)
            pltpu.VMEM((H, W, 9 * Cout), MXU_DTYPE),          # col2 (bf16)
            pltpu.VMEM((H * W, Cout), jnp.float32),           # a2 (f32 pooling stage)
        ],
        compiler_params=pltpu.CompilerParams(
            dimension_semantics=("parallel",),                 # batch across v7x's 2 TCs
            vmem_limit_bytes=64 * 1024 * 1024),
    )(x_nhwc.astype(jnp.float32),
      w1.astype(MXU_DTYPE), s1, b1, w2.astype(MXU_DTYPE), s2, b2)
    return pooled, idx, (N, H, W, Cout)


# ----------------------------------------------------------------------------
# NCHW adapter (PyTorch-interface parity only; keep NHWC end-to-end in real use)
# ----------------------------------------------------------------------------
def segnet_down2_forward(x_nchw, params):
    N, Cin, H, W = x_nchw.shape
    x = jnp.transpose(x_nchw, (0, 2, 3, 1))
    pooled, idx, _ = segnet_down2_forward_nhwc(x, params)
    Cout = pooled.shape[-1]
    return (jnp.transpose(pooled, (0, 3, 1, 2)),
            jnp.transpose(idx, (0, 3, 1, 2)),
            (N, Cout, H, W))


# ----------------------------------------------------------------------------
# Deterministic parameter init (synthetic; mirrors conv2DBatchNormRelu shapes)
# ----------------------------------------------------------------------------
def make_cbr_params(key, cin, cout):
    kw, kb, kg, kbt = jax.random.split(key, 4)
    w_oihw = 0.1 * jax.random.normal(kw, (cout, cin, 3, 3), jnp.float32)  # Conv2d weight
    b_conv = 0.1 * jax.random.normal(kb, (cout,), jnp.float32)            # Conv2d bias
    gamma = 1.0 + 0.1 * jax.random.normal(kg, (cout,), jnp.float32)       # BN weight
    beta = 0.1 * jax.random.normal(kbt, (cout,), jnp.float32)             # BN bias
    run_mean = jnp.zeros((cout,), jnp.float32)
    run_var = jnp.ones((cout,), jnp.float32)
    eps = 1e-5
    scale = gamma / jnp.sqrt(run_var + eps)
    bias = (b_conv - run_mean) * scale + beta
    # (O, I, KH, KW) -> (KH, KW, I, O) -> (9*I, O): im2col weight layout, baked to bf16.
    w_col = jnp.transpose(w_oihw, (2, 3, 1, 0)).reshape(9 * cin, cout).astype(MXU_DTYPE)
    fused = (w_col, scale.reshape(1, cout), bias.reshape(1, cout))
    raw = (w_oihw, b_conv, gamma, beta, run_mean, run_var, eps)
    return fused, raw


# Pure-JAX f32 reference (NCHW, eval-mode BN, PyTorch maxpool semantics).
def reference_forward(x, raw_params):
    y = x
    for (w, b, gamma, beta, rm, rv, eps) in raw_params:
        y = lax.conv_general_dilated(
            y, w, (1, 1), ((1, 1), (1, 1)),
            dimension_numbers=("NCHW", "OIHW", "NCHW"),
            precision=lax.Precision.HIGHEST)
        y = y + b[None, :, None, None]
        y = (y - rm[None, :, None, None]) * (
            gamma / jnp.sqrt(rv + eps))[None, :, None, None] + beta[None, :, None, None]
        y = jnp.maximum(y, 0.0)
    N, C, H, W = y.shape
    Hp, Wp = H // 2, W // 2
    win = y.reshape(N, C, Hp, 2, Wp, 2).transpose(0, 1, 2, 4, 3, 5).reshape(N, C, Hp, Wp, 4)
    k = jnp.argmax(win, axis=-1)            # first max on ties, like torch's strict >
    vals = jnp.max(win, axis=-1)
    hh = 2 * jnp.arange(Hp)[None, None, :, None] + k // 2
    ww = 2 * jnp.arange(Wp)[None, None, None, :] + k % 2
    idx = (hh * W + ww).astype(jnp.int32)
    return vals, idx, y, (N, C, H, W)


if __name__ == "__main__":
    key = jax.random.PRNGKey(0)
    kx, k1, k2 = jax.random.split(key, 3)

    N, Cin, Cout, H, W = 2, 4, 8, 16, 16
    x = jax.random.normal(kx, (N, Cin, H, W), jnp.float32)

    p1, r1 = make_cbr_params(k1, Cin, Cout)    # conv1: in_channels  -> out_channels
    p2, r2 = make_cbr_params(k2, Cout, Cout)   # conv2: out_channels -> out_channels
    params = {"conv1": p1, "conv2": p2}

    @jax.jit
    def fwd(a):
        pooled, idx, _ = segnet_down2_forward(a, params)
        return pooled, idx

    pooled, pool_idx = fwd(x)
    pooled = jax.block_until_ready(pooled)
    pool_idx = jax.block_until_ready(pool_idx)

    ref_vals, ref_idx, ref_act, ref_unpool = reference_forward(x, [r1, r2])
    Hp, Wp = H // 2, W // 2
    assert pooled.shape == (N, Cout, Hp, Wp), pooled.shape
    assert pool_idx.shape == (N, Cout, Hp, Wp), pool_idx.shape
    assert ref_unpool == (N, Cout, H, W)

    # Pooled values: bf16 MXU inputs with f32 accumulation -> small relative error.
    assert jnp.allclose(pooled, ref_vals, atol=2e-2, rtol=2e-2), "pooled values mismatch"

    # Index check: bf16 MXU inputs can legitimately flip near-tied argmaxes vs the f32
    # reference, so validate semantics instead of bit-exact equality:
    #   (1) every index lies inside its own 2x2 pooling window,
    #   (2) the f32-reference activation at the chosen index equals the window max.
    h_idx, w_idx = pool_idx // W, pool_idx % W
    hp_g = jnp.arange(Hp).reshape(1, 1, Hp, 1)
    wp_g = jnp.arange(Wp).reshape(1, 1, 1, Wp)
    assert bool(jnp.all((h_idx // 2 == hp_g) & (w_idx // 2 == wp_g))), \
        "pool index outside its 2x2 window"
    picked = jnp.take_along_axis(
        ref_act.reshape(N, Cout, H * W),
        pool_idx.reshape(N, Cout, Hp * Wp), axis=-1).reshape(N, Cout, Hp, Wp)
    assert jnp.allclose(picked, ref_vals, atol=2e-2, rtol=2e-2), \
        "pool index does not point at the window max"

    print("KERNEL_OK")
</pallas_src>

<mosaic_0001>
module attributes {stable_mosaic.version = 11 : i64} {
  func.func @_fused_down2_kernel(%arg0: i32, %arg1: memref<1x16x16x4xf32, #tpu.memory_space<vmem>>, %arg2: memref<36x8xbf16, #tpu.memory_space<vmem>>, %arg3: memref<1x8xf32, #tpu.memory_space<vmem>>, %arg4: memref<1x8xf32, #tpu.memory_space<vmem>>, %arg5: memref<72x8xbf16, #tpu.memory_space<vmem>>, %arg6: memref<1x8xf32, #tpu.memory_space<vmem>>, %arg7: memref<1x8xf32, #tpu.memory_space<vmem>>, %arg8: memref<1x8x8x8xf32, #tpu.memory_space<vmem>>, %arg9: memref<1x8x8x8xi32, #tpu.memory_space<vmem>>, %arg10: memref<18x48x4xbf16, #tpu.memory_space<vmem>>, %arg11: memref<16x16x36xbf16, #tpu.memory_space<vmem>>, %arg12: memref<18x48x8xbf16, #tpu.memory_space<vmem>>, %arg13: memref<16x16x72xbf16, #tpu.memory_space<vmem>>, %arg14: memref<256x8xf32, #tpu.memory_space<vmem>>) attributes {dimension_semantics = [#tpu.dimension_semantics<parallel>], iteration_bounds = array<i64: 2>, scalar_prefetch = 0 : i64, scratch_operands = 5 : i64, tpu.core_type = #tpu.core_type<tc>, window_params = [{transform_indices = @transform_0, window_bounds = array<i64: 1, 16, 16, 4>}, {pipeline_mode = #tpu.pipeline_mode<synchronous>, transform_indices = @transform_1, window_bounds = array<i64: 36, 8>}, {pipeline_mode = #tpu.pipeline_mode<synchronous>, transform_indices = @transform_2, window_bounds = array<i64: 1, 8>}, {pipeline_mode = #tpu.pipeline_mode<synchronous>, transform_indices = @transform_3, window_bounds = array<i64: 1, 8>}, {pipeline_mode = #tpu.pipeline_mode<synchronous>, transform_indices = @transform_4, window_bounds = array<i64: 72, 8>}, {pipeline_mode = #tpu.pipeline_mode<synchronous>, transform_indices = @transform_5, window_bounds = array<i64: 1, 8>}, {pipeline_mode = #tpu.pipeline_mode<synchronous>, transform_indices = @transform_6, window_bounds = array<i64: 1, 8>}, {transform_indices = @transform_7, window_bounds = array<i64: 1, 8, 8, 8>}, {transform_indices = @transform_8, window_bounds = array<i64: 1, 8, 8, 8>}]} {
    %cst = arith.constant 0.000000e+00 : bf16
    %0 = vector.broadcast %cst : bf16 to vector<1x48x4xbf16>
    %cst_0 = arith.constant 0.000000e+00 : bf16
    %1 = vector.broadcast %cst_0 : bf16 to vector<18x1x4xbf16>
    %c0 = arith.constant 0 : index
    %c0_1 = arith.constant 0 : index
    %c0_2 = arith.constant 0 : index
    %2 = vector.load %arg10[%c0, %c0_1, %c0_2] : memref<18x48x4xbf16, #tpu.memory_space<vmem>>, vector<1x48x4xbf16>
    tpu.vector_store %arg10[%c0, %c0_1, %c0_2], %0 {strides = array<i32>} : memref<18x48x4xbf16, #tpu.memory_space<vmem>>, vector<1x48x4xbf16>,
    %c17 = arith.constant 17 : index
    %c0_3 = arith.constant 0 : index
    %c0_4 = arith.constant 0 : index
    %3 = vector.load %arg10[%c17, %c0_3, %c0_4] : memref<18x48x4xbf16, #tpu.memory_space<vmem>>, vector<1x48x4xbf16>
    tpu.vector_store %arg10[%c17, %c0_3, %c0_4], %0 {strides = array<i32>} : memref<18x48x4xbf16, #tpu.memory_space<vmem>>, vector<1x48x4xbf16>,
    %c0_5 = arith.constant 0 : index
    %c15 = arith.constant 15 : index
    %c0_6 = arith.constant 0 : index
    %4 = vector.load %arg10[%c0_5, %c15, %c0_6] : memref<18x48x4xbf16, #tpu.memory_space<vmem>>, vector<18x1x4xbf16>
    tpu.vector_store %arg10[%c0_5, %c15, %c0_6], %1 {strides = array<i32>} : memref<18x48x4xbf16, #tpu.memory_space<vmem>>, vector<18x1x4xbf16>,
    %c0_7 = arith.constant 0 : index
    %c32 = arith.constant 32 : index
    %c0_8 = arith.constant 0 : index
    %5 = vector.load %arg10[%c0_7, %c32, %c0_8] : memref<18x48x4xbf16, #tpu.memory_space<vmem>>, vector<18x1x4xbf16>
    tpu.vector_store %arg10[%c0_7, %c32, %c0_8], %1 {strides = array<i32>} : memref<18x48x4xbf16, #tpu.memory_space<vmem>>, vector<18x1x4xbf16>,
    %c0_9 = arith.constant 0 : index
    %c0_10 = arith.constant 0 : index
    %c0_11 = arith.constant 0 : index
    %c0_12 = arith.constant 0 : index
    %6 = vector.load %arg1[%c0_9, %c0_10, %c0_11, %c0_12] : memref<1x16x16x4xf32, #tpu.memory_space<vmem>>, vector<1x16x16x4xf32>
    %7 = vector.shape_cast %6 : vector<1x16x16x4xf32> to vector<16x16x4xf32>
    %8 = arith.truncf %7 : vector<16x16x4xf32> to vector<16x16x4xbf16>
    %c1 = arith.constant 1 : index
    %c16 = arith.constant 16 : index
    %c0_13 = arith.constant 0 : index
    %9 = vector.load %arg10[%c1, %c16, %c0_13] : memref<18x48x4xbf16, #tpu.memory_space<vmem>>, vector<16x16x4xbf16>
    tpu.vector_store %arg10[%c1, %c16, %c0_13], %8 {strides = array<i32>} : memref<18x48x4xbf16, #tpu.memory_space<vmem>>, vector<16x16x4xbf16>,
    %c0_14 = arith.constant 0 : index
    %c15_15 = arith.constant 15 : index
    %c0_16 = arith.constant 0 : index
    %10 = vector.load %arg10[%c0_14, %c15_15, %c0_16] : memref<18x48x4xbf16, #tpu.memory_space<vmem>>, vector<16x16x4xbf16>
    %c0_17 = arith.constant 0 : index
    %c0_18 = arith.constant 0 : index
    %c0_19 = arith.constant 0 : index
    %11 = vector.load %arg11[%c0_17, %c0_18, %c0_19] : memref<16x16x36xbf16, #tpu.memory_space<vmem>>, vector<16x16x4xbf16>
    tpu.vector_store %arg11[%c0_17, %c0_18, %c0_19], %10 {strides = array<i32>} : memref<16x16x36xbf16, #tpu.memory_space<vmem>>, vector<16x16x4xbf16>,
    %c0_20 = arith.constant 0 : index
    %c16_21 = arith.constant 16 : index
    %c0_22 = arith.constant 0 : index
    %12 = vector.load %arg10[%c0_20, %c16_21, %c0_22] : memref<18x48x4xbf16, #tpu.memory_space<vmem>>, vector<16x16x4xbf16>
    %c0_23 = arith.constant 0 : index
    %c0_24 = arith.constant 0 : index
    %c4 = arith.constant 4 : index
    %13 = vector.load %arg11[%c0_23, %c0_24, %c4] : memref<16x16x36xbf16, #tpu.memory_space<vmem>>, vector<16x16x4xbf16>
    tpu.vector_store %arg11[%c0_23, %c0_24, %c4], %12 {strides = array<i32>} : memref<16x16x36xbf16, #tpu.memory_space<vmem>>, vector<16x16x4xbf16>,
    %c0_25 = arith.constant 0 : index
    %c17_26 = arith.constant 17 : index
    %c0_27 = arith.constant 0 : index
    %14 = vector.load %arg10[%c0_25, %c17_26, %c0_27] : memref<18x48x4xbf16, #tpu.memory_space<vmem>>, vector<16x16x4xbf16>
    %c0_28 = arith.constant 0 : index
    %c0_29 = arith.constant 0 : index
    %c8 = arith.constant 8 : index
    %15 = vector.load %arg11[%c0_28, %c0_29, %c8] : memref<16x16x36xbf16, #tpu.memory_space<vmem>>, vector<16x16x4xbf16>
    tpu.vector_store %arg11[%c0_28, %c0_29, %c8], %14 {strides = array<i32>} : memref<16x16x36xbf16, #tpu.memory_space<vmem>>, vector<16x16x4xbf16>,
    %c1_30 = arith.constant 1 : index
    %c15_31 = arith.constant 15 : index
    %c0_32 = arith.constant 0 : index
    %16 = vector.load %arg10[%c1_30, %c15_31, %c0_32] : memref<18x48x4xbf16, #tpu.memory_space<vmem>>, vector<16x16x4xbf16>
    %c0_33 = arith.constant 0 : index
    %c0_34 = arith.constant 0 : index
    %c12 = arith.constant 12 : index
    %17 = vector.load %arg11[%c0_33, %c0_34, %c12] : memref<16x16x36xbf16, #tpu.memory_space<vmem>>, vector<16x16x4xbf16>
    tpu.vector_store %arg11[%c0_33, %c0_34, %c12], %16 {strides = array<i32>} : memref<16x16x36xbf16, #tpu.memory_space<vmem>>, vector<16x16x4xbf16>,
    %c1_35 = arith.constant 1 : index
    %c16_36 = arith.constant 16 : index
    %c0_37 = arith.constant 0 : index
    %18 = vector.load %arg10[%c1_35, %c16_36, %c0_37] : memref<18x48x4xbf16, #tpu.memory_space<vmem>>, vector<16x16x4xbf16>
    %c0_38 = arith.constant 0 : index
    %c0_39 = arith.constant 0 : index
    %c16_40 = arith.constant 16 : index
    %19 = vector.load %arg11[%c0_38, %c0_39, %c16_40] : memref<16x16x36xbf16, #tpu.memory_space<vmem>>, vector<16x16x4xbf16>
    tpu.vector_store %arg11[%c0_38, %c0_39, %c16_40], %18 {strides = array<i32>} : memref<16x16x36xbf16, #tpu.memory_space<vmem>>, vector<16x16x4xbf16>,
    %c1_41 = arith.constant 1 : index
    %c17_42 = arith.constant 17 : index
    %c0_43 = arith.constant 0 : index
    %20 = vector.load %arg10[%c1_41, %c17_42, %c0_43] : memref<18x48x4xbf16, #tpu.memory_space<vmem>>, vector<16x16x4xbf16>
    %c0_44 = arith.constant 0 : index
    %c0_45 = arith.constant 0 : index
    %c20 = arith.constant 20 : index
    %21 = vector.load %arg11[%c0_44, %c0_45, %c20] : memref<16x16x36xbf16, #tpu.memory_space<vmem>>, vector<16x16x4xbf16>
    tpu.vector_store %arg11[%c0_44, %c0_45, %c20], %20 {strides = array<i32>} : memref<16x16x36xbf16, #tpu.memory_space<vmem>>, vector<16x16x4xbf16>,
    %c2 = arith.constant 2 : index
    %c15_46 = arith.constant 15 : index
    %c0_47 = arith.constant 0 : index
    %22 = vector.load %arg10[%c2, %c15_46, %c0_47] : memref<18x48x4xbf16, #tpu.memory_space<vmem>>, vector<16x16x4xbf16>
    %c0_48 = arith.constant 0 : index
    %c0_49 = arith.constant 0 : index
    %c24 = arith.constant 24 : index
    %23 = vector.load %arg11[%c0_48, %c0_49, %c24] : memref<16x16x36xbf16, #tpu.memory_space<vmem>>, vector<16x16x4xbf16>
    tpu.vector_store %arg11[%c0_48, %c0_49, %c24], %22 {strides = array<i32>} : memref<16x16x36xbf16, #tpu.memory_space<vmem>>, vector<16x16x4xbf16>,
    %c2_50 = arith.constant 2 : index
    %c16_51 = arith.constant 16 : index
    %c0_52 = arith.constant 0 : index
    %24 = vector.load %arg10[%c2_50, %c16_51, %c0_52] : memref<18x48x4xbf16, #tpu.memory_space<vmem>>, vector<16x16x4xbf16>
    %c0_53 = arith.constant 0 : index
    %c0_54 = arith.constant 0 : index
    %c28 = arith.constant 28 : index
    %25 = vector.load %arg11[%c0_53, %c0_54, %c28] : memref<16x16x36xbf16, #tpu.memory_space<vmem>>, vector<16x16x4xbf16>
    tpu.vector_store %arg11[%c0_53, %c0_54, %c28], %24 {strides = array<i32>} : memref<16x16x36xbf16, #tpu.memory_space<vmem>>, vector<16x16x4xbf16>,
    %c2_55 = arith.constant 2 : index
    %c17_56 = arith.constant 17 : index
    %c0_57 = arith.constant 0 : index
    %26 = vector.load %arg10[%c2_55, %c17_56, %c0_57] : memref<18x48x4xbf16, #tpu.memory_space<vmem>>, vector<16x16x4xbf16>
    %c0_58 = arith.constant 0 : index
    %c0_59 = arith.constant 0 : index
    %c32_60 = arith.constant 32 : index
    %27 = vector.load %arg11[%c0_58, %c0_59, %c32_60] : memref<16x16x36xbf16, #tpu.memory_space<vmem>>, vector<16x16x4xbf16>
    tpu.vector_store %arg11[%c0_58, %c0_59, %c32_60], %26 {strides = array<i32>} : memref<16x16x36xbf16, #tpu.memory_space<vmem>>, vector<16x16x4xbf16>,
    %c0_61 = arith.constant 0 : index
    %c0_62 = arith.constant 0 : index
    %c0_63 = arith.constant 0 : index
    %28 = vector.load %arg11[%c0_61, %c0_62, %c0_63] : memref<16x16x36xbf16, #tpu.memory_space<vmem>>, vector<16x16x36xbf16>
    %29 = vector.shape_cast %28 : vector<16x16x36xbf16> to vector<256x36xbf16>
    %c0_64 = arith.constant 0 : index
    %c0_65 = arith.constant 0 : index
    %30 = vector.load %arg2[%c0_64, %c0_65] : memref<36x8xbf16, #tpu.memory_space<vmem>>, vector<36x8xbf16>
    %cst_66 = arith.constant dense<0.000000e+00> : vector<256x8xf32>
    %31 = tpu.matmul %29, %30, %cst_66 {dimension_numbers = #tpu.dot_dimension_numbers<[1], [0], [0], [1], [0, 0, 1, 1], [], []>} : vector<256x36xbf16>, vector<36x8xbf16>, vector<256x8xf32> -> vector<256x8xf32>
    %c0_67 = arith.constant 0 : index
    %c0_68 = arith.constant 0 : index
    %32 = vector.load %arg3[%c0_67, %c0_68] : memref<1x8xf32, #tpu.memory_space<vmem>>, vector<1x8xf32>
    %33 = vector.broadcast %32 : vector<1x8xf32> to vector<256x8xf32>
    %34 = arith.mulf %31, %33 : vector<256x8xf32>
    %c0_69 = arith.constant 0 : index
    %c0_70 = arith.constant 0 : index
    %35 = vector.load %arg4[%c0_69, %c0_70] : memref<1x8xf32, #tpu.memory_space<vmem>>, vector<1x8xf32>
    %36 = vector.broadcast %35 : vector<1x8xf32> to vector<256x8xf32>
    %37 = arith.addf %34, %36 : vector<256x8xf32>
    %cst_71 = arith.constant 0.000000e+00 : f32
    %38 = vector.broadcast %cst_71 : f32 to vector<256x8xf32>
    %39 = arith.maximumf %37, %38 : vector<256x8xf32>
    %cst_72 = arith.constant 0.000000e+00 : bf16
    %40 = vector.broadcast %cst_72 : bf16 to vector<1x48x8xbf16>
    %cst_73 = arith.constant 0.000000e+00 : bf16
    %41 = vector.broadcast %cst_73 : bf16 to vector<18x1x8xbf16>
    %c0_74 = arith.constant 0 : index
    %c0_75 = arith.constant 0 : index
    %c0_76 = arith.constant 0 : index
    %42 = vector.load %arg12[%c0_74, %c0_75, %c0_76] : memref<18x48x8xbf16, #tpu.memory_space<vmem>>, vector<1x48x8xbf16>
    tpu.vector_store %arg12[%c0_74, %c0_75, %c0_76], %40 {strides = array<i32>} : memref<18x48x8xbf16, #tpu.memory_space<vmem>>, vector<1x48x8xbf16>,
    %c17_77 = arith.constant 17 : index
    %c0_78 = arith.constant 0 : index
    %c0_79 = arith.constant 0 : index
    %43 = vector.load %arg12[%c17_77, %c0_78, %c0_79] : memref<18x48x8xbf16, #tpu.memory_space<vmem>>, vector<1x48x8xbf16>
    tpu.vector_store %arg12[%c17_77, %c0_78, %c0_79], %40 {strides = array<i32>} : memref<18x48x8xbf16, #tpu.memory_space<vmem>>, vector<1x48x8xbf16>,
    %c0_80 = arith.constant 0 : index
    %c15_81 = arith.constant 15 : index
    %c0_82 = arith.constant 0 : index
    %44 = vector.load %arg12[%c0_80, %c15_81, %c0_82] : memref<18x48x8xbf16, #tpu.memory_space<vmem>>, vector<18x1x8xbf16>
    tpu.vector_store %arg12[%c0_80, %c15_81, %c0_82], %41 {strides = array<i32>} : memref<18x48x8xbf16, #tpu.memory_space<vmem>>, vector<18x1x8xbf16>,
    %c0_83 = arith.constant 0 : index
    %c32_84 = arith.constant 32 : index
    %c0_85 = arith.constant 0 : index
    %45 = vector.load %arg12[%c0_83, %c32_84, %c0_85] : memref<18x48x8xbf16, #tpu.memory_space<vmem>>, vector<18x1x8xbf16>
    tpu.vector_store %arg12[%c0_83, %c32_84, %c0_85], %41 {strides = array<i32>} : memref<18x48x8xbf16, #tpu.memory_space<vmem>>, vector<18x1x8xbf16>,
    %46 = vector.shape_cast %39 : vector<256x8xf32> to vector<16x16x8xf32>
    %47 = arith.truncf %46 : vector<16x16x8xf32> to vector<16x16x8xbf16>
    %c1_86 = arith.constant 1 : index
    %c16_87 = arith.constant 16 : index
    %c0_88 = arith.constant 0 : index
    %48 = vector.load %arg12[%c1_86, %c16_87, %c0_88] : memref<18x48x8xbf16, #tpu.memory_space<vmem>>, vector<16x16x8xbf16>
    tpu.vector_store %arg12[%c1_86, %c16_87, %c0_88], %47 {strides = array<i32>} : memref<18x48x8xbf16, #tpu.memory_space<vmem>>, vector<16x16x8xbf16>,
    %c0_89 = arith.constant 0 : index
    %c15_90 = arith.constant 15 : index
    %c0_91 = arith.constant 0 : index
    %49 = vector.load %arg12[%c0_89, %c15_90, %c0_91] : memref<18x48x8xbf16, #tpu.memory_space<vmem>>, vector<16x16x8xbf16>
    %c0_92 = arith.constant 0 : index
    %c0_93 = arith.constant 0 : index
    %c0_94 = arith.constant 0 : index
    %50 = vector.load %arg13[%c0_92, %c0_93, %c0_94] : memref<16x16x72xbf16, #tpu.memory_space<vmem>>, vector<16x16x8xbf16>
    tpu.vector_store %arg13[%c0_92, %c0_93, %c0_94], %49 {strides = array<i32>} : memref<16x16x72xbf16, #tpu.memory_space<vmem>>, vector<16x16x8xbf16>,
    %c0_95 = arith.constant 0 : index
    %c16_96 = arith.constant 16 : index
    %c0_97 = arith.constant 0 : index
    %51 = vector.load %arg12[%c0_95, %c16_96, %c0_97] : memref<18x48x8xbf16, #tpu.memory_space<vmem>>, vector<16x16x8xbf16>
    %c0_98 = arith.constant 0 : index
    %c0_99 = arith.constant 0 : index
    %c8_100 = arith.constant 8 : index
    %52 = vector.load %arg13[%c0_98, %c0_99, %c8_100] : memref<16x16x72xbf16, #tpu.memory_space<vmem>>, vector<16x16x8xbf16>
    tpu.vector_store %arg13[%c0_98, %c0_99, %c8_100], %51 {strides = array<i32>} : memref<16x16x72xbf16, #tpu.memory_space<vmem>>, vector<16x16x8xbf16>,
    %c0_101 = arith.constant 0 : index
    %c17_102 = arith.constant 17 : index
    %c0_103 = arith.constant 0 : index
    %53 = vector.load %arg12[%c0_101, %c17_102, %c0_103] : memref<18x48x8xbf16, #tpu.memory_space<vmem>>, vector<16x16x8xbf16>
    %c0_104 = arith.constant 0 : index
    %c0_105 = arith.constant 0 : index
    %c16_106 = arith.constant 16 : index
    %54 = vector.load %arg13[%c0_104, %c0_105, %c16_106] : memref<16x16x72xbf16, #tpu.memory_space<vmem>>, vector<16x16x8xbf16>
    tpu.vector_store %arg13[%c0_104, %c0_105, %c16_106], %53 {strides = array<i32>} : memref<16x16x72xbf16, #tpu.memory_space<vmem>>, vector<16x16x8xbf16>,
    %c1_107 = arith.constant 1 : index
    %c15_108 = arith.constant 15 : index
    %c0_109 = arith.constant 0 : index
    %55 = vector.load %arg12[%c1_107, %c15_108, %c0_109] : memref<18x48x8xbf16, #tpu.memory_space<vmem>>, vector<16x16x8xbf16>
    %c0_110 = arith.constant 0 : index
    %c0_111 = arith.constant 0 : index
    %c24_112 = arith.constant 24 : index
    %56 = vector.load %arg13[%c0_110, %c0_111, %c24_112] : memref<16x16x72xbf16, #tpu.memory_space<vmem>>, vector<16x16x8xbf16>
    tpu.vector_store %arg13[%c0_110, %c0_111, %c24_112], %55 {strides = array<i32>} : memref<16x16x72xbf16, #tpu.memory_space<vmem>>, vector<16x16x8xbf16>,
    %c1_113 = arith.constant 1 : index
    %c16_114 = arith.constant 16 : index
    %c0_115 = arith.constant 0 : index
    %57 = vector.load %arg12[%c1_113, %c16_114, %c0_115] : memref<18x48x8xbf16, #tpu.memory_space<vmem>>, vector<16x16x8xbf16>
    %c0_116 = arith.constant 0 : index
    %c0_117 = arith.constant 0 : index
    %c32_118 = arith.constant 32 : index
    %58 = vector.load %arg13[%c0_116, %c0_117, %c32_118] : memref<16x16x72xbf16, #tpu.memory_space<vmem>>, vector<16x16x8xbf16>
    tpu.vector_store %arg13[%c0_116, %c0_117, %c32_118], %57 {strides = array<i32>} : memref<16x16x72xbf16, #tpu.memory_space<vmem>>, vector<16x16x8xbf16>,
    %c1_119 = arith.constant 1 : index
    %c17_120 = arith.constant 17 : index
    %c0_121 = arith.constant 0 : index
    %59 = vector.load %arg12[%c1_119, %c17_120, %c0_121] : memref<18x48x8xbf16, #tpu.memory_space<vmem>>, vector<16x16x8xbf16>
    %c0_122 = arith.constant 0 : index
    %c0_123 = arith.constant 0 : index
    %c40 = arith.constant 40 : index
    %60 = vector.load %arg13[%c0_122, %c0_123, %c40] : memref<16x16x72xbf16, #tpu.memory_space<vmem>>, vector<16x16x8xbf16>
    tpu.vector_store %arg13[%c0_122, %c0_123, %c40], %59 {strides = array<i32>} : memref<16x16x72xbf16, #tpu.memory_space<vmem>>, vector<16x16x8xbf16>,
    %c2_124 = arith.constant 2 : index
    %c15_125 = arith.constant 15 : index
    %c0_126 = arith.constant 0 : index
    %61 = vector.load %arg12[%c2_124, %c15_125, %c0_126] : memref<18x48x8xbf16, #tpu.memory_space<vmem>>, vector<16x16x8xbf16>
    %c0_127 = arith.constant 0 : index
    %c0_128 = arith.constant 0 : index
    %c48 = arith.constant 48 : index
    %62 = vector.load %arg13[%c0_127, %c0_128, %c48] : memref<16x16x72xbf16, #tpu.memory_space<vmem>>, vector<16x16x8xbf16>
    tpu.vector_store %arg13[%c0_127, %c0_128, %c48], %61 {strides = array<i32>} : memref<16x16x72xbf16, #tpu.memory_space<vmem>>, vector<16x16x8xbf16>,
    %c2_129 = arith.constant 2 : index
    %c16_130 = arith.constant 16 : index
    %c0_131 = arith.constant 0 : index
    %63 = vector.load %arg12[%c2_129, %c16_130, %c0_131] : memref<18x48x8xbf16, #tpu.memory_space<vmem>>, vector<16x16x8xbf16>
    %c0_132 = arith.constant 0 : index
    %c0_133 = arith.constant 0 : index
    %c56 = arith.constant 56 : index
    %64 = vector.load %arg13[%c0_132, %c0_133, %c56] : memref<16x16x72xbf16, #tpu.memory_space<vmem>>, vector<16x16x8xbf16>
    tpu.vector_store %arg13[%c0_132, %c0_133, %c56], %63 {strides = array<i32>} : memref<16x16x72xbf16, #tpu.memory_space<vmem>>, vector<16x16x8xbf16>,
    %c2_134 = arith.constant 2 : index
    %c17_135 = arith.constant 17 : index
    %c0_136 = arith.constant 0 : index
    %65 = vector.load %arg12[%c2_134, %c17_135, %c0_136] : memref<18x48x8xbf16, #tpu.memory_space<vmem>>, vector<16x16x8xbf16>
    %c0_137 = arith.constant 0 : index
    %c0_138 = arith.constant 0 : index
    %c64 = arith.constant 64 : index
    %66 = vector.load %arg13[%c0_137, %c0_138, %c64] : memref<16x16x72xbf16, #tpu.memory_space<vmem>>, vector<16x16x8xbf16>
    tpu.vector_store %arg13[%c0_137, %c0_138, %c64], %65 {strides = array<i32>} : memref<16x16x72xbf16, #tpu.memory_space<vmem>>, vector<16x16x8xbf16>,
    %c0_139 = arith.constant 0 : index
    %c0_140 = arith.constant 0 : index
    %c0_141 = arith.constant 0 : index
    %67 = vector.load %arg13[%c0_139, %c0_140, %c0_141] : memref<16x16x72xbf16, #tpu.memory_space<vmem>>, vector<16x16x72xbf16>
    %68 = vector.shape_cast %67 : vector<16x16x72xbf16> to vector<256x72xbf16>
    %c0_142 = arith.constant 0 : index
    %c0_143 = arith.constant 0 : index
    %69 = vector.load %arg5[%c0_142, %c0_143] : memref<72x8xbf16, #tpu.memory_space<vmem>>, vector<72x8xbf16>
    %cst_144 = arith.constant dense<0.000000e+00> : vector<256x8xf32>
    %70 = tpu.matmul %68, %69, %cst_144 {dimension_numbers = #tpu.dot_dimension_numbers<[1], [0], [0], [1], [0, 0, 1, 1], [], []>} : vector<256x72xbf16>, vector<72x8xbf16>, vector<256x8xf32> -> vector<256x8xf32>
    %c0_145 = arith.constant 0 : index
    %c0_146 = arith.constant 0 : index
    %71 = vector.load %arg6[%c0_145, %c0_146] : memref<1x8xf32, #tpu.memory_space<vmem>>, vector<1x8xf32>
    %72 = vector.broadcast %71 : vector<1x8xf32> to vector<256x8xf32>
    %73 = arith.mulf %70, %72 : vector<256x8xf32>
    %c0_147 = arith.constant 0 : index
    %c0_148 = arith.constant 0 : index
    %74 = vector.load %arg7[%c0_147, %c0_148] : memref<1x8xf32, #tpu.memory_space<vmem>>, vector<1x8xf32>
    %75 = vector.broadcast %74 : vector<1x8xf32> to vector<256x8xf32>
    %76 = arith.addf %73, %75 : vector<256x8xf32>
    %cst_149 = arith.constant 0.000000e+00 : f32
    %77 = vector.broadcast %cst_149 : f32 to vector<256x8xf32>
    %78 = arith.maximumf %76, %77 : vector<256x8xf32>
    %c0_150 = arith.constant 0 : index
    %c0_151 = arith.constant 0 : index
    %79 = vector.load %arg14[%c0_150, %c0_151] : memref<256x8xf32, #tpu.memory_space<vmem>>, vector<256x8xf32>
    tpu.vector_store %arg14[%c0_150, %c0_151], %78 {strides = array<i32>} : memref<256x8xf32, #tpu.memory_space<vmem>>, vector<256x8xf32>,
    %c0_152 = arith.constant 0 : index
    %c0_153 = arith.constant 0 : index
    %80 = tpu.strided_load %arg14[%c0_152, %c0_153] {strides = array<i32: 2, 1>} : memref<256x8xf32, #tpu.memory_space<vmem>>, vector<128x8xf32>
    %81 = vector.shape_cast %80 : vector<128x8xf32> to vector<16x8x8xf32>
    %c1_154 = arith.constant 1 : index
    %c0_155 = arith.constant 0 : index
    %82 = tpu.strided_load %arg14[%c1_154, %c0_155] {strides = array<i32: 2, 1>} : memref<256x8xf32, #tpu.memory_space<vmem>>, vector<128x8xf32>
    %83 = vector.shape_cast %82 : vector<128x8xf32> to vector<16x8x8xf32>
    %84 = tpu.iota {dimensions = array<i32: 0>} : vector<16x8x8xi32>
    %85 = tpu.iota {dimensions = array<i32: 1>} : vector<16x8x8xi32>
    %c16_i32 = arith.constant 16 : i32
    %86 = vector.broadcast %c16_i32 : i32 to vector<16x8x8xi32>
    %87 = arith.muli %84, %86 : vector<16x8x8xi32>
    %c2_i32 = arith.constant 2 : i32
    %88 = vector.broadcast %c2_i32 : i32 to vector<16x8x8xi32>
    %89 = arith.muli %88, %85 : vector<16x8x8xi32>
    %90 = arith.addi %87, %89 : vector<16x8x8xi32>
    %91 = arith.cmpf ogt, %83, %81 : vector<16x8x8xf32>
    %92 = arith.select %91, %83, %81 : vector<16x8x8xi1>, vector<16x8x8xf32>
    %93 = vector.shape_cast %92 : vector<16x8x8xf32> to vector<8x2x8x8xf32>
    %c1_i32 = arith.constant 1 : i32
    %94 = vector.broadcast %c1_i32 : i32 to vector<16x8x8xi32>
    %95 = arith.addi %90, %94 : vector<16x8x8xi32>
    %96 = arith.select %91, %95, %90 : vector<16x8x8xi1>, vector<16x8x8xi32>
    %97 = vector.shape_cast %96 : vector<16x8x8xi32> to vector<8x2x8x8xi32>
    %98 = vector.extract_strided_slice %93 {offsets = [0, 1, 0, 0], sizes = [8, 1, 8, 8], strides = [1, 1, 1, 1]} : vector<8x2x8x8xf32> to vector<8x1x8x8xf32>
    %99 = vector.shape_cast %98 : vector<8x1x8x8xf32> to vector<8x8x8xf32>
    %100 = vector.extract_strided_slice %93 {offsets = [0, 0, 0, 0], sizes = [8, 1, 8, 8], strides = [1, 1, 1, 1]} : vector<8x2x8x8xf32> to vector<8x1x8x8xf32>
    %101 = vector.shape_cast %100 : vector<8x1x8x8xf32> to vector<8x8x8xf32>
    %102 = arith.cmpf ogt, %99, %101 : vector<8x8x8xf32>
    %103 = vector.extract_strided_slice %93 {offsets = [0, 1, 0, 0], sizes = [8, 1, 8, 8], strides = [1, 1, 1, 1]} : vector<8x2x8x8xf32> to vector<8x1x8x8xf32>
    %104 = vector.shape_cast %103 : vector<8x1x8x8xf32> to vector<8x8x8xf32>
    %105 = vector.extract_strided_slice %93 {offsets = [0, 0, 0, 0], sizes = [8, 1, 8, 8], strides = [1, 1, 1, 1]} : vector<8x2x8x8xf32> to vector<8x1x8x8xf32>
    %106 = vector.shape_cast %105 : vector<8x1x8x8xf32> to vector<8x8x8xf32>
    %107 = arith.select %102, %104, %106 : vector<8x8x8xi1>, vector<8x8x8xf32>
    %c0_156 = arith.constant 0 : index
    %c0_157 = arith.constant 0 : index
    %c0_158 = arith.constant 0 : index
    %c0_159 = arith.constant 0 : index
    %108 = vector.load %arg8[%c0_156, %c0_157, %c0_158, %c0_159] : memref<1x8x8x8xf32, #tpu.memory_space<vmem>>, vector<1x8x8x8xf32>
    %109 = vector.shape_cast %108 : vector<1x8x8x8xf32> to vector<8x8x8xf32>
    %110 = vector.shape_cast %107 : vector<8x8x8xf32> to vector<1x8x8x8xf32>
    tpu.vector_store %arg8[%c0_156, %c0_157, %c0_158, %c0_159], %110 {strides = array<i32>} : memref<1x8x8x8xf32, #tpu.memory_space<vmem>>, vector<1x8x8x8xf32>,
    %111 = vector.extract_strided_slice %97 {offsets = [0, 1, 0, 0], sizes = [8, 1, 8, 8], strides = [1, 1, 1, 1]} : vector<8x2x8x8xi32> to vector<8x1x8x8xi32>
    %112 = vector.shape_cast %111 : vector<8x1x8x8xi32> to vector<8x8x8xi32>
    %113 = vector.extract_strided_slice %97 {offsets = [0, 0, 0, 0], sizes = [8, 1, 8, 8], strides = [1, 1, 1, 1]} : vector<8x2x8x8xi32> to vector<8x1x8x8xi32>
    %114 = vector.shape_cast %113 : vector<8x1x8x8xi32> to vector<8x8x8xi32>
    %115 = arith.select %102, %112, %114 : vector<8x8x8xi1>, vector<8x8x8xi32>
    %c0_160 = arith.constant 0 : index
    %c0_161 = arith.constant 0 : index
    %c0_162 = arith.constant 0 : index
    %c0_163 = arith.constant 0 : index
    %116 = vector.load %arg9[%c0_160, %c0_161, %c0_162, %c0_163] : memref<1x8x8x8xi32, #tpu.memory_space<vmem>>, vector<1x8x8x8xi32>
    %117 = vector.shape_cast %116 : vector<1x8x8x8xi32> to vector<8x8x8xi32>
    %118 = vector.shape_cast %115 : vector<8x8x8xi32> to vector<1x8x8x8xi32>
    tpu.vector_store %arg9[%c0_160, %c0_161, %c0_162, %c0_163], %118 {strides = array<i32>} : memref<1x8x8x8xi32, #tpu.memory_space<vmem>>, vector<1x8x8x8xi32>,
    return
  }
  func.func @transform_0(%arg0: i32) -> (i32, i32, i32, i32) {
    %c0_i32 = arith.constant 0 : i32
    %c0_i32_0 = arith.constant 0 : i32
    %c0_i32_1 = arith.constant 0 : i32
    %c0_i32_2 = arith.constant 0 : i32
    return %arg0, %c0_i32, %c0_i32_0, %c0_i32_1 : i32, i32, i32, i32
  }
  func.func @transform_1(%arg0: i32) -> (i32, i32) {
    %c0_i32 = arith.constant 0 : i32
    %c0_i32_0 = arith.constant 0 : i32
    %c0_i32_1 = arith.constant 0 : i32
    return %c0_i32, %c0_i32_0 : i32, i32
  }
  func.func @transform_2(%arg0: i32) -> (i32, i32) {
    %c0_i32 = arith.constant 0 : i32
    %c0_i32_0 = arith.constant 0 : i32
    %c0_i32_1 = arith.constant 0 : i32
    return %c0_i32, %c0_i32_0 : i32, i32
  }
  func.func @transform_3(%arg0: i32) -> (i32, i32) {
    %c0_i32 = arith.constant 0 : i32
    %c0_i32_0 = arith.constant 0 : i32
    %c0_i32_1 = arith.constant 0 : i32
    return %c0_i32, %c0_i32_0 : i32, i32
  }
  func.func @transform_4(%arg0: i32) -> (i32, i32) {
    %c0_i32 = arith.constant 0 : i32
    %c0_i32_0 = arith.constant 0 : i32
    %c0_i32_1 = arith.constant 0 : i32
    return %c0_i32, %c0_i32_0 : i32, i32
  }
  func.func @transform_5(%arg0: i32) -> (i32, i32) {
    %c0_i32 = arith.constant 0 : i32
    %c0_i32_0 = arith.constant 0 : i32
    %c0_i32_1 = arith.constant 0 : i32
    return %c0_i32, %c0_i32_0 : i32, i32
  }
  func.func @transform_6(%arg0: i32) -> (i32, i32) {
    %c0_i32 = arith.constant 0 : i32
    %c0_i32_0 = arith.constant 0 : i32
    %c0_i32_1 = arith.constant 0 : i32
    return %c0_i32, %c0_i32_0 : i32, i32
  }
  func.func @transform_7(%arg0: i32) -> (i32, i32, i32, i32) {
    %c0_i32 = arith.constant 0 : i32
    %c0_i32_0 = arith.constant 0 : i32
    %c0_i32_1 = arith.constant 0 : i32
    %c0_i32_2 = arith.constant 0 : i32
    return %arg0, %c0_i32, %c0_i32_0, %c0_i32_1 : i32, i32, i32, i32
  }
  func.func @transform_8(%arg0: i32) -> (i32, i32, i32, i32) {
    %c0_i32 = arith.constant 0 : i32
    %c0_i32_0 = arith.constant 0 : i32
    %c0_i32_1 = arith.constant 0 : i32
    %c0_i32_2 = arith.constant 0 : i32
    return %arg0, %c0_i32, %c0_i32_0, %c0_i32_1 : i32, i32, i32, i32
  }
}

</mosaic_0001>

<llo_original>
// kernel: fwd.1
$region0: #{fwd.1}
  #allocation0 [shape = 'u32[]', space=smem, size = 0x4, offset = 0x4, fixed_abs, tag = 'smem constant byte address 0x4 - core index']
  #allocation1 [shape = 'u32[144,128]{1,0:T(1,128)}', space=vmem, size = 0x12000, scoped, tag = 'internal scratch']
  #allocation2 [shape = 'bf16[18,48,4]{2,1,0:T(8,128)(2,1)}', space=vmem, size = 0x36000, scoped, tag = 'scratch operand']
  #allocation3 [shape = 'bf16[16,16,36]{2,1,0:T(8,128)(2,1)}', space=vmem, size = 0x10000, scoped, tag = 'scratch operand']
  #allocation4 [shape = 'bf16[18,48,8]{2,1,0:T(8,128)(2,1)}', space=vmem, size = 0x36000, scoped, tag = 'scratch operand']
  #allocation5 [shape = 'bf16[16,16,72]{2,1,0:T(8,128)(2,1)}', space=vmem, size = 0x10000, scoped, tag = 'scratch operand']
  #allocation6 [shape = 'f32[256,8]{1,0:T(8,128)}', space=vmem, size = 0x20000, scoped, tag = 'scratch operand']
  %s0 = inlined_call_operand.vmem [shape: f32[2,16,16,4], index: 0, kind: input, shape index: {}]
  %s1 = inlined_call_operand.vmem [shape: bf16[36,8], index: 1, kind: input, shape index: {}]
  %s2 = inlined_call_operand.vmem [shape: f32[1,8], index: 2, kind: input, shape index: {}]
  %s3 = inlined_call_operand.vmem [shape: f32[1,8], index: 3, kind: input, shape index: {}]
  %s4 = inlined_call_operand.vmem [shape: bf16[72,8], index: 4, kind: input, shape index: {}]
  %s5 = inlined_call_operand.vmem [shape: f32[1,8], index: 5, kind: input, shape index: {}]
  %s6 = inlined_call_operand.vmem [shape: f32[1,8], index: 6, kind: input, shape index: {}]
  %s7 = inlined_call_operand.vmem [shape: f32[2,8,8,8], index: 7, kind: output, shape index: {0}]
  %s8 = inlined_call_operand.vmem [shape: s32[2,8,8,8], index: 8, kind: output, shape index: {1}]
  %9 = xla_tuple %s7, %s8
  %s10 = sld [smem:[#allocation0]]
  $region69: #{fwd.1} parent=0
    _
  %s12 = ssub.s32 1, %s10
  %s13 = scalar_select 0, %s12, %s10
  loop: start=0, step=1, limit=4
  $region2: #{fwd.1} parent=0 // loop_pre_header
    _
  $region3: #{fwd.1} parent=0 // loop_header
    %s15 = sphi 0, %s19
    %p16 = scmp.ge.s32.totalorder %s15, 4
    %s25 = sphi 0, %s27
    %s28 = sphi 0, %s25
    %s29 = sphi 0, %s28
    %s45 = sphi 0, %s29
    %s49 = sphi 0, %s49
    %s51 = sphi 0, %s49
    %s52 = sphi 0, %s51
    %s66 = sphi 0, %s52
    %s70 = sphi 0, %s70
    %s72 = sphi 0, %s70
    %s73 = sphi 0, %s72
    %s87 = sphi 0, %s73
    %s91 = sphi 0, %s91
    %s93 = sphi 0, %s91
    %s94 = sphi 0, %s93
    %s108 = sphi 0, %s94
    %s112 = sphi 0, %s112
    %s114 = sphi 0, %s112
    %s115 = sphi 0, %s114
    %s129 = sphi 0, %s115
    %s133 = sphi 0, %s133
    %s135 = sphi 0, %s133
    %s136 = sphi 0, %s135
    %s150 = sphi 0, %s136
    %s154 = sphi 0, %s154
    %s156 = sphi 0, %s154
    %s157 = sphi 0, %s156
    %s171 = sphi 0, %s157
    %s177 = sphi 0, %s179
    %s180 = sphi 0, %s177
    %s181 = sphi 0, %s180
    %s197 = sphi 0, %s181
    %s203 = sphi 0, %s205
    %s206 = sphi 0, %s203
    %s207 = sphi 0, %s206
    %s223 = sphi 0, %s207
  $region4: #{fwd.1} parent=0 // loop_header_branch
    %18 = sbr.rel (%p16) target = $region8
  $region5: #{fwd.1} parent=0 // loop_body
    %s20 = ssub.s32 %s15, 1
    %s21 = ssub.s32 %s15, 2
    %s22 = sadd.s32 %s15, 1
    %s23 = ssub.s32 %s15, %s22
    %p24 = scmp.eq.s32.totalorder %s23, 0
    %s26 = sadd.s32 %s25, 1
    %s27 = scalar_select %p24, %s25, %s26
    %p30 = pneg %p24
    %p31 = scmp.eq.s32.totalorder %s15, 1
    %p32 = por %p30, %p31
    %p33 = scmp.ne.s32.totalorder %s25, %s28
    %p34 = scmp.eq.s32.totalorder %s15, 0
    %p35 = por %p33, %p34
    %p36 = scmp.ne.s32.totalorder %s25, %s28
    %p37 = scmp.eq.s32.totalorder %s20, 1
    %p38 = por %p36, %p37
    %p39 = scmp.ne.s32.totalorder %s28, %s29
    %p40 = scmp.eq.s32.totalorder %s20, 0
    %p41 = por %p39, %p40
    %p42 = scmp.ne.s32.totalorder %s28, %s29
    %p43 = scmp.eq.s32.totalorder %s21, 1
    %p44 = por %p42, %p43
    %p46 = scmp.ne.s32.totalorder %s29, %s45
    %p47 = scmp.eq.s32.totalorder %s21, 0
    %p48 = por %p46, %p47
    %s50 = sadd.s32 %s49, 1
    %p53 = scmp.eq.s32.totalorder %s15, 1
    %p54 = scmp.ne.s32.totalorder %s49, %s51
    %p55 = scmp.eq.s32.totalorder %s15, 0
    %p56 = por %p54, %p55
    %p57 = scmp.ne.s32.totalorder %s49, %s51
    %p58 = scmp.eq.s32.totalorder %s20, 1
    %p59 = por %p57, %p58
    %p60 = scmp.ne.s32.totalorder %s51, %s52
    %p61 = scmp.eq.s32.totalorder %s20, 0
    %p62 = por %p60, %p61
    %p63 = scmp.ne.s32.totalorder %s51, %s52
    %p64 = scmp.eq.s32.totalorder %s21, 1
    %p65 = por %p63, %p64
    %p67 = scmp.ne.s32.totalorder %s52, %s66
    %p68 = scmp.eq.s32.totalorder %s21, 0
    %p69 = por %p67, %p68
    %s71 = sadd.s32 %s70, 1
    %p74 = scmp.eq.s32.totalorder %s15, 1
    %p75 = scmp.ne.s32.totalorder %s70, %s72
    %p76 = scmp.eq.s32.totalorder %s15, 0
    %p77 = por %p75, %p76
    %p78 = scmp.ne.s32.totalorder %s70, %s72
    %p79 = scmp.eq.s32.totalorder %s20, 1
    %p80 = por %p78, %p79
    %p81 = scmp.ne.s32.totalorder %s72, %s73
    %p82 = scmp.eq.s32.totalorder %s20, 0
    %p83 = por %p81, %p82
    %p84 = scmp.ne.s32.totalorder %s72, %s73
    %p85 = scmp.eq.s32.totalorder %s21, 1
    %p86 = por %p84, %p85
    %p88 = scmp.ne.s32.totalorder %s73, %s87
    %p89 = scmp.eq.s32.totalorder %s21, 0
    %p90 = por %p88, %p89
    %s92 = sadd.s32 %s91, 1
    %p95 = scmp.eq.s32.totalorder %s15, 1
    %p96 = scmp.ne.s32.totalorder %s91, %s93
    %p97 = scmp.eq.s32.totalorder %s15, 0
    %p98 = por %p96, %p97
    %p99 = scmp.ne.s32.totalorder %s91, %s93
    %p100 = scmp.eq.s32.totalorder %s20, 1
    %p101 = por %p99, %p100
    %p102 = scmp.ne.s32.totalorder %s93, %s94
    %p103 = scmp.eq.s32.totalorder %s20, 0
    %p104 = por %p102, %p103
    %p105 = scmp.ne.s32.totalorder %s93, %s94
    %p106 = scmp.eq.s32.totalorder %s21, 1
    %p107 = por %p105, %p106
    %p109 = scmp.ne.s32.totalorder %s94, %s108
    %p110 = scmp.eq.s32.totalorder %s21, 0
    %p111 = por %p109, %p110
    %s113 = sadd.s32 %s112, 1
    %p116 = scmp.eq.s32.totalorder %s15, 1
    %p117 = scmp.ne.s32.totalorder %s112, %s114
    %p118 = scmp.eq.s32.totalorder %s15, 0
    %p119 = por %p117, %p118
    %p120 = scmp.ne.s32.totalorder %s112, %s114
    %p121 = scmp.eq.s32.totalorder %s20, 1
    %p122 = por %p120, %p121
    %p123 = scmp.ne.s32.totalorder %s114, %s115
    %p124 = scmp.eq.s32.totalorder %s20, 0
    %p125 = por %p123, %p124
    %p126 = scmp.ne.s32.totalorder %s114, %s115
    %p127 = scmp.eq.s32.totalorder %s21, 1
    %p128 = por %p126, %p127
    %p130 = scmp.ne.s32.totalorder %s115, %s129
    %p131 = scmp.eq.s32.totalorder %s21, 0
    %p132 = por %p130, %p131
    %s134 = sadd.s32 %s133, 1
    %p137 = scmp.eq.s32.totalorder %s15, 1
    %p138 = scmp.ne.s32.totalorder %s133, %s135
    %p139 = scmp.eq.s32.totalorder %s15, 0
    %p140 = por %p138, %p139
    %p141 = scmp.ne.s32.totalorder %s133, %s135
    %p142 = scmp.eq.s32.totalorder %s20, 1
    %p143 = por %p141, %p142
    %p144 = scmp.ne.s32.totalorder %s135, %s136
    %p145 = scmp.eq.s32.totalorder %s20, 0
    %p146 = por %p144, %p145
    %p147 = scmp.ne.s32.totalorder %s135, %s136
    %p148 = scmp.eq.s32.totalorder %s21, 1
    %p149 = por %p147, %p148
    %p151 = scmp.ne.s32.totalorder %s136, %s150
    %p152 = scmp.eq.s32.totalorder %s21, 0
    %p153 = por %p151, %p152
    %s155 = sadd.s32 %s154, 1
    %p158 = scmp.eq.s32.totalorder %s15, 1
    %p159 = scmp.ne.s32.totalorder %s154, %s156
    %p160 = scmp.eq.s32.totalorder %s15, 0
    %p161 = por %p159, %p160
    %p162 = scmp.ne.s32.totalorder %s154, %s156
    %p163 = scmp.eq.s32.totalorder %s20, 1
    %p164 = por %p162, %p163
    %p165 = scmp.ne.s32.totalorder %s156, %s157
    %p166 = scmp.eq.s32.totalorder %s20, 0
    %p167 = por %p165, %p166
    %p168 = scmp.ne.s32.totalorder %s156, %s157
    %p169 = scmp.eq.s32.totalorder %s21, 1
    %p170 = por %p168, %p169
    %p172 = scmp.ne.s32.totalorder %s157, %s171
    %p173 = scmp.eq.s32.totalorder %s21, 0
    %p174 = por %p172, %p173
    %s175 = ssub.s32 %s15, %s22
    %p176 = scmp.eq.s32.totalorder %s175, 0
    %s178 = sadd.s32 %s177, 1
    %s179 = scalar_select %p176, %s177, %s178
    %p182 = pneg %p176
    %p183 = scmp.eq.s32.totalorder %s15, 1
    %p184 = por %p182, %p183
    %p185 = scmp.ne.s32.totalorder %s177, %s180
    %p186 = scmp.eq.s32.totalorder %s15, 0
    %p187 = por %p185, %p186
    %p188 = scmp.ne.s32.totalorder %s177, %s180
    %p189 = scmp.eq.s32.totalorder %s20, 1
    %p190 = por %p188, %p189
    %p191 = scmp.ne.s32.totalorder %s180, %s181
    %p192 = scmp.eq.s32.totalorder %s20, 0
    %p193 = por %p191, %p192
    %p194 = scmp.ne.s32.totalorder %s180, %s181
    %p195 = scmp.eq.s32.totalorder %s21, 1
    %p196 = por %p194, %p195
    %p198 = scmp.ne.s32.totalorder %s181, %s197
    %p199 = scmp.eq.s32.totalorder %s21, 0
    %p200 = por %p198, %p199
    %s201 = ssub.s32 %s15, %s22
    %p202 = scmp.eq.s32.totalorder %s201, 0
    %s204 = sadd.s32 %s203, 1
    %s205 = scalar_select %p202, %s203, %s204
    %p208 = pneg %p202
    %p209 = scmp.eq.s32.totalorder %s15, 1
    %p210 = por %p208, %p209
    %p211 = scmp.ne.s32.totalorder %s203, %s206
    %p212 = scmp.eq.s32.totalorder %s15, 0
    %p213 = por %p211, %p212
    %p214 = scmp.ne.s32.totalorder %s203, %s206
    %p215 = scmp.eq.s32.totalorder %s20, 1
    %p216 = por %p214, %p215
    %p217 = scmp.ne.s32.totalorder %s206, %s207
    %p218 = scmp.eq.s32.totalorder %s20, 0
    %p219 = por %p217, %p218
    %p220 = scmp.ne.s32.totalorder %s206, %s207
    %p221 = scmp.eq.s32.totalorder %s21, 1
    %p222 = por %p220, %p221
    %p224 = scmp.ne.s32.totalorder %s207, %s223
    %p225 = scmp.eq.s32.totalorder %s21, 0
    %p226 = por %p224, %p225
    %p227 = scmp.le.s32.totalorder 1, %s15
    %p228 = scmp.lt.s32.totalorder %s15, 3
    %p229 = pnand %p227, %p228
    %p230 = pneg %p229
    // Predicated region
    $region9: #{fwd.1} parent=5 // pred_check
      _
    $region10: #{fwd.1} parent=5 // pred_check_branch
      %232 = sbr.rel (%p229) target = $region12
    $region11: #{fwd.1} parent=5 // pred_region
      %s233 = ssub.s32 %s15, 1
      // Predicated region
      $region13: #{fwd.1} parent=11 // pred_check
        %p234 = pneg %p62
      $region14: #{fwd.1} parent=11 // pred_check_branch
        %236 = sbr.rel (%p234) target = $region16
      $region15: #{fwd.1} parent=11 // pred_region
        _
      $region16: #{fwd.1} parent=11 // pred_fallthru
        _
      // Predicated region
      $region17: #{fwd.1} parent=11 // pred_check
        %p237 = pneg %p83
      $region18: #{fwd.1} parent=11 // pred_check_branch
        %239 = sbr.rel (%p237) target = $region20
      $region19: #{fwd.1} parent=11 // pred_region
        _
      $region20: #{fwd.1} parent=11 // pred_fallthru
        _
      // Predicated region
      $region21: #{fwd.1} parent=11 // pred_check
        %p240 = pneg %p104
      $region22: #{fwd.1} parent=11 // pred_check_branch
        %242 = sbr.rel (%p240) target = $region24
      $region23: #{fwd.1} parent=11 // pred_region
        _
      $region24: #{fwd.1} parent=11 // pred_fallthru
        _
      // Predicated region
      $region25: #{fwd.1} parent=11 // pred_check
        %p243 = pneg %p125
      $region26: #{fwd.1} parent=11 // pred_check_branch
        %245 = sbr.rel (%p243) target = $region28
      $region27: #{fwd.1} parent=11 // pred_region
        _
      $region28: #{fwd.1} parent=11 // pred_fallthru
        _
      // Predicated region
      $region29: #{fwd.1} parent=11 // pred_check
        %p246 = pneg %p146
      $region30: #{fwd.1} parent=11 // pred_check_branch
        %248 = sbr.rel (%p246) target = $region32
      $region31: #{fwd.1} parent=11 // pred_region
        _
      $region32: #{fwd.1} parent=11 // pred_fallthru
        _
      // Predicated region
      $region33: #{fwd.1} parent=11 // pred_check
        %p249 = pneg %p167
      $region34: #{fwd.1} parent=11 // pred_check_branch
        %251 = sbr.rel (%p249) target = $region36
      $region35: #{fwd.1} parent=11 // pred_region
        _
      $region36: #{fwd.1} parent=11 // pred_fallthru
        _
    $region12: #{fwd.1} parent=5 // pred_fallthru
      _
    %p252 = scmp.lt.s32.totalorder %s15, 2
    // Predicated region
    $region37: #{fwd.1} parent=5 // pred_check
      %p253 = pneg %p252
    $region38: #{fwd.1} parent=5 // pred_check_branch
      %255 = sbr.rel (%p253) target = $region40
    $region39: #{fwd.1} parent=5 // pred_region
      // Predicated region
      $region41: #{fwd.1} parent=39 // pred_check
        %p256 = pneg %p35
      $region42: #{fwd.1} parent=39 // pred_check_branch
        %258 = sbr.rel (%p256) target = $region44
      $region43: #{fwd.1} parent=39 // pred_region
        %p259 = scmp.lt.s32.totalorder %s15, 1
        %s260 = scalar_select %p259, %s15, 1
        %s261 = smul.addr %s260, 32
        %s262 = smul.addr %s261, 8
        %s263 = scalar_lea.vmem %s0, %s262
      $region44: #{fwd.1} parent=39 // pred_fallthru
        _
    $region40: #{fwd.1} parent=5 // pred_fallthru
      _
    %p264 = scmp.le.s32.totalorder 1, %s15
    %p265 = scmp.lt.s32.totalorder %s15, 3
    %p266 = pnand %p264, %p265
    %p267 = pneg %p266
    // Predicated region
    $region45: #{fwd.1} parent=5 // pred_check
      _
    $region46: #{fwd.1} parent=5 // pred_check_branch
      %269 = sbr.rel (%p266) target = $region48
    $region47: #{fwd.1} parent=5 // pred_region
      %s270 = ssub.s32 %s15, 1
      %p271 = scmp.lt.s32.totalorder %s20, 1
      %s272 = scalar_select %p271, %s20, 1
      %s273 = smul.addr %s272, 32
      %s274 = smul.addr %s273, 8
      %s275 = scalar_lea.vmem %s0, %s274
      %p276 = pneg %p41
      %p277 = pneg %p38
      %p278 = pneg %p62
      %p279 = pneg %p59
      %p280 = pneg %p83
      %p281 = pneg %p80
      %p282 = pneg %p104
      %p283 = pneg %p101
      %p284 = pneg %p125
      %p285 = pneg %p122
      %p286 = pneg %p146
      %p287 = pneg %p143
      %p288 = pneg %p167
      %p289 = pneg %p164
      %p290 = pneg %p193
      %p291 = pneg %p190
      %p292 = scmp.lt.s32.totalorder %s20, 1
      %s293 = scalar_select %p292, %s20, 1
      %s294 = smul.addr %s293, 8
      %s295 = smul.addr %s294, 8
      %s296 = scalar_lea.vmem %s7, %s295
      %p297 = pneg %p219
      %p298 = pneg %p216
      %p299 = scmp.lt.s32.totalorder %s20, 1
      %s300 = scalar_select %p299, %s20, 1
      %s301 = smul.addr %s300, 8
      %s302 = smul.addr %s301, 8
      %s303 = scalar_lea.vmem %s8, %s302
      %p304 = scmp.lt.s32.totalorder %s20, 1
      %s305 = scalar_select %p304, %s20, 1
      %s306 = smul.addr %s305, 32
      %s307 = smul.addr %s306, 8
      %s308 = scalar_lea.vmem %s0, %s307
      %p309 = scmp.lt.s32.totalorder %s20, 1
      %s310 = scalar_select %p309, %s20, 1
      %s311 = smul.addr %s310, 8
      %s312 = smul.addr %s311, 8
      %s313 = scalar_lea.vmem %s7, %s312
      %p314 = scmp.lt.s32.totalorder %s20, 1
      %s315 = scalar_select %p314, %s20, 1
      %s316 = smul.addr %s315, 8
      %s317 = smul.addr %s316, 8
      %s318 = scalar_lea.vmem %s8, %s317
      %vm320 = vcmask 27648
      %321 = vst.msk [vmem:[#allocation2] sm:$0xf] %vm320, 0
      %322 = vst.msk [vmem:[#allocation2 + $0x4] sm:$0xf] %vm320, 0
      %323 = vst.msk [vmem:[#allocation2 + $0x8] sm:$0xf] %vm320, 0
      %324 = vst.msk [vmem:[#allocation2 + $0xc] sm:$0xf] %vm320, 0
      %325 = vst.msk [vmem:[#allocation2 + $0x10] sm:$0xf] %vm320, 0
      %326 = vst.msk [vmem:[#allocation2 + $0x14] sm:$0xf] %vm320, 0
      %s327 = scalar_lea.vmem [#allocation2], 408
      %328 = vst.msk [vmem:[%s327] sm:$0xf] %vm320, 0
      %329 = vst.msk [vmem:[%s327 + $0x4] sm:$0xf] %vm320, 0
      %330 = vst.msk [vmem:[%s327 + $0x8] sm:$0xf] %vm320, 0
      %331 = vst.msk [vmem:[%s327 + $0xc] sm:$0xf] %vm320, 0
      %332 = vst.msk [vmem:[%s327 + $0x10] sm:$0xf] %vm320, 0
      %333 = vst.msk [vmem:[%s327 + $0x14] sm:$0xf] %vm320, 0
      %vm334 = vcmask 27651
      %vm335 = vsmask.f32 7950
      %vm336 = vmand %vm334, %vm335
      %v337 = vld [vmem:[#allocation2 + $0x4] sm:$0x8]
      %v338 = vsel %vm336, 0, %v337
      %339 = vst [vmem:[#allocation2 + $0x4] sm:$0x8] %v338
      %v340 = vld [vmem:[#allocation2 + $0x1c] sm:$0x8]
      %v341 = vsel %vm336, 0, %v340
      %342 = vst [vmem:[#allocation2 + $0x1c] sm:$0x8] %v341
      %v343 = vld [vmem:[#allocation2 + $0x34] sm:$0x8]
      %v344 = vsel %vm336, 0, %v343
      %345 = vst [vmem:[#allocation2 + $0x34] sm:$0x8] %v344
      %v346 = vld [vmem:[#allocation2 + $0x4c] sm:$0x8]
      %v347 = vsel %vm336, 0, %v346
      %348 = vst [vmem:[#allocation2 + $0x4c] sm:$0x8] %v347
      %v349 = vld [vmem:[#allocation2 + $0x64] sm:$0x8]
      %v350 = vsel %vm336, 0, %v349
      %351 = vst [vmem:[#allocation2 + $0x64] sm:$0x8] %v350
      %v352 = vld [vmem:[#allocation2 + $0x7c] sm:$0x8]
      %v353 = vsel %vm336, 0, %v352
      %354 = vst [vmem:[#allocation2 + $0x7c] sm:$0x8] %v353
      %v355 = vld [vmem:[#allocation2 + $0x94] sm:$0x8]
      %v356 = vsel %vm336, 0, %v355
      %357 = vst [vmem:[#allocation2 + $0x94] sm:$0x8] %v356
      %v358 = vld [vmem:[#allocation2 + $0xac] sm:$0x8]
      %v359 = vsel %vm336, 0, %v358
      %360 = vst [vmem:[#allocation2 + $0xac] sm:$0x8] %v359
      %v361 = vld [vmem:[#allocation2 + $0xc4] sm:$0x8]
      %v362 = vsel %vm336, 0, %v361
      %363 = vst [vmem:[#allocation2 + $0xc4] sm:$0x8] %v362
      %v364 = vld [vmem:[#allocation2 + $0xdc] sm:$0x8]
      %v365 = vsel %vm336, 0, %v364
      %366 = vst [vmem:[#allocation2 + $0xdc] sm:$0x8] %v365
      %v367 = vld [vmem:[#allocation2 + $0xf4] sm:$0x8]
      %v368 = vsel %vm336, 0, %v367
      %369 = vst [vmem:[#allocation2 + $0xf4] sm:$0x8] %v368
      %v370 = vld [vmem:[#allocation2 + $0x10c] sm:$0x8]
      %v371 = vsel %vm336, 0, %v370
      %372 = vst [vmem:[#allocation2 + $0x10c] sm:$0x8] %v371
      %v373 = vld [vmem:[#allocation2 + $0x124] sm:$0x8]
      %v374 = vsel %vm336, 0, %v373
      %375 = vst [vmem:[#allocation2 + $0x124] sm:$0x8] %v374
      %v376 = vld [vmem:[#allocation2 + $0x13c] sm:$0x8]
      %v377 = vsel %vm336, 0, %v376
      %378 = vst [vmem:[#allocation2 + $0x13c] sm:$0x8] %v377
      %v379 = vld [vmem:[#allocation2 + $0x154] sm:$0x8]
      %v380 = vsel %vm336, 0, %v379
      %381 = vst [vmem:[#allocation2 + $0x154] sm:$0x8] %v380
      %v382 = vld [vmem:[#allocation2 + $0x16c] sm:$0x8]
      %v383 = vsel %vm336, 0, %v382
      %384 = vst [vmem:[#allocation2 + $0x16c] sm:$0x8] %v383
      %v385 = vld [vmem:[#allocation2 + $0x184] sm:$0x8]
      %v386 = vsel %vm336, 0, %v385
      %387 = vst [vmem:[#allocation2 + $0x184] sm:$0x8] %v386
      %v388 = vld [vmem:[#allocation2 + $0x19c] sm:$0x8]
      %v389 = vsel %vm336, 0, %v388
      %390 = vst [vmem:[#allocation2 + $0x19c] sm:$0x8] %v389
      %vm391 = vcmask 24576
      %vm392 = vsmask.f32 256
      %vm393 = vmand %vm391, %vm392
      %v394 = vld [vmem:[#allocation2 + $0x10] sm:$0x1]
      %v395 = vsel %vm393, 0, %v394
      %396 = vst [vmem:[#allocation2 + $0x10] sm:$0x1] %v395
      %v397 = vld [vmem:[#allocation2 + $0x28] sm:$0x1]
      %v398 = vsel %vm393, 0, %v397
      %399 = vst [vmem:[#allocation2 + $0x28] sm:$0x1] %v398
      %v400 = vld [vmem:[#allocation2 + $0x40] sm:$0x1]
      %v401 = vsel %vm393, 0, %v400
      %402 = vst [vmem:[#allocation2 + $0x40] sm:$0x1] %v401
      %v403 = vld [vmem:[#allocation2 + $0x58] sm:$0x1]
      %v404 = vsel %vm393, 0, %v403
      %405 = vst [vmem:[#allocation2 + $0x58] sm:$0x1] %v404
      %v406 = vld [vmem:[#allocation2 + $0x70] sm:$0x1]
      %v407 = vsel %vm393, 0, %v406
      %408 = vst [vmem:[#allocation2 + $0x70] sm:$0x1] %v407
      %v409 = vld [vmem:[#allocation2 + $0x88] sm:$0x1]
      %v410 = vsel %vm393, 0, %v409
      %411 = vst [vmem:[#allocation2 + $0x88] sm:$0x1] %v410
      %v412 = vld [vmem:[#allocation2 + $0xa0] sm:$0x1]
      %v413 = vsel %vm393, 0, %v412
      %414 = vst [vmem:[#allocation2 + $0xa0] sm:$0x1] %v413
      %v415 = vld [vmem:[#allocation2 + $0xb8] sm:$0x1]
      %v416 = vsel %vm393, 0, %v415
      %417 = vst [vmem:[#allocation2 + $0xb8] sm:$0x1] %v416
      %v418 = vld [vmem:[#allocation2 + $0xd0] sm:$0x1]
      %v419 = vsel %vm393, 0, %v418
      %420 = vst [vmem:[#allocation2 + $0xd0] sm:$0x1] %v419
      %v421 = vld [vmem:[#allocation2 + $0xe8] sm:$0x1]
      %v422 = vsel %vm393, 0, %v421
      %423 = vst [vmem:[#allocation2 + $0xe8] sm:$0x1] %v422
      %v424 = vld [vmem:[#allocation2 + $0x100] sm:$0x1]
      %v425 = vsel %vm393, 0, %v424
      %426 = vst [vmem:[#allocation2 + $0x100] sm:$0x1] %v425
      %v427 = vld [vmem:[#allocation2 + $0x118] sm:$0x1]
      %v428 = vsel %vm393, 0, %v427
      %429 = vst [vmem:[#allocation2 + $0x118] sm:$0x1] %v428
      %v430 = vld [vmem:[#allocation2 + $0x130] sm:$0x1]
      %v431 = vsel %vm393, 0, %v430
      %432 = vst [vmem:[#allocation2 + $0x130] sm:$0x1] %v431
      %v433 = vld [vmem:[#allocation2 + $0x148] sm:$0x1]
      %v434 = vsel %vm393, 0, %v433
      %435 = vst [vmem:[#allocation2 + $0x148] sm:$0x1] %v434
      %v436 = vld [vmem:[#allocation2 + $0x160] sm:$0x1]
      %v437 = vsel %vm393, 0, %v436
      %438 = vst [vmem:[#allocation2 + $0x160] sm:$0x1] %v437
      %v439 = vld [vmem:[#allocation2 + $0x178] sm:$0x1]
      %v440 = vsel %vm393, 0, %v439
      %441 = vst [vmem:[#allocation2 + $0x178] sm:$0x1] %v440
      %v442 = vld [vmem:[#allocation2 + $0x190] sm:$0x1]
      %v443 = vsel %vm393, 0, %v442
      %444 = vst [vmem:[#allocation2 + $0x190] sm:$0x1] %v443
      %v445 = vld [vmem:[#allocation2 + $0x1a8] sm:$0x1]
      %v446 = vsel %vm393, 0, %v445
      %447 = vst [vmem:[#allocation2 + $0x1a8] sm:$0x1] %v446
      %v448 = vld [vmem:[%s308] sm:$0xff]
      %v449 = vld [vmem:[%s308 + $0x8] sm:$0xff]
      %v450 = vld [vmem:[%s308 + $0x10] sm:$0xff]
      %v451 = vld [vmem:[%s308 + $0x18] sm:$0xff]
      %v452 = vld [vmem:[%s308 + $0x20] sm:$0xff]
      %v453 = vld [vmem:[%s308 + $0x28] sm:$0xff]
      %v454 = vld [vmem:[%s308 + $0x30] sm:$0xff]
      %v455 = vld [vmem:[%s308 + $0x38] sm:$0xff]
      %v456 = vld [vmem:[%s308 + $0x40] sm:$0xff]
      %v457 = vld [vmem:[%s308 + $0x48] sm:$0xff]
      %v458 = vld [vmem:[%s308 + $0x50] sm:$0xff]
      %v459 = vld [vmem:[%s308 + $0x58] sm:$0xff]
      %v460 = vld [vmem:[%s308 + $0x60] sm:$0xff]
      %v461 = vld [vmem:[%s308 + $0x68] sm:$0xff]
      %v462 = vld [vmem:[%s308 + $0x70] sm:$0xff]
      %v463 = vld [vmem:[%s308 + $0x78] sm:$0xff]
      %v464 = vld [vmem:[%s308 + $0x80] sm:$0xff]
      %v465 = vld [vmem:[%s308 + $0x88] sm:$0xff]
      %v466 = vld [vmem:[%s308 + $0x90] sm:$0xff]
      %v467 = vld [vmem:[%s308 + $0x98] sm:$0xff]
      %v468 = vld [vmem:[%s308 + $0xa0] sm:$0xff]
      %v469 = vld [vmem:[%s308 + $0xa8] sm:$0xff]
      %v470 = vld [vmem:[%s308 + $0xb0] sm:$0xff]
      %v471 = vld [vmem:[%s308 + $0xb8] sm:$0xff]
      %v472 = vld [vmem:[%s308 + $0xc0] sm:$0xff]
      %v473 = vld [vmem:[%s308 + $0xc8] sm:$0xff]
      %v474 = vld [vmem:[%s308 + $0xd0] sm:$0xff]
      %v475 = vld [vmem:[%s308 + $0xd8] sm:$0xff]
      %v476 = vld [vmem:[%s308 + $0xe0] sm:$0xff]
      %v477 = vld [vmem:[%s308 + $0xe8] sm:$0xff]
      %v478 = vld [vmem:[%s308 + $0xf0] sm:$0xff]
      %v479 = vld [vmem:[%s308 + $0xf8] sm:$0xff]
      %v480 = vpack.c.bf16 %v449, %v448
      %v481 = vpack.c.bf16 %v451, %v450
      %v482 = vpack.c.bf16 %v453, %v452
      %v483 = vpack.c.bf16 %v455, %v454
      %v484 = vpack.c.bf16 %v457, %v456
      %v485 = vpack.c.bf16 %v459, %v458
      %v486 = vpack.c.bf16 %v461, %v460
      %v487 = vpack.c.bf16 %v463, %v462
      %v488 = vpack.c.bf16 %v465, %v464
      %v489 = vpack.c.bf16 %v467, %v466
      %v490 = vpack.c.bf16 %v469, %v468
      %v491 = vpack.c.bf16 %v471, %v470
      %v492 = vpack.c.bf16 %v473, %v472
      %v493 = vpack.c.bf16 %v475, %v474
      %v494 = vpack.c.bf16 %v477, %v476
      %v495 = vpack.c.bf16 %v479, %v478
      %v512 = vunpack.c.l.b16 %v480
      %v513 = vunpack.c.h.b16 %v480
      %v514 = vunpack.c.l.b16 %v481
      %v515 = vunpack.c.h.b16 %v481
      %v516 = vunpack.c.l.b16 %v482
      %v517 = vunpack.c.h.b16 %v482
      %v518 = vunpack.c.l.b16 %v483
      %v519 = vunpack.c.h.b16 %v483
      %v520 = vunpack.c.l.b16 %v484
      %v521 = vunpack.c.h.b16 %v484
      %v522 = vunpack.c.l.b16 %v485
      %v523 = vunpack.c.h.b16 %v485
      %v524 = vunpack.c.l.b16 %v486
      %v525 = vunpack.c.h.b16 %v486
      %v526 = vunpack.c.l.b16 %v487
      %v527 = vunpack.c.h.b16 %v487
      %v528 = vunpack.c.l.b16 %v488
      %v529 = vunpack.c.h.b16 %v488
      %v530 = vunpack.c.l.b16 %v489
      %v531 = vunpack.c.h.b16 %v489
      %v532 = vunpack.c.l.b16 %v490
      %v533 = vunpack.c.h.b16 %v490
      %v534 = vunpack.c.l.b16 %v491
      %v535 = vunpack.c.h.b16 %v491
      %v536 = vunpack.c.l.b16 %v492
      %v537 = vunpack.c.h.b16 %v492
      %v538 = vunpack.c.l.b16 %v493
      %v539 = vunpack.c.h.b16 %v493
      %v540 = vunpack.c.l.b16 %v494
      %v541 = vunpack.c.h.b16 %v494
      %v542 = vunpack.c.l.b16 %v495
      %v543 = vunpack.c.h.b16 %v495
      %v544 = vpack.c.b16 %v512, %v512
      %v545 = vpack.c.b16 %v513, %v513
      %v546 = vpack.c.b16 %v514, %v514
      %v547 = vpack.c.b16 %v515, %v515
      %v548 = vpack.c.b16 %v516, %v516
      %v549 = vpack.c.b16 %v517, %v517
      %v550 = vpack.c.b16 %v518, %v518
      %v551 = vpack.c.b16 %v519, %v519
      %v552 = vpack.c.b16 %v520, %v520
      %v553 = vpack.c.b16 %v521, %v521
      %v554 = vpack.c.b16 %v522, %v522
      %v555 = vpack.c.b16 %v523, %v523
      %v556 = vpack.c.b16 %v524, %v524
      %v557 = vpack.c.b16 %v525, %v525
      %v558 = vpack.c.b16 %v526, %v526
      %v559 = vpack.c.b16 %v527, %v527
      %v560 = vpack.c.b16 %v528, %v528
      %v561 = vpack.c.b16 %v529, %v529
      %v562 = vpack.c.b16 %v530, %v530
      %v563 = vpack.c.b16 %v531, %v531
      %v564 = vpack.c.b16 %v532, %v532
      %v565 = vpack.c.b16 %v533, %v533
      %v566 = vpack.c.b16 %v534, %v534
      %v567 = vpack.c.b16 %v535, %v535
      %v568 = vpack.c.b16 %v536, %v536
      %v569 = vpack.c.b16 %v537, %v537
      %v570 = vpack.c.b16 %v538, %v538
      %v571 = vpack.c.b16 %v539, %v539
      %v572 = vpack.c.b16 %v540, %v540
      %v573 = vpack.c.b16 %v541, %v541
      %v574 = vpack.c.b16 %v542, %v542
      %v575 = vpack.c.b16 %v543, %v543
      %s608 = scalar_lea.vmem [#allocation2], 24
      %609 = vst.msk [vmem:[%s608 + $0x8] sm:$0xf] %vm320, %v544
      %610 = vst.msk [vmem:[%s608 + $0xc] sm:$0xf] %vm320, %v545
      %611 = vst.msk [vmem:[%s608 + $0x20] sm:$0xf] %vm320, %v546
      %612 = vst.msk [vmem:[%s608 + $0x24] sm:$0xf] %vm320, %v547
      %613 = vst.msk [vmem:[%s608 + $0x38] sm:$0xf] %vm320, %v548
      %614 = vst.msk [vmem:[%s608 + $0x3c] sm:$0xf] %vm320, %v549
      %615 = vst.msk [vmem:[%s608 + $0x50] sm:$0xf] %vm320, %v550
      %616 = vst.msk [vmem:[%s608 + $0x54] sm:$0xf] %vm320, %v551
      %617 = vst.msk [vmem:[%s608 + $0x68] sm:$0xf] %vm320, %v552
      %618 = vst.msk [vmem:[%s608 + $0x6c] sm:$0xf] %vm320, %v553
      %619 = vst.msk [vmem:[%s608 + $0x80] sm:$0xf] %vm320, %v554
      %620 = vst.msk [vmem:[%s608 + $0x84] sm:$0xf] %vm320, %v555
      %621 = vst.msk [vmem:[%s608 + $0x98] sm:$0xf] %vm320, %v556
      %622 = vst.msk [vmem:[%s608 + $0x9c] sm:$0xf] %vm320, %v557
      %623 = vst.msk [vmem:[%s608 + $0xb0] sm:$0xf] %vm320, %v558
      %624 = vst.msk [vmem:[%s608 + $0xb4] sm:$0xf] %vm320, %v559
      %625 = vst.msk [vmem:[%s608 + $0xc8] sm:$0xf] %vm320, %v560
      %626 = vst.msk [vmem:[%s608 + $0xcc] sm:$0xf] %vm320, %v561
      %627 = vst.msk [vmem:[%s608 + $0xe0] sm:$0xf] %vm320, %v562
      %628 = vst.msk [vmem:[%s608 + $0xe4] sm:$0xf] %vm320, %v563
      %629 = vst.msk [vmem:[%s608 + $0xf8] sm:$0xf] %vm320, %v564
      %630 = vst.msk [vmem:[%s608 + $0xfc] sm:$0xf] %vm320, %v565
      %631 = vst.msk [vmem:[%s608 + $0x110] sm:$0xf] %vm320, %v566
      %632 = vst.msk [vmem:[%s608 + $0x114] sm:$0xf] %vm320, %v567
      %633 = vst.msk [vmem:[%s608 + $0x128] sm:$0xf] %vm320, %v568
      %634 = vst.msk [vmem:[%s608 + $0x12c] sm:$0xf] %vm320, %v569
      %635 = vst.msk [vmem:[%s608 + $0x140] sm:$0xf] %vm320, %v570
      %636 = vst.msk [vmem:[%s608 + $0x144] sm:$0xf] %vm320, %v571
      %637 = vst.msk [vmem:[%s608 + $0x158] sm:$0xf] %vm320, %v572
      %638 = vst.msk [vmem:[%s608 + $0x15c] sm:$0xf] %vm320, %v573
      %639 = vst.msk [vmem:[%s608 + $0x170] sm:$0xf] %vm320, %v574
      %640 = vst.msk [vmem:[%s608 + $0x174] sm:$0xf] %vm320, %v575
      %v641 = vld [vmem:[#allocation2 + $0x4] sm:$0x8]
      %v642 = vld [vmem:[#allocation2 + $0x8] sm:$0xf]
      %v643 = vld [vmem:[#allocation2 + $0xc] sm:$0xf]
      %v644 = vld [vmem:[#allocation2 + $0x1c] sm:$0x8]
      %v645 = vld [vmem:[#allocation2 + $0x20] sm:$0xf]
      %v646 = vld [vmem:[#allocation2 + $0x24] sm:$0xf]
      %v647 = vld [vmem:[#allocation2 + $0x34] sm:$0x8]
      %v648 = vld [vmem:[#allocation2 + $0x38] sm:$0xf]
      %v649 = vld [vmem:[#allocation2 + $0x3c] sm:$0xf]
      %v650 = vld [vmem:[#allocation2 + $0x4c] sm:$0x8]
      %v651 = vld [vmem:[#allocation2 + $0x50] sm:$0xf]
      %v652 = vld [vmem:[#allocation2 + $0x54] sm:$0xf]
      %v653 = vld [vmem:[#allocation2 + $0x64] sm:$0x8]
      %v654 = vld [vmem:[#allocation2 + $0x68] sm:$0xf]
      %v655 = vld [vmem:[#allocation2 + $0x6c] sm:$0xf]
      %v656 = vld [vmem:[#allocation2 + $0x7c] sm:$0x8]
      %v657 = vld [vmem:[#allocation2 + $0x80] sm:$0xf]
      %v658 = vld [vmem:[#allocation2 + $0x84] sm:$0xf]
      %v659 = vld [vmem:[#allocation2 + $0x94] sm:$0x8]
      %v660 = vld [vmem:[#allocation2 + $0x98] sm:$0xf]
      %v661 = vld [vmem:[#allocation2 + $0x9c] sm:$0xf]
      %v662 = vld [vmem:[#allocation2 + $0xac] sm:$0x8]
      %v663 = vld [vmem:[#allocation2 + $0xb0] sm:$0xf]
      %v664 = vld [vmem:[#allocation2 + $0xb4] sm:$0xf]
      %v665 = vld [vmem:[#allocation2 + $0xc4] sm:$0x8]
      %v666 = vld [vmem:[#allocation2 + $0xc8] sm:$0xf]
      %v667 = vld [vmem:[#allocation2 + $0xcc] sm:$0xf]
      %v668 = vld [vmem:[#allocation2 + $0xdc] sm:$0x8]
      %v669 = vld [vmem:[#allocation2 + $0xe0] sm:$0xf]
      %v670 = vld [vmem:[#allocation2 + $0xe4] sm:$0xf]
      %v671 = vld [vmem:[#allocation2 + $0xf4] sm:$0x8]
      %v672 = vld [vmem:[#allocation2 + $0xf8] sm:$0xf]
      %v673 = vld [vmem:[#allocation2 + $0xfc] sm:$0xf]
      %v674 = vld [vmem:[#allocation2 + $0x10c] sm:$0x8]
      %v675 = vld [vmem:[#allocation2 + $0x110] sm:$0xf]
      %v676 = vld [vmem:[#allocation2 + $0x114] sm:$0xf]
      %v677 = vld [vmem:[#allocation2 + $0x124] sm:$0x8]
      %v678 = vld [vmem:[#allocation2 + $0x128] sm:$0xf]
      %v679 = vld [vmem:[#allocation2 + $0x12c] sm:$0xf]
      %v680 = vld [vmem:[#allocation2 + $0x13c] sm:$0x8]
      %v681 = vld [vmem:[#allocation2 + $0x140] sm:$0xf]
      %v682 = vld [vmem:[#allocation2 + $0x144] sm:$0xf]
      %v683 = vld [vmem:[#allocation2 + $0x154] sm:$0x8]
      %v684 = vld [vmem:[#allocation2 + $0x158] sm:$0xf]
      %v685 = vld [vmem:[#allocation2 + $0x15c] sm:$0xf]
      %v686 = vld [vmem:[#allocation2 + $0x16c] sm:$0x8]
      %v687 = vld [vmem:[#allocation2 + $0x170] sm:$0xf]
      %v688 = vld [vmem:[#allocation2 + $0x174] sm:$0xf]
      %vm689 = vsmask.f32 4368
      %vm690 = vmor %vm392, %vm689
      %v692 = vshrl.u32 %v641, 16
      %v694 = vrot.slane %v692, 7
      %v695 = vrot.slane %v694, 4
      %v697 = vshrl.u32 %v642, 16
      %v699 = vrot.slane %v697, 7
      %v700 = vshll.u32 %v642, 16
      %v702 = vor.u32 %v699, %v700
      %v703 = vsel %vm690, %v695, %v702
      %v704 = vrot.slane %v699, 4
      %v706 = vshrl.u32 %v643, 16
      %v708 = vrot.slane %v706, 7
      %v709 = vshll.u32 %v643, 16
      %v711 = vor.u32 %v708, %v709
      %v712 = vsel %vm690, %v704, %v711
      %v714 = vshrl.u32 %v644, 16
      %v716 = vrot.slane %v714, 7
      %v717 = vrot.slane %v716, 4
      %v719 = vshrl.u32 %v645, 16
      %v721 = vrot.slane %v719, 7
      %v722 = vshll.u32 %v645, 16
      %v724 = vor.u32 %v721, %v722
      %v725 = vsel %vm690, %v717, %v724
      %v726 = vrot.slane %v721, 4
      %v728 = vshrl.u32 %v646, 16
      %v730 = vrot.slane %v728, 7
      %v731 = vshll.u32 %v646, 16
      %v733 = vor.u32 %v730, %v731
      %v734 = vsel %vm690, %v726, %v733
      %v736 = vshrl.u32 %v647, 16
      %v738 = vrot.slane %v736, 7
      %v739 = vrot.slane %v738, 4
      %v741 = vshrl.u32 %v648, 16
      %v743 = vrot.slane %v741, 7
      %v744 = vshll.u32 %v648, 16
      %v746 = vor.u32 %v743, %v744
      %v747 = vsel %vm690, %v739, %v746
      %v748 = vrot.slane %v743, 4
      %v750 = vshrl.u32 %v649, 16
      %v752 = vrot.slane %v750, 7
      %v753 = vshll.u32 %v649, 16
      %v755 = vor.u32 %v752, %v753
      %v756 = vsel %vm690, %v748, %v755
      %v758 = vshrl.u32 %v650, 16
      %v760 = vrot.slane %v758, 7
      %v761 = vrot.slane %v760, 4
      %v763 = vshrl.u32 %v651, 16
      %v765 = vrot.slane %v763, 7
      %v766 = vshll.u32 %v651, 16
      %v768 = vor.u32 %v765, %v766
      %v769 = vsel %vm690, %v761, %v768
      %v770 = vrot.slane %v765, 4
      %v772 = vshrl.u32 %v652, 16
      %v774 = vrot.slane %v772, 7
      %v775 = vshll.u32 %v652, 16
      %v777 = vor.u32 %v774, %v775
      %v778 = vsel %vm690, %v770, %v777
      %v780 = vshrl.u32 %v653, 16
      %v782 = vrot.slane %v780, 7
      %v783 = vrot.slane %v782, 4
      %v785 = vshrl.u32 %v654, 16
      %v787 = vrot.slane %v785, 7
      %v788 = vshll.u32 %v654, 16
      %v790 = vor.u32 %v787, %v788
      %v791 = vsel %vm690, %v783, %v790
      %v792 = vrot.slane %v787, 4
      %v794 = vshrl.u32 %v655, 16
      %v796 = vrot.slane %v794, 7
      %v797 = vshll.u32 %v655, 16
      %v799 = vor.u32 %v796, %v797
      %v800 = vsel %vm690, %v792, %v799
      %v802 = vshrl.u32 %v656, 16
      %v804 = vrot.slane %v802, 7
      %v805 = vrot.slane %v804, 4
      %v807 = vshrl.u32 %v657, 16
      %v809 = vrot.slane %v807, 7
      %v810 = vshll.u32 %v657, 16
      %v812 = vor.u32 %v809, %v810
      %v813 = vsel %vm690, %v805, %v812
      %v814 = vrot.slane %v809, 4
      %v816 = vshrl.u32 %v658, 16
      %v818 = vrot.slane %v816, 7
      %v819 = vshll.u32 %v658, 16
      %v821 = vor.u32 %v818, %v819
      %v822 = vsel %vm690, %v814, %v821
      %v824 = vshrl.u32 %v659, 16
      %v826 = vrot.slane %v824, 7
      %v827 = vrot.slane %v826, 4
      %v829 = vshrl.u32 %v660, 16
      %v831 = vrot.slane %v829, 7
      %v832 = vshll.u32 %v660, 16
      %v834 = vor.u32 %v831, %v832
      %v835 = vsel %vm690, %v827, %v834
      %v836 = vrot.slane %v831, 4
      %v838 = vshrl.u32 %v661, 16
      %v840 = vrot.slane %v838, 7
      %v841 = vshll.u32 %v661, 16
      %v843 = vor.u32 %v840, %v841
      %v844 = vsel %vm690, %v836, %v843
      %v846 = vshrl.u32 %v662, 16
      %v848 = vrot.slane %v846, 7
      %v849 = vrot.slane %v848, 4
      %v851 = vshrl.u32 %v663, 16
      %v853 = vrot.slane %v851, 7
      %v854 = vshll.u32 %v663, 16
      %v856 = vor.u32 %v853, %v854
      %v857 = vsel %vm690, %v849, %v856
      %v858 = vrot.slane %v853, 4
      %v860 = vshrl.u32 %v664, 16
      %v862 = vrot.slane %v860, 7
      %v863 = vshll.u32 %v664, 16
      %v865 = vor.u32 %v862, %v863
      %v866 = vsel %vm690, %v858, %v865
      %v868 = vshrl.u32 %v665, 16
      %v870 = vrot.slane %v868, 7
      %v871 = vrot.slane %v870, 4
      %v873 = vshrl.u32 %v666, 16
      %v875 = vrot.slane %v873, 7
      %v876 = vshll.u32 %v666, 16
      %v878 = vor.u32 %v875, %v876
      %v879 = vsel %vm690, %v871, %v878
      %v880 = vrot.slane %v875, 4
      %v882 = vshrl.u32 %v667, 16
      %v884 = vrot.slane %v882, 7
      %v885 = vshll.u32 %v667, 16
      %v887 = vor.u32 %v884, %v885
      %v888 = vsel %vm690, %v880, %v887
      %v890 = vshrl.u32 %v668, 16
      %v892 = vrot.slane %v890, 7
      %v893 = vrot.slane %v892, 4
      %v895 = vshrl.u32 %v669, 16
      %v897 = vrot.slane %v895, 7
      %v898 = vshll.u32 %v669, 16
      %v900 = vor.u32 %v897, %v898
      %v901 = vsel %vm690, %v893, %v900
      %v902 = vrot.slane %v897, 4
      %v904 = vshrl.u32 %v670, 16
      %v906 = vrot.slane %v904, 7
      %v907 = vshll.u32 %v670, 16
      %v909 = vor.u32 %v906, %v907
      %v910 = vsel %vm690, %v902, %v909
      %v912 = vshrl.u32 %v671, 16
      %v914 = vrot.slane %v912, 7
      %v915 = vrot.slane %v914, 4
      %v917 = vshrl.u32 %v672, 16
      %v919 = vrot.slane %v917, 7
      %v920 = vshll.u32 %v672, 16
      %v922 = vor.u32 %v919, %v920
      %v923 = vsel %vm690, %v915, %v922
      %v924 = vrot.slane %v919, 4
      %v926 = vshrl.u32 %v673, 16
      %v928 = vrot.slane %v926, 7
      %v929 = vshll.u32 %v673, 16
      %v931 = vor.u32 %v928, %v929
      %v932 = vsel %vm690, %v924, %v931
      %v934 = vshrl.u32 %v674, 16
      %v936 = vrot.slane %v934, 7
      %v937 = vrot.slane %v936, 4
      %v939 = vshrl.u32 %v675, 16
      %v941 = vrot.slane %v939, 7
      %v942 = vshll.u32 %v675, 16
      %v944 = vor.u32 %v941, %v942
      %v945 = vsel %vm690, %v937, %v944
      %v946 = vrot.slane %v941, 4
      %v948 = vshrl.u32 %v676, 16
      %v950 = vrot.slane %v948, 7
      %v951 = vshll.u32 %v676, 16
      %v953 = vor.u32 %v950, %v951
      %v954 = vsel %vm690, %v946, %v953
      %v956 = vshrl.u32 %v677, 16
      %v958 = vrot.slane %v956, 7
      %v959 = vrot.slane %v958, 4
      %v961 = vshrl.u32 %v678, 16
      %v963 = vrot.slane %v961, 7
      %v964 = vshll.u32 %v678, 16
      %v966 = vor.u32 %v963, %v964
      %v967 = vsel %vm690, %v959, %v966
      %v968 = vrot.slane %v963, 4
      %v970 = vshrl.u32 %v679, 16
      %v972 = vrot.slane %v970, 7
      %v973 = vshll.u32 %v679, 16
      %v975 = vor.u32 %v972, %v973
      %v976 = vsel %vm690, %v968, %v975
      %v978 = vshrl.u32 %v680, 16
      %v980 = vrot.slane %v978, 7
      %v981 = vrot.slane %v980, 4
      %v983 = vshrl.u32 %v681, 16
      %v985 = vrot.slane %v983, 7
      %v986 = vshll.u32 %v681, 16
      %v988 = vor.u32 %v985, %v986
      %v989 = vsel %vm690, %v981, %v988
      %v990 = vrot.slane %v985, 4
      %v992 = vshrl.u32 %v682, 16
      %v994 = vrot.slane %v992, 7
      %v995 = vshll.u32 %v682, 16
      %v997 = vor.u32 %v994, %v995
      %v998 = vsel %vm690, %v990, %v997
      %v1000 = vshrl.u32 %v683, 16
      %v1002 = vrot.slane %v1000, 7
      %v1003 = vrot.slane %v1002, 4
      %v1005 = vshrl.u32 %v684, 16
      %v1007 = vrot.slane %v1005, 7
      %v1008 = vshll.u32 %v684, 16
      %v1010 = vor.u32 %v1007, %v1008
      %v1011 = vsel %vm690, %v1003, %v1010
      %v1012 = vrot.slane %v1007, 4
      %v1014 = vshrl.u32 %v685, 16
      %v1016 = vrot.slane %v1014, 7
      %v1017 = vshll.u32 %v685, 16
      %v1019 = vor.u32 %v1016, %v1017
      %v1020 = vsel %vm690, %v1012, %v1019
      %v1022 = vshrl.u32 %v686, 16
      %v1024 = vrot.slane %v1022, 7
      %v1025 = vrot.slane %v1024, 4
      %v1027 = vshrl.u32 %v687, 16
      %v1029 = vrot.slane %v1027, 7
      %v1030 = vshll.u32 %v687, 16
      %v1032 = vor.u32 %v1029, %v1030
      %v1033 = vsel %vm690, %v1025, %v1032
      %v1034 = vrot.slane %v1029, 4
      %v1036 = vshrl.u32 %v688, 16
      %v1038 = vrot.slane %v1036, 7
      %v1039 = vshll.u32 %v688, 16
      %v1041 = vor.u32 %v1038, %v1039
      %v1042 = vsel %vm690, %v1034, %v1041
      %1075 = vst.msk [vmem:[#allocation3] sm:$0xf] %vm320, %v703
      %1076 = vst.msk [vmem:[#allocation3 + $0x4] sm:$0xf] %vm320, %v712
      %1077 = vst.msk [vmem:[#allocation3 + $0x8] sm:$0xf] %vm320, %v725
      %1078 = vst.msk [vmem:[#allocation3 + $0xc] sm:$0xf] %vm320, %v734
      %1079 = vst.msk [vmem:[#allocation3 + $0x10] sm:$0xf] %vm320, %v747
      %1080 = vst.msk [vmem:[#allocation3 + $0x14] sm:$0xf] %vm320, %v756
      %1081 = vst.msk [vmem:[#allocation3 + $0x18] sm:$0xf] %vm320, %v769
      %1082 = vst.msk [vmem:[#allocation3 + $0x1c] sm:$0xf] %vm320, %v778
      %1083 = vst.msk [vmem:[#allocation3 + $0x20] sm:$0xf] %vm320, %v791
      %1084 = vst.msk [vmem:[#allocation3 + $0x24] sm:$0xf] %vm320, %v800
      %1085 = vst.msk [vmem:[#allocation3 + $0x28] sm:$0xf] %vm320, %v813
      %1086 = vst.msk [vmem:[#allocation3 + $0x2c] sm:$0xf] %vm320, %v822
      %1087 = vst.msk [vmem:[#allocation3 + $0x30] sm:$0xf] %vm320, %v835
      %1088 = vst.msk [vmem:[#allocation3 + $0x34] sm:$0xf] %vm320, %v844
      %1089 = vst.msk [vmem:[#allocation3 + $0x38] sm:$0xf] %vm320, %v857
      %1090 = vst.msk [vmem:[#allocation3 + $0x3c] sm:$0xf] %vm320, %v866
      %1091 = vst.msk [vmem:[#allocation3 + $0x40] sm:$0xf] %vm320, %v879
      %1092 = vst.msk [vmem:[#allocation3 + $0x44] sm:$0xf] %vm320, %v888
      %1093 = vst.msk [vmem:[#allocation3 + $0x48] sm:$0xf] %vm320, %v901
      %1094 = vst.msk [vmem:[#allocation3 + $0x4c] sm:$0xf] %vm320, %v910
      %1095 = vst.msk [vmem:[#allocation3 + $0x50] sm:$0xf] %vm320, %v923
      %1096 = vst.msk [vmem:[#allocation3 + $0x54] sm:$0xf] %vm320, %v932
      %1097 = vst.msk [vmem:[#allocation3 + $0x58] sm:$0xf] %vm320, %v945
      %1098 = vst.msk [vmem:[#allocation3 + $0x5c] sm:$0xf] %vm320, %v954
      %1099 = vst.msk [vmem:[#allocation3 + $0x60] sm:$0xf] %vm320, %v967
      %1100 = vst.msk [vmem:[#allocation3 + $0x64] sm:$0xf] %vm320, %v976
      %1101 = vst.msk [vmem:[#allocation3 + $0x68] sm:$0xf] %vm320, %v989
      %1102 = vst.msk [vmem:[#allocation3 + $0x6c] sm:$0xf] %vm320, %v998
      %1103 = vst.msk [vmem:[#allocation3 + $0x70] sm:$0xf] %vm320, %v1011
      %1104 = vst.msk [vmem:[#allocation3 + $0x74] sm:$0xf] %vm320, %v1020
      %1105 = vst.msk [vmem:[#allocation3 + $0x78] sm:$0xf] %vm320, %v1033
      %1106 = vst.msk [vmem:[#allocation3 + $0x7c] sm:$0xf] %vm320, %v1042
      %v1107 = vld [vmem:[#allocation2 + $0x8] sm:$0xf]
      %v1108 = vld [vmem:[#allocation2 + $0xc] sm:$0xf]
      %v1109 = vld [vmem:[#allocation2 + $0x20] sm:$0xf]
      %v1110 = vld [vmem:[#allocation2 + $0x24] sm:$0xf]
      %v1111 = vld [vmem:[#allocation2 + $0x38] sm:$0xf]
      %v1112 = vld [vmem:[#allocation2 + $0x3c] sm:$0xf]
      %v1113 = vld [vmem:[#allocation2 + $0x50] sm:$0xf]
      %v1114 = vld [vmem:[#allocation2 + $0x54] sm:$0xf]
      %v1115 = vld [vmem:[#allocation2 + $0x68] sm:$0xf]
      %v1116 = vld [vmem:[#allocation2 + $0x6c] sm:$0xf]
      %v1117 = vld [vmem:[#allocation2 + $0x80] sm:$0xf]
      %v1118 = vld [vmem:[#allocation2 + $0x84] sm:$0xf]
      %v1119 = vld [vmem:[#allocation2 + $0x98] sm:$0xf]
      %v1120 = vld [vmem:[#allocation2 + $0x9c] sm:$0xf]
      %v1121 = vld [vmem:[#allocation2 + $0xb0] sm:$0xf]
      %v1122 = vld [vmem:[#allocation2 + $0xb4] sm:$0xf]
      %v1123 = vld [vmem:[#allocation2 + $0xc8] sm:$0xf]
      %v1124 = vld [vmem:[#allocation2 + $0xcc] sm:$0xf]
      %v1125 = vld [vmem:[#allocation2 + $0xe0] sm:$0xf]
      %v1126 = vld [vmem:[#allocation2 + $0xe4] sm:$0xf]
      %v1127 = vld [vmem:[#allocation2 + $0xf8] sm:$0xf]
      %v1128 = vld [vmem:[#allocation2 + $0xfc] sm:$0xf]
      %v1129 = vld [vmem:[#allocation2 + $0x110] sm:$0xf]
      %v1130 = vld [vmem:[#allocation2 + $0x114] sm:$0xf]
      %v1131 = vld [vmem:[#allocation2 + $0x128] sm:$0xf]
      %v1132 = vld [vmem:[#allocation2 + $0x12c] sm:$0xf]
      %v1133 = vld [vmem:[#allocation2 + $0x140] sm:$0xf]
      %v1134 = vld [vmem:[#allocation2 + $0x144] sm:$0xf]
      %v1135 = vld [vmem:[#allocation2 + $0x158] sm:$0xf]
      %v1136 = vld [vmem:[#allocation2 + $0x15c] sm:$0xf]
      %v1137 = vld [vmem:[#allocation2 + $0x170] sm:$0xf]
      %v1138 = vld [vmem:[#allocation2 + $0x174] sm:$0xf]
      %1171 = vrot.lane.b32.xlu0 %v1107, 4
      %v1172 = vpop.permute.xlu0 %1171
      %1173 = vrot.lane.b32.xlu0 %v1108, 4
      %v1174 = vpop.permute.xlu0 %1173
      %1175 = vrot.lane.b32.xlu0 %v1109, 4
      %v1176 = vpop.permute.xlu0 %1175
      %1177 = vrot.lane.b32.xlu0 %v1110, 4
      %v1178 = vpop.permute.xlu0 %1177
      %1179 = vrot.lane.b32.xlu0 %v1111, 4
      %v1180 = vpop.permute.xlu0 %1179
      %1181 = vrot.lane.b32.xlu0 %v1112, 4
      %v1182 = vpop.permute.xlu0 %1181
      %1183 = vrot.lane.b32.xlu0 %v1113, 4
      %v1184 = vpop.permute.xlu0 %1183
      %1185 = vrot.lane.b32.xlu0 %v1114, 4
      %v1186 = vpop.permute.xlu0 %1185
      %1187 = vrot.lane.b32.xlu0 %v1115, 4
      %v1188 = vpop.permute.xlu0 %1187
      %1189 = vrot.lane.b32.xlu0 %v1116, 4
      %v1190 = vpop.permute.xlu0 %1189
      %1191 = vrot.lane.b32.xlu0 %v1117, 4
      %v1192 = vpop.permute.xlu0 %1191
      %1193 = vrot.lane.b32.xlu0 %v1118, 4
      %v1194 = vpop.permute.xlu0 %1193
      %1195 = vrot.lane.b32.xlu0 %v1119, 4
      %v1196 = vpop.permute.xlu0 %1195
      %1197 = vrot.lane.b32.xlu0 %v1120, 4
      %v1198 = vpop.permute.xlu0 %1197
      %1199 = vrot.lane.b32.xlu0 %v1121, 4
      %v1200 = vpop.permute.xlu0 %1199
      %1201 = vrot.lane.b32.xlu0 %v1122, 4
      %v1202 = vpop.permute.xlu0 %1201
      %1203 = vrot.lane.b32.xlu0 %v1123, 4
      %v1204 = vpop.permute.xlu0 %1203
      %1205 = vrot.lane.b32.xlu0 %v1124, 4
      %v1206 = vpop.permute.xlu0 %1205
      %1207 = vrot.lane.b32.xlu0 %v1125, 4
      %v1208 = vpop.permute.xlu0 %1207
      %1209 = vrot.lane.b32.xlu0 %v1126, 4
      %v1210 = vpop.permute.xlu0 %1209
      %1211 = vrot.lane.b32.xlu0 %v1127, 4
      %v1212 = vpop.permute.xlu0 %1211
      %1213 = vrot.lane.b32.xlu0 %v1128, 4
      %v1214 = vpop.permute.xlu0 %1213
      %1215 = vrot.lane.b32.xlu0 %v1129, 4
      %v1216 = vpop.permute.xlu0 %1215
      %1217 = vrot.lane.b32.xlu0 %v1130, 4
      %v1218 = vpop.permute.xlu0 %1217
      %1219 = vrot.lane.b32.xlu0 %v1131, 4
      %v1220 = vpop.permute.xlu0 %1219
      %1221 = vrot.lane.b32.xlu0 %v1132, 4
      %v1222 = vpop.permute.xlu0 %1221
      %1223 = vrot.lane.b32.xlu0 %v1133, 4
      %v1224 = vpop.permute.xlu0 %1223
      %1225 = vrot.lane.b32.xlu0 %v1134, 4
      %v1226 = vpop.permute.xlu0 %1225
      %1227 = vrot.lane.b32.xlu0 %v1135, 4
      %v1228 = vpop.permute.xlu0 %1227
      %1229 = vrot.lane.b32.xlu0 %v1136, 4
      %v1230 = vpop.permute.xlu0 %1229
      %1231 = vrot.lane.b32.xlu0 %v1137, 4
      %v1232 = vpop.permute.xlu0 %1231
      %1233 = vrot.lane.b32.xlu0 %v1138, 4
      %v1234 = vpop.permute.xlu0 %1233
      %vm1267 = vcmask 60448
      %1268 = vst.msk [vmem:[#allocation3] sm:$0xf] %vm1267, %v1172
      %1269 = vst.msk [vmem:[#allocation3 + $0x4] sm:$0xf] %vm1267, %v1174
      %1270 = vst.msk [vmem:[#allocation3 + $0x8] sm:$0xf] %vm1267, %v1176
      %1271 = vst.msk [vmem:[#allocation3 + $0xc] sm:$0xf] %vm1267, %v1178
      %1272 = vst.msk [vmem:[#allocation3 + $0x10] sm:$0xf] %vm1267, %v1180
      %1273 = vst.msk [vmem:[#allocation3 + $0x14] sm:$0xf] %vm1267, %v1182
      %1274 = vst.msk [vmem:[#allocation3 + $0x18] sm:$0xf] %vm1267, %v1184
      %1275 = vst.msk [vmem:[#allocation3 + $0x1c] sm:$0xf] %vm1267, %v1186
      %1276 = vst.msk [vmem:[#allocation3 + $0x20] sm:$0xf] %vm1267, %v1188
      %1277 = vst.msk [vmem:[#allocation3 + $0x24] sm:$0xf] %vm1267, %v1190
      %1278 = vst.msk [vmem:[#allocation3 + $0x28] sm:$0xf] %vm1267, %v1192
      %1279 = vst.msk [vmem:[#allocation3 + $0x2c] sm:$0xf] %vm1267, %v1194
      %1280 = vst.msk [vmem:[#allocation3 + $0x30] sm:$0xf] %vm1267, %v1196
      %1281 = vst.msk [vmem:[#allocation3 + $0x34] sm:$0xf] %vm1267, %v1198
      %1282 = vst.msk [vmem:[#allocation3 + $0x38] sm:$0xf] %vm1267, %v1200
      %1283 = vst.msk [vmem:[#allocation3 + $0x3c] sm:$0xf] %vm1267, %v1202
      %1284 = vst.msk [vmem:[#allocation3 + $0x40] sm:$0xf] %vm1267, %v1204
      %1285 = vst.msk [vmem:[#allocation3 + $0x44] sm:$0xf] %vm1267, %v1206
      %1286 = vst.msk [vmem:[#allocation3 + $0x48] sm:$0xf] %vm1267, %v1208
      %1287 = vst.msk [vmem:[#allocation3 + $0x4c] sm:$0xf] %vm1267, %v1210
      %1288 = vst.msk [vmem:[#allocation3 + $0x50] sm:$0xf] %vm1267, %v1212
      %1289 = vst.msk [vmem:[#allocation3 + $0x54] sm:$0xf] %vm1267, %v1214
      %1290 = vst.msk [vmem:[#allocation3 + $0x58] sm:$0xf] %vm1267, %v1216
      %1291 = vst.msk [vmem:[#allocation3 + $0x5c] sm:$0xf] %vm1267, %v1218
      %1292 = vst.msk [vmem:[#allocation3 + $0x60] sm:$0xf] %vm1267, %v1220
      %1293 = vst.msk [vmem:[#allocation3 + $0x64] sm:$0xf] %vm1267, %v1222
      %1294 = vst.msk [vmem:[#allocation3 + $0x68] sm:$0xf] %vm1267, %v1224
      %1295 = vst.msk [vmem:[#allocation3 + $0x6c] sm:$0xf] %vm1267, %v1226
      %1296 = vst.msk [vmem:[#allocation3 + $0x70] sm:$0xf] %vm1267, %v1228
      %1297 = vst.msk [vmem:[#allocation3 + $0x74] sm:$0xf] %vm1267, %v1230
      %1298 = vst.msk [vmem:[#allocation3 + $0x78] sm:$0xf] %vm1267, %v1232
      %1299 = vst.msk [vmem:[#allocation3 + $0x7c] sm:$0xf] %vm1267, %v1234
      %v1300 = vld [vmem:[#allocation2 + $0x8] sm:$0xf]
      %v1301 = vld [vmem:[#allocation2 + $0xc] sm:$0xf]
      %v1302 = vld [vmem:[#allocation2 + $0x10] sm:$0x1]
      %v1303 = vld [vmem:[#allocation2 + $0x20] sm:$0xf]
      %v1304 = vld [vmem:[#allocation2 + $0x24] sm:$0xf]
      %v1305 = vld [vmem:[#allocation2 + $0x28] sm:$0x1]
      %v1306 = vld [vmem:[#allocation2 + $0x38] sm:$0xf]
      %v1307 = vld [vmem:[#allocation2 + $0x3c] sm:$0xf]
      %v1308 = vld [vmem:[#allocation2 + $0x40] sm:$0x1]
      %v1309 = vld [vmem:[#allocation2 + $0x50] sm:$0xf]
      %v1310 = vld [vmem:[#allocation2 + $0x54] sm:$0xf]
      %v1311 = vld [vmem:[#allocation2 + $0x58] sm:$0x1]
      %v1312 = vld [vmem:[#allocation2 + $0x68] sm:$0xf]
      %v1313 = vld [vmem:[#allocation2 + $0x6c] sm:$0xf]
      %v1314 = vld [vmem:[#allocation2 + $0x70] sm:$0x1]
      %v1315 = vld [vmem:[#allocation2 + $0x80] sm:$0xf]
      %v1316 = vld [vmem:[#allocation2 + $0x84] sm:$0xf]
      %v1317 = vld [vmem:[#allocation2 + $0x88] sm:$0x1]
      %v1318 = vld [vmem:[#allocation2 + $0x98] sm:$0xf]
      %v1319 = vld [vmem:[#allocation2 + $0x9c] sm:$0xf]
      %v1320 = vld [vmem:[#allocation2 + $0xa0] sm:$0x1]
      %v1321 = vld [vmem:[#allocation2 + $0xb0] sm:$0xf]
      %v1322 = vld [vmem:[#allocation2 + $0xb4] sm:$0xf]
      %v1323 = vld [vmem:[#allocation2 + $0xb8] sm:$0x1]
      %v1324 = vld [vmem:[#allocation2 + $0xc8] sm:$0xf]
      %v1325 = vld [vmem:[#allocation2 + $0xcc] sm:$0xf]
      %v1326 = vld [vmem:[#allocation2 + $0xd0] sm:$0x1]
      %v1327 = vld [vmem:[#allocation2 + $0xe0] sm:$0xf]
      %v1328 = vld [vmem:[#allocation2 + $0xe4] sm:$0xf]
      %v1329 = vld [vmem:[#allocation2 + $0xe8] sm:$0x1]
      %v1330 = vld [vmem:[#allocation2 + $0xf8] sm:$0xf]
      %v1331 = vld [vmem:[#allocation2 + $0xfc] sm:$0xf]
      %v1332 = vld [vmem:[#allocation2 + $0x100] sm:$0x1]
      %v1333 = vld [vmem:[#allocation2 + $0x110] sm:$0xf]
      %v1334 = vld [vmem:[#allocation2 + $0x114] sm:$0xf]
      %v1335 = vld [vmem:[#allocation2 + $0x118] sm:$0x1]
      %v1336 = vld [vmem:[#allocation2 + $0x128] sm:$0xf]
      %v1337 = vld [vmem:[#allocation2 + $0x12c] sm:$0xf]
      %v1338 = vld [vmem:[#allocation2 + $0x130] sm:$0x1]
      %v1339 = vld [vmem:[#allocation2 + $0x140] sm:$0xf]
      %v1340 = vld [vmem:[#allocation2 + $0x144] sm:$0xf]
      %v1341 = vld [vmem:[#allocation2 + $0x148] sm:$0x1]
      %v1342 = vld [vmem:[#allocation2 + $0x158] sm:$0xf]
      %v1343 = vld [vmem:[#allocation2 + $0x15c] sm:$0xf]
      %v1344 = vld [vmem:[#allocation2 + $0x160] sm:$0x1]
      %v1345 = vld [vmem:[#allocation2 + $0x170] sm:$0xf]
      %v1346 = vld [vmem:[#allocation2 + $0x174] sm:$0xf]
      %v1347 = vld [vmem:[#allocation2 + $0x178] sm:$0x1]
      %vm1348 = vsmask.f32 3328
      %vm1349 = vsmask.f32 7440
      %vm1350 = vmor %vm1348, %vm1349
      %v1352 = vshrl.u32 %v1300, 16
      %v1354 = vrot.slane %v1352, 4
      %v1355 = vshll.u32 %v1300, 16
      %v1357 = vrot.slane %v1355, 5
      %v1358 = vor.u32 %v1354, %v1357
      %v1359 = vrot.slane %v1358, 4
      %v1361 = vshll.u32 %v1301, 16
      %v1363 = vrot.slane %v1361, 5
      %v1364 = vsel %vm1350, %v1359, %v1363
      %v1365 = vshrl.u32 %v1301, 16
      %v1367 = vrot.slane %v1365, 4
      %v1368 = vor.u32 %v1367, %v1363
      %v1369 = vrot.slane %v1368, 4
      %v1371 = vshll.u32 %v1302, 16
      %v1373 = vrot.slane %v1371, 5
      %v1374 = vsel %vm1350, %v1369, %v1373
      %v1376 = vshrl.u32 %v1303, 16
      %v1378 = vrot.slane %v1376, 4
      %v1379 = vshll.u32 %v1303, 16
      %v1381 = vrot.slane %v1379, 5
      %v1382 = vor.u32 %v1378, %v1381
      %v1383 = vrot.slane %v1382, 4
      %v1385 = vshll.u32 %v1304, 16
      %v1387 = vrot.slane %v1385, 5
      %v1388 = vsel %vm1350, %v1383, %v1387
      %v1389 = vshrl.u32 %v1304, 16
      %v1391 = vrot.slane %v1389, 4
      %v1392 = vor.u32 %v1391, %v1387
      %v1393 = vrot.slane %v1392, 4
      %v1395 = vshll.u32 %v1305, 16
      %v1397 = vrot.slane %v1395, 5
      %v1398 = vsel %vm1350, %v1393, %v1397
      %v1400 = vshrl.u32 %v1306, 16
      %v1402 = vrot.slane %v1400, 4
      %v1403 = vshll.u32 %v1306, 16
      %v1405 = vrot.slane %v1403, 5
      %v1406 = vor.u32 %v1402, %v1405
      %v1407 = vrot.slane %v1406, 4
      %v1409 = vshll.u32 %v1307, 16
      %v1411 = vrot.slane %v1409, 5
      %v1412 = vsel %vm1350, %v1407, %v1411
      %v1413 = vshrl.u32 %v1307, 16
      %v1415 = vrot.slane %v1413, 4
      %v1416 = vor.u32 %v1415, %v1411
      %v1417 = vrot.slane %v1416, 4
      %v1419 = vshll.u32 %v1308, 16
      %v1421 = vrot.slane %v1419, 5
      %v1422 = vsel %vm1350, %v1417, %v1421
      %v1424 = vshrl.u32 %v1309, 16
      %v1426 = vrot.slane %v1424, 4
      %v1427 = vshll.u32 %v1309, 16
      %v1429 = vrot.slane %v1427, 5
      %v1430 = vor.u32 %v1426, %v1429
      %v1431 = vrot.slane %v1430, 4
      %v1433 = vshll.u32 %v1310, 16
      %v1435 = vrot.slane %v1433, 5
      %v1436 = vsel %vm1350, %v1431, %v1435
      %v1437 = vshrl.u32 %v1310, 16
      %v1439 = vrot.slane %v1437, 4
      %v1440 = vor.u32 %v1439, %v1435
      %v1441 = vrot.slane %v1440, 4
      %v1443 = vshll.u32 %v1311, 16
      %v1445 = vrot.slane %v1443, 5
      %v1446 = vsel %vm1350, %v1441, %v1445
      %v1448 = vshrl.u32 %v1312, 16
      %v1450 = vrot.slane %v1448, 4
      %v1451 = vshll.u32 %v1312, 16
      %v1453 = vrot.slane %v1451, 5
      %v1454 = vor.u32 %v1450, %v1453
      %v1455 = vrot.slane %v1454, 4
      %v1457 = vshll.u32 %v1313, 16
      %v1459 = vrot.slane %v1457, 5
      %v1460 = vsel %vm1350, %v1455, %v1459
      %v1461 = vshrl.u32 %v1313, 16
      %v1463 = vrot.slane %v1461, 4
      %v1464 = vor.u32 %v1463, %v1459
      %v1465 = vrot.slane %v1464, 4
      %v1467 = vshll.u32 %v1314, 16
      %v1469 = vrot.slane %v1467, 5
      %v1470 = vsel %vm1350, %v1465, %v1469
      %v1472 = vshrl.u32 %v1315, 16
      %v1474 = vrot.slane %v1472, 4
      %v1475 = vshll.u32 %v1315, 16
      %v1477 = vrot.slane %v1475, 5
      %v1478 = vor.u32 %v1474, %v1477
      %v1479 = vrot.slane %v1478, 4
      %v1481 = vshll.u32 %v1316, 16
      %v1483 = vrot.slane %v1481, 5
      %v1484 = vsel %vm1350, %v1479, %v1483
      %v1485 = vshrl.u32 %v1316, 16
      %v1487 = vrot.slane %v1485, 4
      %v1488 = vor.u32 %v1487, %v1483
      %v1489 = vrot.slane %v1488, 4
      %v1491 = vshll.u32 %v1317, 16
      %v1493 = vrot.slane %v1491, 5
      %v1494 = vsel %vm1350, %v1489, %v1493
      %v1496 = vshrl.u32 %v1318, 16
      %v1498 = vrot.slane %v1496, 4
      %v1499 = vshll.u32 %v1318, 16
      %v1501 = vrot.slane %v1499, 5
      %v1502 = vor.u32 %v1498, %v1501
      %v1503 = vrot.slane %v1502, 4
      %v1505 = vshll.u32 %v1319, 16
      %v1507 = vrot.slane %v1505, 5
      %v1508 = vsel %vm1350, %v1503, %v1507
      %v1509 = vshrl.u32 %v1319, 16
      %v1511 = vrot.slane %v1509, 4
      %v1512 = vor.u32 %v1511, %v1507
      %v1513 = vrot.slane %v1512, 4
      %v1515 = vshll.u32 %v1320, 16
      %v1517 = vrot.slane %v1515, 5
      %v1518 = vsel %vm1350, %v1513, %v1517
      %v1520 = vshrl.u32 %v1321, 16
      %v1522 = vrot.slane %v1520, 4
      %v1523 = vshll.u32 %v1321, 16
      %v1525 = vrot.slane %v1523, 5
      %v1526 = vor.u32 %v1522, %v1525
      %v1527 = vrot.slane %v1526, 4
      %v1529 = vshll.u32 %v1322, 16
      %v1531 = vrot.slane %v1529, 5
      %v1532 = vsel %vm1350, %v1527, %v1531
      %v1533 = vshrl.u32 %v1322, 16
      %v1535 = vrot.slane %v1533, 4
      %v1536 = vor.u32 %v1535, %v1531
      %v1537 = vrot.slane %v1536, 4
      %v1539 = vshll.u32 %v1323, 16
      %v1541 = vrot.slane %v1539, 5
      %v1542 = vsel %vm1350, %v1537, %v1541
      %v1544 = vshrl.u32 %v1324, 16
      %v1546 = vrot.slane %v1544, 4
      %v1547 = vshll.u32 %v1324, 16
      %v1549 = vrot.slane %v1547, 5
      %v1550 = vor.u32 %v1546, %v1549
      %v1551 = vrot.slane %v1550, 4
      %v1553 = vshll.u32 %v1325, 16
      %v1555 = vrot.slane %v1553, 5
      %v1556 = vsel %vm1350, %v1551, %v1555
      %v1557 = vshrl.u32 %v1325, 16
      %v1559 = vrot.slane %v1557, 4
      %v1560 = vor.u32 %v1559, %v1555
      %v1561 = vrot.slane %v1560, 4
      %v1563 = vshll.u32 %v1326, 16
      %v1565 = vrot.slane %v1563, 5
      %v1566 = vsel %vm1350, %v1561, %v1565
      %v1568 = vshrl.u32 %v1327, 16
      %v1570 = vrot.slane %v1568, 4
      %v1571 = vshll.u32 %v1327, 16
      %v1573 = vrot.slane %v1571, 5
      %v1574 = vor.u32 %v1570, %v1573
      %v1575 = vrot.slane %v1574, 4
      %v1577 = vshll.u32 %v1328, 16
      %v1579 = vrot.slane %v1577, 5
      %v1580 = vsel %vm1350, %v1575, %v1579
      %v1581 = vshrl.u32 %v1328, 16
      %v1583 = vrot.slane %v1581, 4
      %v1584 = vor.u32 %v1583, %v1579
      %v1585 = vrot.slane %v1584, 4
      %v1587 = vshll.u32 %v1329, 16
      %v1589 = vrot.slane %v1587, 5
      %v1590 = vsel %vm1350, %v1585, %v1589
      %v1592 = vshrl.u32 %v1330, 16
      %v1594 = vrot.slane %v1592, 4
      %v1595 = vshll.u32 %v1330, 16
      %v1597 = vrot.slane %v1595, 5
      %v1598 = vor.u32 %v1594, %v1597
      %v1599 = vrot.slane %v1598, 4
      %v1601 = vshll.u32 %v1331, 16
      %v1603 = vrot.slane %v1601, 5
      %v1604 = vsel %vm1350, %v1599, %v1603
      %v1605 = vshrl.u32 %v1331, 16
      %v1607 = vrot.slane %v1605, 4
      %v1608 = vor.u32 %v1607, %v1603
      %v1609 = vrot.slane %v1608, 4
      %v1611 = vshll.u32 %v1332, 16
      %v1613 = vrot.slane %v1611, 5
      %v1614 = vsel %vm1350, %v1609, %v1613
      %v1616 = vshrl.u32 %v1333, 16
      %v1618 = vrot.slane %v1616, 4
      %v1619 = vshll.u32 %v1333, 16
      %v1621 = vrot.slane %v1619, 5
      %v1622 = vor.u32 %v1618, %v1621
      %v1623 = vrot.slane %v1622, 4
      %v1625 = vshll.u32 %v1334, 16
      %v1627 = vrot.slane %v1625, 5
      %v1628 = vsel %vm1350, %v1623, %v1627
      %v1629 = vshrl.u32 %v1334, 16
      %v1631 = vrot.slane %v1629, 4
      %v1632 = vor.u32 %v1631, %v1627
      %v1633 = vrot.slane %v1632, 4
      %v1635 = vshll.u32 %v1335, 16
      %v1637 = vrot.slane %v1635, 5
      %v1638 = vsel %vm1350, %v1633, %v1637
      %v1640 = vshrl.u32 %v1336, 16
      %v1642 = vrot.slane %v1640, 4
      %v1643 = vshll.u32 %v1336, 16
      %v1645 = vrot.slane %v1643, 5
      %v1646 = vor.u32 %v1642, %v1645
      %v1647 = vrot.slane %v1646, 4
      %v1649 = vshll.u32 %v1337, 16
      %v1651 = vrot.slane %v1649, 5
      %v1652 = vsel %vm1350, %v1647, %v1651
      %v1653 = vshrl.u32 %v1337, 16
      %v1655 = vrot.slane %v1653, 4
      %v1656 = vor.u32 %v1655, %v1651
      %v1657 = vrot.slane %v1656, 4
      %v1659 = vshll.u32 %v1338, 16
      %v1661 = vrot.slane %v1659, 5
      %v1662 = vsel %vm1350, %v1657, %v1661
      %v1664 = vshrl.u32 %v1339, 16
      %v1666 = vrot.slane %v1664, 4
      %v1667 = vshll.u32 %v1339, 16
      %v1669 = vrot.slane %v1667, 5
      %v1670 = vor.u32 %v1666, %v1669
      %v1671 = vrot.slane %v1670, 4
      %v1673 = vshll.u32 %v1340, 16
      %v1675 = vrot.slane %v1673, 5
      %v1676 = vsel %vm1350, %v1671, %v1675
      %v1677 = vshrl.u32 %v1340, 16
      %v1679 = vrot.slane %v1677, 4
      %v1680 = vor.u32 %v1679, %v1675
      %v1681 = vrot.slane %v1680, 4
      %v1683 = vshll.u32 %v1341, 16
      %v1685 = vrot.slane %v1683, 5
      %v1686 = vsel %vm1350, %v1681, %v1685
      %v1688 = vshrl.u32 %v1342, 16
      %v1690 = vrot.slane %v1688, 4
      %v1691 = vshll.u32 %v1342, 16
      %v1693 = vrot.slane %v1691, 5
      %v1694 = vor.u32 %v1690, %v1693
      %v1695 = vrot.slane %v1694, 4
      %v1697 = vshll.u32 %v1343, 16
      %v1699 = vrot.slane %v1697, 5
      %v1700 = vsel %vm1350, %v1695, %v1699
      %v1701 = vshrl.u32 %v1343, 16
      %v1703 = vrot.slane %v1701, 4
      %v1704 = vor.u32 %v1703, %v1699
      %v1705 = vrot.slane %v1704, 4
      %v1707 = vshll.u32 %v1344, 16
      %v1709 = vrot.slane %v1707, 5
      %v1710 = vsel %vm1350, %v1705, %v1709
      %v1712 = vshrl.u32 %v1345, 16
      %v1714 = vrot.slane %v1712, 4
      %v1715 = vshll.u32 %v1345, 16
      %v1717 = vrot.slane %v1715, 5
      %v1718 = vor.u32 %v1714, %v1717
      %v1719 = vrot.slane %v1718, 4
      %v1721 = vshll.u32 %v1346, 16
      %v1723 = vrot.slane %v1721, 5
      %v1724 = vsel %vm1350, %v1719, %v1723
      %v1725 = vshrl.u32 %v1346, 16
      %v1727 = vrot.slane %v1725, 4
      %v1728 = vor.u32 %v1727, %v1723
      %v1729 = vrot.slane %v1728, 4
      %v1731 = vshll.u32 %v1347, 16
      %v1733 = vrot.slane %v1731, 5
      %v1734 = vsel %vm1350, %v1729, %v1733
      %1735 = vrot.lane.b32.xlu0 %v1364, 8
      %v1736 = vpop.permute.xlu0 %1735
      %1737 = vrot.lane.b32.xlu0 %v1374, 8
      %v1738 = vpop.permute.xlu0 %1737
      %1739 = vrot.lane.b32.xlu0 %v1388, 8
      %v1740 = vpop.permute.xlu0 %1739
      %1741 = vrot.lane.b32.xlu0 %v1398, 8
      %v1742 = vpop.permute.xlu0 %1741
      %1743 = vrot.lane.b32.xlu0 %v1412, 8
      %v1744 = vpop.permute.xlu0 %1743
      %1745 = vrot.lane.b32.xlu0 %v1422, 8
      %v1746 = vpop.permute.xlu0 %1745
      %1747 = vrot.lane.b32.xlu0 %v1436, 8
      %v1748 = vpop.permute.xlu0 %1747
      %1749 = vrot.lane.b32.xlu0 %v1446, 8
      %v1750 = vpop.permute.xlu0 %1749
      %1751 = vrot.lane.b32.xlu0 %v1460, 8
      %v1752 = vpop.permute.xlu0 %1751
      %1753 = vrot.lane.b32.xlu0 %v1470, 8
      %v1754 = vpop.permute.xlu0 %1753
      %1755 = vrot.lane.b32.xlu0 %v1484, 8
      %v1756 = vpop.permute.xlu0 %1755
      %1757 = vrot.lane.b32.xlu0 %v1494, 8
      %v1758 = vpop.permute.xlu0 %1757
      %1759 = vrot.lane.b32.xlu0 %v1508, 8
      %v1760 = vpop.permute.xlu0 %1759
      %1761 = vrot.lane.b32.xlu0 %v1518, 8
      %v1762 = vpop.permute.xlu0 %1761
      %1763 = vrot.lane.b32.xlu0 %v1532, 8
      %v1764 = vpop.permute.xlu0 %1763
      %1765 = vrot.lane.b32.xlu0 %v1542, 8
      %v1766 = vpop.permute.xlu0 %1765
      %1767 = vrot.lane.b32.xlu0 %v1556, 8
      %v1768 = vpop.permute.xlu0 %1767
      %1769 = vrot.lane.b32.xlu0 %v1566, 8
      %v1770 = vpop.permute.xlu0 %1769
      %1771 = vrot.lane.b32.xlu0 %v1580, 8
      %v1772 = vpop.permute.xlu0 %1771
      %1773 = vrot.lane.b32.xlu0 %v1590, 8
      %v1774 = vpop.permute.xlu0 %1773
      %1775 = vrot.lane.b32.xlu0 %v1604, 8
      %v1776 = vpop.permute.xlu0 %1775
      %1777 = vrot.lane.b32.xlu0 %v1614, 8
      %v1778 = vpop.permute.xlu0 %1777
      %1779 = vrot.lane.b32.xlu0 %v1628, 8
      %v1780 = vpop.permute.xlu0 %1779
      %1781 = vrot.lane.b32.xlu0 %v1638, 8
      %v1782 = vpop.permute.xlu0 %1781
      %1783 = vrot.lane.b32.xlu0 %v1652, 8
      %v1784 = vpop.permute.xlu0 %1783
      %1785 = vrot.lane.b32.xlu0 %v1662, 8
      %v1786 = vpop.permute.xlu0 %1785
      %1787 = vrot.lane.b32.xlu0 %v1676, 8
      %v1788 = vpop.permute.xlu0 %1787
      %1789 = vrot.lane.b32.xlu0 %v1686, 8
      %v1790 = vpop.permute.xlu0 %1789
      %1791 = vrot.lane.b32.xlu0 %v1700, 8
      %v1792 = vpop.permute.xlu0 %1791
      %1793 = vrot.lane.b32.xlu0 %v1710, 8
      %v1794 = vpop.permute.xlu0 %1793
      %1795 = vrot.lane.b32.xlu0 %v1724, 8
      %v1796 = vpop.permute.xlu0 %1795
      %1797 = vrot.lane.b32.xlu0 %v1734, 8
      %v1798 = vpop.permute.xlu0 %1797
      %vm1831 = vcmask 93248
      %1832 = vst.msk [vmem:[#allocation3] sm:$0xf] %vm1831, %v1736
      %1833 = vst.msk [vmem:[#allocation3 + $0x4] sm:$0xf] %vm1831, %v1738
      %1834 = vst.msk [vmem:[#allocation3 + $0x8] sm:$0xf] %vm1831, %v1740
      %1835 = vst.msk [vmem:[#allocation3 + $0xc] sm:$0xf] %vm1831, %v1742
      %1836 = vst.msk [vmem:[#allocation3 + $0x10] sm:$0xf] %vm1831, %v1744
      %1837 = vst.msk [vmem:[#allocation3 + $0x14] sm:$0xf] %vm1831, %v1746
      %1838 = vst.msk [vmem:[#allocation3 + $0x18] sm:$0xf] %vm1831, %v1748
      %1839 = vst.msk [vmem:[#allocation3 + $0x1c] sm:$0xf] %vm1831, %v1750
      %1840 = vst.msk [vmem:[#allocation3 + $0x20] sm:$0xf] %vm1831, %v1752
      %1841 = vst.msk [vmem:[#allocation3 + $0x24] sm:$0xf] %vm1831, %v1754
      %1842 = vst.msk [vmem:[#allocation3 + $0x28] sm:$0xf] %vm1831, %v1756
      %1843 = vst.msk [vmem:[#allocation3 + $0x2c] sm:$0xf] %vm1831, %v1758
      %1844 = vst.msk [vmem:[#allocation3 + $0x30] sm:$0xf] %vm1831, %v1760
      %1845 = vst.msk [vmem:[#allocation3 + $0x34] sm:$0xf] %vm1831, %v1762
      %1846 = vst.msk [vmem:[#allocation3 + $0x38] sm:$0xf] %vm1831, %v1764
      %1847 = vst.msk [vmem:[#allocation3 + $0x3c] sm:$0xf] %vm1831, %v1766
      %1848 = vst.msk [vmem:[#allocation3 + $0x40] sm:$0xf] %vm1831, %v1768
      %1849 = vst.msk [vmem:[#allocation3 + $0x44] sm:$0xf] %vm1831, %v1770
      %1850 = vst.msk [vmem:[#allocation3 + $0x48] sm:$0xf] %vm1831, %v1772
      %1851 = vst.msk [vmem:[#allocation3 + $0x4c] sm:$0xf] %vm1831, %v1774
      %1852 = vst.msk [vmem:[#allocation3 + $0x50] sm:$0xf] %vm1831, %v1776
      %1853 = vst.msk [vmem:[#allocation3 + $0x54] sm:$0xf] %vm1831, %v1778
      %1854 = vst.msk [vmem:[#allocation3 + $0x58] sm:$0xf] %vm1831, %v1780
      %1855 = vst.msk [vmem:[#allocation3 + $0x5c] sm:$0xf] %vm1831, %v1782
      %1856 = vst.msk [vmem:[#allocation3 + $0x60] sm:$0xf] %vm1831, %v1784
      %1857 = vst.msk [vmem:[#allocation3 + $0x64] sm:$0xf] %vm1831, %v1786
      %1858 = vst.msk [vmem:[#allocation3 + $0x68] sm:$0xf] %vm1831, %v1788
      %1859 = vst.msk [vmem:[#allocation3 + $0x6c] sm:$0xf] %vm1831, %v1790
      %1860 = vst.msk [vmem:[#allocation3 + $0x70] sm:$0xf] %vm1831, %v1792
      %1861 = vst.msk [vmem:[#allocation3 + $0x74] sm:$0xf] %vm1831, %v1794
      %1862 = vst.msk [vmem:[#allocation3 + $0x78] sm:$0xf] %vm1831, %v1796
      %1863 = vst.msk [vmem:[#allocation3 + $0x7c] sm:$0xf] %vm1831, %v1798
      %v1864 = vld [vmem:[%s608 + $0x4] sm:$0x8]
      %v1865 = vld [vmem:[%s608 + $0x8] sm:$0xf]
      %v1866 = vld [vmem:[%s608 + $0xc] sm:$0xf]
      %v1867 = vld [vmem:[%s608 + $0x1c] sm:$0x8]
      %v1868 = vld [vmem:[%s608 + $0x20] sm:$0xf]
      %v1869 = vld [vmem:[%s608 + $0x24] sm:$0xf]
      %v1870 = vld [vmem:[%s608 + $0x34] sm:$0x8]
      %v1871 = vld [vmem:[%s608 + $0x38] sm:$0xf]
      %v1872 = vld [vmem:[%s608 + $0x3c] sm:$0xf]
      %v1873 = vld [vmem:[%s608 + $0x4c] sm:$0x8]
      %v1874 = vld [vmem:[%s608 + $0x50] sm:$0xf]
      %v1875 = vld [vmem:[%s608 + $0x54] sm:$0xf]
      %v1876 = vld [vmem:[%s608 + $0x64] sm:$0x8]
      %v1877 = vld [vmem:[%s608 + $0x68] sm:$0xf]
      %v1878 = vld [vmem:[%s608 + $0x6c] sm:$0xf]
      %v1879 = vld [vmem:[%s608 + $0x7c] sm:$0x8]
      %v1880 = vld [vmem:[%s608 + $0x80] sm:$0xf]
      %v1881 = vld [vmem:[%s608 + $0x84] sm:$0xf]
      %v1882 = vld [vmem:[%s608 + $0x94] sm:$0x8]
      %v1883 = vld [vmem:[%s608 + $0x98] sm:$0xf]
      %v1884 = vld [vmem:[%s608 + $0x9c] sm:$0xf]
      %v1885 = vld [vmem:[%s608 + $0xac] sm:$0x8]
      %v1886 = vld [vmem:[%s608 + $0xb0] sm:$0xf]
      %v1887 = vld [vmem:[%s608 + $0xb4] sm:$0xf]
      %v1888 = vld [vmem:[%s608 + $0xc4] sm:$0x8]
      %v1889 = vld [vmem:[%s608 + $0xc8] sm:$0xf]
      %v1890 = vld [vmem:[%s608 + $0xcc] sm:$0xf]
      %v1891 = vld [vmem:[%s608 + $0xdc] sm:$0x8]
      %v1892 = vld [vmem:[%s608 + $0xe0] sm:$0xf]
      %v1893 = vld [vmem:[%s608 + $0xe4] sm:$0xf]
      %v1894 = vld [vmem:[%s608 + $0xf4] sm:$0x8]
      %v1895 = vld [vmem:[%s608 + $0xf8] sm:$0xf]
      %v1896 = vld [vmem:[%s608 + $0xfc] sm:$0xf]
      %v1897 = vld [vmem:[%s608 + $0x10c] sm:$0x8]
      %v1898 = vld [vmem:[%s608 + $0x110] sm:$0xf]
      %v1899 = vld [vmem:[%s608 + $0x114] sm:$0xf]
      %v1900 = vld [vmem:[%s608 + $0x124] sm:$0x8]
      %v1901 = vld [vmem:[%s608 + $0x128] sm:$0xf]
      %v1902 = vld [vmem:[%s608 + $0x12c] sm:$0xf]
      %v1903 = vld [vmem:[%s608 + $0x13c] sm:$0x8]
      %v1904 = vld [vmem:[%s608 + $0x140] sm:$0xf]
      %v1905 = vld [vmem:[%s608 + $0x144] sm:$0xf]
      %v1906 = vld [vmem:[%s608 + $0x154] sm:$0x8]
      %v1907 = vld [vmem:[%s608 + $0x158] sm:$0xf]
      %v1908 = vld [vmem:[%s608 + $0x15c] sm:$0xf]
      %v1909 = vld [vmem:[%s608 + $0x16c] sm:$0x8]
      %v1910 = vld [vmem:[%s608 + $0x170] sm:$0xf]
      %v1911 = vld [vmem:[%s608 + $0x174] sm:$0xf]
      %v1913 = vshrl.u32 %v1864, 16
      %v1915 = vrot.slane %v1913, 7
      %v1916 = vrot.slane %v1915, 4
      %v1918 = vshrl.u32 %v1865, 16
      %v1920 = vrot.slane %v1918, 7
      %v1921 = vshll.u32 %v1865, 16
      %v1923 = vor.u32 %v1920, %v1921
      %v1924 = vsel %vm690, %v1916, %v1923
      %v1925 = vrot.slane %v1920, 4
      %v1927 = vshrl.u32 %v1866, 16
      %v1929 = vrot.slane %v1927, 7
      %v1930 = vshll.u32 %v1866, 16
      %v1932 = vor.u32 %v1929, %v1930
      %v1933 = vsel %vm690, %v1925, %v1932
      %v1935 = vshrl.u32 %v1867, 16
      %v1937 = vrot.slane %v1935, 7
      %v1938 = vrot.slane %v1937, 4
      %v1940 = vshrl.u32 %v1868, 16
      %v1942 = vrot.slane %v1940, 7
      %v1943 = vshll.u32 %v1868, 16
      %v1945 = vor.u32 %v1942, %v1943
      %v1946 = vsel %vm690, %v1938, %v1945
      %v1947 = vrot.slane %v1942, 4
      %v1949 = vshrl.u32 %v1869, 16
      %v1951 = vrot.slane %v1949, 7
      %v1952 = vshll.u32 %v1869, 16
      %v1954 = vor.u32 %v1951, %v1952
      %v1955 = vsel %vm690, %v1947, %v1954
      %v1957 = vshrl.u32 %v1870, 16
      %v1959 = vrot.slane %v1957, 7
      %v1960 = vrot.slane %v1959, 4
      %v1962 = vshrl.u32 %v1871, 16
      %v1964 = vrot.slane %v1962, 7
      %v1965 = vshll.u32 %v1871, 16
      %v1967 = vor.u32 %v1964, %v1965
      %v1968 = vsel %vm690, %v1960, %v1967
      %v1969 = vrot.slane %v1964, 4
      %v1971 = vshrl.u32 %v1872, 16
      %v1973 = vrot.slane %v1971, 7
      %v1974 = vshll.u32 %v1872, 16
      %v1976 = vor.u32 %v1973, %v1974
      %v1977 = vsel %vm690, %v1969, %v1976
      %v1979 = vshrl.u32 %v1873, 16
      %v1981 = vrot.slane %v1979, 7
      %v1982 = vrot.slane %v1981, 4
      %v1984 = vshrl.u32 %v1874, 16
      %v1986 = vrot.slane %v1984, 7
      %v1987 = vshll.u32 %v1874, 16
      %v1989 = vor.u32 %v1986, %v1987
      %v1990 = vsel %vm690, %v1982, %v1989
      %v1991 = vrot.slane %v1986, 4
      %v1993 = vshrl.u32 %v1875, 16
      %v1995 = vrot.slane %v1993, 7
      %v1996 = vshll.u32 %v1875, 16
      %v1998 = vor.u32 %v1995, %v1996
      %v1999 = vsel %vm690, %v1991, %v1998
      %v2001 = vshrl.u32 %v1876, 16
      %v2003 = vrot.slane %v2001, 7
      %v2004 = vrot.slane %v2003, 4
      %v2006 = vshrl.u32 %v1877, 16
      %v2008 = vrot.slane %v2006, 7
      %v2009 = vshll.u32 %v1877, 16
      %v2011 = vor.u32 %v2008, %v2009
      %v2012 = vsel %vm690, %v2004, %v2011
      %v2013 = vrot.slane %v2008, 4
      %v2015 = vshrl.u32 %v1878, 16
      %v2017 = vrot.slane %v2015, 7
      %v2018 = vshll.u32 %v1878, 16
      %v2020 = vor.u32 %v2017, %v2018
      %v2021 = vsel %vm690, %v2013, %v2020
      %v2023 = vshrl.u32 %v1879, 16
      %v2025 = vrot.slane %v2023, 7
      %v2026 = vrot.slane %v2025, 4
      %v2028 = vshrl.u32 %v1880, 16
      %v2030 = vrot.slane %v2028, 7
      %v2031 = vshll.u32 %v1880, 16
      %v2033 = vor.u32 %v2030, %v2031
      %v2034 = vsel %vm690, %v2026, %v2033
      %v2035 = vrot.slane %v2030, 4
      %v2037 = vshrl.u32 %v1881, 16
      %v2039 = vrot.slane %v2037, 7
      %v2040 = vshll.u32 %v1881, 16
      %v2042 = vor.u32 %v2039, %v2040
      %v2043 = vsel %vm690, %v2035, %v2042
      %v2045 = vshrl.u32 %v1882, 16
      %v2047 = vrot.slane %v2045, 7
      %v2048 = vrot.slane %v2047, 4
      %v2050 = vshrl.u32 %v1883, 16
      %v2052 = vrot.slane %v2050, 7
      %v2053 = vshll.u32 %v1883, 16
      %v2055 = vor.u32 %v2052, %v2053
      %v2056 = vsel %vm690, %v2048, %v2055
      %v2057 = vrot.slane %v2052, 4
      %v2059 = vshrl.u32 %v1884, 16
      %v2061 = vrot.slane %v2059, 7
      %v2062 = vshll.u32 %v1884, 16
      %v2064 = vor.u32 %v2061, %v2062
      %v2065 = vsel %vm690, %v2057, %v2064
      %v2067 = vshrl.u32 %v1885, 16
      %v2069 = vrot.slane %v2067, 7
      %v2070 = vrot.slane %v2069, 4
      %v2072 = vshrl.u32 %v1886, 16
      %v2074 = vrot.slane %v2072, 7
      %v2075 = vshll.u32 %v1886, 16
      %v2077 = vor.u32 %v2074, %v2075
      %v2078 = vsel %vm690, %v2070, %v2077
      %v2079 = vrot.slane %v2074, 4
      %v2081 = vshrl.u32 %v1887, 16
      %v2083 = vrot.slane %v2081, 7
      %v2084 = vshll.u32 %v1887, 16
      %v2086 = vor.u32 %v2083, %v2084
      %v2087 = vsel %vm690, %v2079, %v2086
      %v2089 = vshrl.u32 %v1888, 16
      %v2091 = vrot.slane %v2089, 7
      %v2092 = vrot.slane %v2091, 4
      %v2094 = vshrl.u32 %v1889, 16
      %v2096 = vrot.slane %v2094, 7
      %v2097 = vshll.u32 %v1889, 16
      %v2099 = vor.u32 %v2096, %v2097
      %v2100 = vsel %vm690, %v2092, %v2099
      %v2101 = vrot.slane %v2096, 4
      %v2103 = vshrl.u32 %v1890, 16
      %v2105 = vrot.slane %v2103, 7
      %v2106 = vshll.u32 %v1890, 16
      %v2108 = vor.u32 %v2105, %v2106
      %v2109 = vsel %vm690, %v2101, %v2108
      %v2111 = vshrl.u32 %v1891, 16
      %v2113 = vrot.slane %v2111, 7
      %v2114 = vrot.slane %v2113, 4
      %v2116 = vshrl.u32 %v1892, 16
      %v2118 = vrot.slane %v2116, 7
      %v2119 = vshll.u32 %v1892, 16
      %v2121 = vor.u32 %v2118, %v2119
      %v2122 = vsel %vm690, %v2114, %v2121
      %v2123 = vrot.slane %v2118, 4
      %v2125 = vshrl.u32 %v1893, 16
      %v2127 = vrot.slane %v2125, 7
      %v2128 = vshll.u32 %v1893, 16
      %v2130 = vor.u32 %v2127, %v2128
      %v2131 = vsel %vm690, %v2123, %v2130
      %v2133 = vshrl.u32 %v1894, 16
      %v2135 = vrot.slane %v2133, 7
      %v2136 = vrot.slane %v2135, 4
      %v2138 = vshrl.u32 %v1895, 16
      %v2140 = vrot.slane %v2138, 7
      %v2141 = vshll.u32 %v1895, 16
      %v2143 = vor.u32 %v2140, %v2141
      %v2144 = vsel %vm690, %v2136, %v2143
      %v2145 = vrot.slane %v2140, 4
      %v2147 = vshrl.u32 %v1896, 16
      %v2149 = vrot.slane %v2147, 7
      %v2150 = vshll.u32 %v1896, 16
      %v2152 = vor.u32 %v2149, %v2150
      %v2153 = vsel %vm690, %v2145, %v2152
      %v2155 = vshrl.u32 %v1897, 16
      %v2157 = vrot.slane %v2155, 7
      %v2158 = vrot.slane %v2157, 4
      %v2160 = vshrl.u32 %v1898, 16
      %v2162 = vrot.slane %v2160, 7
      %v2163 = vshll.u32 %v1898, 16
      %v2165 = vor.u32 %v2162, %v2163
      %v2166 = vsel %vm690, %v2158, %v2165
      %v2167 = vrot.slane %v2162, 4
      %v2169 = vshrl.u32 %v1899, 16
      %v2171 = vrot.slane %v2169, 7
      %v2172 = vshll.u32 %v1899, 16
      %v2174 = vor.u32 %v2171, %v2172
      %v2175 = vsel %vm690, %v2167, %v2174
      %v2177 = vshrl.u32 %v1900, 16
      %v2179 = vrot.slane %v2177, 7
      %v2180 = vrot.slane %v2179, 4
      %v2182 = vshrl.u32 %v1901, 16
      %v2184 = vrot.slane %v2182, 7
      %v2185 = vshll.u32 %v1901, 16
      %v2187 = vor.u32 %v2184, %v2185
      %v2188 = vsel %vm690, %v2180, %v2187
      %v2189 = vrot.slane %v2184, 4
      %v2191 = vshrl.u32 %v1902, 16
      %v2193 = vrot.slane %v2191, 7
      %v2194 = vshll.u32 %v1902, 16
      %v2196 = vor.u32 %v2193, %v2194
      %v2197 = vsel %vm690, %v2189, %v2196
      %v2199 = vshrl.u32 %v1903, 16
      %v2201 = vrot.slane %v2199, 7
      %v2202 = vrot.slane %v2201, 4
      %v2204 = vshrl.u32 %v1904, 16
      %v2206 = vrot.slane %v2204, 7
      %v2207 = vshll.u32 %v1904, 16
      %v2209 = vor.u32 %v2206, %v2207
      %v2210 = vsel %vm690, %v2202, %v2209
      %v2211 = vrot.slane %v2206, 4
      %v2213 = vshrl.u32 %v1905, 16
      %v2215 = vrot.slane %v2213, 7
      %v2216 = vshll.u32 %v1905, 16
      %v2218 = vor.u32 %v2215, %v2216
      %v2219 = vsel %vm690, %v2211, %v2218
      %v2221 = vshrl.u32 %v1906, 16
      %v2223 = vrot.slane %v2221, 7
      %v2224 = vrot.slane %v2223, 4
      %v2226 = vshrl.u32 %v1907, 16
      %v2228 = vrot.slane %v2226, 7
      %v2229 = vshll.u32 %v1907, 16
      %v2231 = vor.u32 %v2228, %v2229
      %v2232 = vsel %vm690, %v2224, %v2231
      %v2233 = vrot.slane %v2228, 4
      %v2235 = vshrl.u32 %v1908, 16
      %v2237 = vrot.slane %v2235, 7
      %v2238 = vshll.u32 %v1908, 16
      %v2240 = vor.u32 %v2237, %v2238
      %v2241 = vsel %vm690, %v2233, %v2240
      %v2243 = vshrl.u32 %v1909, 16
      %v2245 = vrot.slane %v2243, 7
      %v2246 = vrot.slane %v2245, 4
      %v2248 = vshrl.u32 %v1910, 16
      %v2250 = vrot.slane %v2248, 7
      %v2251 = vshll.u32 %v1910, 16
      %v2253 = vor.u32 %v2250, %v2251
      %v2254 = vsel %vm690, %v2246, %v2253
      %v2255 = vrot.slane %v2250, 4
      %v2257 = vshrl.u32 %v1911, 16
      %v2259 = vrot.slane %v2257, 7
      %v2260 = vshll.u32 %v1911, 16
      %v2262 = vor.u32 %v2259, %v2260
      %v2263 = vsel %vm690, %v2255, %v2262
      %2264 = vrot.lane.b32.xlu0 %v1924, 12
      %v2265 = vpop.permute.xlu0 %2264
      %2266 = vrot.lane.b32.xlu0 %v1933, 12
      %v2267 = vpop.permute.xlu0 %2266
      %2268 = vrot.lane.b32.xlu0 %v1946, 12
      %v2269 = vpop.permute.xlu0 %2268
      %2270 = vrot.lane.b32.xlu0 %v1955, 12
      %v2271 = vpop.permute.xlu0 %2270
      %2272 = vrot.lane.b32.xlu0 %v1968, 12
      %v2273 = vpop.permute.xlu0 %2272
      %2274 = vrot.lane.b32.xlu0 %v1977, 12
      %v2275 = vpop.permute.xlu0 %2274
      %2276 = vrot.lane.b32.xlu0 %v1990, 12
      %v2277 = vpop.permute.xlu0 %2276
      %2278 = vrot.lane.b32.xlu0 %v1999, 12
      %v2279 = vpop.permute.xlu0 %2278
      %2280 = vrot.lane.b32.xlu0 %v2012, 12
      %v2281 = vpop.permute.xlu0 %2280
      %2282 = vrot.lane.b32.xlu0 %v2021, 12
      %v2283 = vpop.permute.xlu0 %2282
      %2284 = vrot.lane.b32.xlu0 %v2034, 12
      %v2285 = vpop.permute.xlu0 %2284
      %2286 = vrot.lane.b32.xlu0 %v2043, 12
      %v2287 = vpop.permute.xlu0 %2286
      %2288 = vrot.lane.b32.xlu0 %v2056, 12
      %v2289 = vpop.permute.xlu0 %2288
      %2290 = vrot.lane.b32.xlu0 %v2065, 12
      %v2291 = vpop.permute.xlu0 %2290
      %2292 = vrot.lane.b32.xlu0 %v2078, 12
      %v2293 = vpop.permute.xlu0 %2292
      %2294 = vrot.lane.b32.xlu0 %v2087, 12
      %v2295 = vpop.permute.xlu0 %2294
      %2296 = vrot.lane.b32.xlu0 %v2100, 12
      %v2297 = vpop.permute.xlu0 %2296
      %2298 = vrot.lane.b32.xlu0 %v2109, 12
      %v2299 = vpop.permute.xlu0 %2298
      %2300 = vrot.lane.b32.xlu0 %v2122, 12
      %v2301 = vpop.permute.xlu0 %2300
      %2302 = vrot.lane.b32.xlu0 %v2131, 12
      %v2303 = vpop.permute.xlu0 %2302
      %2304 = vrot.lane.b32.xlu0 %v2144, 12
      %v2305 = vpop.permute.xlu0 %2304
      %2306 = vrot.lane.b32.xlu0 %v2153, 12
      %v2307 = vpop.permute.xlu0 %2306
      %2308 = vrot.lane.b32.xlu0 %v2166, 12
      %v2309 = vpop.permute.xlu0 %2308
      %2310 = vrot.lane.b32.xlu0 %v2175, 12
      %v2311 = vpop.permute.xlu0 %2310
      %2312 = vrot.lane.b32.xlu0 %v2188, 12
      %v2313 = vpop.permute.xlu0 %2312
      %2314 = vrot.lane.b32.xlu0 %v2197, 12
      %v2315 = vpop.permute.xlu0 %2314
      %2316 = vrot.lane.b32.xlu0 %v2210, 12
      %v2317 = vpop.permute.xlu0 %2316
      %2318 = vrot.lane.b32.xlu0 %v2219, 12
      %v2319 = vpop.permute.xlu0 %2318
      %2320 = vrot.lane.b32.xlu0 %v2232, 12
      %v2321 = vpop.permute.xlu0 %2320
      %2322 = vrot.lane.b32.xlu0 %v2241, 12
      %v2323 = vpop.permute.xlu0 %2322
      %2324 = vrot.lane.b32.xlu0 %v2254, 12
      %v2325 = vpop.permute.xlu0 %2324
      %2326 = vrot.lane.b32.xlu0 %v2263, 12
      %v2327 = vpop.permute.xlu0 %2326
      %vm2360 = vcmask 126048
      %2361 = vst.msk [vmem:[#allocation3] sm:$0xf] %vm2360, %v2265
      %2362 = vst.msk [vmem:[#allocation3 + $0x4] sm:$0xf] %vm2360, %v2267
      %2363 = vst.msk [vmem:[#allocation3 + $0x8] sm:$0xf] %vm2360, %v2269
      %2364 = vst.msk [vmem:[#allocation3 + $0xc] sm:$0xf] %vm2360, %v2271
      %2365 = vst.msk [vmem:[#allocation3 + $0x10] sm:$0xf] %vm2360, %v2273
      %2366 = vst.msk [vmem:[#allocation3 + $0x14] sm:$0xf] %vm2360, %v2275
      %2367 = vst.msk [vmem:[#allocation3 + $0x18] sm:$0xf] %vm2360, %v2277
      %2368 = vst.msk [vmem:[#allocation3 + $0x1c] sm:$0xf] %vm2360, %v2279
      %2369 = vst.msk [vmem:[#allocation3 + $0x20] sm:$0xf] %vm2360, %v2281
      %2370 = vst.msk [vmem:[#allocation3 + $0x24] sm:$0xf] %vm2360, %v2283
      %2371 = vst.msk [vmem:[#allocation3 + $0x28] sm:$0xf] %vm2360, %v2285
      %2372 = vst.msk [vmem:[#allocation3 + $0x2c] sm:$0xf] %vm2360, %v2287
      %2373 = vst.msk [vmem:[#allocation3 + $0x30] sm:$0xf] %vm2360, %v2289
      %2374 = vst.msk [vmem:[#allocation3 + $0x34] sm:$0xf] %vm2360, %v2291
      %2375 = vst.msk [vmem:[#allocation3 + $0x38] sm:$0xf] %vm2360, %v2293
      %2376 = vst.msk [vmem:[#allocation3 + $0x3c] sm:$0xf] %vm2360, %v2295
      %2377 = vst.msk [vmem:[#allocation3 + $0x40] sm:$0xf] %vm2360, %v2297
      %2378 = vst.msk [vmem:[#allocation3 + $0x44] sm:$0xf] %vm2360, %v2299
      %2379 = vst.msk [vmem:[#allocation3 + $0x48] sm:$0xf] %vm2360, %v2301
      %2380 = vst.msk [vmem:[#allocation3 + $0x4c] sm:$0xf] %vm2360, %v2303
      %2381 = vst.msk [vmem:[#allocation3 + $0x50] sm:$0xf] %vm2360, %v2305
      %2382 = vst.msk [vmem:[#allocation3 + $0x54] sm:$0xf] %vm2360, %v2307
      %2383 = vst.msk [vmem:[#allocation3 + $0x58] sm:$0xf] %vm2360, %v2309
      %2384 = vst.msk [vmem:[#allocation3 + $0x5c] sm:$0xf] %vm2360, %v2311
      %2385 = vst.msk [vmem:[#allocation3 + $0x60] sm:$0xf] %vm2360, %v2313
      %2386 = vst.msk [vmem:[#allocation3 + $0x64] sm:$0xf] %vm2360, %v2315
      %2387 = vst.msk [vmem:[#allocation3 + $0x68] sm:$0xf] %vm2360, %v2317
      %2388 = vst.msk [vmem:[#allocation3 + $0x6c] sm:$0xf] %vm2360, %v2319
      %2389 = vst.msk [vmem:[#allocation3 + $0x70] sm:$0xf] %vm2360, %v2321
      %2390 = vst.msk [vmem:[#allocation3 + $0x74] sm:$0xf] %vm2360, %v2323
      %2391 = vst.msk [vmem:[#allocation3 + $0x78] sm:$0xf] %vm2360, %v2325
      %2392 = vst.msk [vmem:[#allocation3 + $0x7c] sm:$0xf] %vm2360, %v2327
      %v2393 = vld [vmem:[%s608 + $0x8] sm:$0xf]
      %v2394 = vld [vmem:[%s608 + $0xc] sm:$0xf]
      %v2395 = vld [vmem:[%s608 + $0x20] sm:$0xf]
      %v2396 = vld [vmem:[%s608 + $0x24] sm:$0xf]
      %v2397 = vld [vmem:[%s608 + $0x38] sm:$0xf]
      %v2398 = vld [vmem:[%s608 + $0x3c] sm:$0xf]
      %v2399 = vld [vmem:[%s608 + $0x50] sm:$0xf]
      %v2400 = vld [vmem:[%s608 + $0x54] sm:$0xf]
      %v2401 = vld [vmem:[%s608 + $0x68] sm:$0xf]
      %v2402 = vld [vmem:[%s608 + $0x6c] sm:$0xf]
      %v2403 = vld [vmem:[%s608 + $0x80] sm:$0xf]
      %v2404 = vld [vmem:[%s608 + $0x84] sm:$0xf]
      %v2405 = vld [vmem:[%s608 + $0x98] sm:$0xf]
      %v2406 = vld [vmem:[%s608 + $0x9c] sm:$0xf]
      %v2407 = vld [vmem:[%s608 + $0xb0] sm:$0xf]
      %v2408 = vld [vmem:[%s608 + $0xb4] sm:$0xf]
      %v2409 = vld [vmem:[%s608 + $0xc8] sm:$0xf]
      %v2410 = vld [vmem:[%s608 + $0xcc] sm:$0xf]
      %v2411 = vld [vmem:[%s608 + $0xe0] sm:$0xf]
      %v2412 = vld [vmem:[%s608 + $0xe4] sm:$0xf]
      %v2413 = vld [vmem:[%s608 + $0xf8] sm:$0xf]
      %v2414 = vld [vmem:[%s608 + $0xfc] sm:$0xf]
      %v2415 = vld [vmem:[%s608 + $0x110] sm:$0xf]
      %v2416 = vld [vmem:[%s608 + $0x114] sm:$0xf]
      %v2417 = vld [vmem:[%s608 + $0x128] sm:$0xf]
      %v2418 = vld [vmem:[%s608 + $0x12c] sm:$0xf]
      %v2419 = vld [vmem:[%s608 + $0x140] sm:$0xf]
      %v2420 = vld [vmem:[%s608 + $0x144] sm:$0xf]
      %v2421 = vld [vmem:[%s608 + $0x158] sm:$0xf]
      %v2422 = vld [vmem:[%s608 + $0x15c] sm:$0xf]
      %v2423 = vld [vmem:[%s608 + $0x170] sm:$0xf]
      %v2424 = vld [vmem:[%s608 + $0x174] sm:$0xf]
      %2457 = vrot.lane.b32.xlu0 %v2393, 16
      %v2458 = vpop.permute.xlu0 %2457
      %2459 = vrot.lane.b32.xlu0 %v2394, 16
      %v2460 = vpop.permute.xlu0 %2459
      %2461 = vrot.lane.b32.xlu0 %v2395, 16
      %v2462 = vpop.permute.xlu0 %2461
      %2463 = vrot.lane.b32.xlu0 %v2396, 16
      %v2464 = vpop.permute.xlu0 %2463
      %2465 = vrot.lane.b32.xlu0 %v2397, 16
      %v2466 = vpop.permute.xlu0 %2465
      %2467 = vrot.lane.b32.xlu0 %v2398, 16
      %v2468 = vpop.permute.xlu0 %2467
      %2469 = vrot.lane.b32.xlu0 %v2399, 16
      %v2470 = vpop.permute.xlu0 %2469
      %2471 = vrot.lane.b32.xlu0 %v2400, 16
      %v2472 = vpop.permute.xlu0 %2471
      %2473 = vrot.lane.b32.xlu0 %v2401, 16
      %v2474 = vpop.permute.xlu0 %2473
      %2475 = vrot.lane.b32.xlu0 %v2402, 16
      %v2476 = vpop.permute.xlu0 %2475
      %2477 = vrot.lane.b32.xlu0 %v2403, 16
      %v2478 = vpop.permute.xlu0 %2477
      %2479 = vrot.lane.b32.xlu0 %v2404, 16
      %v2480 = vpop.permute.xlu0 %2479
      %2481 = vrot.lane.b32.xlu0 %v2405, 16
      %v2482 = vpop.permute.xlu0 %2481
      %2483 = vrot.lane.b32.xlu0 %v2406, 16
      %v2484 = vpop.permute.xlu0 %2483
      %2485 = vrot.lane.b32.xlu0 %v2407, 16
      %v2486 = vpop.permute.xlu0 %2485
      %2487 = vrot.lane.b32.xlu0 %v2408, 16
      %v2488 = vpop.permute.xlu0 %2487
      %2489 = vrot.lane.b32.xlu0 %v2409, 16
      %v2490 = vpop.permute.xlu0 %2489
      %2491 = vrot.lane.b32.xlu0 %v2410, 16
      %v2492 = vpop.permute.xlu0 %2491
      %2493 = vrot.lane.b32.xlu0 %v2411, 16
      %v2494 = vpop.permute.xlu0 %2493
      %2495 = vrot.lane.b32.xlu0 %v2412, 16
      %v2496 = vpop.permute.xlu0 %2495
      %2497 = vrot.lane.b32.xlu0 %v2413, 16
      %v2498 = vpop.permute.xlu0 %2497
      %2499 = vrot.lane.b32.xlu0 %v2414, 16
      %v2500 = vpop.permute.xlu0 %2499
      %2501 = vrot.lane.b32.xlu0 %v2415, 16
      %v2502 = vpop.permute.xlu0 %2501
      %2503 = vrot.lane.b32.xlu0 %v2416, 16
      %v2504 = vpop.permute.xlu0 %2503
      %2505 = vrot.lane.b32.xlu0 %v2417, 16
      %v2506 = vpop.permute.xlu0 %2505
      %2507 = vrot.lane.b32.xlu0 %v2418, 16
      %v2508 = vpop.permute.xlu0 %2507
      %2509 = vrot.lane.b32.xlu0 %v2419, 16
      %v2510 = vpop.permute.xlu0 %2509
      %2511 = vrot.lane.b32.xlu0 %v2420, 16
      %v2512 = vpop.permute.xlu0 %2511
      %2513 = vrot.lane.b32.xlu0 %v2421, 16
      %v2514 = vpop.permute.xlu0 %2513
      %2515 = vrot.lane.b32.xlu0 %v2422, 16
      %v2516 = vpop.permute.xlu0 %2515
      %2517 = vrot.lane.b32.xlu0 %v2423, 16
      %v2518 = vpop.permute.xlu0 %2517
      %2519 = vrot.lane.b32.xlu0 %v2424, 16
      %v2520 = vpop.permute.xlu0 %2519
      %vm2553 = vcmask 158848
      %2554 = vst.msk [vmem:[#allocation3] sm:$0xf] %vm2553, %v2458
      %2555 = vst.msk [vmem:[#allocation3 + $0x4] sm:$0xf] %vm2553, %v2460
      %2556 = vst.msk [vmem:[#allocation3 + $0x8] sm:$0xf] %vm2553, %v2462
      %2557 = vst.msk [vmem:[#allocation3 + $0xc] sm:$0xf] %vm2553, %v2464
      %2558 = vst.msk [vmem:[#allocation3 + $0x10] sm:$0xf] %vm2553, %v2466
      %2559 = vst.msk [vmem:[#allocation3 + $0x14] sm:$0xf] %vm2553, %v2468
      %2560 = vst.msk [vmem:[#allocation3 + $0x18] sm:$0xf] %vm2553, %v2470
      %2561 = vst.msk [vmem:[#allocation3 + $0x1c] sm:$0xf] %vm2553, %v2472
      %2562 = vst.msk [vmem:[#allocation3 + $0x20] sm:$0xf] %vm2553, %v2474
      %2563 = vst.msk [vmem:[#allocation3 + $0x24] sm:$0xf] %vm2553, %v2476
      %2564 = vst.msk [vmem:[#allocation3 + $0x28] sm:$0xf] %vm2553, %v2478
      %2565 = vst.msk [vmem:[#allocation3 + $0x2c] sm:$0xf] %vm2553, %v2480
      %2566 = vst.msk [vmem:[#allocation3 + $0x30] sm:$0xf] %vm2553, %v2482
      %2567 = vst.msk [vmem:[#allocation3 + $0x34] sm:$0xf] %vm2553, %v2484
      %2568 = vst.msk [vmem:[#allocation3 + $0x38] sm:$0xf] %vm2553, %v2486
      %2569 = vst.msk [vmem:[#allocation3 + $0x3c] sm:$0xf] %vm2553, %v2488
      %2570 = vst.msk [vmem:[#allocation3 + $0x40] sm:$0xf] %vm2553, %v2490
      %2571 = vst.msk [vmem:[#allocation3 + $0x44] sm:$0xf] %vm2553, %v2492
      %2572 = vst.msk [vmem:[#allocation3 + $0x48] sm:$0xf] %vm2553, %v2494
      %2573 = vst.msk [vmem:[#allocation3 + $0x4c] sm:$0xf] %vm2553, %v2496
      %2574 = vst.msk [vmem:[#allocation3 + $0x50] sm:$0xf] %vm2553, %v2498
      %2575 = vst.msk [vmem:[#allocation3 + $0x54] sm:$0xf] %vm2553, %v2500
      %2576 = vst.msk [vmem:[#allocation3 + $0x58] sm:$0xf] %vm2553, %v2502
      %2577 = vst.msk [vmem:[#allocation3 + $0x5c] sm:$0xf] %vm2553, %v2504
      %2578 = vst.msk [vmem:[#allocation3 + $0x60] sm:$0xf] %vm2553, %v2506
      %2579 = vst.msk [vmem:[#allocation3 + $0x64] sm:$0xf] %vm2553, %v2508
      %2580 = vst.msk [vmem:[#allocation3 + $0x68] sm:$0xf] %vm2553, %v2510
      %2581 = vst.msk [vmem:[#allocation3 + $0x6c] sm:$0xf] %vm2553, %v2512
      %2582 = vst.msk [vmem:[#allocation3 + $0x70] sm:$0xf] %vm2553, %v2514
      %2583 = vst.msk [vmem:[#allocation3 + $0x74] sm:$0xf] %vm2553, %v2516
      %2584 = vst.msk [vmem:[#allocation3 + $0x78] sm:$0xf] %vm2553, %v2518
      %2585 = vst.msk [vmem:[#allocation3 + $0x7c] sm:$0xf] %vm2553, %v2520
      %v2586 = vld [vmem:[%s608 + $0x8] sm:$0xf]
      %v2587 = vld [vmem:[%s608 + $0xc] sm:$0xf]
      %v2588 = vld [vmem:[%s608 + $0x10] sm:$0x1]
      %v2589 = vld [vmem:[%s608 + $0x20] sm:$0xf]
      %v2590 = vld [vmem:[%s608 + $0x24] sm:$0xf]
      %v2591 = vld [vmem:[%s608 + $0x28] sm:$0x1]
      %v2592 = vld [vmem:[%s608 + $0x38] sm:$0xf]
      %v2593 = vld [vmem:[%s608 + $0x3c] sm:$0xf]
      %v2594 = vld [vmem:[%s608 + $0x40] sm:$0x1]
      %v2595 = vld [vmem:[%s608 + $0x50] sm:$0xf]
      %v2596 = vld [vmem:[%s608 + $0x54] sm:$0xf]
      %v2597 = vld [vmem:[%s608 + $0x58] sm:$0x1]
      %v2598 = vld [vmem:[%s608 + $0x68] sm:$0xf]
      %v2599 = vld [vmem:[%s608 + $0x6c] sm:$0xf]
      %v2600 = vld [vmem:[%s608 + $0x70] sm:$0x1]
      %v2601 = vld [vmem:[%s608 + $0x80] sm:$0xf]
      %v2602 = vld [vmem:[%s608 + $0x84] sm:$0xf]
      %v2603 = vld [vmem:[%s608 + $0x88] sm:$0x1]
      %v2604 = vld [vmem:[%s608 + $0x98] sm:$0xf]
      %v2605 = vld [vmem:[%s608 + $0x9c] sm:$0xf]
      %v2606 = vld [vmem:[%s608 + $0xa0] sm:$0x1]
      %v2607 = vld [vmem:[%s608 + $0xb0] sm:$0xf]
      %v2608 = vld [vmem:[%s608 + $0xb4] sm:$0xf]
      %v2609 = vld [vmem:[%s608 + $0xb8] sm:$0x1]
      %v2610 = vld [vmem:[%s608 + $0xc8] sm:$0xf]
      %v2611 = vld [vmem:[%s608 + $0xcc] sm:$0xf]
      %v2612 = vld [vmem:[%s608 + $0xd0] sm:$0x1]
      %v2613 = vld [vmem:[%s608 + $0xe0] sm:$0xf]
      %v2614 = vld [vmem:[%s608 + $0xe4] sm:$0xf]
      %v2615 = vld [vmem:[%s608 + $0xe8] sm:$0x1]
      %v2616 = vld [vmem:[%s608 + $0xf8] sm:$0xf]
      %v2617 = vld [vmem:[%s608 + $0xfc] sm:$0xf]
      %v2618 = vld [vmem:[%s608 + $0x100] sm:$0x1]
      %v2619 = vld [vmem:[%s608 + $0x110] sm:$0xf]
      %v2620 = vld [vmem:[%s608 + $0x114] sm:$0xf]
      %v2621 = vld [vmem:[%s608 + $0x118] sm:$0x1]
      %v2622 = vld [vmem:[%s608 + $0x128] sm:$0xf]
      %v2623 = vld [vmem:[%s608 + $0x12c] sm:$0xf]
      %v2624 = vld [vmem:[%s608 + $0x130] sm:$0x1]
      %v2625 = vld [vmem:[%s608 + $0x140] sm:$0xf]
      %v2626 = vld [vmem:[%s608 + $0x144] sm:$0xf]
      %v2627 = vld [vmem:[%s608 + $0x148] sm:$0x1]
      %v2628 = vld [vmem:[%s608 + $0x158] sm:$0xf]
      %v2629 = vld [vmem:[%s608 + $0x15c] sm:$0xf]
      %v2630 = vld [vmem:[%s608 + $0x160] sm:$0x1]
      %v2631 = vld [vmem:[%s608 + $0x170] sm:$0xf]
      %v2632 = vld [vmem:[%s608 + $0x174] sm:$0xf]
      %v2633 = vld [vmem:[%s608 + $0x178] sm:$0x1]
      %v2635 = vshrl.u32 %v2586, 16
      %v2637 = vrot.slane %v2635, 4
      %v2638 = vshll.u32 %v2586, 16
      %v2640 = vrot.slane %v2638, 5
      %v2641 = vor.u32 %v2637, %v2640
      %v2642 = vrot.slane %v2641, 4
      %v2644 = vshll.u32 %v2587, 16
      %v2646 = vrot.slane %v2644, 5
      %v2647 = vsel %vm1350, %v2642, %v2646
      %v2648 = vshrl.u32 %v2587, 16
      %v2650 = vrot.slane %v2648, 4
      %v2651 = vor.u32 %v2650, %v2646
      %v2652 = vrot.slane %v2651, 4
      %v2654 = vshll.u32 %v2588, 16
      %v2656 = vrot.slane %v2654, 5
      %v2657 = vsel %vm1350, %v2652, %v2656
      %v2659 = vshrl.u32 %v2589, 16
      %v2661 = vrot.slane %v2659, 4
      %v2662 = vshll.u32 %v2589, 16
      %v2664 = vrot.slane %v2662, 5
      %v2665 = vor.u32 %v2661, %v2664
      %v2666 = vrot.slane %v2665, 4
      %v2668 = vshll.u32 %v2590, 16
      %v2670 = vrot.slane %v2668, 5
      %v2671 = vsel %vm1350, %v2666, %v2670
      %v2672 = vshrl.u32 %v2590, 16
      %v2674 = vrot.slane %v2672, 4
      %v2675 = vor.u32 %v2674, %v2670
      %v2676 = vrot.slane %v2675, 4
      %v2678 = vshll.u32 %v2591, 16
      %v2680 = vrot.slane %v2678, 5
      %v2681 = vsel %vm1350, %v2676, %v2680
      %v2683 = vshrl.u32 %v2592, 16
      %v2685 = vrot.slane %v2683, 4
      %v2686 = vshll.u32 %v2592, 16
      %v2688 = vrot.slane %v2686, 5
      %v2689 = vor.u32 %v2685, %v2688
      %v2690 = vrot.slane %v2689, 4
      %v2692 = vshll.u32 %v2593, 16
      %v2694 = vrot.slane %v2692, 5
      %v2695 = vsel %vm1350, %v2690, %v2694
      %v2696 = vshrl.u32 %v2593, 16
      %v2698 = vrot.slane %v2696, 4
      %v2699 = vor.u32 %v2698, %v2694
      %v2700 = vrot.slane %v2699, 4
      %v2702 = vshll.u32 %v2594, 16
      %v2704 = vrot.slane %v2702, 5
      %v2705 = vsel %vm1350, %v2700, %v2704
      %v2707 = vshrl.u32 %v2595, 16
      %v2709 = vrot.slane %v2707, 4
      %v2710 = vshll.u32 %v2595, 16
      %v2712 = vrot.slane %v2710, 5
      %v2713 = vor.u32 %v2709, %v2712
      %v2714 = vrot.slane %v2713, 4
      %v2716 = vshll.u32 %v2596, 16
      %v2718 = vrot.slane %v2716, 5
      %v2719 = vsel %vm1350, %v2714, %v2718
      %v2720 = vshrl.u32 %v2596, 16
      %v2722 = vrot.slane %v2720, 4
      %v2723 = vor.u32 %v2722, %v2718
      %v2724 = vrot.slane %v2723, 4
      %v2726 = vshll.u32 %v2597, 16
      %v2728 = vrot.slane %v2726, 5
      %v2729 = vsel %vm1350, %v2724, %v2728
      %v2731 = vshrl.u32 %v2598, 16
      %v2733 = vrot.slane %v2731, 4
      %v2734 = vshll.u32 %v2598, 16
      %v2736 = vrot.slane %v2734, 5
      %v2737 = vor.u32 %v2733, %v2736
      %v2738 = vrot.slane %v2737, 4
      %v2740 = vshll.u32 %v2599, 16
      %v2742 = vrot.slane %v2740, 5
      %v2743 = vsel %vm1350, %v2738, %v2742
      %v2744 = vshrl.u32 %v2599, 16
      %v2746 = vrot.slane %v2744, 4
      %v2747 = vor.u32 %v2746, %v2742
      %v2748 = vrot.slane %v2747, 4
      %v2750 = vshll.u32 %v2600, 16
      %v2752 = vrot.slane %v2750, 5
      %v2753 = vsel %vm1350, %v2748, %v2752
      %v2755 = vshrl.u32 %v2601, 16
      %v2757 = vrot.slane %v2755, 4
      %v2758 = vshll.u32 %v2601, 16
      %v2760 = vrot.slane %v2758, 5
      %v2761 = vor.u32 %v2757, %v2760
      %v2762 = vrot.slane %v2761, 4
      %v2764 = vshll.u32 %v2602, 16
      %v2766 = vrot.slane %v2764, 5
      %v2767 = vsel %vm1350, %v2762, %v2766
      %v2768 = vshrl.u32 %v2602, 16
      %v2770 = vrot.slane %v2768, 4
      %v2771 = vor.u32 %v2770, %v2766
      %v2772 = vrot.slane %v2771, 4
      %v2774 = vshll.u32 %v2603, 16
      %v2776 = vrot.slane %v2774, 5
      %v2777 = vsel %vm1350, %v2772, %v2776
      %v2779 = vshrl.u32 %v2604, 16
      %v2781 = vrot.slane %v2779, 4
      %v2782 = vshll.u32 %v2604, 16
      %v2784 = vrot.slane %v2782, 5
      %v2785 = vor.u32 %v2781, %v2784
      %v2786 = vrot.slane %v2785, 4
      %v2788 = vshll.u32 %v2605, 16
      %v2790 = vrot.slane %v2788, 5
      %v2791 = vsel %vm1350, %v2786, %v2790
      %v2792 = vshrl.u32 %v2605, 16
      %v2794 = vrot.slane %v2792, 4
      %v2795 = vor.u32 %v2794, %v2790
      %v2796 = vrot.slane %v2795, 4
      %v2798 = vshll.u32 %v2606, 16
      %v2800 = vrot.slane %v2798, 5
      %v2801 = vsel %vm1350, %v2796, %v2800
      %v2803 = vshrl.u32 %v2607, 16
      %v2805 = vrot.slane %v2803, 4
      %v2806 = vshll.u32 %v2607, 16
      %v2808 = vrot.slane %v2806, 5
      %v2809 = vor.u32 %v2805, %v2808
      %v2810 = vrot.slane %v2809, 4
      %v2812 = vshll.u32 %v2608, 16
      %v2814 = vrot.slane %v2812, 5
      %v2815 = vsel %vm1350, %v2810, %v2814
      %v2816 = vshrl.u32 %v2608, 16
      %v2818 = vrot.slane %v2816, 4
      %v2819 = vor.u32 %v2818, %v2814
      %v2820 = vrot.slane %v2819, 4
      %v2822 = vshll.u32 %v2609, 16
      %v2824 = vrot.slane %v2822, 5
      %v2825 = vsel %vm1350, %v2820, %v2824
      %v2827 = vshrl.u32 %v2610, 16
      %v2829 = vrot.slane %v2827, 4
      %v2830 = vshll.u32 %v2610, 16
      %v2832 = vrot.slane %v2830, 5
      %v2833 = vor.u32 %v2829, %v2832
      %v2834 = vrot.slane %v2833, 4
      %v2836 = vshll.u32 %v2611, 16
      %v2838 = vrot.slane %v2836, 5
      %v2839 = vsel %vm1350, %v2834, %v2838
      %v2840 = vshrl.u32 %v2611, 16
      %v2842 = vrot.slane %v2840, 4
      %v2843 = vor.u32 %v2842, %v2838
      %v2844 = vrot.slane %v2843, 4
      %v2846 = vshll.u32 %v2612, 16
      %v2848 = vrot.slane %v2846, 5
      %v2849 = vsel %vm1350, %v2844, %v2848
      %v2851 = vshrl.u32 %v2613, 16
      %v2853 = vrot.slane %v2851, 4
      %v2854 = vshll.u32 %v2613, 16
      %v2856 = vrot.slane %v2854, 5
      %v2857 = vor.u32 %v2853, %v2856
      %v2858 = vrot.slane %v2857, 4
      %v2860 = vshll.u32 %v2614, 16
      %v2862 = vrot.slane %v2860, 5
      %v2863 = vsel %vm1350, %v2858, %v2862
      %v2864 = vshrl.u32 %v2614, 16
      %v2866 = vrot.slane %v2864, 4
      %v2867 = vor.u32 %v2866, %v2862
      %v2868 = vrot.slane %v2867, 4
      %v2870 = vshll.u32 %v2615, 16
      %v2872 = vrot.slane %v2870, 5
      %v2873 = vsel %vm1350, %v2868, %v2872
      %v2875 = vshrl.u32 %v2616, 16
      %v2877 = vrot.slane %v2875, 4
      %v2878 = vshll.u32 %v2616, 16
      %v2880 = vrot.slane %v2878, 5
      %v2881 = vor.u32 %v2877, %v2880
      %v2882 = vrot.slane %v2881, 4
      %v2884 = vshll.u32 %v2617, 16
      %v2886 = vrot.slane %v2884, 5
      %v2887 = vsel %vm1350, %v2882, %v2886
      %v2888 = vshrl.u32 %v2617, 16
      %v2890 = vrot.slane %v2888, 4
      %v2891 = vor.u32 %v2890, %v2886
      %v2892 = vrot.slane %v2891, 4
      %v2894 = vshll.u32 %v2618, 16
      %v2896 = vrot.slane %v2894, 5
      %v2897 = vsel %vm1350, %v2892, %v2896
      %v2899 = vshrl.u32 %v2619, 16
      %v2901 = vrot.slane %v2899, 4
      %v2902 = vshll.u32 %v2619, 16
      %v2904 = vrot.slane %v2902, 5
      %v2905 = vor.u32 %v2901, %v2904
      %v2906 = vrot.slane %v2905, 4
      %v2908 = vshll.u32 %v2620, 16
      %v2910 = vrot.slane %v2908, 5
      %v2911 = vsel %vm1350, %v2906, %v2910
      %v2912 = vshrl.u32 %v2620, 16
      %v2914 = vrot.slane %v2912, 4
      %v2915 = vor.u32 %v2914, %v2910
      %v2916 = vrot.slane %v2915, 4
      %v2918 = vshll.u32 %v2621, 16
      %v2920 = vrot.slane %v2918, 5
      %v2921 = vsel %vm1350, %v2916, %v2920
      %v2923 = vshrl.u32 %v2622, 16
      %v2925 = vrot.slane %v2923, 4
      %v2926 = vshll.u32 %v2622, 16
      %v2928 = vrot.slane %v2926, 5
      %v2929 = vor.u32 %v2925, %v2928
      %v2930 = vrot.slane %v2929, 4
      %v2932 = vshll.u32 %v2623, 16
      %v2934 = vrot.slane %v2932, 5
      %v2935 = vsel %vm1350, %v2930, %v2934
      %v2936 = vshrl.u32 %v2623, 16
      %v2938 = vrot.slane %v2936, 4
      %v2939 = vor.u32 %v2938, %v2934
      %v2940 = vrot.slane %v2939, 4
      %v2942 = vshll.u32 %v2624, 16
      %v2944 = vrot.slane %v2942, 5
      %v2945 = vsel %vm1350, %v2940, %v2944
      %v2947 = vshrl.u32 %v2625, 16
      %v2949 = vrot.slane %v2947, 4
      %v2950 = vshll.u32 %v2625, 16
      %v2952 = vrot.slane %v2950, 5
      %v2953 = vor.u32 %v2949, %v2952
      %v2954 = vrot.slane %v2953, 4
      %v2956 = vshll.u32 %v2626, 16
      %v2958 = vrot.slane %v2956, 5
      %v2959 = vsel %vm1350, %v2954, %v2958
      %v2960 = vshrl.u32 %v2626, 16
      %v2962 = vrot.slane %v2960, 4
      %v2963 = vor.u32 %v2962, %v2958
      %v2964 = vrot.slane %v2963, 4
      %v2966 = vshll.u32 %v2627, 16
      %v2968 = vrot.slane %v2966, 5
      %v2969 = vsel %vm1350, %v2964, %v2968
      %v2971 = vshrl.u32 %v2628, 16
      %v2973 = vrot.slane %v2971, 4
      %v2974 = vshll.u32 %v2628, 16
      %v2976 = vrot.slane %v2974, 5
      %v2977 = vor.u32 %v2973, %v2976
      %v2978 = vrot.slane %v2977, 4
      %v2980 = vshll.u32 %v2629, 16
      %v2982 = vrot.slane %v2980, 5
      %v2983 = vsel %vm1350, %v2978, %v2982
      %v2984 = vshrl.u32 %v2629, 16
      %v2986 = vrot.slane %v2984, 4
      %v2987 = vor.u32 %v2986, %v2982
      %v2988 = vrot.slane %v2987, 4
      %v2990 = vshll.u32 %v2630, 16
      %v2992 = vrot.slane %v2990, 5
      %v2993 = vsel %vm1350, %v2988, %v2992
      %v2995 = vshrl.u32 %v2631, 16
      %v2997 = vrot.slane %v2995, 4
      %v2998 = vshll.u32 %v2631, 16
      %v3000 = vrot.slane %v2998, 5
      %v3001 = vor.u32 %v2997, %v3000
      %v3002 = vrot.slane %v3001, 4
      %v3004 = vshll.u32 %v2632, 16
      %v3006 = vrot.slane %v3004, 5
      %v3007 = vsel %vm1350, %v3002, %v3006
      %v3008 = vshrl.u32 %v2632, 16
      %v3010 = vrot.slane %v3008, 4
      %v3011 = vor.u32 %v3010, %v3006
      %v3012 = vrot.slane %v3011, 4
      %v3014 = vshll.u32 %v2633, 16
      %v3016 = vrot.slane %v3014, 5
      %v3017 = vsel %vm1350, %v3012, %v3016
      %3018 = vrot.lane.b32.xlu0 %v2647, 20
      %v3019 = vpop.permute.xlu0 %3018
      %3020 = vrot.lane.b32.xlu0 %v2657, 20
      %v3021 = vpop.permute.xlu0 %3020
      %3022 = vrot.lane.b32.xlu0 %v2671, 20
      %v3023 = vpop.permute.xlu0 %3022
      %3024 = vrot.lane.b32.xlu0 %v2681, 20
      %v3025 = vpop.permute.xlu0 %3024
      %3026 = vrot.lane.b32.xlu0 %v2695, 20
      %v3027 = vpop.permute.xlu0 %3026
      %3028 = vrot.lane.b32.xlu0 %v2705, 20
      %v3029 = vpop.permute.xlu0 %3028
      %3030 = vrot.lane.b32.xlu0 %v2719, 20
      %v3031 = vpop.permute.xlu0 %3030
      %3032 = vrot.lane.b32.xlu0 %v2729, 20
      %v3033 = vpop.permute.xlu0 %3032
      %3034 = vrot.lane.b32.xlu0 %v2743, 20
      %v3035 = vpop.permute.xlu0 %3034
      %3036 = vrot.lane.b32.xlu0 %v2753, 20
      %v3037 = vpop.permute.xlu0 %3036
      %3038 = vrot.lane.b32.xlu0 %v2767, 20
      %v3039 = vpop.permute.xlu0 %3038
      %3040 = vrot.lane.b32.xlu0 %v2777, 20
      %v3041 = vpop.permute.xlu0 %3040
      %3042 = vrot.lane.b32.xlu0 %v2791, 20
      %v3043 = vpop.permute.xlu0 %3042
      %3044 = vrot.lane.b32.xlu0 %v2801, 20
      %v3045 = vpop.permute.xlu0 %3044
      %3046 = vrot.lane.b32.xlu0 %v2815, 20
      %v3047 = vpop.permute.xlu0 %3046
      %3048 = vrot.lane.b32.xlu0 %v2825, 20
      %v3049 = vpop.permute.xlu0 %3048
      %3050 = vrot.lane.b32.xlu0 %v2839, 20
      %v3051 = vpop.permute.xlu0 %3050
      %3052 = vrot.lane.b32.xlu0 %v2849, 20
      %v3053 = vpop.permute.xlu0 %3052
      %3054 = vrot.lane.b32.xlu0 %v2863, 20
      %v3055 = vpop.permute.xlu0 %3054
      %3056 = vrot.lane.b32.xlu0 %v2873, 20
      %v3057 = vpop.permute.xlu0 %3056
      %3058 = vrot.lane.b32.xlu0 %v2887, 20
      %v3059 = vpop.permute.xlu0 %3058
      %3060 = vrot.lane.b32.xlu0 %v2897, 20
      %v3061 = vpop.permute.xlu0 %3060
      %3062 = vrot.lane.b32.xlu0 %v2911, 20
      %v3063 = vpop.permute.xlu0 %3062
      %3064 = vrot.lane.b32.xlu0 %v2921, 20
      %v3065 = vpop.permute.xlu0 %3064
      %3066 = vrot.lane.b32.xlu0 %v2935, 20
      %v3067 = vpop.permute.xlu0 %3066
      %3068 = vrot.lane.b32.xlu0 %v2945, 20
      %v3069 = vpop.permute.xlu0 %3068
      %3070 = vrot.lane.b32.xlu0 %v2959, 20
      %v3071 = vpop.permute.xlu0 %3070
      %3072 = vrot.lane.b32.xlu0 %v2969, 20
      %v3073 = vpop.permute.xlu0 %3072
      %3074 = vrot.lane.b32.xlu0 %v2983, 20
      %v3075 = vpop.permute.xlu0 %3074
      %3076 = vrot.lane.b32.xlu0 %v2993, 20
      %v3077 = vpop.permute.xlu0 %3076
      %3078 = vrot.lane.b32.xlu0 %v3007, 20
      %v3079 = vpop.permute.xlu0 %3078
      %3080 = vrot.lane.b32.xlu0 %v3017, 20
      %v3081 = vpop.permute.xlu0 %3080
      %vm3114 = vcmask 191648
      %3115 = vst.msk [vmem:[#allocation3] sm:$0xf] %vm3114, %v3019
      %3116 = vst.msk [vmem:[#allocation3 + $0x4] sm:$0xf] %vm3114, %v3021
      %3117 = vst.msk [vmem:[#allocation3 + $0x8] sm:$0xf] %vm3114, %v3023
      %3118 = vst.msk [vmem:[#allocation3 + $0xc] sm:$0xf] %vm3114, %v3025
      %3119 = vst.msk [vmem:[#allocation3 + $0x10] sm:$0xf] %vm3114, %v3027
      %3120 = vst.msk [vmem:[#allocation3 + $0x14] sm:$0xf] %vm3114, %v3029
      %3121 = vst.msk [vmem:[#allocation3 + $0x18] sm:$0xf] %vm3114, %v3031
      %3122 = vst.msk [vmem:[#allocation3 + $0x1c] sm:$0xf] %vm3114, %v3033
      %3123 = vst.msk [vmem:[#allocation3 + $0x20] sm:$0xf] %vm3114, %v3035
      %3124 = vst.msk [vmem:[#allocation3 + $0x24] sm:$0xf] %vm3114, %v3037
      %3125 = vst.msk [vmem:[#allocation3 + $0x28] sm:$0xf] %vm3114, %v3039
      %3126 = vst.msk [vmem:[#allocation3 + $0x2c] sm:$0xf] %vm3114, %v3041
      %3127 = vst.msk [vmem:[#allocation3 + $0x30] sm:$0xf] %vm3114, %v3043
      %3128 = vst.msk [vmem:[#allocation3 + $0x34] sm:$0xf] %vm3114, %v3045
      %3129 = vst.msk [vmem:[#allocation3 + $0x38] sm:$0xf] %vm3114, %v3047
      %3130 = vst.msk [vmem:[#allocation3 + $0x3c] sm:$0xf] %vm3114, %v3049
      %3131 = vst.msk [vmem:[#allocation3 + $0x40] sm:$0xf] %vm3114, %v3051
      %3132 = vst.msk [vmem:[#allocation3 + $0x44] sm:$0xf] %vm3114, %v3053
      %3133 = vst.msk [vmem:[#allocation3 + $0x48] sm:$0xf] %vm3114, %v3055
      %3134 = vst.msk [vmem:[#allocation3 + $0x4c] sm:$0xf] %vm3114, %v3057
      %3135 = vst.msk [vmem:[#allocation3 + $0x50] sm:$0xf] %vm3114, %v3059
      %3136 = vst.msk [vmem:[#allocation3 + $0x54] sm:$0xf] %vm3114, %v3061
      %3137 = vst.msk [vmem:[#allocation3 + $0x58] sm:$0xf] %vm3114, %v3063
      %3138 = vst.msk [vmem:[#allocation3 + $0x5c] sm:$0xf] %vm3114, %v3065
      %3139 = vst.msk [vmem:[#allocation3 + $0x60] sm:$0xf] %vm3114, %v3067
      %3140 = vst.msk [vmem:[#allocation3 + $0x64] sm:$0xf] %vm3114, %v3069
      %3141 = vst.msk [vmem:[#allocation3 + $0x68] sm:$0xf] %vm3114, %v3071
      %3142 = vst.msk [vmem:[#allocation3 + $0x6c] sm:$0xf] %vm3114, %v3073
      %3143 = vst.msk [vmem:[#allocation3 + $0x70] sm:$0xf] %vm3114, %v3075
      %3144 = vst.msk [vmem:[#allocation3 + $0x74] sm:$0xf] %vm3114, %v3077
      %3145 = vst.msk [vmem:[#allocation3 + $0x78] sm:$0xf] %vm3114, %v3079
      %3146 = vst.msk [vmem:[#allocation3 + $0x7c] sm:$0xf] %vm3114, %v3081
      %s3147 = scalar_lea.vmem [#allocation2], 48
      %v3148 = vld [vmem:[%s3147 + $0x4] sm:$0x8]
      %v3149 = vld [vmem:[%s3147 + $0x8] sm:$0xf]
      %v3150 = vld [vmem:[%s3147 + $0xc] sm:$0xf]
      %v3151 = vld [vmem:[%s3147 + $0x1c] sm:$0x8]
      %v3152 = vld [vmem:[%s3147 + $0x20] sm:$0xf]
      %v3153 = vld [vmem:[%s3147 + $0x24] sm:$0xf]
      %v3154 = vld [vmem:[%s3147 + $0x34] sm:$0x8]
      %v3155 = vld [vmem:[%s3147 + $0x38] sm:$0xf]
      %v3156 = vld [vmem:[%s3147 + $0x3c] sm:$0xf]
      %v3157 = vld [vmem:[%s3147 + $0x4c] sm:$0x8]
      %v3158 = vld [vmem:[%s3147 + $0x50] sm:$0xf]
      %v3159 = vld [vmem:[%s3147 + $0x54] sm:$0xf]
      %v3160 = vld [vmem:[%s3147 + $0x64] sm:$0x8]
      %v3161 = vld [vmem:[%s3147 + $0x68] sm:$0xf]
      %v3162 = vld [vmem:[%s3147 + $0x6c] sm:$0xf]
      %v3163 = vld [vmem:[%s3147 + $0x7c] sm:$0x8]
      %v3164 = vld [vmem:[%s3147 + $0x80] sm:$0xf]
      %v3165 = vld [vmem:[%s3147 + $0x84] sm:$0xf]
      %v3166 = vld [vmem:[%s3147 + $0x94] sm:$0x8]
      %v3167 = vld [vmem:[%s3147 + $0x98] sm:$0xf]
      %v3168 = vld [vmem:[%s3147 + $0x9c] sm:$0xf]
      %v3169 = vld [vmem:[%s3147 + $0xac] sm:$0x8]
      %v3170 = vld [vmem:[%s3147 + $0xb0] sm:$0xf]
      %v3171 = vld [vmem:[%s3147 + $0xb4] sm:$0xf]
      %v3172 = vld [vmem:[%s3147 + $0xc4] sm:$0x8]
      %v3173 = vld [vmem:[%s3147 + $0xc8] sm:$0xf]
      %v3174 = vld [vmem:[%s3147 + $0xcc] sm:$0xf]
      %v3175 = vld [vmem:[%s3147 + $0xdc] sm:$0x8]
      %v3176 = vld [vmem:[%s3147 + $0xe0] sm:$0xf]
      %v3177 = vld [vmem:[%s3147 + $0xe4] sm:$0xf]
      %v3178 = vld [vmem:[%s3147 + $0xf4] sm:$0x8]
      %v3179 = vld [vmem:[%s3147 + $0xf8] sm:$0xf]
      %v3180 = vld [vmem:[%s3147 + $0xfc] sm:$0xf]
      %v3181 = vld [vmem:[%s3147 + $0x10c] sm:$0x8]
      %v3182 = vld [vmem:[%s3147 + $0x110] sm:$0xf]
      %v3183 = vld [vmem:[%s3147 + $0x114] sm:$0xf]
      %v3184 = vld [vmem:[%s3147 + $0x124] sm:$0x8]
      %v3185 = vld [vmem:[%s3147 + $0x128] sm:$0xf]
      %v3186 = vld [vmem:[%s3147 + $0x12c] sm:$0xf]
      %v3187 = vld [vmem:[%s3147 + $0x13c] sm:$0x8]
      %v3188 = vld [vmem:[%s3147 + $0x140] sm:$0xf]
      %v3189 = vld [vmem:[%s3147 + $0x144] sm:$0xf]
      %v3190 = vld [vmem:[%s3147 + $0x154] sm:$0x8]
      %v3191 = vld [vmem:[%s3147 + $0x158] sm:$0xf]
      %v3192 = vld [vmem:[%s3147 + $0x15c] sm:$0xf]
      %v3193 = vld [vmem:[%s3147 + $0x16c] sm:$0x8]
      %v3194 = vld [vmem:[%s3147 + $0x170] sm:$0xf]
      %v3195 = vld [vmem:[%s3147 + $0x174] sm:$0xf]
      %v3197 = vshrl.u32 %v3148, 16
      %v3199 = vrot.slane %v3197, 7
      %v3200 = vrot.slane %v3199, 4
      %v3202 = vshrl.u32 %v3149, 16
      %v3204 = vrot.slane %v3202, 7
      %v3205 = vshll.u32 %v3149, 16
      %v3207 = vor.u32 %v3204, %v3205
      %v3208 = vsel %vm690, %v3200, %v3207
      %v3209 = vrot.slane %v3204, 4
      %v3211 = vshrl.u32 %v3150, 16
      %v3213 = vrot.slane %v3211, 7
      %v3214 = vshll.u32 %v3150, 16
      %v3216 = vor.u32 %v3213, %v3214
      %v3217 = vsel %vm690, %v3209, %v3216
      %v3219 = vshrl.u32 %v3151, 16
      %v3221 = vrot.slane %v3219, 7
      %v3222 = vrot.slane %v3221, 4
      %v3224 = vshrl.u32 %v3152, 16
      %v3226 = vrot.slane %v3224, 7
      %v3227 = vshll.u32 %v3152, 16
      %v3229 = vor.u32 %v3226, %v3227
      %v3230 = vsel %vm690, %v3222, %v3229
      %v3231 = vrot.slane %v3226, 4
      %v3233 = vshrl.u32 %v3153, 16
      %v3235 = vrot.slane %v3233, 7
      %v3236 = vshll.u32 %v3153, 16
      %v3238 = vor.u32 %v3235, %v3236
      %v3239 = vsel %vm690, %v3231, %v3238
      %v3241 = vshrl.u32 %v3154, 16
      %v3243 = vrot.slane %v3241, 7
      %v3244 = vrot.slane %v3243, 4
      %v3246 = vshrl.u32 %v3155, 16
      %v3248 = vrot.slane %v3246, 7
      %v3249 = vshll.u32 %v3155, 16
      %v3251 = vor.u32 %v3248, %v3249
      %v3252 = vsel %vm690, %v3244, %v3251
      %v3253 = vrot.slane %v3248, 4
      %v3255 = vshrl.u32 %v3156, 16
      %v3257 = vrot.slane %v3255, 7
      %v3258 = vshll.u32 %v3156, 16
      %v3260 = vor.u32 %v3257, %v3258
      %v3261 = vsel %vm690, %v3253, %v3260
      %v3263 = vshrl.u32 %v3157, 16
      %v3265 = vrot.slane %v3263, 7
      %v3266 = vrot.slane %v3265, 4
      %v3268 = vshrl.u32 %v3158, 16
      %v3270 = vrot.slane %v3268, 7
      %v3271 = vshll.u32 %v3158, 16
      %v3273 = vor.u32 %v3270, %v3271
      %v3274 = vsel %vm690, %v3266, %v3273
      %v3275 = vrot.slane %v3270, 4
      %v3277 = vshrl.u32 %v3159, 16
      %v3279 = vrot.slane %v3277, 7
      %v3280 = vshll.u32 %v3159, 16
      %v3282 = vor.u32 %v3279, %v3280
      %v3283 = vsel %vm690, %v3275, %v3282
      %v3285 = vshrl.u32 %v3160, 16
      %v3287 = vrot.slane %v3285, 7
      %v3288 = vrot.slane %v3287, 4
      %v3290 = vshrl.u32 %v3161, 16
      %v3292 = vrot.slane %v3290, 7
      %v3293 = vshll.u32 %v3161, 16
      %v3295 = vor.u32 %v3292, %v3293
      %v3296 = vsel %vm690, %v3288, %v3295
      %v3297 = vrot.slane %v3292, 4
      %v3299 = vshrl.u32 %v3162, 16
      %v3301 = vrot.slane %v3299, 7
      %v3302 = vshll.u32 %v3162, 16
      %v3304 = vor.u32 %v3301, %v3302
      %v3305 = vsel %vm690, %v3297, %v3304
      %v3307 = vshrl.u32 %v3163, 16
      %v3309 = vrot.slane %v3307, 7
      %v3310 = vrot.slane %v3309, 4
      %v3312 = vshrl.u32 %v3164, 16
      %v3314 = vrot.slane %v3312, 7
      %v3315 = vshll.u32 %v3164, 16
      %v3317 = vor.u32 %v3314, %v3315
      %v3318 = vsel %vm690, %v3310, %v3317
      %v3319 = vrot.slane %v3314, 4
      %v3321 = vshrl.u32 %v3165, 16
      %v3323 = vrot.slane %v3321, 7
      %v3324 = vshll.u32 %v3165, 16
      %v3326 = vor.u32 %v3323, %v3324
      %v3327 = vsel %vm690, %v3319, %v3326
      %v3329 = vshrl.u32 %v3166, 16
      %v3331 = vrot.slane %v3329, 7
      %v3332 = vrot.slane %v3331, 4
      %v3334 = vshrl.u32 %v3167, 16
      %v3336 = vrot.slane %v3334, 7
      %v3337 = vshll.u32 %v3167, 16
      %v3339 = vor.u32 %v3336, %v3337
      %v3340 = vsel %vm690, %v3332, %v3339
      %v3341 = vrot.slane %v3336, 4
      %v3343 = vshrl.u32 %v3168, 16
      %v3345 = vrot.slane %v3343, 7
      %v3346 = vshll.u32 %v3168, 16
      %v3348 = vor.u32 %v3345, %v3346
      %v3349 = vsel %vm690, %v3341, %v3348
      %v3351 = vshrl.u32 %v3169, 16
      %v3353 = vrot.slane %v3351, 7
      %v3354 = vrot.slane %v3353, 4
      %v3356 = vshrl.u32 %v3170, 16
      %v3358 = vrot.slane %v3356, 7
      %v3359 = vshll.u32 %v3170, 16
      %v3361 = vor.u32 %v3358, %v3359
      %v3362 = vsel %vm690, %v3354, %v3361
      %v3363 = vrot.slane %v3358, 4
      %v3365 = vshrl.u32 %v3171, 16
      %v3367 = vrot.slane %v3365, 7
      %v3368 = vshll.u32 %v3171, 16
      %v3370 = vor.u32 %v3367, %v3368
      %v3371 = vsel %vm690, %v3363, %v3370
      %v3373 = vshrl.u32 %v3172, 16
      %v3375 = vrot.slane %v3373, 7
      %v3376 = vrot.slane %v3375, 4
      %v3378 = vshrl.u32 %v3173, 16
      %v3380 = vrot.slane %v3378, 7
      %v3381 = vshll.u32 %v3173, 16
      %v3383 = vor.u32 %v3380, %v3381
      %v3384 = vsel %vm690, %v3376, %v3383
      %v3385 = vrot.slane %v3380, 4
      %v3387 = vshrl.u32 %v3174, 16
      %v3389 = vrot.slane %v3387, 7
      %v3390 = vshll.u32 %v3174, 16
      %v3392 = vor.u32 %v3389, %v3390
      %v3393 = vsel %vm690, %v3385, %v3392
      %v3395 = vshrl.u32 %v3175, 16
      %v3397 = vrot.slane %v3395, 7
      %v3398 = vrot.slane %v3397, 4
      %v3400 = vshrl.u32 %v3176, 16
      %v3402 = vrot.slane %v3400, 7
      %v3403 = vshll.u32 %v3176, 16
      %v3405 = vor.u32 %v3402, %v3403
      %v3406 = vsel %vm690, %v3398, %v3405
      %v3407 = vrot.slane %v3402, 4
      %v3409 = vshrl.u32 %v3177, 16
      %v3411 = vrot.slane %v3409, 7
      %v3412 = vshll.u32 %v3177, 16
      %v3414 = vor.u32 %v3411, %v3412
      %v3415 = vsel %vm690, %v3407, %v3414
      %v3417 = vshrl.u32 %v3178, 16
      %v3419 = vrot.slane %v3417, 7
      %v3420 = vrot.slane %v3419, 4
      %v3422 = vshrl.u32 %v3179, 16
      %v3424 = vrot.slane %v3422, 7
      %v3425 = vshll.u32 %v3179, 16
      %v3427 = vor.u32 %v3424, %v3425
      %v3428 = vsel %vm690, %v3420, %v3427
      %v3429 = vrot.slane %v3424, 4
      %v3431 = vshrl.u32 %v3180, 16
      %v3433 = vrot.slane %v3431, 7
      %v3434 = vshll.u32 %v3180, 16
      %v3436 = vor.u32 %v3433, %v3434
      %v3437 = vsel %vm690, %v3429, %v3436
      %v3439 = vshrl.u32 %v3181, 16
      %v3441 = vrot.slane %v3439, 7
      %v3442 = vrot.slane %v3441, 4
      %v3444 = vshrl.u32 %v3182, 16
      %v3446 = vrot.slane %v3444, 7
      %v3447 = vshll.u32 %v3182, 16
      %v3449 = vor.u32 %v3446, %v3447
      %v3450 = vsel %vm690, %v3442, %v3449
      %v3451 = vrot.slane %v3446, 4
      %v3453 = vshrl.u32 %v3183, 16
      %v3455 = vrot.slane %v3453, 7
      %v3456 = vshll.u32 %v3183, 16
      %v3458 = vor.u32 %v3455, %v3456
      %v3459 = vsel %vm690, %v3451, %v3458
      %v3461 = vshrl.u32 %v3184, 16
      %v3463 = vrot.slane %v3461, 7
      %v3464 = vrot.slane %v3463, 4
      %v3466 = vshrl.u32 %v3185, 16
      %v3468 = vrot.slane %v3466, 7
      %v3469 = vshll.u32 %v3185, 16
      %v3471 = vor.u32 %v3468, %v3469
      %v3472 = vsel %vm690, %v3464, %v3471
      %v3473 = vrot.slane %v3468, 4
      %v3475 = vshrl.u32 %v3186, 16
      %v3477 = vrot.slane %v3475, 7
      %v3478 = vshll.u32 %v3186, 16
      %v3480 = vor.u32 %v3477, %v3478
      %v3481 = vsel %vm690, %v3473, %v3480
      %v3483 = vshrl.u32 %v3187, 16
      %v3485 = vrot.slane %v3483, 7
      %v3486 = vrot.slane %v3485, 4
      %v3488 = vshrl.u32 %v3188, 16
      %v3490 = vrot.slane %v3488, 7
      %v3491 = vshll.u32 %v3188, 16
      %v3493 = vor.u32 %v3490, %v3491
      %v3494 = vsel %vm690, %v3486, %v3493
      %v3495 = vrot.slane %v3490, 4
      %v3497 = vshrl.u32 %v3189, 16
      %v3499 = vrot.slane %v3497, 7
      %v3500 = vshll.u32 %v3189, 16
      %v3502 = vor.u32 %v3499, %v3500
      %v3503 = vsel %vm690, %v3495, %v3502
      %v3505 = vshrl.u32 %v3190, 16
      %v3507 = vrot.slane %v3505, 7
      %v3508 = vrot.slane %v3507, 4
      %v3510 = vshrl.u32 %v3191, 16
      %v3512 = vrot.slane %v3510, 7
      %v3513 = vshll.u32 %v3191, 16
      %v3515 = vor.u32 %v3512, %v3513
      %v3516 = vsel %vm690, %v3508, %v3515
      %v3517 = vrot.slane %v3512, 4
      %v3519 = vshrl.u32 %v3192, 16
      %v3521 = vrot.slane %v3519, 7
      %v3522 = vshll.u32 %v3192, 16
      %v3524 = vor.u32 %v3521, %v3522
      %v3525 = vsel %vm690, %v3517, %v3524
      %v3527 = vshrl.u32 %v3193, 16
      %v3529 = vrot.slane %v3527, 7
      %v3530 = vrot.slane %v3529, 4
      %v3532 = vshrl.u32 %v3194, 16
      %v3534 = vrot.slane %v3532, 7
      %v3535 = vshll.u32 %v3194, 16
      %v3537 = vor.u32 %v3534, %v3535
      %v3538 = vsel %vm690, %v3530, %v3537
      %v3539 = vrot.slane %v3534, 4
      %v3541 = vshrl.u32 %v3195, 16
      %v3543 = vrot.slane %v3541, 7
      %v3544 = vshll.u32 %v3195, 16
      %v3546 = vor.u32 %v3543, %v3544
      %v3547 = vsel %vm690, %v3539, %v3546
      %3548 = vrot.lane.b32.xlu0 %v3208, 24
      %v3549 = vpop.permute.xlu0 %3548
      %3550 = vrot.lane.b32.xlu0 %v3217, 24
      %v3551 = vpop.permute.xlu0 %3550
      %3552 = vrot.lane.b32.xlu0 %v3230, 24
      %v3553 = vpop.permute.xlu0 %3552
      %3554 = vrot.lane.b32.xlu0 %v3239, 24
      %v3555 = vpop.permute.xlu0 %3554
      %3556 = vrot.lane.b32.xlu0 %v3252, 24
      %v3557 = vpop.permute.xlu0 %3556
      %3558 = vrot.lane.b32.xlu0 %v3261, 24
      %v3559 = vpop.permute.xlu0 %3558
      %3560 = vrot.lane.b32.xlu0 %v3274, 24
      %v3561 = vpop.permute.xlu0 %3560
      %3562 = vrot.lane.b32.xlu0 %v3283, 24
      %v3563 = vpop.permute.xlu0 %3562
      %3564 = vrot.lane.b32.xlu0 %v3296, 24
      %v3565 = vpop.permute.xlu0 %3564
      %3566 = vrot.lane.b32.xlu0 %v3305, 24
      %v3567 = vpop.permute.xlu0 %3566
      %3568 = vrot.lane.b32.xlu0 %v3318, 24
      %v3569 = vpop.permute.xlu0 %3568
      %3570 = vrot.lane.b32.xlu0 %v3327, 24
      %v3571 = vpop.permute.xlu0 %3570
      %3572 = vrot.lane.b32.xlu0 %v3340, 24
      %v3573 = vpop.permute.xlu0 %3572
      %3574 = vrot.lane.b32.xlu0 %v3349, 24
      %v3575 = vpop.permute.xlu0 %3574
      %3576 = vrot.lane.b32.xlu0 %v3362, 24
      %v3577 = vpop.permute.xlu0 %3576
      %3578 = vrot.lane.b32.xlu0 %v3371, 24
      %v3579 = vpop.permute.xlu0 %3578
      %3580 = vrot.lane.b32.xlu0 %v3384, 24
      %v3581 = vpop.permute.xlu0 %3580
      %3582 = vrot.lane.b32.xlu0 %v3393, 24
      %v3583 = vpop.permute.xlu0 %3582
      %3584 = vrot.lane.b32.xlu0 %v3406, 24
      %v3585 = vpop.permute.xlu0 %3584
      %3586 = vrot.lane.b32.xlu0 %v3415, 24
      %v3587 = vpop.permute.xlu0 %3586
      %3588 = vrot.lane.b32.xlu0 %v3428, 24
      %v3589 = vpop.permute.xlu0 %3588
      %3590 = vrot.lane.b32.xlu0 %v3437, 24
      %v3591 = vpop.permute.xlu0 %3590
      %3592 = vrot.lane.b32.xlu0 %v3450, 24
      %v3593 = vpop.permute.xlu0 %3592
      %3594 = vrot.lane.b32.xlu0 %v3459, 24
      %v3595 = vpop.permute.xlu0 %3594
      %3596 = vrot.lane.b32.xlu0 %v3472, 24
      %v3597 = vpop.permute.xlu0 %3596
      %3598 = vrot.lane.b32.xlu0 %v3481, 24
      %v3599 = vpop.permute.xlu0 %3598
      %3600 = vrot.lane.b32.xlu0 %v3494, 24
      %v3601 = vpop.permute.xlu0 %3600
      %3602 = vrot.lane.b32.xlu0 %v3503, 24
      %v3603 = vpop.permute.xlu0 %3602
      %3604 = vrot.lane.b32.xlu0 %v3516, 24
      %v3605 = vpop.permute.xlu0 %3604
      %3606 = vrot.lane.b32.xlu0 %v3525, 24
      %v3607 = vpop.permute.xlu0 %3606
      %3608 = vrot.lane.b32.xlu0 %v3538, 24
      %v3609 = vpop.permute.xlu0 %3608
      %3610 = vrot.lane.b32.xlu0 %v3547, 24
      %v3611 = vpop.permute.xlu0 %3610
      %vm3644 = vcmask 224448
      %3645 = vst.msk [vmem:[#allocation3] sm:$0xf] %vm3644, %v3549
      %3646 = vst.msk [vmem:[#allocation3 + $0x4] sm:$0xf] %vm3644, %v3551
      %3647 = vst.msk [vmem:[#allocation3 + $0x8] sm:$0xf] %vm3644, %v3553
      %3648 = vst.msk [vmem:[#allocation3 + $0xc] sm:$0xf] %vm3644, %v3555
      %3649 = vst.msk [vmem:[#allocation3 + $0x10] sm:$0xf] %vm3644, %v3557
      %3650 = vst.msk [vmem:[#allocation3 + $0x14] sm:$0xf] %vm3644, %v3559
      %3651 = vst.msk [vmem:[#allocation3 + $0x18] sm:$0xf] %vm3644, %v3561
      %3652 = vst.msk [vmem:[#allocation3 + $0x1c] sm:$0xf] %vm3644, %v3563
      %3653 = vst.msk [vmem:[#allocation3 + $0x20] sm:$0xf] %vm3644, %v3565
      %3654 = vst.msk [vmem:[#allocation3 + $0x24] sm:$0xf] %vm3644, %v3567
      %3655 = vst.msk [vmem:[#allocation3 + $0x28] sm:$0xf] %vm3644, %v3569
      %3656 = vst.msk [vmem:[#allocation3 + $0x2c] sm:$0xf] %vm3644, %v3571
      %3657 = vst.msk [vmem:[#allocation3 + $0x30] sm:$0xf] %vm3644, %v3573
      %3658 = vst.msk [vmem:[#allocation3 + $0x34] sm:$0xf] %vm3644, %v3575
      %3659 = vst.msk [vmem:[#allocation3 + $0x38] sm:$0xf] %vm3644, %v3577
      %3660 = vst.msk [vmem:[#allocation3 + $0x3c] sm:$0xf] %vm3644, %v3579
      %3661 = vst.msk [vmem:[#allocation3 + $0x40] sm:$0xf] %vm3644, %v3581
      %3662 = vst.msk [vmem:[#allocation3 + $0x44] sm:$0xf] %vm3644, %v3583
      %3663 = vst.msk [vmem:[#allocation3 + $0x48] sm:$0xf] %vm3644, %v3585
      %3664 = vst.msk [vmem:[#allocation3 + $0x4c] sm:$0xf] %vm3644, %v3587
      %3665 = vst.msk [vmem:[#allocation3 + $0x50] sm:$0xf] %vm3644, %v3589
      %3666 = vst.msk [vmem:[#allocation3 + $0x54] sm:$0xf] %vm3644, %v3591
      %3667 = vst.msk [vmem:[#allocation3 + $0x58] sm:$0xf] %vm3644, %v3593
      %3668 = vst.msk [vmem:[#allocation3 + $0x5c] sm:$0xf] %vm3644, %v3595
      %3669 = vst.msk [vmem:[#allocation3 + $0x60] sm:$0xf] %vm3644, %v3597
      %3670 = vst.msk [vmem:[#allocation3 + $0x64] sm:$0xf] %vm3644, %v3599
      %3671 = vst.msk [vmem:[#allocation3 + $0x68] sm:$0xf] %vm3644, %v3601
      %3672 = vst.msk [vmem:[#allocation3 + $0x6c] sm:$0xf] %vm3644, %v3603
      %3673 = vst.msk [vmem:[#allocation3 + $0x70] sm:$0xf] %vm3644, %v3605
      %3674 = vst.msk [vmem:[#allocation3 + $0x74] sm:$0xf] %vm3644, %v3607
      %3675 = vst.msk [vmem:[#allocation3 + $0x78] sm:$0xf] %vm3644, %v3609
      %3676 = vst.msk [vmem:[#allocation3 + $0x7c] sm:$0xf] %vm3644, %v3611
      %v3677 = vld [vmem:[%s3147 + $0x8] sm:$0xf]
      %v3678 = vld [vmem:[%s3147 + $0xc] sm:$0xf]
      %v3679 = vld [vmem:[%s3147 + $0x20] sm:$0xf]
      %v3680 = vld [vmem:[%s3147 + $0x24] sm:$0xf]
      %v3681 = vld [vmem:[%s3147 + $0x38] sm:$0xf]
      %v3682 = vld [vmem:[%s3147 + $0x3c] sm:$0xf]
      %v3683 = vld [vmem:[%s3147 + $0x50] sm:$0xf]
      %v3684 = vld [vmem:[%s3147 + $0x54] sm:$0xf]
      %v3685 = vld [vmem:[%s3147 + $0x68] sm:$0xf]
      %v3686 = vld [vmem:[%s3147 + $0x6c] sm:$0xf]
      %v3687 = vld [vmem:[%s3147 + $0x80] sm:$0xf]
      %v3688 = vld [vmem:[%s3147 + $0x84] sm:$0xf]
      %v3689 = vld [vmem:[%s3147 + $0x98] sm:$0xf]
      %v3690 = vld [vmem:[%s3147 + $0x9c] sm:$0xf]
      %v3691 = vld [vmem:[%s3147 + $0xb0] sm:$0xf]
      %v3692 = vld [vmem:[%s3147 + $0xb4] sm:$0xf]
      %v3693 = vld [vmem:[%s3147 + $0xc8] sm:$0xf]
      %v3694 = vld [vmem:[%s3147 + $0xcc] sm:$0xf]
      %v3695 = vld [vmem:[%s3147 + $0xe0] sm:$0xf]
      %v3696 = vld [vmem:[%s3147 + $0xe4] sm:$0xf]
      %v3697 = vld [vmem:[%s3147 + $0xf8] sm:$0xf]
      %v3698 = vld [vmem:[%s3147 + $0xfc] sm:$0xf]
      %v3699 = vld [vmem:[%s3147 + $0x110] sm:$0xf]
      %v3700 = vld [vmem:[%s3147 + $0x114] sm:$0xf]
      %v3701 = vld [vmem:[%s3147 + $0x128] sm:$0xf]
      %v3702 = vld [vmem:[%s3147 + $0x12c] sm:$0xf]
      %v3703 = vld [vmem:[%s3147 + $0x140] sm:$0xf]
      %v3704 = vld [vmem:[%s3147 + $0x144] sm:$0xf]
      %v3705 = vld [vmem:[%s3147 + $0x158] sm:$0xf]
      %v3706 = vld [vmem:[%s3147 + $0x15c] sm:$0xf]
      %v3707 = vld [vmem:[%s3147 + $0x170] sm:$0xf]
      %v3708 = vld [vmem:[%s3147 + $0x174] sm:$0xf]
      %3741 = vrot.lane.b32.xlu0 %v3677, 28
      %v3742 = vpop.permute.xlu0 %3741
      %3743 = vrot.lane.b32.xlu0 %v3678, 28
      %v3744 = vpop.permute.xlu0 %3743
      %3745 = vrot.lane.b32.xlu0 %v3679, 28
      %v3746 = vpop.permute.xlu0 %3745
      %3747 = vrot.lane.b32.xlu0 %v3680, 28
      %v3748 = vpop.permute.xlu0 %3747
      %3749 = vrot.lane.b32.xlu0 %v3681, 28
      %v3750 = vpop.permute.xlu0 %3749
      %3751 = vrot.lane.b32.xlu0 %v3682, 28
      %v3752 = vpop.permute.xlu0 %3751
      %3753 = vrot.lane.b32.xlu0 %v3683, 28
      %v3754 = vpop.permute.xlu0 %3753
      %3755 = vrot.lane.b32.xlu0 %v3684, 28
      %v3756 = vpop.permute.xlu0 %3755
      %3757 = vrot.lane.b32.xlu0 %v3685, 28
      %v3758 = vpop.permute.xlu0 %3757
      %3759 = vrot.lane.b32.xlu0 %v3686, 28
      %v3760 = vpop.permute.xlu0 %3759
      %3761 = vrot.lane.b32.xlu0 %v3687, 28
      %v3762 = vpop.permute.xlu0 %3761
      %3763 = vrot.lane.b32.xlu0 %v3688, 28
      %v3764 = vpop.permute.xlu0 %3763
      %3765 = vrot.lane.b32.xlu0 %v3689, 28
      %v3766 = vpop.permute.xlu0 %3765
      %3767 = vrot.lane.b32.xlu0 %v3690, 28
      %v3768 = vpop.permute.xlu0 %3767
      %3769 = vrot.lane.b32.xlu0 %v3691, 28
      %v3770 = vpop.permute.xlu0 %3769
      %3771 = vrot.lane.b32.xlu0 %v3692, 28
      %v3772 = vpop.permute.xlu0 %3771
      %3773 = vrot.lane.b32.xlu0 %v3693, 28
      %v3774 = vpop.permute.xlu0 %3773
      %3775 = vrot.lane.b32.xlu0 %v3694, 28
      %v3776 = vpop.permute.xlu0 %3775
      %3777 = vrot.lane.b32.xlu0 %v3695, 28
      %v3778 = vpop.permute.xlu0 %3777
      %3779 = vrot.lane.b32.xlu0 %v3696, 28
      %v3780 = vpop.permute.xlu0 %3779
      %3781 = vrot.lane.b32.xlu0 %v3697, 28
      %v3782 = vpop.permute.xlu0 %3781
      %3783 = vrot.lane.b32.xlu0 %v3698, 28
      %v3784 = vpop.permute.xlu0 %3783
      %3785 = vrot.lane.b32.xlu0 %v3699, 28
      %v3786 = vpop.permute.xlu0 %3785
      %3787 = vrot.lane.b32.xlu0 %v3700, 28
      %v3788 = vpop.permute.xlu0 %3787
      %3789 = vrot.lane.b32.xlu0 %v3701, 28
      %v3790 = vpop.permute.xlu0 %3789
      %3791 = vrot.lane.b32.xlu0 %v3702, 28
      %v3792 = vpop.permute.xlu0 %3791
      %3793 = vrot.lane.b32.xlu0 %v3703, 28
      %v3794 = vpop.permute.xlu0 %3793
      %3795 = vrot.lane.b32.xlu0 %v3704, 28
      %v3796 = vpop.permute.xlu0 %3795
      %3797 = vrot.lane.b32.xlu0 %v3705, 28
      %v3798 = vpop.permute.xlu0 %3797
      %3799 = vrot.lane.b32.xlu0 %v3706, 28
      %v3800 = vpop.permute.xlu0 %3799
      %3801 = vrot.lane.b32.xlu0 %v3707, 28
      %v3802 = vpop.permute.xlu0 %3801
      %3803 = vrot.lane.b32.xlu0 %v3708, 28
      %v3804 = vpop.permute.xlu0 %3803
      %vm3837 = vcmask 257248
      %3838 = vst.msk [vmem:[#allocation3] sm:$0xf] %vm3837, %v3742
      %3839 = vst.msk [vmem:[#allocation3 + $0x4] sm:$0xf] %vm3837, %v3744
      %3840 = vst.msk [vmem:[#allocation3 + $0x8] sm:$0xf] %vm3837, %v3746
      %3841 = vst.msk [vmem:[#allocation3 + $0xc] sm:$0xf] %vm3837, %v3748
      %3842 = vst.msk [vmem:[#allocation3 + $0x10] sm:$0xf] %vm3837, %v3750
      %3843 = vst.msk [vmem:[#allocation3 + $0x14] sm:$0xf] %vm3837, %v3752
      %3844 = vst.msk [vmem:[#allocation3 + $0x18] sm:$0xf] %vm3837, %v3754
      %3845 = vst.msk [vmem:[#allocation3 + $0x1c] sm:$0xf] %vm3837, %v3756
      %3846 = vst.msk [vmem:[#allocation3 + $0x20] sm:$0xf] %vm3837, %v3758
      %3847 = vst.msk [vmem:[#allocation3 + $0x24] sm:$0xf] %vm3837, %v3760
      %3848 = vst.msk [vmem:[#allocation3 + $0x28] sm:$0xf] %vm3837, %v3762
      %3849 = vst.msk [vmem:[#allocation3 + $0x2c] sm:$0xf] %vm3837, %v3764
      %3850 = vst.msk [vmem:[#allocation3 + $0x30] sm:$0xf] %vm3837, %v3766
      %3851 = vst.msk [vmem:[#allocation3 + $0x34] sm:$0xf] %vm3837, %v3768
      %3852 = vst.msk [vmem:[#allocation3 + $0x38] sm:$0xf] %vm3837, %v3770
      %3853 = vst.msk [vmem:[#allocation3 + $0x3c] sm:$0xf] %vm3837, %v3772
      %3854 = vst.msk [vmem:[#allocation3 + $0x40] sm:$0xf] %vm3837, %v3774
      %3855 = vst.msk [vmem:[#allocation3 + $0x44] sm:$0xf] %vm3837, %v3776
      %3856 = vst.msk [vmem:[#allocation3 + $0x48] sm:$0xf] %vm3837, %v3778
      %3857 = vst.msk [vmem:[#allocation3 + $0x4c] sm:$0xf] %vm3837, %v3780
      %3858 = vst.msk [vmem:[#allocation3 + $0x50] sm:$0xf] %vm3837, %v3782
      %3859 = vst.msk [vmem:[#allocation3 + $0x54] sm:$0xf] %vm3837, %v3784
      %3860 = vst.msk [vmem:[#allocation3 + $0x58] sm:$0xf] %vm3837, %v3786
      %3861 = vst.msk [vmem:[#allocation3 + $0x5c] sm:$0xf] %vm3837, %v3788
      %3862 = vst.msk [vmem:[#allocation3 + $0x60] sm:$0xf] %vm3837, %v3790
      %3863 = vst.msk [vmem:[#allocation3 + $0x64] sm:$0xf] %vm3837, %v3792
      %3864 = vst.msk [vmem:[#allocation3 + $0x68] sm:$0xf] %vm3837, %v3794
      %3865 = vst.msk [vmem:[#allocation3 + $0x6c] sm:$0xf] %vm3837, %v3796
      %3866 = vst.msk [vmem:[#allocation3 + $0x70] sm:$0xf] %vm3837, %v3798
      %3867 = vst.msk [vmem:[#allocation3 + $0x74] sm:$0xf] %vm3837, %v3800
      %3868 = vst.msk [vmem:[#allocation3 + $0x78] sm:$0xf] %vm3837, %v3802
      %3869 = vst.msk [vmem:[#allocation3 + $0x7c] sm:$0xf] %vm3837, %v3804
      %v3870 = vld [vmem:[%s3147 + $0x8] sm:$0xf]
      %v3871 = vld [vmem:[%s3147 + $0xc] sm:$0xf]
      %v3872 = vld [vmem:[%s3147 + $0x10] sm:$0x1]
      %v3873 = vld [vmem:[%s3147 + $0x20] sm:$0xf]
      %v3874 = vld [vmem:[%s3147 + $0x24] sm:$0xf]
      %v3875 = vld [vmem:[%s3147 + $0x28] sm:$0x1]
      %v3876 = vld [vmem:[%s3147 + $0x38] sm:$0xf]
      %v3877 = vld [vmem:[%s3147 + $0x3c] sm:$0xf]
      %v3878 = vld [vmem:[%s3147 + $0x40] sm:$0x1]
      %v3879 = vld [vmem:[%s3147 + $0x50] sm:$0xf]
      %v3880 = vld [vmem:[%s3147 + $0x54] sm:$0xf]
      %v3881 = vld [vmem:[%s3147 + $0x58] sm:$0x1]
      %v3882 = vld [vmem:[%s3147 + $0x68] sm:$0xf]
      %v3883 = vld [vmem:[%s3147 + $0x6c] sm:$0xf]
      %v3884 = vld [vmem:[%s3147 + $0x70] sm:$0x1]
      %v3885 = vld [vmem:[%s3147 + $0x80] sm:$0xf]
      %v3886 = vld [vmem:[%s3147 + $0x84] sm:$0xf]
      %v3887 = vld [vmem:[%s3147 + $0x88] sm:$0x1]
      %v3888 = vld [vmem:[%s3147 + $0x98] sm:$0xf]
      %v3889 = vld [vmem:[%s3147 + $0x9c] sm:$0xf]
      %v3890 = vld [vmem:[%s3147 + $0xa0] sm:$0x1]
      %v3891 = vld [vmem:[%s3147 + $0xb0] sm:$0xf]
      %v3892 = vld [vmem:[%s3147 + $0xb4] sm:$0xf]
      %v3893 = vld [vmem:[%s3147 + $0xb8] sm:$0x1]
      %v3894 = vld [vmem:[%s3147 + $0xc8] sm:$0xf]
      %v3895 = vld [vmem:[%s3147 + $0xcc] sm:$0xf]
      %v3896 = vld [vmem:[%s3147 + $0xd0] sm:$0x1]
      %v3897 = vld [vmem:[%s3147 + $0xe0] sm:$0xf]
      %v3898 = vld [vmem:[%s3147 + $0xe4] sm:$0xf]
      %v3899 = vld [vmem:[%s3147 + $0xe8] sm:$0x1]
      %v3900 = vld [vmem:[%s3147 + $0xf8] sm:$0xf]
      %v3901 = vld [vmem:[%s3147 + $0xfc] sm:$0xf]
      %v3902 = vld [vmem:[%s3147 + $0x100] sm:$0x1]
      %v3903 = vld [vmem:[%s3147 + $0x110] sm:$0xf]
      %v3904 = vld [vmem:[%s3147 + $0x114] sm:$0xf]
      %v3905 = vld [vmem:[%s3147 + $0x118] sm:$0x1]
      %v3906 = vld [vmem:[%s3147 + $0x128] sm:$0xf]
      %v3907 = vld [vmem:[%s3147 + $0x12c] sm:$0xf]
      %v3908 = vld [vmem:[%s3147 + $0x130] sm:$0x1]
      %v3909 = vld [vmem:[%s3147 + $0x140] sm:$0xf]
      %v3910 = vld [vmem:[%s3147 + $0x144] sm:$0xf]
      %v3911 = vld [vmem:[%s3147 + $0x148] sm:$0x1]
      %v3912 = vld [vmem:[%s3147 + $0x158] sm:$0xf]
      %v3913 = vld [vmem:[%s3147 + $0x15c] sm:$0xf]
      %v3914 = vld [vmem:[%s3147 + $0x160] sm:$0x1]
      %v3915 = vld [vmem:[%s3147 + $0x170] sm:$0xf]
      %v3916 = vld [vmem:[%s3147 + $0x174] sm:$0xf]
      %v3917 = vld [vmem:[%s3147 + $0x178] sm:$0x1]
      %v3919 = vshrl.u32 %v3870, 16
      %v3921 = vrot.slane %v3919, 4
      %v3922 = vshll.u32 %v3870, 16
      %v3924 = vrot.slane %v3922, 5
      %v3925 = vor.u32 %v3921, %v3924
      %v3926 = vrot.slane %v3925, 4
      %v3928 = vshll.u32 %v3871, 16
      %v3930 = vrot.slane %v3928, 5
      %v3931 = vsel %vm1350, %v3926, %v3930
      %v3932 = vshrl.u32 %v3871, 16
      %v3934 = vrot.slane %v3932, 4
      %v3935 = vor.u32 %v3934, %v3930
      %v3936 = vrot.slane %v3935, 4
      %v3938 = vshll.u32 %v3872, 16
      %v3940 = vrot.slane %v3938, 5
      %v3941 = vsel %vm1350, %v3936, %v3940
      %v3943 = vshrl.u32 %v3873, 16
      %v3945 = vrot.slane %v3943, 4
      %v3946 = vshll.u32 %v3873, 16
      %v3948 = vrot.slane %v3946, 5
      %v3949 = vor.u32 %v3945, %v3948
      %v3950 = vrot.slane %v3949, 4
      %v3952 = vshll.u32 %v3874, 16
      %v3954 = vrot.slane %v3952, 5
      %v3955 = vsel %vm1350, %v3950, %v3954
      %v3956 = vshrl.u32 %v3874, 16
      %v3958 = vrot.slane %v3956, 4
      %v3959 = vor.u32 %v3958, %v3954
      %v3960 = vrot.slane %v3959, 4
      %v3962 = vshll.u32 %v3875, 16
      %v3964 = vrot.slane %v3962, 5
      %v3965 = vsel %vm1350, %v3960, %v3964
      %v3967 = vshrl.u32 %v3876, 16
      %v3969 = vrot.slane %v3967, 4
      %v3970 = vshll.u32 %v3876, 16
      %v3972 = vrot.slane %v3970, 5
      %v3973 = vor.u32 %v3969, %v3972
      %v3974 = vrot.slane %v3973, 4
      %v3976 = vshll.u32 %v3877, 16
      %v3978 = vrot.slane %v3976, 5
      %v3979 = vsel %vm1350, %v3974, %v3978
      %v3980 = vshrl.u32 %v3877, 16
      %v3982 = vrot.slane %v3980, 4
      %v3983 = vor.u32 %v3982, %v3978
      %v3984 = vrot.slane %v3983, 4
      %v3986 = vshll.u32 %v3878, 16
      %v3988 = vrot.slane %v3986, 5
      %v3989 = vsel %vm1350, %v3984, %v3988
      %v3991 = vshrl.u32 %v3879, 16
      %v3993 = vrot.slane %v3991, 4
      %v3994 = vshll.u32 %v3879, 16
      %v3996 = vrot.slane %v3994, 5
      %v3997 = vor.u32 %v3993, %v3996
      %v3998 = vrot.slane %v3997, 4
      %v4000 = vshll.u32 %v3880, 16
      %v4002 = vrot.slane %v4000, 5
      %v4003 = vsel %vm1350, %v3998, %v4002
      %v4004 = vshrl.u32 %v3880, 16
      %v4006 = vrot.slane %v4004, 4
      %v4007 = vor.u32 %v4006, %v4002
      %v4008 = vrot.slane %v4007, 4
      %v4010 = vshll.u32 %v3881, 16
      %v4012 = vrot.slane %v4010, 5
      %v4013 = vsel %vm1350, %v4008, %v4012
      %v4015 = vshrl.u32 %v3882, 16
      %v4017 = vrot.slane %v4015, 4
      %v4018 = vshll.u32 %v3882, 16
      %v4020 = vrot.slane %v4018, 5
      %v4021 = vor.u32 %v4017, %v4020
      %v4022 = vrot.slane %v4021, 4
      %v4024 = vshll.u32 %v3883, 16
      %v4026 = vrot.slane %v4024, 5
      %v4027 = vsel %vm1350, %v4022, %v4026
      %v4028 = vshrl.u32 %v3883, 16
      %v4030 = vrot.slane %v4028, 4
      %v4031 = vor.u32 %v4030, %v4026
      %v4032 = vrot.slane %v4031, 4
      %v4034 = vshll.u32 %v3884, 16
      %v4036 = vrot.slane %v4034, 5
      %v4037 = vsel %vm1350, %v4032, %v4036
      %v4039 = vshrl.u32 %v3885, 16
      %v4041 = vrot.slane %v4039, 4
      %v4042 = vshll.u32 %v3885, 16
      %v4044 = vrot.slane %v4042, 5
      %v4045 = vor.u32 %v4041, %v4044
      %v4046 = vrot.slane %v4045, 4
      %v4048 = vshll.u32 %v3886, 16
      %v4050 = vrot.slane %v4048, 5
      %v4051 = vsel %vm1350, %v4046, %v4050
      %v4052 = vshrl.u32 %v3886, 16
      %v4054 = vrot.slane %v4052, 4
      %v4055 = vor.u32 %v4054, %v4050
      %v4056 = vrot.slane %v4055, 4
      %v4058 = vshll.u32 %v3887, 16
      %v4060 = vrot.slane %v4058, 5
      %v4061 = vsel %vm1350, %v4056, %v4060
      %v4063 = vshrl.u32 %v3888, 16
      %v4065 = vrot.slane %v4063, 4
      %v4066 = vshll.u32 %v3888, 16
      %v4068 = vrot.slane %v4066, 5
      %v4069 = vor.u32 %v4065, %v4068
      %v4070 = vrot.slane %v4069, 4
      %v4072 = vshll.u32 %v3889, 16
      %v4074 = vrot.slane %v4072, 5
      %v4075 = vsel %vm1350, %v4070, %v4074
      %v4076 = vshrl.u32 %v3889, 16
      %v4078 = vrot.slane %v4076, 4
      %v4079 = vor.u32 %v4078, %v4074
      %v4080 = vrot.slane %v4079, 4
      %v4082 = vshll.u32 %v3890, 16
      %v4084 = vrot.slane %v4082, 5
      %v4085 = vsel %vm1350, %v4080, %v4084
      %v4087 = vshrl.u32 %v3891, 16
      %v4089 = vrot.slane %v4087, 4
      %v4090 = vshll.u32 %v3891, 16
      %v4092 = vrot.slane %v4090, 5
      %v4093 = vor.u32 %v4089, %v4092
      %v4094 = vrot.slane %v4093, 4
      %v4096 = vshll.u32 %v3892, 16
      %v4098 = vrot.slane %v4096, 5
      %v4099 = vsel %vm1350, %v4094, %v4098
      %v4100 = vshrl.u32 %v3892, 16
      %v4102 = vrot.slane %v4100, 4
      %v4103 = vor.u32 %v4102, %v4098
      %v4104 = vrot.slane %v4103, 4
      %v4106 = vshll.u32 %v3893, 16
      %v4108 = vrot.slane %v4106, 5
      %v4109 = vsel %vm1350, %v4104, %v4108
      %v4111 = vshrl.u32 %v3894, 16
      %v4113 = vrot.slane %v4111, 4
      %v4114 = vshll.u32 %v3894, 16
      %v4116 = vrot.slane %v4114, 5
      %v4117 = vor.u32 %v4113, %v4116
      %v4118 = vrot.slane %v4117, 4
      %v4120 = vshll.u32 %v3895, 16
      %v4122 = vrot.slane %v4120, 5
      %v4123 = vsel %vm1350, %v4118, %v4122
      %v4124 = vshrl.u32 %v3895, 16
      %v4126 = vrot.slane %v4124, 4
      %v4127 = vor.u32 %v4126, %v4122
      %v4128 = vrot.slane %v4127, 4
      %v4130 = vshll.u32 %v3896, 16
      %v4132 = vrot.slane %v4130, 5
      %v4133 = vsel %vm1350, %v4128, %v4132
      %v4135 = vshrl.u32 %v3897, 16
      %v4137 = vrot.slane %v4135, 4
      %v4138 = vshll.u32 %v3897, 16
      %v4140 = vrot.slane %v4138, 5
      %v4141 = vor.u32 %v4137, %v4140
      %v4142 = vrot.slane %v4141, 4
      %v4144 = vshll.u32 %v3898, 16
      %v4146 = vrot.slane %v4144, 5
      %v4147 = vsel %vm1350, %v4142, %v4146
      %v4148 = vshrl.u32 %v3898, 16
      %v4150 = vrot.slane %v4148, 4
      %v4151 = vor.u32 %v4150, %v4146
      %v4152 = vrot.slane %v4151, 4
      %v4154 = vshll.u32 %v3899, 16
      %v4156 = vrot.slane %v4154, 5
      %v4157 = vsel %vm1350, %v4152, %v4156
      %v4159 = vshrl.u32 %v3900, 16
      %v4161 = vrot.slane %v4159, 4
      %v4162 = vshll.u32 %v3900, 16
      %v4164 = vrot.slane %v4162, 5
      %v4165 = vor.u32 %v4161, %v4164
      %v4166 = vrot.slane %v4165, 4
      %v4168 = vshll.u32 %v3901, 16
      %v4170 = vrot.slane %v4168, 5
      %v4171 = vsel %vm1350, %v4166, %v4170
      %v4172 = vshrl.u32 %v3901, 16
      %v4174 = vrot.slane %v4172, 4
      %v4175 = vor.u32 %v4174, %v4170
      %v4176 = vrot.slane %v4175, 4
      %v4178 = vshll.u32 %v3902, 16
      %v4180 = vrot.slane %v4178, 5
      %v4181 = vsel %vm1350, %v4176, %v4180
      %v4183 = vshrl.u32 %v3903, 16
      %v4185 = vrot.slane %v4183, 4
      %v4186 = vshll.u32 %v3903, 16
      %v4188 = vrot.slane %v4186, 5
      %v4189 = vor.u32 %v4185, %v4188
      %v4190 = vrot.slane %v4189, 4
      %v4192 = vshll.u32 %v3904, 16
      %v4194 = vrot.slane %v4192, 5
      %v4195 = vsel %vm1350, %v4190, %v4194
      %v4196 = vshrl.u32 %v3904, 16
      %v4198 = vrot.slane %v4196, 4
      %v4199 = vor.u32 %v4198, %v4194
      %v4200 = vrot.slane %v4199, 4
      %v4202 = vshll.u32 %v3905, 16
      %v4204 = vrot.slane %v4202, 5
      %v4205 = vsel %vm1350, %v4200, %v4204
      %v4207 = vshrl.u32 %v3906, 16
      %v4209 = vrot.slane %v4207, 4
      %v4210 = vshll.u32 %v3906, 16
      %v4212 = vrot.slane %v4210, 5
      %v4213 = vor.u32 %v4209, %v4212
      %v4214 = vrot.slane %v4213, 4
      %v4216 = vshll.u32 %v3907, 16
      %v4218 = vrot.slane %v4216, 5
      %v4219 = vsel %vm1350, %v4214, %v4218
      %v4220 = vshrl.u32 %v3907, 16
      %v4222 = vrot.slane %v4220, 4
      %v4223 = vor.u32 %v4222, %v4218
      %v4224 = vrot.slane %v4223, 4
      %v4226 = vshll.u32 %v3908, 16
      %v4228 = vrot.slane %v4226, 5
      %v4229 = vsel %vm1350, %v4224, %v4228
      %v4231 = vshrl.u32 %v3909, 16
      %v4233 = vrot.slane %v4231, 4
      %v4234 = vshll.u32 %v3909, 16
      %v4236 = vrot.slane %v4234, 5
      %v4237 = vor.u32 %v4233, %v4236
      %v4238 = vrot.slane %v4237, 4
      %v4240 = vshll.u32 %v3910, 16
      %v4242 = vrot.slane %v4240, 5
      %v4243 = vsel %vm1350, %v4238, %v4242
      %v4244 = vshrl.u32 %v3910, 16
      %v4246 = vrot.slane %v4244, 4
      %v4247 = vor.u32 %v4246, %v4242
      %v4248 = vrot.slane %v4247, 4
      %v4250 = vshll.u32 %v3911, 16
      %v4252 = vrot.slane %v4250, 5
      %v4253 = vsel %vm1350, %v4248, %v4252
      %v4255 = vshrl.u32 %v3912, 16
      %v4257 = vrot.slane %v4255, 4
      %v4258 = vshll.u32 %v3912, 16
      %v4260 = vrot.slane %v4258, 5
      %v4261 = vor.u32 %v4257, %v4260
      %v4262 = vrot.slane %v4261, 4
      %v4264 = vshll.u32 %v3913, 16
      %v4266 = vrot.slane %v4264, 5
      %v4267 = vsel %vm1350, %v4262, %v4266
      %v4268 = vshrl.u32 %v3913, 16
      %v4270 = vrot.slane %v4268, 4
      %v4271 = vor.u32 %v4270, %v4266
      %v4272 = vrot.slane %v4271, 4
      %v4274 = vshll.u32 %v3914, 16
      %v4276 = vrot.slane %v4274, 5
      %v4277 = vsel %vm1350, %v4272, %v4276
      %v4279 = vshrl.u32 %v3915, 16
      %v4281 = vrot.slane %v4279, 4
      %v4282 = vshll.u32 %v3915, 16
      %v4284 = vrot.slane %v4282, 5
      %v4285 = vor.u32 %v4281, %v4284
      %v4286 = vrot.slane %v4285, 4
      %v4288 = vshll.u32 %v3916, 16
      %v4290 = vrot.slane %v4288, 5
      %v4291 = vsel %vm1350, %v4286, %v4290
      %v4292 = vshrl.u32 %v3916, 16
      %v4294 = vrot.slane %v4292, 4
      %v4295 = vor.u32 %v4294, %v4290
      %v4296 = vrot.slane %v4295, 4
      %v4298 = vshll.u32 %v3917, 16
      %v4300 = vrot.slane %v4298, 5
      %v4301 = vsel %vm1350, %v4296, %v4300
      %4302 = vrot.lane.b32.xlu0 %v3931, 32
      %v4303 = vpop.permute.xlu0 %4302
      %4304 = vrot.lane.b32.xlu0 %v3941, 32
      %v4305 = vpop.permute.xlu0 %4304
      %4306 = vrot.lane.b32.xlu0 %v3955, 32
      %v4307 = vpop.permute.xlu0 %4306
      %4308 = vrot.lane.b32.xlu0 %v3965, 32
      %v4309 = vpop.permute.xlu0 %4308
      %4310 = vrot.lane.b32.xlu0 %v3979, 32
      %v4311 = vpop.permute.xlu0 %4310
      %4312 = vrot.lane.b32.xlu0 %v3989, 32
      %v4313 = vpop.permute.xlu0 %4312
      %4314 = vrot.lane.b32.xlu0 %v4003, 32
      %v4315 = vpop.permute.xlu0 %4314
      %4316 = vrot.lane.b32.xlu0 %v4013, 32
      %v4317 = vpop.permute.xlu0 %4316
      %4318 = vrot.lane.b32.xlu0 %v4027, 32
      %v4319 = vpop.permute.xlu0 %4318
      %4320 = vrot.lane.b32.xlu0 %v4037, 32
      %v4321 = vpop.permute.xlu0 %4320
      %4322 = vrot.lane.b32.xlu0 %v4051, 32
      %v4323 = vpop.permute.xlu0 %4322
      %4324 = vrot.lane.b32.xlu0 %v4061, 32
      %v4325 = vpop.permute.xlu0 %4324
      %4326 = vrot.lane.b32.xlu0 %v4075, 32
      %v4327 = vpop.permute.xlu0 %4326
      %4328 = vrot.lane.b32.xlu0 %v4085, 32
      %v4329 = vpop.permute.xlu0 %4328
      %4330 = vrot.lane.b32.xlu0 %v4099, 32
      %v4331 = vpop.permute.xlu0 %4330
      %4332 = vrot.lane.b32.xlu0 %v4109, 32
      %v4333 = vpop.permute.xlu0 %4332
      %4334 = vrot.lane.b32.xlu0 %v4123, 32
      %v4335 = vpop.permute.xlu0 %4334
      %4336 = vrot.lane.b32.xlu0 %v4133, 32
      %v4337 = vpop.permute.xlu0 %4336
      %4338 = vrot.lane.b32.xlu0 %v4147, 32
      %v4339 = vpop.permute.xlu0 %4338
      %4340 = vrot.lane.b32.xlu0 %v4157, 32
      %v4341 = vpop.permute.xlu0 %4340
      %4342 = vrot.lane.b32.xlu0 %v4171, 32
      %v4343 = vpop.permute.xlu0 %4342
      %4344 = vrot.lane.b32.xlu0 %v4181, 32
      %v4345 = vpop.permute.xlu0 %4344
      %4346 = vrot.lane.b32.xlu0 %v4195, 32
      %v4347 = vpop.permute.xlu0 %4346
      %4348 = vrot.lane.b32.xlu0 %v4205, 32
      %v4349 = vpop.permute.xlu0 %4348
      %4350 = vrot.lane.b32.xlu0 %v4219, 32
      %v4351 = vpop.permute.xlu0 %4350
      %4352 = vrot.lane.b32.xlu0 %v4229, 32
      %v4353 = vpop.permute.xlu0 %4352
      %4354 = vrot.lane.b32.xlu0 %v4243, 32
      %v4355 = vpop.permute.xlu0 %4354
      %4356 = vrot.lane.b32.xlu0 %v4253, 32
      %v4357 = vpop.permute.xlu0 %4356
      %4358 = vrot.lane.b32.xlu0 %v4267, 32
      %v4359 = vpop.permute.xlu0 %4358
      %4360 = vrot.lane.b32.xlu0 %v4277, 32
      %v4361 = vpop.permute.xlu0 %4360
      %4362 = vrot.lane.b32.xlu0 %v4291, 32
      %v4363 = vpop.permute.xlu0 %4362
      %4364 = vrot.lane.b32.xlu0 %v4301, 32
      %v4365 = vpop.permute.xlu0 %4364
      %vm4398 = vcmask 290048
      %4399 = vst.msk [vmem:[#allocation3] sm:$0xf] %vm4398, %v4303
      %4400 = vst.msk [vmem:[#allocation3 + $0x4] sm:$0xf] %vm4398, %v4305
      %4401 = vst.msk [vmem:[#allocation3 + $0x8] sm:$0xf] %vm4398, %v4307
      %4402 = vst.msk [vmem:[#allocation3 + $0xc] sm:$0xf] %vm4398, %v4309
      %4403 = vst.msk [vmem:[#allocation3 + $0x10] sm:$0xf] %vm4398, %v4311
      %4404 = vst.msk [vmem:[#allocation3 + $0x14] sm:$0xf] %vm4398, %v4313
      %4405 = vst.msk [vmem:[#allocation3 + $0x18] sm:$0xf] %vm4398, %v4315
      %4406 = vst.msk [vmem:[#allocation3 + $0x1c] sm:$0xf] %vm4398, %v4317
      %4407 = vst.msk [vmem:[#allocation3 + $0x20] sm:$0xf] %vm4398, %v4319
      %4408 = vst.msk [vmem:[#allocation3 + $0x24] sm:$0xf] %vm4398, %v4321
      %4409 = vst.msk [vmem:[#allocation3 + $0x28] sm:$0xf] %vm4398, %v4323
      %4410 = vst.msk [vmem:[#allocation3 + $0x2c] sm:$0xf] %vm4398, %v4325
      %4411 = vst.msk [vmem:[#allocation3 + $0x30] sm:$0xf] %vm4398, %v4327
      %4412 = vst.msk [vmem:[#allocation3 + $0x34] sm:$0xf] %vm4398, %v4329
      %4413 = vst.msk [vmem:[#allocation3 + $0x38] sm:$0xf] %vm4398, %v4331
      %4414 = vst.msk [vmem:[#allocation3 + $0x3c] sm:$0xf] %vm4398, %v4333
      %4415 = vst.msk [vmem:[#allocation3 + $0x40] sm:$0xf] %vm4398, %v4335
      %4416 = vst.msk [vmem:[#allocation3 + $0x44] sm:$0xf] %vm4398, %v4337
      %4417 = vst.msk [vmem:[#allocation3 + $0x48] sm:$0xf] %vm4398, %v4339
      %4418 = vst.msk [vmem:[#allocation3 + $0x4c] sm:$0xf] %vm4398, %v4341
      %4419 = vst.msk [vmem:[#allocation3 + $0x50] sm:$0xf] %vm4398, %v4343
      %4420 = vst.msk [vmem:[#allocation3 + $0x54] sm:$0xf] %vm4398, %v4345
      %4421 = vst.msk [vmem:[#allocation3 + $0x58] sm:$0xf] %vm4398, %v4347
      %4422 = vst.msk [vmem:[#allocation3 + $0x5c] sm:$0xf] %vm4398, %v4349
      %4423 = vst.msk [vmem:[#allocation3 + $0x60] sm:$0xf] %vm4398, %v4351
      %4424 = vst.msk [vmem:[#allocation3 + $0x64] sm:$0xf] %vm4398, %v4353
      %4425 = vst.msk [vmem:[#allocation3 + $0x68] sm:$0xf] %vm4398, %v4355
      %4426 = vst.msk [vmem:[#allocation3 + $0x6c] sm:$0xf] %vm4398, %v4357
      %4427 = vst.msk [vmem:[#allocation3 + $0x70] sm:$0xf] %vm4398, %v4359
      %4428 = vst.msk [vmem:[#allocation3 + $0x74] sm:$0xf] %vm4398, %v4361
      %4429 = vst.msk [vmem:[#allocation3 + $0x78] sm:$0xf] %vm4398, %v4363
      %4430 = vst.msk [vmem:[#allocation3 + $0x7c] sm:$0xf] %vm4398, %v4365
      %v4431 = vld [vmem:[#allocation3] sm:$0xf]
      %v4432 = vld [vmem:[#allocation3 + $0x4] sm:$0xf]
      %v4433 = vld [vmem:[#allocation3 + $0x8] sm:$0xf]
      %v4434 = vld [vmem:[#allocation3 + $0xc] sm:$0xf]
      %v4435 = vld [vmem:[#allocation3 + $0x10] sm:$0xf]
      %v4436 = vld [vmem:[#allocation3 + $0x14] sm:$0xf]
      %v4437 = vld [vmem:[#allocation3 + $0x18] sm:$0xf]
      %v4438 = vld [vmem:[#allocation3 + $0x1c] sm:$0xf]
      %v4439 = vld [vmem:[#allocation3 + $0x20] sm:$0xf]
      %v4440 = vld [vmem:[#allocation3 + $0x24] sm:$0xf]
      %v4441 = vld [vmem:[#allocation3 + $0x28] sm:$0xf]
      %v4442 = vld [vmem:[#allocation3 + $0x2c] sm:$0xf]
      %v4443 = vld [vmem:[#allocation3 + $0x30] sm:$0xf]
      %v4444 = vld [vmem:[#allocation3 + $0x34] sm:$0xf]
      %v4445 = vld [vmem:[#allocation3 + $0x38] sm:$0xf]
      %v4446 = vld [vmem:[#allocation3 + $0x3c] sm:$0xf]
      %v4447 = vld [vmem:[#allocation3 + $0x40] sm:$0xf]
      %v4448 = vld [vmem:[#allocation3 + $0x44] sm:$0xf]
      %v4449 = vld [vmem:[#allocation3 + $0x48] sm:$0xf]
      %v4450 = vld [vmem:[#allocation3 + $0x4c] sm:$0xf]
      %v4451 = vld [vmem:[#allocation3 + $0x50] sm:$0xf]
      %v4452 = vld [vmem:[#allocation3 + $0x54] sm:$0xf]
      %v4453 = vld [vmem:[#allocation3 + $0x58] sm:$0xf]
      %v4454 = vld [vmem:[#allocation3 + $0x5c] sm:$0xf]
      %v4455 = vld [vmem:[#allocation3 + $0x60] sm:$0xf]
      %v4456 = vld [vmem:[#allocation3 + $0x64] sm:$0xf]
      %v4457 = vld [vmem:[#allocation3 + $0x68] sm:$0xf]
      %v4458 = vld [vmem:[#allocation3 + $0x6c] sm:$0xf]
      %v4459 = vld [vmem:[#allocation3 + $0x70] sm:$0xf]
      %v4460 = vld [vmem:[#allocation3 + $0x74] sm:$0xf]
      %v4461 = vld [vmem:[#allocation3 + $0x78] sm:$0xf]
      %v4462 = vld [vmem:[#allocation3 + $0x7c] sm:$0xf]
      %v4463 = vld [vmem:[%s1] sm:$0xf]
      %v4464 = vld [vmem:[%s1 + $0x4] sm:$0xf]
      %v4465 = vld [vmem:[%s1 + $0x8] sm:$0xf]
      %v4466 = vld [vmem:[%s1 + $0xc] sm:$0xf]
      %v4467 = vld [vmem:[%s1 + $0x10] sm:$0x3]
      %v4500 = vunpack.c.l.b16 %v4431
      %v4501 = vunpack.c.l.b16 %v4432
      %v4502 = vunpack.c.l.b16 %v4433
      %v4503 = vunpack.c.l.b16 %v4434
      %v4504 = vunpack.c.l.b16 %v4435
      %v4505 = vunpack.c.l.b16 %v4436
      %v4506 = vunpack.c.l.b16 %v4437
      %v4507 = vunpack.c.l.b16 %v4438
      %v4508 = vunpack.c.l.b16 %v4439
      %v4509 = vunpack.c.l.b16 %v4440
      %v4510 = vunpack.c.l.b16 %v4441
      %v4511 = vunpack.c.l.b16 %v4442
      %v4512 = vunpack.c.l.b16 %v4443
      %v4513 = vunpack.c.l.b16 %v4444
      %v4514 = vunpack.c.l.b16 %v4445
      %v4515 = vunpack.c.l.b16 %v4446
      %v4516 = vunpack.c.l.b16 %v4447
      %v4517 = vunpack.c.l.b16 %v4448
      %v4518 = vunpack.c.l.b16 %v4449
      %v4519 = vunpack.c.l.b16 %v4450
      %v4520 = vunpack.c.l.b16 %v4451
      %v4521 = vunpack.c.l.b16 %v4452
      %v4522 = vunpack.c.l.b16 %v4453
      %v4523 = vunpack.c.l.b16 %v4454
      %v4524 = vunpack.c.l.b16 %v4455
      %v4525 = vunpack.c.l.b16 %v4456
      %v4526 = vunpack.c.l.b16 %v4457
      %v4527 = vunpack.c.l.b16 %v4458
      %v4528 = vunpack.c.l.b16 %v4459
      %v4529 = vunpack.c.l.b16 %v4460
      %v4530 = vunpack.c.l.b16 %v4461
      %v4531 = vunpack.c.l.b16 %v4462
      %v4532 = vpack.c.b16 %v4501, %v4500
      %v4533 = vpack.c.b16 %v4503, %v4502
      %v4534 = vpack.c.b16 %v4505, %v4504
      %v4535 = vpack.c.b16 %v4507, %v4506
      %v4536 = vpack.c.b16 %v4509, %v4508
      %v4537 = vpack.c.b16 %v4511, %v4510
      %v4538 = vpack.c.b16 %v4513, %v4512
      %v4539 = vpack.c.b16 %v4515, %v4514
      %v4540 = vpack.c.b16 %v4517, %v4516
      %v4541 = vpack.c.b16 %v4519, %v4518
      %v4542 = vpack.c.b16 %v4521, %v4520
      %v4543 = vpack.c.b16 %v4523, %v4522
      %v4544 = vpack.c.b16 %v4525, %v4524
      %v4545 = vpack.c.b16 %v4527, %v4526
      %v4546 = vpack.c.b16 %v4529, %v4528
      %v4547 = vpack.c.b16 %v4531, %v4530
      %v4553 = vunpack.c.l.b16 %v4463
      %v4554 = vunpack.c.l.b16 %v4464
      %v4555 = vunpack.c.l.b16 %v4465
      %v4556 = vunpack.c.l.b16 %v4466
      %v4557 = vunpack.c.l.b16 %v4467
      %v4558 = vpack.c.b16 %v4554, %v4553
      %v4559 = vpack.c.b16 %v4556, %v4555
      %v4560 = vpack.c.b16 %v4557, %v4557
      %vm4563 = vcmask 293888
      %v4565 = vsel %vm4563, %v4532, 0
      %v4568 = vsel %vm4563, %v4533, 0
      %v4571 = vsel %vm4563, %v4534, 0
      %v4574 = vsel %vm4563, %v4535, 0
      %v4577 = vsel %vm4563, %v4536, 0
      %v4580 = vsel %vm4563, %v4537, 0
      %v4583 = vsel %vm4563, %v4538, 0
      %v4586 = vsel %vm4563, %v4539, 0
      %v4589 = vsel %vm4563, %v4540, 0
      %v4592 = vsel %vm4563, %v4541, 0
      %v4595 = vsel %vm4563, %v4542, 0
      %v4598 = vsel %vm4563, %v4543, 0
      %v4601 = vsel %vm4563, %v4544, 0
      %v4604 = vsel %vm4563, %v4545, 0
      %v4607 = vsel %vm4563, %v4546, 0
      %v4610 = vsel %vm4563, %v4547, 0
      %vm4612 = vcmask 1041408
      %v4614 = vsel %vm4612, %v4560, 0
      %4616 = vmatprep.subr.bf16.mxu0 0
      %4617 = vmatpush1.bf16.msra.mxu0 0
      %4618 = vmatprep.subr.bf16.mxu0 0
      %4619 = vmatpush1.bf16.msra.mxu0 0
      %4620 = vmatprep.subr.bf16.mxu0 0
      %4621 = vmatpush1.bf16.msra.mxu0 0
      %4622 = vmatprep.subr.bf16.mxu0 0
      %4623 = vmatpush1.bf16.msra.mxu0 0
      %4624 = vmatprep.subr.bf16.mxu0 0
      %4625 = vmatpush1.bf16.msra.mxu0 0
      %4626 = vmatprep.subr.bf16.mxu0 0
      %4627 = vmatpush1.bf16.msra.mxu0 %v4614
      %4628 = vmatprep.subr.bf16.mxu0 0
      %4629 = vmatpush1.bf16.msra.mxu0 %v4559
      %4630 = vmatprep.subr.bf16.mxu0 0
      %4631 = vmatpush1.bf16.msra.mxu0 %v4558
      %4632 = vmatprep.subr.bf16.mxu0 0
      %4633 = vmatpush2.bf16.msra.mxu0 0
      %4634 = vmatprep.subr.bf16.mxu0 0
      %4635 = vmatpush2.bf16.msra.mxu0 0
      %4636 = vmatprep.subr.bf16.mxu0 0
      %4637 = vmatpush2.bf16.msra.mxu0 0
      %4638 = vmatprep.subr.bf16.mxu0 0
      %4639 = vmatpush2.bf16.msra.mxu0 0
      %4640 = vmatprep.subr.bf16.mxu0 0
      %4641 = vmatpush2.bf16.msra.mxu0 0
      %4642 = vmatprep.subr.bf16.mxu0 0
      %4643 = vmatpush2.bf16.msra.mxu0 0
      %4644 = vmatprep.subr.bf16.mxu0 0
      %4645 = vmatpush2.bf16.msra.mxu0 0
      %4646 = vmatprep.subr.bf16.mxu0 0
      %4647 = vmatpush2.bf16.msra.mxu0 0
      %4648 = vmatprep.mubr.bf16.mxu0 0
      %4649 = vmatmul.mubr.bf16.gmra.mxu0 %v4565
      %v4650 = vpop.f32.mrf.mxu0
      %v4651 = vadd.f32 0.0, %v4650
      %v4652 = vpop.f32.mrf.mxu0
      %v4653 = vpop.f32.mrf.mxu0
      %v4654 = vadd.f32 0.0, %v4653
      %v4655 = vpop.f32.mrf.mxu0
      %4656 = vmatprep.mubr.bf16.mxu0 0
      %4657 = vmatmul.mubr.bf16.gmra.mxu0 %v4568
      %v4658 = vpop.f32.mrf.mxu0
      %v4659 = vadd.f32 0.0, %v4658
      %v4660 = vpop.f32.mrf.mxu0
      %v4661 = vpop.f32.mrf.mxu0
      %v4662 = vadd.f32 0.0, %v4661
      %v4663 = vpop.f32.mrf.mxu0
      %4664 = vmatprep.mubr.bf16.mxu0 0
      %4665 = vmatmul.mubr.bf16.gmra.mxu0 %v4571
      %v4666 = vpop.f32.mrf.mxu0
      %v4667 = vadd.f32 0.0, %v4666
      %v4668 = vpop.f32.mrf.mxu0
      %v4669 = vpop.f32.mrf.mxu0
      %v4670 = vadd.f32 0.0, %v4669
      %v4671 = vpop.f32.mrf.mxu0
      %4672 = vmatprep.mubr.bf16.mxu0 0
      %4673 = vmatmul.mubr.bf16.gmra.mxu0 %v4574
      %v4674 = vpop.f32.mrf.mxu0
      %v4675 = vadd.f32 0.0, %v4674
      %v4676 = vpop.f32.mrf.mxu0
      %v4677 = vpop.f32.mrf.mxu0
      %v4678 = vadd.f32 0.0, %v4677
      %v4679 = vpop.f32.mrf.mxu0
      %4680 = vmatprep.mubr.bf16.mxu0 0
      %4681 = vmatmul.mubr.bf16.gmra.mxu0 %v4577
      %v4682 = vpop.f32.mrf.mxu0
      %v4683 = vadd.f32 0.0, %v4682
      %v4684 = vpop.f32.mrf.mxu0
      %v4685 = vpop.f32.mrf.mxu0
      %v4686 = vadd.f32 0.0, %v4685
      %v4687 = vpop.f32.mrf.mxu0
      %4688 = vmatprep.mubr.bf16.mxu0 0
      %4689 = vmatmul.mubr.bf16.gmra.mxu0 %v4580
      %v4690 = vpop.f32.mrf.mxu0
      %v4691 = vadd.f32 0.0, %v4690
      %v4692 = vpop.f32.mrf.mxu0
      %v4693 = vpop.f32.mrf.mxu0
      %v4694 = vadd.f32 0.0, %v4693
      %v4695 = vpop.f32.mrf.mxu0
      %4696 = vmatprep.mubr.bf16.mxu0 0
      %4697 = vmatmul.mubr.bf16.gmra.mxu0 %v4583
      %v4698 = vpop.f32.mrf.mxu0
      %v4699 = vadd.f32 0.0, %v4698
      %v4700 = vpop.f32.mrf.mxu0
      %v4701 = vpop.f32.mrf.mxu0
      %v4702 = vadd.f32 0.0, %v4701
      %v4703 = vpop.f32.mrf.mxu0
      %4704 = vmatprep.mubr.bf16.mxu0 0
      %4705 = vmatmul.mubr.bf16.gmra.mxu0 %v4586
      %v4706 = vpop.f32.mrf.mxu0
      %v4707 = vadd.f32 0.0, %v4706
      %v4708 = vpop.f32.mrf.mxu0
      %v4709 = vpop.f32.mrf.mxu0
      %v4710 = vadd.f32 0.0, %v4709
      %v4711 = vpop.f32.mrf.mxu0
      %4712 = vmatprep.mubr.bf16.mxu0 0
      %4713 = vmatmul.mubr.bf16.gmra.mxu0 %v4589
      %v4714 = vpop.f32.mrf.mxu0
      %v4715 = vadd.f32 0.0, %v4714
      %v4716 = vpop.f32.mrf.mxu0
      %v4717 = vpop.f32.mrf.mxu0
      %v4718 = vadd.f32 0.0, %v4717
      %v4719 = vpop.f32.mrf.mxu0
      %4720 = vmatprep.mubr.bf16.mxu0 0
      %4721 = vmatmul.mubr.bf16.gmra.mxu0 %v4592
      %v4722 = vpop.f32.mrf.mxu0
      %v4723 = vadd.f32 0.0, %v4722
      %v4724 = vpop.f32.mrf.mxu0
      %v4725 = vpop.f32.mrf.mxu0
      %v4726 = vadd.f32 0.0, %v4725
      %v4727 = vpop.f32.mrf.mxu0
      %4728 = vmatprep.mubr.bf16.mxu0 0
      %4729 = vmatmul.mubr.bf16.gmra.mxu0 %v4595
      %v4730 = vpop.f32.mrf.mxu0
      %v4731 = vadd.f32 0.0, %v4730
      %v4732 = vpop.f32.mrf.mxu0
      %v4733 = vpop.f32.mrf.mxu0
      %v4734 = vadd.f32 0.0, %v4733
      %v4735 = vpop.f32.mrf.mxu0
      %4736 = vmatprep.mubr.bf16.mxu0 0
      %4737 = vmatmul.mubr.bf16.gmra.mxu0 %v4598
      %v4738 = vpop.f32.mrf.mxu0
      %v4739 = vadd.f32 0.0, %v4738
      %v4740 = vpop.f32.mrf.mxu0
      %v4741 = vpop.f32.mrf.mxu0
      %v4742 = vadd.f32 0.0, %v4741
      %v4743 = vpop.f32.mrf.mxu0
      %4744 = vmatprep.mubr.bf16.mxu0 0
      %4745 = vmatmul.mubr.bf16.gmra.mxu0 %v4601
      %v4746 = vpop.f32.mrf.mxu0
      %v4747 = vadd.f32 0.0, %v4746
      %v4748 = vpop.f32.mrf.mxu0
      %v4749 = vpop.f32.mrf.mxu0
      %v4750 = vadd.f32 0.0, %v4749
      %v4751 = vpop.f32.mrf.mxu0
      %4752 = vmatprep.mubr.bf16.mxu0 0
      %4753 = vmatmul.mubr.bf16.gmra.mxu0 %v4604
      %v4754 = vpop.f32.mrf.mxu0
      %v4755 = vadd.f32 0.0, %v4754
      %v4756 = vpop.f32.mrf.mxu0
      %v4757 = vpop.f32.mrf.mxu0
      %v4758 = vadd.f32 0.0, %v4757
      %v4759 = vpop.f32.mrf.mxu0
      %4760 = vmatprep.mubr.bf16.mxu0 0
      %4761 = vmatmul.mubr.bf16.gmra.mxu0 %v4607
      %v4762 = vpop.f32.mrf.mxu0
      %v4763 = vadd.f32 0.0, %v4762
      %v4764 = vpop.f32.mrf.mxu0
      %v4765 = vpop.f32.mrf.mxu0
      %v4766 = vadd.f32 0.0, %v4765
      %v4767 = vpop.f32.mrf.mxu0
      %4768 = vmatprep.mubr.bf16.mxu0 0
      %4769 = vmatmul.mubr.bf16.gmra.mxu0 %v4610
      %v4770 = vpop.f32.mrf.mxu0
      %v4771 = vadd.f32 0.0, %v4770
      %v4772 = vpop.f32.mrf.mxu0
      %v4773 = vpop.f32.mrf.mxu0
      %v4774 = vadd.f32 0.0, %v4773
      %v4775 = vpop.f32.mrf.mxu0
      %4776 = vdwg.mxu0
      %v4777 = vld [vmem:[%s2] sm:$0x1]
      %v4779 = vlaneseq
      %v4780 = vshrl.u32 %v4779, 7
      %v4781 = vsub.s32 0, %v4780
      %v4782 = vrot.slane %v4777, %v4781
      %v4784 = vmul.f32 %v4651, %v4782
      %v4785 = vmul.f32 %v4654, %v4782
      %v4786 = vmul.f32 %v4659, %v4782
      %v4787 = vmul.f32 %v4662, %v4782
      %v4788 = vmul.f32 %v4667, %v4782
      %v4789 = vmul.f32 %v4670, %v4782
      %v4790 = vmul.f32 %v4675, %v4782
      %v4791 = vmul.f32 %v4678, %v4782
      %v4792 = vmul.f32 %v4683, %v4782
      %v4793 = vmul.f32 %v4686, %v4782
      %v4794 = vmul.f32 %v4691, %v4782
      %v4795 = vmul.f32 %v4694, %v4782
      %v4796 = vmul.f32 %v4699, %v4782
      %v4797 = vmul.f32 %v4702, %v4782
      %v4798 = vmul.f32 %v4707, %v4782
      %v4799 = vmul.f32 %v4710, %v4782
      %v4800 = vmul.f32 %v4715, %v4782
      %v4801 = vmul.f32 %v4718, %v4782
      %v4802 = vmul.f32 %v4723, %v4782
      %v4803 = vmul.f32 %v4726, %v4782
      %v4804 = vmul.f32 %v4731, %v4782
      %v4805 = vmul.f32 %v4734, %v4782
      %v4806 = vmul.f32 %v4739, %v4782
      %v4807 = vmul.f32 %v4742, %v4782
      %v4808 = vmul.f32 %v4747, %v4782
      %v4809 = vmul.f32 %v4750, %v4782
      %v4810 = vmul.f32 %v4755, %v4782
      %v4811 = vmul.f32 %v4758, %v4782
      %v4812 = vmul.f32 %v4763, %v4782
      %v4813 = vmul.f32 %v4766, %v4782
      %v4814 = vmul.f32 %v4771, %v4782
      %v4815 = vmul.f32 %v4774, %v4782
      %v4816 = vld [vmem:[%s3] sm:$0x1]
      %v4818 = vlaneseq
      %v4819 = vshrl.u32 %v4818, 7
      %v4820 = vsub.s32 0, %v4819
      %v4821 = vrot.slane %v4816, %v4820
      %v4823 = vadd.f32 %v4784, %v4821
      %v4824 = vadd.f32 %v4785, %v4821
      %v4825 = vadd.f32 %v4786, %v4821
      %v4826 = vadd.f32 %v4787, %v4821
      %v4827 = vadd.f32 %v4788, %v4821
      %v4828 = vadd.f32 %v4789, %v4821
      %v4829 = vadd.f32 %v4790, %v4821
      %v4830 = vadd.f32 %v4791, %v4821
      %v4831 = vadd.f32 %v4792, %v4821
      %v4832 = vadd.f32 %v4793, %v4821
      %v4833 = vadd.f32 %v4794, %v4821
      %v4834 = vadd.f32 %v4795, %v4821
      %v4835 = vadd.f32 %v4796, %v4821
      %v4836 = vadd.f32 %v4797, %v4821
      %v4837 = vadd.f32 %v4798, %v4821
      %v4838 = vadd.f32 %v4799, %v4821
      %v4839 = vadd.f32 %v4800, %v4821
      %v4840 = vadd.f32 %v4801, %v4821
      %v4841 = vadd.f32 %v4802, %v4821
      %v4842 = vadd.f32 %v4803, %v4821
      %v4843 = vadd.f32 %v4804, %v4821
      %v4844 = vadd.f32 %v4805, %v4821
      %v4845 = vadd.f32 %v4806, %v4821
      %v4846 = vadd.f32 %v4807, %v4821
      %v4847 = vadd.f32 %v4808, %v4821
      %v4848 = vadd.f32 %v4809, %v4821
      %v4849 = vadd.f32 %v4810, %v4821
      %v4850 = vadd.f32 %v4811, %v4821
      %v4851 = vadd.f32 %v4812, %v4821
      %v4852 = vadd.f32 %v4813, %v4821
      %v4853 = vadd.f32 %v4814, %v4821
      %v4854 = vadd.f32 %v4815, %v4821
      %v4855 = vmax.f32 %v4823, 0.0
      %v4856 = vmax.f32 %v4824, 0.0
      %v4857 = vmax.f32 %v4825, 0.0
      %v4858 = vmax.f32 %v4826, 0.0
      %v4859 = vmax.f32 %v4827, 0.0
      %v4860 = vmax.f32 %v4828, 0.0
      %v4861 = vmax.f32 %v4829, 0.0
      %v4862 = vmax.f32 %v4830, 0.0
      %v4863 = vmax.f32 %v4831, 0.0
      %v4864 = vmax.f32 %v4832, 0.0
      %v4865 = vmax.f32 %v4833, 0.0
      %v4866 = vmax.f32 %v4834, 0.0
      %v4867 = vmax.f32 %v4835, 0.0
      %v4868 = vmax.f32 %v4836, 0.0
      %v4869 = vmax.f32 %v4837, 0.0
      %v4870 = vmax.f32 %v4838, 0.0
      %v4871 = vmax.f32 %v4839, 0.0
      %v4872 = vmax.f32 %v4840, 0.0
      %v4873 = vmax.f32 %v4841, 0.0
      %v4874 = vmax.f32 %v4842, 0.0
      %v4875 = vmax.f32 %v4843, 0.0
      %v4876 = vmax.f32 %v4844, 0.0
      %v4877 = vmax.f32 %v4845, 0.0
      %v4878 = vmax.f32 %v4846, 0.0
      %v4879 = vmax.f32 %v4847, 0.0
      %v4880 = vmax.f32 %v4848, 0.0
      %v4881 = vmax.f32 %v4849, 0.0
      %v4882 = vmax.f32 %v4850, 0.0
      %v4883 = vmax.f32 %v4851, 0.0
      %v4884 = vmax.f32 %v4852, 0.0
      %v4885 = vmax.f32 %v4853, 0.0
      %v4886 = vmax.f32 %v4854, 0.0
      %vm4887 = vcmask 60416
      %4888 = vst.msk [vmem:[#allocation4] sm:$0xf] %vm4887, 0
      %4889 = vst.msk [vmem:[#allocation4 + $0x4] sm:$0xf] %vm4887, 0
      %4890 = vst.msk [vmem:[#allocation4 + $0x8] sm:$0xf] %vm4887, 0
      %4891 = vst.msk [vmem:[#allocation4 + $0xc] sm:$0xf] %vm4887, 0
      %4892 = vst.msk [vmem:[#allocation4 + $0x10] sm:$0xf] %vm4887, 0
      %4893 = vst.msk [vmem:[#allocation4 + $0x14] sm:$0xf] %vm4887, 0
      %s4894 = scalar_lea.vmem [#allocation4], 408
      %4895 = vst.msk [vmem:[%s4894] sm:$0xf] %vm4887, 0
      %4896 = vst.msk [vmem:[%s4894 + $0x4] sm:$0xf] %vm4887, 0
      %4897 = vst.msk [vmem:[%s4894 + $0x8] sm:$0xf] %vm4887, 0
      %4898 = vst.msk [vmem:[%s4894 + $0xc] sm:$0xf] %vm4887, 0
      %4899 = vst.msk [vmem:[%s4894 + $0x10] sm:$0xf] %vm4887, 0
      %4900 = vst.msk [vmem:[%s4894 + $0x14] sm:$0xf] %vm4887, 0
      %vm4901 = vcmask 60419
      %vm4902 = vmand %vm4901, %vm335
      %v4903 = vld [vmem:[#allocation4 + $0x4] sm:$0x8]
      %v4904 = vsel %vm4902, 0, %v4903
      %4905 = vst [vmem:[#allocation4 + $0x4] sm:$0x8] %v4904
      %v4906 = vld [vmem:[#allocation4 + $0x1c] sm:$0x8]
      %v4907 = vsel %vm4902, 0, %v4906
      %4908 = vst [vmem:[#allocation4 + $0x1c] sm:$0x8] %v4907
      %v4909 = vld [vmem:[#allocation4 + $0x34] sm:$0x8]
      %v4910 = vsel %vm4902, 0, %v4909
      %4911 = vst [vmem:[#allocation4 + $0x34] sm:$0x8] %v4910
      %v4912 = vld [vmem:[#allocation4 + $0x4c] sm:$0x8]
      %v4913 = vsel %vm4902, 0, %v4912
      %4914 = vst [vmem:[#allocation4 + $0x4c] sm:$0x8] %v4913
      %v4915 = vld [vmem:[#allocation4 + $0x64] sm:$0x8]
      %v4916 = vsel %vm4902, 0, %v4915
      %4917 = vst [vmem:[#allocation4 + $0x64] sm:$0x8] %v4916
      %v4918 = vld [vmem:[#allocation4 + $0x7c] sm:$0x8]
      %v4919 = vsel %vm4902, 0, %v4918
      %4920 = vst [vmem:[#allocation4 + $0x7c] sm:$0x8] %v4919
      %v4921 = vld [vmem:[#allocation4 + $0x94] sm:$0x8]
      %v4922 = vsel %vm4902, 0, %v4921
      %4923 = vst [vmem:[#allocation4 + $0x94] sm:$0x8] %v4922
      %v4924 = vld [vmem:[#allocation4 + $0xac] sm:$0x8]
      %v4925 = vsel %vm4902, 0, %v4924
      %4926 = vst [vmem:[#allocation4 + $0xac] sm:$0x8] %v4925
      %v4927 = vld [vmem:[#allocation4 + $0xc4] sm:$0x8]
      %v4928 = vsel %vm4902, 0, %v4927
      %4929 = vst [vmem:[#allocation4 + $0xc4] sm:$0x8] %v4928
      %v4930 = vld [vmem:[#allocation4 + $0xdc] sm:$0x8]
      %v4931 = vsel %vm4902, 0, %v4930
      %4932 = vst [vmem:[#allocation4 + $0xdc] sm:$0x8] %v4931
      %v4933 = vld [vmem:[#allocation4 + $0xf4] sm:$0x8]
      %v4934 = vsel %vm4902, 0, %v4933
      %4935 = vst [vmem:[#allocation4 + $0xf4] sm:$0x8] %v4934
      %v4936 = vld [vmem:[#allocation4 + $0x10c] sm:$0x8]
      %v4937 = vsel %vm4902, 0, %v4936
      %4938 = vst [vmem:[#allocation4 + $0x10c] sm:$0x8] %v4937
      %v4939 = vld [vmem:[#allocation4 + $0x124] sm:$0x8]
      %v4940 = vsel %vm4902, 0, %v4939
      %4941 = vst [vmem:[#allocation4 + $0x124] sm:$0x8] %v4940
      %v4942 = vld [vmem:[#allocation4 + $0x13c] sm:$0x8]
      %v4943 = vsel %vm4902, 0, %v4942
      %4944 = vst [vmem:[#allocation4 + $0x13c] sm:$0x8] %v4943
      %v4945 = vld [vmem:[#allocation4 + $0x154] sm:$0x8]
      %v4946 = vsel %vm4902, 0, %v4945
      %4947 = vst [vmem:[#allocation4 + $0x154] sm:$0x8] %v4946
      %v4948 = vld [vmem:[#allocation4 + $0x16c] sm:$0x8]
      %v4949 = vsel %vm4902, 0, %v4948
      %4950 = vst [vmem:[#allocation4 + $0x16c] sm:$0x8] %v4949
      %v4951 = vld [vmem:[#allocation4 + $0x184] sm:$0x8]
      %v4952 = vsel %vm4902, 0, %v4951
      %4953 = vst [vmem:[#allocation4 + $0x184] sm:$0x8] %v4952
      %v4954 = vld [vmem:[#allocation4 + $0x19c] sm:$0x8]
      %v4955 = vsel %vm4902, 0, %v4954
      %4956 = vst [vmem:[#allocation4 + $0x19c] sm:$0x8] %v4955
      %vm4957 = vcmask 57344
      %vm4958 = vmand %vm4957, %vm392
      %v4959 = vld [vmem:[#allocation4 + $0x10] sm:$0x1]
      %v4960 = vsel %vm4958, 0, %v4959
      %4961 = vst [vmem:[#allocation4 + $0x10] sm:$0x1] %v4960
      %v4962 = vld [vmem:[#allocation4 + $0x28] sm:$0x1]
      %v4963 = vsel %vm4958, 0, %v4962
      %4964 = vst [vmem:[#allocation4 + $0x28] sm:$0x1] %v4963
      %v4965 = vld [vmem:[#allocation4 + $0x40] sm:$0x1]
      %v4966 = vsel %vm4958, 0, %v4965
      %4967 = vst [vmem:[#allocation4 + $0x40] sm:$0x1] %v4966
      %v4968 = vld [vmem:[#allocation4 + $0x58] sm:$0x1]
      %v4969 = vsel %vm4958, 0, %v4968
      %4970 = vst [vmem:[#allocation4 + $0x58] sm:$0x1] %v4969
      %v4971 = vld [vmem:[#allocation4 + $0x70] sm:$0x1]
      %v4972 = vsel %vm4958, 0, %v4971
      %4973 = vst [vmem:[#allocation4 + $0x70] sm:$0x1] %v4972
      %v4974 = vld [vmem:[#allocation4 + $0x88] sm:$0x1]
      %v4975 = vsel %vm4958, 0, %v4974
      %4976 = vst [vmem:[#allocation4 + $0x88] sm:$0x1] %v4975
      %v4977 = vld [vmem:[#allocation4 + $0xa0] sm:$0x1]
      %v4978 = vsel %vm4958, 0, %v4977
      %4979 = vst [vmem:[#allocation4 + $0xa0] sm:$0x1] %v4978
      %v4980 = vld [vmem:[#allocation4 + $0xb8] sm:$0x1]
      %v4981 = vsel %vm4958, 0, %v4980
      %4982 = vst [vmem:[#allocation4 + $0xb8] sm:$0x1] %v4981
      %v4983 = vld [vmem:[#allocation4 + $0xd0] sm:$0x1]
      %v4984 = vsel %vm4958, 0, %v4983
      %4985 = vst [vmem:[#allocation4 + $0xd0] sm:$0x1] %v4984
      %v4986 = vld [vmem:[#allocation4 + $0xe8] sm:$0x1]
      %v4987 = vsel %vm4958, 0, %v4986
      %4988 = vst [vmem:[#allocation4 + $0xe8] sm:$0x1] %v4987
      %v4989 = vld [vmem:[#allocation4 + $0x100] sm:$0x1]
      %v4990 = vsel %vm4958, 0, %v4989
      %4991 = vst [vmem:[#allocation4 + $0x100] sm:$0x1] %v4990
      %v4992 = vld [vmem:[#allocation4 + $0x118] sm:$0x1]
      %v4993 = vsel %vm4958, 0, %v4992
      %4994 = vst [vmem:[#allocation4 + $0x118] sm:$0x1] %v4993
      %v4995 = vld [vmem:[#allocation4 + $0x130] sm:$0x1]
      %v4996 = vsel %vm4958, 0, %v4995
      %4997 = vst [vmem:[#allocation4 + $0x130] sm:$0x1] %v4996
      %v4998 = vld [vmem:[#allocation4 + $0x148] sm:$0x1]
      %v4999 = vsel %vm4958, 0, %v4998
      %5000 = vst [vmem:[#allocation4 + $0x148] sm:$0x1] %v4999
      %v5001 = vld [vmem:[#allocation4 + $0x160] sm:$0x1]
      %v5002 = vsel %vm4958, 0, %v5001
      %5003 = vst [vmem:[#allocation4 + $0x160] sm:$0x1] %v5002
      %v5004 = vld [vmem:[#allocation4 + $0x178] sm:$0x1]
      %v5005 = vsel %vm4958, 0, %v5004
      %5006 = vst [vmem:[#allocation4 + $0x178] sm:$0x1] %v5005
      %v5007 = vld [vmem:[#allocation4 + $0x190] sm:$0x1]
      %v5008 = vsel %vm4958, 0, %v5007
      %5009 = vst [vmem:[#allocation4 + $0x190] sm:$0x1] %v5008
      %v5010 = vld [vmem:[#allocation4 + $0x1a8] sm:$0x1]
      %v5011 = vsel %vm4958, 0, %v5010
      %5012 = vst [vmem:[#allocation4 + $0x1a8] sm:$0x1] %v5011
      %v5013 = vpack.c.bf16 %v4856, %v4855
      %v5014 = vpack.c.bf16 %v4858, %v4857
      %v5015 = vpack.c.bf16 %v4860, %v4859
      %v5016 = vpack.c.bf16 %v4862, %v4861
      %v5017 = vpack.c.bf16 %v4864, %v4863
      %v5018 = vpack.c.bf16 %v4866, %v4865
      %v5019 = vpack.c.bf16 %v4868, %v4867
      %v5020 = vpack.c.bf16 %v4870, %v4869
      %v5021 = vpack.c.bf16 %v4872, %v4871
      %v5022 = vpack.c.bf16 %v4874, %v4873
      %v5023 = vpack.c.bf16 %v4876, %v4875
      %v5024 = vpack.c.bf16 %v4878, %v4877
      %v5025 = vpack.c.bf16 %v4880, %v4879
      %v5026 = vpack.c.bf16 %v4882, %v4881
      %v5027 = vpack.c.bf16 %v4884, %v4883
      %v5028 = vpack.c.bf16 %v4886, %v4885
      %v5045 = vunpack.c.l.b16 %v5013
      %v5046 = vunpack.c.h.b16 %v5013
      %v5047 = vunpack.c.l.b16 %v5014
      %v5048 = vunpack.c.h.b16 %v5014
      %v5049 = vunpack.c.l.b16 %v5015
      %v5050 = vunpack.c.h.b16 %v5015
      %v5051 = vunpack.c.l.b16 %v5016
      %v5052 = vunpack.c.h.b16 %v5016
      %v5053 = vunpack.c.l.b16 %v5017
      %v5054 = vunpack.c.h.b16 %v5017
      %v5055 = vunpack.c.l.b16 %v5018
      %v5056 = vunpack.c.h.b16 %v5018
      %v5057 = vunpack.c.l.b16 %v5019
      %v5058 = vunpack.c.h.b16 %v5019
      %v5059 = vunpack.c.l.b16 %v5020
      %v5060 = vunpack.c.h.b16 %v5020
      %v5061 = vunpack.c.l.b16 %v5021
      %v5062 = vunpack.c.h.b16 %v5021
      %v5063 = vunpack.c.l.b16 %v5022
      %v5064 = vunpack.c.h.b16 %v5022
      %v5065 = vunpack.c.l.b16 %v5023
      %v5066 = vunpack.c.h.b16 %v5023
      %v5067 = vunpack.c.l.b16 %v5024
      %v5068 = vunpack.c.h.b16 %v5024
      %v5069 = vunpack.c.l.b16 %v5025
      %v5070 = vunpack.c.h.b16 %v5025
      %v5071 = vunpack.c.l.b16 %v5026
      %v5072 = vunpack.c.h.b16 %v5026
      %v5073 = vunpack.c.l.b16 %v5027
      %v5074 = vunpack.c.h.b16 %v5027
      %v5075 = vunpack.c.l.b16 %v5028
      %v5076 = vunpack.c.h.b16 %v5028
      %v5077 = vpack.c.b16 %v5045, %v5045
      %v5078 = vpack.c.b16 %v5046, %v5046
      %v5079 = vpack.c.b16 %v5047, %v5047
      %v5080 = vpack.c.b16 %v5048, %v5048
      %v5081 = vpack.c.b16 %v5049, %v5049
      %v5082 = vpack.c.b16 %v5050, %v5050
      %v5083 = vpack.c.b16 %v5051, %v5051
      %v5084 = vpack.c.b16 %v5052, %v5052
      %v5085 = vpack.c.b16 %v5053, %v5053
      %v5086 = vpack.c.b16 %v5054, %v5054
      %v5087 = vpack.c.b16 %v5055, %v5055
      %v5088 = vpack.c.b16 %v5056, %v5056
      %v5089 = vpack.c.b16 %v5057, %v5057
      %v5090 = vpack.c.b16 %v5058, %v5058
      %v5091 = vpack.c.b16 %v5059, %v5059
      %v5092 = vpack.c.b16 %v5060, %v5060
      %v5093 = vpack.c.b16 %v5061, %v5061
      %v5094 = vpack.c.b16 %v5062, %v5062
      %v5095 = vpack.c.b16 %v5063, %v5063
      %v5096 = vpack.c.b16 %v5064, %v5064
      %v5097 = vpack.c.b16 %v5065, %v5065
      %v5098 = vpack.c.b16 %v5066, %v5066
      %v5099 = vpack.c.b16 %v5067, %v5067
      %v5100 = vpack.c.b16 %v5068, %v5068
      %v5101 = vpack.c.b16 %v5069, %v5069
      %v5102 = vpack.c.b16 %v5070, %v5070
      %v5103 = vpack.c.b16 %v5071, %v5071
      %v5104 = vpack.c.b16 %v5072, %v5072
      %v5105 = vpack.c.b16 %v5073, %v5073
      %v5106 = vpack.c.b16 %v5074, %v5074
      %v5107 = vpack.c.b16 %v5075, %v5075
      %v5108 = vpack.c.b16 %v5076, %v5076
      %s5141 = scalar_lea.vmem [#allocation4], 24
      %5142 = vst.msk [vmem:[%s5141 + $0x8] sm:$0xf] %vm4887, %v5077
      %5143 = vst.msk [vmem:[%s5141 + $0xc] sm:$0xf] %vm4887, %v5078
      %5144 = vst.msk [vmem:[%s5141 + $0x20] sm:$0xf] %vm4887, %v5079
      %5145 = vst.msk [vmem:[%s5141 + $0x24] sm:$0xf] %vm4887, %v5080
      %5146 = vst.msk [vmem:[%s5141 + $0x38] sm:$0xf] %vm4887, %v5081
      %5147 = vst.msk [vmem:[%s5141 + $0x3c] sm:$0xf] %vm4887, %v5082
      %5148 = vst.msk [vmem:[%s5141 + $0x50] sm:$0xf] %vm4887, %v5083
      %5149 = vst.msk [vmem:[%s5141 + $0x54] sm:$0xf] %vm4887, %v5084
      %5150 = vst.msk [vmem:[%s5141 + $0x68] sm:$0xf] %vm4887, %v5085
      %5151 = vst.msk [vmem:[%s5141 + $0x6c] sm:$0xf] %vm4887, %v5086
      %5152 = vst.msk [vmem:[%s5141 + $0x80] sm:$0xf] %vm4887, %v5087
      %5153 = vst.msk [vmem:[%s5141 + $0x84] sm:$0xf] %vm4887, %v5088
      %5154 = vst.msk [vmem:[%s5141 + $0x98] sm:$0xf] %vm4887, %v5089
      %5155 = vst.msk [vmem:[%s5141 + $0x9c] sm:$0xf] %vm4887, %v5090
      %5156 = vst.msk [vmem:[%s5141 + $0xb0] sm:$0xf] %vm4887, %v5091
      %5157 = vst.msk [vmem:[%s5141 + $0xb4] sm:$0xf] %vm4887, %v5092
      %5158 = vst.msk [vmem:[%s5141 + $0xc8] sm:$0xf] %vm4887, %v5093
      %5159 = vst.msk [vmem:[%s5141 + $0xcc] sm:$0xf] %vm4887, %v5094
      %5160 = vst.msk [vmem:[%s5141 + $0xe0] sm:$0xf] %vm4887, %v5095
      %5161 = vst.msk [vmem:[%s5141 + $0xe4] sm:$0xf] %vm4887, %v5096
      %5162 = vst.msk [vmem:[%s5141 + $0xf8] sm:$0xf] %vm4887, %v5097
      %5163 = vst.msk [vmem:[%s5141 + $0xfc] sm:$0xf] %vm4887, %v5098
      %5164 = vst.msk [vmem:[%s5141 + $0x110] sm:$0xf] %vm4887, %v5099
      %5165 = vst.msk [vmem:[%s5141 + $0x114] sm:$0xf] %vm4887, %v5100
      %5166 = vst.msk [vmem:[%s5141 + $0x128] sm:$0xf] %vm4887, %v5101
      %5167 = vst.msk [vmem:[%s5141 + $0x12c] sm:$0xf] %vm4887, %v5102
      %5168 = vst.msk [vmem:[%s5141 + $0x140] sm:$0xf] %vm4887, %v5103
      %5169 = vst.msk [vmem:[%s5141 + $0x144] sm:$0xf] %vm4887, %v5104
      %5170 = vst.msk [vmem:[%s5141 + $0x158] sm:$0xf] %vm4887, %v5105
      %5171 = vst.msk [vmem:[%s5141 + $0x15c] sm:$0xf] %vm4887, %v5106
      %5172 = vst.msk [vmem:[%s5141 + $0x170] sm:$0xf] %vm4887, %v5107
      %5173 = vst.msk [vmem:[%s5141 + $0x174] sm:$0xf] %vm4887, %v5108
      %v5174 = vld [vmem:[#allocation4 + $0x4] sm:$0x8]
      %v5175 = vld [vmem:[#allocation4 + $0x8] sm:$0xf]
      %v5176 = vld [vmem:[#allocation4 + $0xc] sm:$0xf]
      %v5177 = vld [vmem:[#allocation4 + $0x1c] sm:$0x8]
      %v5178 = vld [vmem:[#allocation4 + $0x20] sm:$0xf]
      %v5179 = vld [vmem:[#allocation4 + $0x24] sm:$0xf]
      %v5180 = vld [vmem:[#allocation4 + $0x34] sm:$0x8]
      %v5181 = vld [vmem:[#allocation4 + $0x38] sm:$0xf]
      %v5182 = vld [vmem:[#allocation4 + $0x3c] sm:$0xf]
      %v5183 = vld [vmem:[#allocation4 + $0x4c] sm:$0x8]
      %v5184 = vld [vmem:[#allocation4 + $0x50] sm:$0xf]
      %v5185 = vld [vmem:[#allocation4 + $0x54] sm:$0xf]
      %v5186 = vld [vmem:[#allocation4 + $0x64] sm:$0x8]
      %v5187 = vld [vmem:[#allocation4 + $0x68] sm:$0xf]
      %v5188 = vld [vmem:[#allocation4 + $0x6c] sm:$0xf]
      %v5189 = vld [vmem:[#allocation4 + $0x7c] sm:$0x8]
      %v5190 = vld [vmem:[#allocation4 + $0x80] sm:$0xf]
      %v5191 = vld [vmem:[#allocation4 + $0x84] sm:$0xf]
      %v5192 = vld [vmem:[#allocation4 + $0x94] sm:$0x8]
      %v5193 = vld [vmem:[#allocation4 + $0x98] sm:$0xf]
      %v5194 = vld [vmem:[#allocation4 + $0x9c] sm:$0xf]
      %v5195 = vld [vmem:[#allocation4 + $0xac] sm:$0x8]
      %v5196 = vld [vmem:[#allocation4 + $0xb0] sm:$0xf]
      %v5197 = vld [vmem:[#allocation4 + $0xb4] sm:$0xf]
      %v5198 = vld [vmem:[#allocation4 + $0xc4] sm:$0x8]
      %v5199 = vld [vmem:[#allocation4 + $0xc8] sm:$0xf]
      %v5200 = vld [vmem:[#allocation4 + $0xcc] sm:$0xf]
      %v5201 = vld [vmem:[#allocation4 + $0xdc] sm:$0x8]
      %v5202 = vld [vmem:[#allocation4 + $0xe0] sm:$0xf]
      %v5203 = vld [vmem:[#allocation4 + $0xe4] sm:$0xf]
      %v5204 = vld [vmem:[#allocation4 + $0xf4] sm:$0x8]
      %v5205 = vld [vmem:[#allocation4 + $0xf8] sm:$0xf]
      %v5206 = vld [vmem:[#allocation4 + $0xfc] sm:$0xf]
      %v5207 = vld [vmem:[#allocation4 + $0x10c] sm:$0x8]
      %v5208 = vld [vmem:[#allocation4 + $0x110] sm:$0xf]
      %v5209 = vld [vmem:[#allocation4 + $0x114] sm:$0xf]
      %v5210 = vld [vmem:[#allocation4 + $0x124] sm:$0x8]
      %v5211 = vld [vmem:[#allocation4 + $0x128] sm:$0xf]
      %v5212 = vld [vmem:[#allocation4 + $0x12c] sm:$0xf]
      %v5213 = vld [vmem:[#allocation4 + $0x13c] sm:$0x8]
      %v5214 = vld [vmem:[#allocation4 + $0x140] sm:$0xf]
      %v5215 = vld [vmem:[#allocation4 + $0x144] sm:$0xf]
      %v5216 = vld [vmem:[#allocation4 + $0x154] sm:$0x8]
      %v5217 = vld [vmem:[#allocation4 + $0x158] sm:$0xf]
      %v5218 = vld [vmem:[#allocation4 + $0x15c] sm:$0xf]
      %v5219 = vld [vmem:[#allocation4 + $0x16c] sm:$0x8]
      %v5220 = vld [vmem:[#allocation4 + $0x170] sm:$0xf]
      %v5221 = vld [vmem:[#allocation4 + $0x174] sm:$0xf]
      %v5223 = vshrl.u32 %v5174, 16
      %v5225 = vrot.slane %v5223, 7
      %v5226 = vrot.slane %v5225, 4
      %v5228 = vshrl.u32 %v5175, 16
      %v5230 = vrot.slane %v5228, 7
      %v5231 = vshll.u32 %v5175, 16
      %v5233 = vor.u32 %v5230, %v5231
      %v5234 = vsel %vm690, %v5226, %v5233
      %v5235 = vrot.slane %v5230, 4
      %v5237 = vshrl.u32 %v5176, 16
      %v5239 = vrot.slane %v5237, 7
      %v5240 = vshll.u32 %v5176, 16
      %v5242 = vor.u32 %v5239, %v5240
      %v5243 = vsel %vm690, %v5235, %v5242
      %v5245 = vshrl.u32 %v5177, 16
      %v5247 = vrot.slane %v5245, 7
      %v5248 = vrot.slane %v5247, 4
      %v5250 = vshrl.u32 %v5178, 16
      %v5252 = vrot.slane %v5250, 7
      %v5253 = vshll.u32 %v5178, 16
      %v5255 = vor.u32 %v5252, %v5253
      %v5256 = vsel %vm690, %v5248, %v5255
      %v5257 = vrot.slane %v5252, 4
      %v5259 = vshrl.u32 %v5179, 16
      %v5261 = vrot.slane %v5259, 7
      %v5262 = vshll.u32 %v5179, 16
      %v5264 = vor.u32 %v5261, %v5262
      %v5265 = vsel %vm690, %v5257, %v5264
      %v5267 = vshrl.u32 %v5180, 16
      %v5269 = vrot.slane %v5267, 7
      %v5270 = vrot.slane %v5269, 4
      %v5272 = vshrl.u32 %v5181, 16
      %v5274 = vrot.slane %v5272, 7
      %v5275 = vshll.u32 %v5181, 16
      %v5277 = vor.u32 %v5274, %v5275
      %v5278 = vsel %vm690, %v5270, %v5277
      %v5279 = vrot.slane %v5274, 4
      %v5281 = vshrl.u32 %v5182, 16
      %v5283 = vrot.slane %v5281, 7
      %v5284 = vshll.u32 %v5182, 16
      %v5286 = vor.u32 %v5283, %v5284
      %v5287 = vsel %vm690, %v5279, %v5286
      %v5289 = vshrl.u32 %v5183, 16
      %v5291 = vrot.slane %v5289, 7
      %v5292 = vrot.slane %v5291, 4
      %v5294 = vshrl.u32 %v5184, 16
      %v5296 = vrot.slane %v5294, 7
      %v5297 = vshll.u32 %v5184, 16
      %v5299 = vor.u32 %v5296, %v5297
      %v5300 = vsel %vm690, %v5292, %v5299
      %v5301 = vrot.slane %v5296, 4
      %v5303 = vshrl.u32 %v5185, 16
      %v5305 = vrot.slane %v5303, 7
      %v5306 = vshll.u32 %v5185, 16
      %v5308 = vor.u32 %v5305, %v5306
      %v5309 = vsel %vm690, %v5301, %v5308
      %v5311 = vshrl.u32 %v5186, 16
      %v5313 = vrot.slane %v5311, 7
      %v5314 = vrot.slane %v5313, 4
      %v5316 = vshrl.u32 %v5187, 16
      %v5318 = vrot.slane %v5316, 7
      %v5319 = vshll.u32 %v5187, 16
      %v5321 = vor.u32 %v5318, %v5319
      %v5322 = vsel %vm690, %v5314, %v5321
      %v5323 = vrot.slane %v5318, 4
      %v5325 = vshrl.u32 %v5188, 16
      %v5327 = vrot.slane %v5325, 7
      %v5328 = vshll.u32 %v5188, 16
      %v5330 = vor.u32 %v5327, %v5328
      %v5331 = vsel %vm690, %v5323, %v5330
      %v5333 = vshrl.u32 %v5189, 16
      %v5335 = vrot.slane %v5333, 7
      %v5336 = vrot.slane %v5335, 4
      %v5338 = vshrl.u32 %v5190, 16
      %v5340 = vrot.slane %v5338, 7
      %v5341 = vshll.u32 %v5190, 16
      %v5343 = vor.u32 %v5340, %v5341
      %v5344 = vsel %vm690, %v5336, %v5343
      %v5345 = vrot.slane %v5340, 4
      %v5347 = vshrl.u32 %v5191, 16
      %v5349 = vrot.slane %v5347, 7
      %v5350 = vshll.u32 %v5191, 16
      %v5352 = vor.u32 %v5349, %v5350
      %v5353 = vsel %vm690, %v5345, %v5352
      %v5355 = vshrl.u32 %v5192, 16
      %v5357 = vrot.slane %v5355, 7
      %v5358 = vrot.slane %v5357, 4
      %v5360 = vshrl.u32 %v5193, 16
      %v5362 = vrot.slane %v5360, 7
      %v5363 = vshll.u32 %v5193, 16
      %v5365 = vor.u32 %v5362, %v5363
      %v5366 = vsel %vm690, %v5358, %v5365
      %v5367 = vrot.slane %v5362, 4
      %v5369 = vshrl.u32 %v5194, 16
      %v5371 = vrot.slane %v5369, 7
      %v5372 = vshll.u32 %v5194, 16
      %v5374 = vor.u32 %v5371, %v5372
      %v5375 = vsel %vm690, %v5367, %v5374
      %v5377 = vshrl.u32 %v5195, 16
      %v5379 = vrot.slane %v5377, 7
      %v5380 = vrot.slane %v5379, 4
      %v5382 = vshrl.u32 %v5196, 16
      %v5384 = vrot.slane %v5382, 7
      %v5385 = vshll.u32 %v5196, 16
      %v5387 = vor.u32 %v5384, %v5385
      %v5388 = vsel %vm690, %v5380, %v5387
      %v5389 = vrot.slane %v5384, 4
      %v5391 = vshrl.u32 %v5197, 16
      %v5393 = vrot.slane %v5391, 7
      %v5394 = vshll.u32 %v5197, 16
      %v5396 = vor.u32 %v5393, %v5394
      %v5397 = vsel %vm690, %v5389, %v5396
      %v5399 = vshrl.u32 %v5198, 16
      %v5401 = vrot.slane %v5399, 7
      %v5402 = vrot.slane %v5401, 4
      %v5404 = vshrl.u32 %v5199, 16
      %v5406 = vrot.slane %v5404, 7
      %v5407 = vshll.u32 %v5199, 16
      %v5409 = vor.u32 %v5406, %v5407
      %v5410 = vsel %vm690, %v5402, %v5409
      %v5411 = vrot.slane %v5406, 4
      %v5413 = vshrl.u32 %v5200, 16
      %v5415 = vrot.slane %v5413, 7
      %v5416 = vshll.u32 %v5200, 16
      %v5418 = vor.u32 %v5415, %v5416
      %v5419 = vsel %vm690, %v5411, %v5418
      %v5421 = vshrl.u32 %v5201, 16
      %v5423 = vrot.slane %v5421, 7
      %v5424 = vrot.slane %v5423, 4
      %v5426 = vshrl.u32 %v5202, 16
      %v5428 = vrot.slane %v5426, 7
      %v5429 = vshll.u32 %v5202, 16
      %v5431 = vor.u32 %v5428, %v5429
      %v5432 = vsel %vm690, %v5424, %v5431
      %v5433 = vrot.slane %v5428, 4
      %v5435 = vshrl.u32 %v5203, 16
      %v5437 = vrot.slane %v5435, 7
      %v5438 = vshll.u32 %v5203, 16
      %v5440 = vor.u32 %v5437, %v5438
      %v5441 = vsel %vm690, %v5433, %v5440
      %v5443 = vshrl.u32 %v5204, 16
      %v5445 = vrot.slane %v5443, 7
      %v5446 = vrot.slane %v5445, 4
      %v5448 = vshrl.u32 %v5205, 16
      %v5450 = vrot.slane %v5448, 7
      %v5451 = vshll.u32 %v5205, 16
      %v5453 = vor.u32 %v5450, %v5451
      %v5454 = vsel %vm690, %v5446, %v5453
      %v5455 = vrot.slane %v5450, 4
      %v5457 = vshrl.u32 %v5206, 16
      %v5459 = vrot.slane %v5457, 7
      %v5460 = vshll.u32 %v5206, 16
      %v5462 = vor.u32 %v5459, %v5460
      %v5463 = vsel %vm690, %v5455, %v5462
      %v5465 = vshrl.u32 %v5207, 16
      %v5467 = vrot.slane %v5465, 7
      %v5468 = vrot.slane %v5467, 4
      %v5470 = vshrl.u32 %v5208, 16
      %v5472 = vrot.slane %v5470, 7
      %v5473 = vshll.u32 %v5208, 16
      %v5475 = vor.u32 %v5472, %v5473
      %v5476 = vsel %vm690, %v5468, %v5475
      %v5477 = vrot.slane %v5472, 4
      %v5479 = vshrl.u32 %v5209, 16
      %v5481 = vrot.slane %v5479, 7
      %v5482 = vshll.u32 %v5209, 16
      %v5484 = vor.u32 %v5481, %v5482
      %v5485 = vsel %vm690, %v5477, %v5484
      %v5487 = vshrl.u32 %v5210, 16
      %v5489 = vrot.slane %v5487, 7
      %v5490 = vrot.slane %v5489, 4
      %v5492 = vshrl.u32 %v5211, 16
      %v5494 = vrot.slane %v5492, 7
      %v5495 = vshll.u32 %v5211, 16
      %v5497 = vor.u32 %v5494, %v5495
      %v5498 = vsel %vm690, %v5490, %v5497
      %v5499 = vrot.slane %v5494, 4
      %v5501 = vshrl.u32 %v5212, 16
      %v5503 = vrot.slane %v5501, 7
      %v5504 = vshll.u32 %v5212, 16
      %v5506 = vor.u32 %v5503, %v5504
      %v5507 = vsel %vm690, %v5499, %v5506
      %v5509 = vshrl.u32 %v5213, 16
      %v5511 = vrot.slane %v5509, 7
      %v5512 = vrot.slane %v5511, 4
      %v5514 = vshrl.u32 %v5214, 16
      %v5516 = vrot.slane %v5514, 7
      %v5517 = vshll.u32 %v5214, 16
      %v5519 = vor.u32 %v5516, %v5517
      %v5520 = vsel %vm690, %v5512, %v5519
      %v5521 = vrot.slane %v5516, 4
      %v5523 = vshrl.u32 %v5215, 16
      %v5525 = vrot.slane %v5523, 7
      %v5526 = vshll.u32 %v5215, 16
      %v5528 = vor.u32 %v5525, %v5526
      %v5529 = vsel %vm690, %v5521, %v5528
      %v5531 = vshrl.u32 %v5216, 16
      %v5533 = vrot.slane %v5531, 7
      %v5534 = vrot.slane %v5533, 4
      %v5536 = vshrl.u32 %v5217, 16
      %v5538 = vrot.slane %v5536, 7
      %v5539 = vshll.u32 %v5217, 16
      %v5541 = vor.u32 %v5538, %v5539
      %v5542 = vsel %vm690, %v5534, %v5541
      %v5543 = vrot.slane %v5538, 4
      %v5545 = vshrl.u32 %v5218, 16
      %v5547 = vrot.slane %v5545, 7
      %v5548 = vshll.u32 %v5218, 16
      %v5550 = vor.u32 %v5547, %v5548
      %v5551 = vsel %vm690, %v5543, %v5550
      %v5553 = vshrl.u32 %v5219, 16
      %v5555 = vrot.slane %v5553, 7
      %v5556 = vrot.slane %v5555, 4
      %v5558 = vshrl.u32 %v5220, 16
      %v5560 = vrot.slane %v5558, 7
      %v5561 = vshll.u32 %v5220, 16
      %v5563 = vor.u32 %v5560, %v5561
      %v5564 = vsel %vm690, %v5556, %v5563
      %v5565 = vrot.slane %v5560, 4
      %v5567 = vshrl.u32 %v5221, 16
      %v5569 = vrot.slane %v5567, 7
      %v5570 = vshll.u32 %v5221, 16
      %v5572 = vor.u32 %v5569, %v5570
      %v5573 = vsel %vm690, %v5565, %v5572
      %5606 = vst.msk [vmem:[#allocation5] sm:$0xf] %vm4887, %v5234
      %5607 = vst.msk [vmem:[#allocation5 + $0x4] sm:$0xf] %vm4887, %v5243
      %5608 = vst.msk [vmem:[#allocation5 + $0x8] sm:$0xf] %vm4887, %v5256
      %5609 = vst.msk [vmem:[#allocation5 + $0xc] sm:$0xf] %vm4887, %v5265
      %5610 = vst.msk [vmem:[#allocation5 + $0x10] sm:$0xf] %vm4887, %v5278
      %5611 = vst.msk [vmem:[#allocation5 + $0x14] sm:$0xf] %vm4887, %v5287
      %5612 = vst.msk [vmem:[#allocation5 + $0x18] sm:$0xf] %vm4887, %v5300
      %5613 = vst.msk [vmem:[#allocation5 + $0x1c] sm:$0xf] %vm4887, %v5309
      %5614 = vst.msk [vmem:[#allocation5 + $0x20] sm:$0xf] %vm4887, %v5322
      %5615 = vst.msk [vmem:[#allocation5 + $0x24] sm:$0xf] %vm4887, %v5331
      %5616 = vst.msk [vmem:[#allocation5 + $0x28] sm:$0xf] %vm4887, %v5344
      %5617 = vst.msk [vmem:[#allocation5 + $0x2c] sm:$0xf] %vm4887, %v5353
      %5618 = vst.msk [vmem:[#allocation5 + $0x30] sm:$0xf] %vm4887, %v5366
      %5619 = vst.msk [vmem:[#allocation5 + $0x34] sm:$0xf] %vm4887, %v5375
      %5620 = vst.msk [vmem:[#allocation5 + $0x38] sm:$0xf] %vm4887, %v5388
      %5621 = vst.msk [vmem:[#allocation5 + $0x3c] sm:$0xf] %vm4887, %v5397
      %5622 = vst.msk [vmem:[#allocation5 + $0x40] sm:$0xf] %vm4887, %v5410
      %5623 = vst.msk [vmem:[#allocation5 + $0x44] sm:$0xf] %vm4887, %v5419
      %5624 = vst.msk [vmem:[#allocation5 + $0x48] sm:$0xf] %vm4887, %v5432
      %5625 = vst.msk [vmem:[#allocation5 + $0x4c] sm:$0xf] %vm4887, %v5441
      %5626 = vst.msk [vmem:[#allocation5 + $0x50] sm:$0xf] %vm4887, %v5454
      %5627 = vst.msk [vmem:[#allocation5 + $0x54] sm:$0xf] %vm4887, %v5463
      %5628 = vst.msk [vmem:[#allocation5 + $0x58] sm:$0xf] %vm4887, %v5476
      %5629 = vst.msk [vmem:[#allocation5 + $0x5c] sm:$0xf] %vm4887, %v5485
      %5630 = vst.msk [vmem:[#allocation5 + $0x60] sm:$0xf] %vm4887, %v5498
      %5631 = vst.msk [vmem:[#allocation5 + $0x64] sm:$0xf] %vm4887, %v5507
      %5632 = vst.msk [vmem:[#allocation5 + $0x68] sm:$0xf] %vm4887, %v5520
      %5633 = vst.msk [vmem:[#allocation5 + $0x6c] sm:$0xf] %vm4887, %v5529
      %5634 = vst.msk [vmem:[#allocation5 + $0x70] sm:$0xf] %vm4887, %v5542
      %5635 = vst.msk [vmem:[#allocation5 + $0x74] sm:$0xf] %vm4887, %v5551
      %5636 = vst.msk [vmem:[#allocation5 + $0x78] sm:$0xf] %vm4887, %v5564
      %5637 = vst.msk [vmem:[#allocation5 + $0x7c] sm:$0xf] %vm4887, %v5573
      %v5638 = vld [vmem:[#allocation4 + $0x8] sm:$0xf]
      %v5639 = vld [vmem:[#allocation4 + $0xc] sm:$0xf]
      %v5640 = vld [vmem:[#allocation4 + $0x20] sm:$0xf]
      %v5641 = vld [vmem:[#allocation4 + $0x24] sm:$0xf]
      %v5642 = vld [vmem:[#allocation4 + $0x38] sm:$0xf]
      %v5643 = vld [vmem:[#allocation4 + $0x3c] sm:$0xf]
      %v5644 = vld [vmem:[#allocation4 + $0x50] sm:$0xf]
      %v5645 = vld [vmem:[#allocation4 + $0x54] sm:$0xf]
      %v5646 = vld [vmem:[#allocation4 + $0x68] sm:$0xf]
      %v5647 = vld [vmem:[#allocation4 + $0x6c] sm:$0xf]
      %v5648 = vld [vmem:[#allocation4 + $0x80] sm:$0xf]
      %v5649 = vld [vmem:[#allocation4 + $0x84] sm:$0xf]
      %v5650 = vld [vmem:[#allocation4 + $0x98] sm:$0xf]
      %v5651 = vld [vmem:[#allocation4 + $0x9c] sm:$0xf]
      %v5652 = vld [vmem:[#allocation4 + $0xb0] sm:$0xf]
      %v5653 = vld [vmem:[#allocation4 + $0xb4] sm:$0xf]
      %v5654 = vld [vmem:[#allocation4 + $0xc8] sm:$0xf]
      %v5655 = vld [vmem:[#allocation4 + $0xcc] sm:$0xf]
      %v5656 = vld [vmem:[#allocation4 + $0xe0] sm:$0xf]
      %v5657 = vld [vmem:[#allocation4 + $0xe4] sm:$0xf]
      %v5658 = vld [vmem:[#allocation4 + $0xf8] sm:$0xf]
      %v5659 = vld [vmem:[#allocation4 + $0xfc] sm:$0xf]
      %v5660 = vld [vmem:[#allocation4 + $0x110] sm:$0xf]
      %v5661 = vld [vmem:[#allocation4 + $0x114] sm:$0xf]
      %v5662 = vld [vmem:[#allocation4 + $0x128] sm:$0xf]
      %v5663 = vld [vmem:[#allocation4 + $0x12c] sm:$0xf]
      %v5664 = vld [vmem:[#allocation4 + $0x140] sm:$0xf]
      %v5665 = vld [vmem:[#allocation4 + $0x144] sm:$0xf]
      %v5666 = vld [vmem:[#allocation4 + $0x158] sm:$0xf]
      %v5667 = vld [vmem:[#allocation4 + $0x15c] sm:$0xf]
      %v5668 = vld [vmem:[#allocation4 + $0x170] sm:$0xf]
      %v5669 = vld [vmem:[#allocation4 + $0x174] sm:$0xf]
      %5702 = vrot.lane.b32.xlu0 %v5638, 8
      %v5703 = vpop.permute.xlu0 %5702
      %5704 = vrot.lane.b32.xlu0 %v5639, 8
      %v5705 = vpop.permute.xlu0 %5704
      %5706 = vrot.lane.b32.xlu0 %v5640, 8
      %v5707 = vpop.permute.xlu0 %5706
      %5708 = vrot.lane.b32.xlu0 %v5641, 8
      %v5709 = vpop.permute.xlu0 %5708
      %5710 = vrot.lane.b32.xlu0 %v5642, 8
      %v5711 = vpop.permute.xlu0 %5710
      %5712 = vrot.lane.b32.xlu0 %v5643, 8
      %v5713 = vpop.permute.xlu0 %5712
      %5714 = vrot.lane.b32.xlu0 %v5644, 8
      %v5715 = vpop.permute.xlu0 %5714
      %5716 = vrot.lane.b32.xlu0 %v5645, 8
      %v5717 = vpop.permute.xlu0 %5716
      %5718 = vrot.lane.b32.xlu0 %v5646, 8
      %v5719 = vpop.permute.xlu0 %5718
      %5720 = vrot.lane.b32.xlu0 %v5647, 8
      %v5721 = vpop.permute.xlu0 %5720
      %5722 = vrot.lane.b32.xlu0 %v5648, 8
      %v5723 = vpop.permute.xlu0 %5722
      %5724 = vrot.lane.b32.xlu0 %v5649, 8
      %v5725 = vpop.permute.xlu0 %5724
      %5726 = vrot.lane.b32.xlu0 %v5650, 8
      %v5727 = vpop.permute.xlu0 %5726
      %5728 = vrot.lane.b32.xlu0 %v5651, 8
      %v5729 = vpop.permute.xlu0 %5728
      %5730 = vrot.lane.b32.xlu0 %v5652, 8
      %v5731 = vpop.permute.xlu0 %5730
      %5732 = vrot.lane.b32.xlu0 %v5653, 8
      %v5733 = vpop.permute.xlu0 %5732
      %5734 = vrot.lane.b32.xlu0 %v5654, 8
      %v5735 = vpop.permute.xlu0 %5734
      %5736 = vrot.lane.b32.xlu0 %v5655, 8
      %v5737 = vpop.permute.xlu0 %5736
      %5738 = vrot.lane.b32.xlu0 %v5656, 8
      %v5739 = vpop.permute.xlu0 %5738
      %5740 = vrot.lane.b32.xlu0 %v5657, 8
      %v5741 = vpop.permute.xlu0 %5740
      %5742 = vrot.lane.b32.xlu0 %v5658, 8
      %v5743 = vpop.permute.xlu0 %5742
      %5744 = vrot.lane.b32.xlu0 %v5659, 8
      %v5745 = vpop.permute.xlu0 %5744
      %5746 = vrot.lane.b32.xlu0 %v5660, 8
      %v5747 = vpop.permute.xlu0 %5746
      %5748 = vrot.lane.b32.xlu0 %v5661, 8
      %v5749 = vpop.permute.xlu0 %5748
      %5750 = vrot.lane.b32.xlu0 %v5662, 8
      %v5751 = vpop.permute.xlu0 %5750
      %5752 = vrot.lane.b32.xlu0 %v5663, 8
      %v5753 = vpop.permute.xlu0 %5752
      %5754 = vrot.lane.b32.xlu0 %v5664, 8
      %v5755 = vpop.permute.xlu0 %5754
      %5756 = vrot.lane.b32.xlu0 %v5665, 8
      %v5757 = vpop.permute.xlu0 %5756
      %5758 = vrot.lane.b32.xlu0 %v5666, 8
      %v5759 = vpop.permute.xlu0 %5758
      %5760 = vrot.lane.b32.xlu0 %v5667, 8
      %v5761 = vpop.permute.xlu0 %5760
      %5762 = vrot.lane.b32.xlu0 %v5668, 8
      %v5763 = vpop.permute.xlu0 %5762
      %5764 = vrot.lane.b32.xlu0 %v5669, 8
      %v5765 = vpop.permute.xlu0 %5764
      %vm5798 = vcmask 126016
      %5799 = vst.msk [vmem:[#allocation5] sm:$0xf] %vm5798, %v5703
      %5800 = vst.msk [vmem:[#allocation5 + $0x4] sm:$0xf] %vm5798, %v5705
      %5801 = vst.msk [vmem:[#allocation5 + $0x8] sm:$0xf] %vm5798, %v5707
      %5802 = vst.msk [vmem:[#allocation5 + $0xc] sm:$0xf] %vm5798, %v5709
      %5803 = vst.msk [vmem:[#allocation5 + $0x10] sm:$0xf] %vm5798, %v5711
      %5804 = vst.msk [vmem:[#allocation5 + $0x14] sm:$0xf] %vm5798, %v5713
      %5805 = vst.msk [vmem:[#allocation5 + $0x18] sm:$0xf] %vm5798, %v5715
      %5806 = vst.msk [vmem:[#allocation5 + $0x1c] sm:$0xf] %vm5798, %v5717
      %5807 = vst.msk [vmem:[#allocation5 + $0x20] sm:$0xf] %vm5798, %v5719
      %5808 = vst.msk [vmem:[#allocation5 + $0x24] sm:$0xf] %vm5798, %v5721
      %5809 = vst.msk [vmem:[#allocation5 + $0x28] sm:$0xf] %vm5798, %v5723
      %5810 = vst.msk [vmem:[#allocation5 + $0x2c] sm:$0xf] %vm5798, %v5725
      %5811 = vst.msk [vmem:[#allocation5 + $0x30] sm:$0xf] %vm5798, %v5727
      %5812 = vst.msk [vmem:[#allocation5 + $0x34] sm:$0xf] %vm5798, %v5729
      %5813 = vst.msk [vmem:[#allocation5 + $0x38] sm:$0xf] %vm5798, %v5731
      %5814 = vst.msk [vmem:[#allocation5 + $0x3c] sm:$0xf] %vm5798, %v5733
      %5815 = vst.msk [vmem:[#allocation5 + $0x40] sm:$0xf] %vm5798, %v5735
      %5816 = vst.msk [vmem:[#allocation5 + $0x44] sm:$0xf] %vm5798, %v5737
      %5817 = vst.msk [vmem:[#allocation5 + $0x48] sm:$0xf] %vm5798, %v5739
      %5818 = vst.msk [vmem:[#allocation5 + $0x4c] sm:$0xf] %vm5798, %v5741
      %5819 = vst.msk [vmem:[#allocation5 + $0x50] sm:$0xf] %vm5798, %v5743
      %5820 = vst.msk [vmem:[#allocation5 + $0x54] sm:$0xf] %vm5798, %v5745
      %5821 = vst.msk [vmem:[#allocation5 + $0x58] sm:$0xf] %vm5798, %v5747
      %5822 = vst.msk [vmem:[#allocation5 + $0x5c] sm:$0xf] %vm5798, %v5749
      %5823 = vst.msk [vmem:[#allocation5 + $0x60] sm:$0xf] %vm5798, %v5751
      %5824 = vst.msk [vmem:[#allocation5 + $0x64] sm:$0xf] %vm5798, %v5753
      %5825 = vst.msk [vmem:[#allocation5 + $0x68] sm:$0xf] %vm5798, %v5755
      %5826 = vst.msk [vmem:[#allocation5 + $0x6c] sm:$0xf] %vm5798, %v5757
      %5827 = vst.msk [vmem:[#allocation5 + $0x70] sm:$0xf] %vm5798, %v5759
      %5828 = vst.msk [vmem:[#allocation5 + $0x74] sm:$0xf] %vm5798, %v5761
      %5829 = vst.msk [vmem:[#allocation5 + $0x78] sm:$0xf] %vm5798, %v5763
      %5830 = vst.msk [vmem:[#allocation5 + $0x7c] sm:$0xf] %vm5798, %v5765
      %v5831 = vld [vmem:[#allocation4 + $0x8] sm:$0xf]
      %v5832 = vld [vmem:[#allocation4 + $0xc] sm:$0xf]
      %v5833 = vld [vmem:[#allocation4 + $0x10] sm:$0x1]
      %v5834 = vld [vmem:[#allocation4 + $0x20] sm:$0xf]
      %v5835 = vld [vmem:[#allocation4 + $0x24] sm:$0xf]
      %v5836 = vld [vmem:[#allocation4 + $0x28] sm:$0x1]
      %v5837 = vld [vmem:[#allocation4 + $0x38] sm:$0xf]
      %v5838 = vld [vmem:[#allocation4 + $0x3c] sm:$0xf]
      %v5839 = vld [vmem:[#allocation4 + $0x40] sm:$0x1]
      %v5840 = vld [vmem:[#allocation4 + $0x50] sm:$0xf]
      %v5841 = vld [vmem:[#allocation4 + $0x54] sm:$0xf]
      %v5842 = vld [vmem:[#allocation4 + $0x58] sm:$0x1]
      %v5843 = vld [vmem:[#allocation4 + $0x68] sm:$0xf]
      %v5844 = vld [vmem:[#allocation4 + $0x6c] sm:$0xf]
      %v5845 = vld [vmem:[#allocation4 + $0x70] sm:$0x1]
      %v5846 = vld [vmem:[#allocation4 + $0x80] sm:$0xf]
      %v5847 = vld [vmem:[#allocation4 + $0x84] sm:$0xf]
      %v5848 = vld [vmem:[#allocation4 + $0x88] sm:$0x1]
      %v5849 = vld [vmem:[#allocation4 + $0x98] sm:$0xf]
      %v5850 = vld [vmem:[#allocation4 + $0x9c] sm:$0xf]
      %v5851 = vld [vmem:[#allocation4 + $0xa0] sm:$0x1]
      %v5852 = vld [vmem:[#allocation4 + $0xb0] sm:$0xf]
      %v5853 = vld [vmem:[#allocation4 + $0xb4] sm:$0xf]
      %v5854 = vld [vmem:[#allocation4 + $0xb8] sm:$0x1]
      %v5855 = vld [vmem:[#allocation4 + $0xc8] sm:$0xf]
      %v5856 = vld [vmem:[#allocation4 + $0xcc] sm:$0xf]
      %v5857 = vld [vmem:[#allocation4 + $0xd0] sm:$0x1]
      %v5858 = vld [vmem:[#allocation4 + $0xe0] sm:$0xf]
      %v5859 = vld [vmem:[#allocation4 + $0xe4] sm:$0xf]
      %v5860 = vld [vmem:[#allocation4 + $0xe8] sm:$0x1]
      %v5861 = vld [vmem:[#allocation4 + $0xf8] sm:$0xf]
      %v5862 = vld [vmem:[#allocation4 + $0xfc] sm:$0xf]
      %v5863 = vld [vmem:[#allocation4 + $0x100] sm:$0x1]
      %v5864 = vld [vmem:[#allocation4 + $0x110] sm:$0xf]
      %v5865 = vld [vmem:[#allocation4 + $0x114] sm:$0xf]
      %v5866 = vld [vmem:[#allocation4 + $0x118] sm:$0x1]
      %v5867 = vld [vmem:[#allocation4 + $0x128] sm:$0xf]
      %v5868 = vld [vmem:[#allocation4 + $0x12c] sm:$0xf]
      %v5869 = vld [vmem:[#allocation4 + $0x130] sm:$0x1]
      %v5870 = vld [vmem:[#allocation4 + $0x140] sm:$0xf]
      %v5871 = vld [vmem:[#allocation4 + $0x144] sm:$0xf]
      %v5872 = vld [vmem:[#allocation4 + $0x148] sm:$0x1]
      %v5873 = vld [vmem:[#allocation4 + $0x158] sm:$0xf]
      %v5874 = vld [vmem:[#allocation4 + $0x15c] sm:$0xf]
      %v5875 = vld [vmem:[#allocation4 + $0x160] sm:$0x1]
      %v5876 = vld [vmem:[#allocation4 + $0x170] sm:$0xf]
      %v5877 = vld [vmem:[#allocation4 + $0x174] sm:$0xf]
      %v5878 = vld [vmem:[#allocation4 + $0x178] sm:$0x1]
      %v5880 = vshrl.u32 %v5831, 16
      %v5882 = vrot.slane %v5880, 4
      %v5883 = vshll.u32 %v5831, 16
      %v5885 = vrot.slane %v5883, 5
      %v5886 = vor.u32 %v5882, %v5885
      %v5887 = vrot.slane %v5886, 4
      %v5889 = vshll.u32 %v5832, 16
      %v5891 = vrot.slane %v5889, 5
      %v5892 = vsel %vm1350, %v5887, %v5891
      %v5893 = vshrl.u32 %v5832, 16
      %v5895 = vrot.slane %v5893, 4
      %v5896 = vor.u32 %v5895, %v5891
      %v5897 = vrot.slane %v5896, 4
      %v5899 = vshll.u32 %v5833, 16
      %v5901 = vrot.slane %v5899, 5
      %v5902 = vsel %vm1350, %v5897, %v5901
      %v5904 = vshrl.u32 %v5834, 16
      %v5906 = vrot.slane %v5904, 4
      %v5907 = vshll.u32 %v5834, 16
      %v5909 = vrot.slane %v5907, 5
      %v5910 = vor.u32 %v5906, %v5909
      %v5911 = vrot.slane %v5910, 4
      %v5913 = vshll.u32 %v5835, 16
      %v5915 = vrot.slane %v5913, 5
      %v5916 = vsel %vm1350, %v5911, %v5915
      %v5917 = vshrl.u32 %v5835, 16
      %v5919 = vrot.slane %v5917, 4
      %v5920 = vor.u32 %v5919, %v5915
      %v5921 = vrot.slane %v5920, 4
      %v5923 = vshll.u32 %v5836, 16
      %v5925 = vrot.slane %v5923, 5
      %v5926 = vsel %vm1350, %v5921, %v5925
      %v5928 = vshrl.u32 %v5837, 16
      %v5930 = vrot.slane %v5928, 4
      %v5931 = vshll.u32 %v5837, 16
      %v5933 = vrot.slane %v5931, 5
      %v5934 = vor.u32 %v5930, %v5933
      %v5935 = vrot.slane %v5934, 4
      %v5937 = vshll.u32 %v5838, 16
      %v5939 = vrot.slane %v5937, 5
      %v5940 = vsel %vm1350, %v5935, %v5939
      %v5941 = vshrl.u32 %v5838, 16
      %v5943 = vrot.slane %v5941, 4
      %v5944 = vor.u32 %v5943, %v5939
      %v5945 = vrot.slane %v5944, 4
      %v5947 = vshll.u32 %v5839, 16
      %v5949 = vrot.slane %v5947, 5
      %v5950 = vsel %vm1350, %v5945, %v5949
      %v5952 = vshrl.u32 %v5840, 16
      %v5954 = vrot.slane %v5952, 4
      %v5955 = vshll.u32 %v5840, 16
      %v5957 = vrot.slane %v5955, 5
      %v5958 = vor.u32 %v5954, %v5957
      %v5959 = vrot.slane %v5958, 4
      %v5961 = vshll.u32 %v5841, 16
      %v5963 = vrot.slane %v5961, 5
      %v5964 = vsel %vm1350, %v5959, %v5963
      %v5965 = vshrl.u32 %v5841, 16
      %v5967 = vrot.slane %v5965, 4
      %v5968 = vor.u32 %v5967, %v5963
      %v5969 = vrot.slane %v5968, 4
      %v5971 = vshll.u32 %v5842, 16
      %v5973 = vrot.slane %v5971, 5
      %v5974 = vsel %vm1350, %v5969, %v5973
      %v5976 = vshrl.u32 %v5843, 16
      %v5978 = vrot.slane %v5976, 4
      %v5979 = vshll.u32 %v5843, 16
      %v5981 = vrot.slane %v5979, 5
      %v5982 = vor.u32 %v5978, %v5981
      %v5983 = vrot.slane %v5982, 4
      %v5985 = vshll.u32 %v5844, 16
      %v5987 = vrot.slane %v5985, 5
      %v5988 = vsel %vm1350, %v5983, %v5987
      %v5989 = vshrl.u32 %v5844, 16
      %v5991 = vrot.slane %v5989, 4
      %v5992 = vor.u32 %v5991, %v5987
      %v5993 = vrot.slane %v5992, 4
      %v5995 = vshll.u32 %v5845, 16
      %v5997 = vrot.slane %v5995, 5
      %v5998 = vsel %vm1350, %v5993, %v5997
      %v6000 = vshrl.u32 %v5846, 16
      %v6002 = vrot.slane %v6000, 4
      %v6003 = vshll.u32 %v5846, 16
      %v6005 = vrot.slane %v6003, 5
      %v6006 = vor.u32 %v6002, %v6005
      %v6007 = vrot.slane %v6006, 4
      %v6009 = vshll.u32 %v5847, 16
      %v6011 = vrot.slane %v6009, 5
      %v6012 = vsel %vm1350, %v6007, %v6011
      %v6013 = vshrl.u32 %v5847, 16
      %v6015 = vrot.slane %v6013, 4
      %v6016 = vor.u32 %v6015, %v6011
      %v6017 = vrot.slane %v6016, 4
      %v6019 = vshll.u32 %v5848, 16
      %v6021 = vrot.slane %v6019, 5
      %v6022 = vsel %vm1350, %v6017, %v6021
      %v6024 = vshrl.u32 %v5849, 16
      %v6026 = vrot.slane %v6024, 4
      %v6027 = vshll.u32 %v5849, 16
      %v6029 = vrot.slane %v6027, 5
      %v6030 = vor.u32 %v6026, %v6029
      %v6031 = vrot.slane %v6030, 4
      %v6033 = vshll.u32 %v5850, 16
      %v6035 = vrot.slane %v6033, 5
      %v6036 = vsel %vm1350, %v6031, %v6035
      %v6037 = vshrl.u32 %v5850, 16
      %v6039 = vrot.slane %v6037, 4
      %v6040 = vor.u32 %v6039, %v6035
      %v6041 = vrot.slane %v6040, 4
      %v6043 = vshll.u32 %v5851, 16
      %v6045 = vrot.slane %v6043, 5
      %v6046 = vsel %vm1350, %v6041, %v6045
      %v6048 = vshrl.u32 %v5852, 16
      %v6050 = vrot.slane %v6048, 4
      %v6051 = vshll.u32 %v5852, 16
      %v6053 = vrot.slane %v6051, 5
      %v6054 = vor.u32 %v6050, %v6053
      %v6055 = vrot.slane %v6054, 4
      %v6057 = vshll.u32 %v5853, 16
      %v6059 = vrot.slane %v6057, 5
      %v6060 = vsel %vm1350, %v6055, %v6059
      %v6061 = vshrl.u32 %v5853, 16
      %v6063 = vrot.slane %v6061, 4
      %v6064 = vor.u32 %v6063, %v6059
      %v6065 = vrot.slane %v6064, 4
      %v6067 = vshll.u32 %v5854, 16
      %v6069 = vrot.slane %v6067, 5
      %v6070 = vsel %vm1350, %v6065, %v6069
      %v6072 = vshrl.u32 %v5855, 16
      %v6074 = vrot.slane %v6072, 4
      %v6075 = vshll.u32 %v5855, 16
      %v6077 = vrot.slane %v6075, 5
      %v6078 = vor.u32 %v6074, %v6077
      %v6079 = vrot.slane %v6078, 4
      %v6081 = vshll.u32 %v5856, 16
      %v6083 = vrot.slane %v6081, 5
      %v6084 = vsel %vm1350, %v6079, %v6083
      %v6085 = vshrl.u32 %v5856, 16
      %v6087 = vrot.slane %v6085, 4
      %v6088 = vor.u32 %v6087, %v6083
      %v6089 = vrot.slane %v6088, 4
      %v6091 = vshll.u32 %v5857, 16
      %v6093 = vrot.slane %v6091, 5
      %v6094 = vsel %vm1350, %v6089, %v6093
      %v6096 = vshrl.u32 %v5858, 16
      %v6098 = vrot.slane %v6096, 4
      %v6099 = vshll.u32 %v5858, 16
      %v6101 = vrot.slane %v6099, 5
      %v6102 = vor.u32 %v6098, %v6101
      %v6103 = vrot.slane %v6102, 4
      %v6105 = vshll.u32 %v5859, 16
      %v6107 = vrot.slane %v6105, 5
      %v6108 = vsel %vm1350, %v6103, %v6107
      %v6109 = vshrl.u32 %v5859, 16
      %v6111 = vrot.slane %v6109, 4
      %v6112 = vor.u32 %v6111, %v6107
      %v6113 = vrot.slane %v6112, 4
      %v6115 = vshll.u32 %v5860, 16
      %v6117 = vrot.slane %v6115, 5
      %v6118 = vsel %vm1350, %v6113, %v6117
      %v6120 = vshrl.u32 %v5861, 16
      %v6122 = vrot.slane %v6120, 4
      %v6123 = vshll.u32 %v5861, 16
      %v6125 = vrot.slane %v6123, 5
      %v6126 = vor.u32 %v6122, %v6125
      %v6127 = vrot.slane %v6126, 4
      %v6129 = vshll.u32 %v5862, 16
      %v6131 = vrot.slane %v6129, 5
      %v6132 = vsel %vm1350, %v6127, %v6131
      %v6133 = vshrl.u32 %v5862, 16
      %v6135 = vrot.slane %v6133, 4
      %v6136 = vor.u32 %v6135, %v6131
      %v6137 = vrot.slane %v6136, 4
      %v6139 = vshll.u32 %v5863, 16
      %v6141 = vrot.slane %v6139, 5
      %v6142 = vsel %vm1350, %v6137, %v6141
      %v6144 = vshrl.u32 %v5864, 16
      %v6146 = vrot.slane %v6144, 4
      %v6147 = vshll.u32 %v5864, 16
      %v6149 = vrot.slane %v6147, 5
      %v6150 = vor.u32 %v6146, %v6149
      %v6151 = vrot.slane %v6150, 4
      %v6153 = vshll.u32 %v5865, 16
      %v6155 = vrot.slane %v6153, 5
      %v6156 = vsel %vm1350, %v6151, %v6155
      %v6157 = vshrl.u32 %v5865, 16
      %v6159 = vrot.slane %v6157, 4
      %v6160 = vor.u32 %v6159, %v6155
      %v6161 = vrot.slane %v6160, 4
      %v6163 = vshll.u32 %v5866, 16
      %v6165 = vrot.slane %v6163, 5
      %v6166 = vsel %vm1350, %v6161, %v6165
      %v6168 = vshrl.u32 %v5867, 16
      %v6170 = vrot.slane %v6168, 4
      %v6171 = vshll.u32 %v5867, 16
      %v6173 = vrot.slane %v6171, 5
      %v6174 = vor.u32 %v6170, %v6173
      %v6175 = vrot.slane %v6174, 4
      %v6177 = vshll.u32 %v5868, 16
      %v6179 = vrot.slane %v6177, 5
      %v6180 = vsel %vm1350, %v6175, %v6179
      %v6181 = vshrl.u32 %v5868, 16
      %v6183 = vrot.slane %v6181, 4
      %v6184 = vor.u32 %v6183, %v6179
      %v6185 = vrot.slane %v6184, 4
      %v6187 = vshll.u32 %v5869, 16
      %v6189 = vrot.slane %v6187, 5
      %v6190 = vsel %vm1350, %v6185, %v6189
      %v6192 = vshrl.u32 %v5870, 16
      %v6194 = vrot.slane %v6192, 4
      %v6195 = vshll.u32 %v5870, 16
      %v6197 = vrot.slane %v6195, 5
      %v6198 = vor.u32 %v6194, %v6197
      %v6199 = vrot.slane %v6198, 4
      %v6201 = vshll.u32 %v5871, 16
      %v6203 = vrot.slane %v6201, 5
      %v6204 = vsel %vm1350, %v6199, %v6203
      %v6205 = vshrl.u32 %v5871, 16
      %v6207 = vrot.slane %v6205, 4
      %v6208 = vor.u32 %v6207, %v6203
      %v6209 = vrot.slane %v6208, 4
      %v6211 = vshll.u32 %v5872, 16
      %v6213 = vrot.slane %v6211, 5
      %v6214 = vsel %vm1350, %v6209, %v6213
      %v6216 = vshrl.u32 %v5873, 16
      %v6218 = vrot.slane %v6216, 4
      %v6219 = vshll.u32 %v5873, 16
      %v6221 = vrot.slane %v6219, 5
      %v6222 = vor.u32 %v6218, %v6221
      %v6223 = vrot.slane %v6222, 4
      %v6225 = vshll.u32 %v5874, 16
      %v6227 = vrot.slane %v6225, 5
      %v6228 = vsel %vm1350, %v6223, %v6227
      %v6229 = vshrl.u32 %v5874, 16
      %v6231 = vrot.slane %v6229, 4
      %v6232 = vor.u32 %v6231, %v6227
      %v6233 = vrot.slane %v6232, 4
      %v6235 = vshll.u32 %v5875, 16
      %v6237 = vrot.slane %v6235, 5
      %v6238 = vsel %vm1350, %v6233, %v6237
      %v6240 = vshrl.u32 %v5876, 16
      %v6242 = vrot.slane %v6240, 4
      %v6243 = vshll.u32 %v5876, 16
      %v6245 = vrot.slane %v6243, 5
      %v6246 = vor.u32 %v6242, %v6245
      %v6247 = vrot.slane %v6246, 4
      %v6249 = vshll.u32 %v5877, 16
      %v6251 = vrot.slane %v6249, 5
      %v6252 = vsel %vm1350, %v6247, %v6251
      %v6253 = vshrl.u32 %v5877, 16
      %v6255 = vrot.slane %v6253, 4
      %v6256 = vor.u32 %v6255, %v6251
      %v6257 = vrot.slane %v6256, 4
      %v6259 = vshll.u32 %v5878, 16
      %v6261 = vrot.slane %v6259, 5
      %v6262 = vsel %vm1350, %v6257, %v6261
      %6263 = vrot.lane.b32.xlu0 %v5892, 16
      %v6264 = vpop.permute.xlu0 %6263
      %6265 = vrot.lane.b32.xlu0 %v5902, 16
      %v6266 = vpop.permute.xlu0 %6265
      %6267 = vrot.lane.b32.xlu0 %v5916, 16
      %v6268 = vpop.permute.xlu0 %6267
      %6269 = vrot.lane.b32.xlu0 %v5926, 16
      %v6270 = vpop.permute.xlu0 %6269
      %6271 = vrot.lane.b32.xlu0 %v5940, 16
      %v6272 = vpop.permute.xlu0 %6271
      %6273 = vrot.lane.b32.xlu0 %v5950, 16
      %v6274 = vpop.permute.xlu0 %6273
      %6275 = vrot.lane.b32.xlu0 %v5964, 16
      %v6276 = vpop.permute.xlu0 %6275
      %6277 = vrot.lane.b32.xlu0 %v5974, 16
      %v6278 = vpop.permute.xlu0 %6277
      %6279 = vrot.lane.b32.xlu0 %v5988, 16
      %v6280 = vpop.permute.xlu0 %6279
      %6281 = vrot.lane.b32.xlu0 %v5998, 16
      %v6282 = vpop.permute.xlu0 %6281
      %6283 = vrot.lane.b32.xlu0 %v6012, 16
      %v6284 = vpop.permute.xlu0 %6283
      %6285 = vrot.lane.b32.xlu0 %v6022, 16
      %v6286 = vpop.permute.xlu0 %6285
      %6287 = vrot.lane.b32.xlu0 %v6036, 16
      %v6288 = vpop.permute.xlu0 %6287
      %6289 = vrot.lane.b32.xlu0 %v6046, 16
      %v6290 = vpop.permute.xlu0 %6289
      %6291 = vrot.lane.b32.xlu0 %v6060, 16
      %v6292 = vpop.permute.xlu0 %6291
      %6293 = vrot.lane.b32.xlu0 %v6070, 16
      %v6294 = vpop.permute.xlu0 %6293
      %6295 = vrot.lane.b32.xlu0 %v6084, 16
      %v6296 = vpop.permute.xlu0 %6295
      %6297 = vrot.lane.b32.xlu0 %v6094, 16
      %v6298 = vpop.permute.xlu0 %6297
      %6299 = vrot.lane.b32.xlu0 %v6108, 16
      %v6300 = vpop.permute.xlu0 %6299
      %6301 = vrot.lane.b32.xlu0 %v6118, 16
      %v6302 = vpop.permute.xlu0 %6301
      %6303 = vrot.lane.b32.xlu0 %v6132, 16
      %v6304 = vpop.permute.xlu0 %6303
      %6305 = vrot.lane.b32.xlu0 %v6142, 16
      %v6306 = vpop.permute.xlu0 %6305
      %6307 = vrot.lane.b32.xlu0 %v6156, 16
      %v6308 = vpop.permute.xlu0 %6307
      %6309 = vrot.lane.b32.xlu0 %v6166, 16
      %v6310 = vpop.permute.xlu0 %6309
      %6311 = vrot.lane.b32.xlu0 %v6180, 16
      %v6312 = vpop.permute.xlu0 %6311
      %6313 = vrot.lane.b32.xlu0 %v6190, 16
      %v6314 = vpop.permute.xlu0 %6313
      %6315 = vrot.lane.b32.xlu0 %v6204, 16
      %v6316 = vpop.permute.xlu0 %6315
      %6317 = vrot.lane.b32.xlu0 %v6214, 16
      %v6318 = vpop.permute.xlu0 %6317
      %6319 = vrot.lane.b32.xlu0 %v6228, 16
      %v6320 = vpop.permute.xlu0 %6319
      %6321 = vrot.lane.b32.xlu0 %v6238, 16
      %v6322 = vpop.permute.xlu0 %6321
      %6323 = vrot.lane.b32.xlu0 %v6252, 16
      %v6324 = vpop.permute.xlu0 %6323
      %6325 = vrot.lane.b32.xlu0 %v6262, 16
      %v6326 = vpop.permute.xlu0 %6325
      %vm6359 = vcmask 191616
      %6360 = vst.msk [vmem:[#allocation5] sm:$0xf] %vm6359, %v6264
      %6361 = vst.msk [vmem:[#allocation5 + $0x4] sm:$0xf] %vm6359, %v6266
      %6362 = vst.msk [vmem:[#allocation5 + $0x8] sm:$0xf] %vm6359, %v6268
      %6363 = vst.msk [vmem:[#allocation5 + $0xc] sm:$0xf] %vm6359, %v6270
      %6364 = vst.msk [vmem:[#allocation5 + $0x10] sm:$0xf] %vm6359, %v6272
      %6365 = vst.msk [vmem:[#allocation5 + $0x14] sm:$0xf] %vm6359, %v6274
      %6366 = vst.msk [vmem:[#allocation5 + $0x18] sm:$0xf] %vm6359, %v6276
      %6367 = vst.msk [vmem:[#allocation5 + $0x1c] sm:$0xf] %vm6359, %v6278
      %6368 = vst.msk [vmem:[#allocation5 + $0x20] sm:$0xf] %vm6359, %v6280
      %6369 = vst.msk [vmem:[#allocation5 + $0x24] sm:$0xf] %vm6359, %v6282
      %6370 = vst.msk [vmem:[#allocation5 + $0x28] sm:$0xf] %vm6359, %v6284
      %6371 = vst.msk [vmem:[#allocation5 + $0x2c] sm:$0xf] %vm6359, %v6286
      %6372 = vst.msk [vmem:[#allocation5 + $0x30] sm:$0xf] %vm6359, %v6288
      %6373 = vst.msk [vmem:[#allocation5 + $0x34] sm:$0xf] %vm6359, %v6290
      %6374 = vst.msk [vmem:[#allocation5 + $0x38] sm:$0xf] %vm6359, %v6292
      %6375 = vst.msk [vmem:[#allocation5 + $0x3c] sm:$0xf] %vm6359, %v6294
      %6376 = vst.msk [vmem:[#allocation5 + $0x40] sm:$0xf] %vm6359, %v6296
      %6377 = vst.msk [vmem:[#allocation5 + $0x44] sm:$0xf] %vm6359, %v6298
      %6378 = vst.msk [vmem:[#allocation5 + $0x48] sm:$0xf] %vm6359, %v6300
      %6379 = vst.msk [vmem:[#allocation5 + $0x4c] sm:$0xf] %vm6359, %v6302
      %6380 = vst.msk [vmem:[#allocation5 + $0x50] sm:$0xf] %vm6359, %v6304
      %6381 = vst.msk [vmem:[#allocation5 + $0x54] sm:$0xf] %vm6359, %v6306
      %6382 = vst.msk [vmem:[#allocation5 + $0x58] sm:$0xf] %vm6359, %v6308
      %6383 = vst.msk [vmem:[#allocation5 + $0x5c] sm:$0xf] %vm6359, %v6310
      %6384 = vst.msk [vmem:[#allocation5 + $0x60] sm:$0xf] %vm6359, %v6312
      %6385 = vst.msk [vmem:[#allocation5 + $0x64] sm:$0xf] %vm6359, %v6314
      %6386 = vst.msk [vmem:[#allocation5 + $0x68] sm:$0xf] %vm6359, %v6316
      %6387 = vst.msk [vmem:[#allocation5 + $0x6c] sm:$0xf] %vm6359, %v6318
      %6388 = vst.msk [vmem:[#allocation5 + $0x70] sm:$0xf] %vm6359, %v6320
      %6389 = vst.msk [vmem:[#allocation5 + $0x74] sm:$0xf] %vm6359, %v6322
      %6390 = vst.msk [vmem:[#allocation5 + $0x78] sm:$0xf] %vm6359, %v6324
      %6391 = vst.msk [vmem:[#allocation5 + $0x7c] sm:$0xf] %vm6359, %v6326
      %v6392 = vld [vmem:[%s5141 + $0x4] sm:$0x8]
      %v6393 = vld [vmem:[%s5141 + $0x8] sm:$0xf]
      %v6394 = vld [vmem:[%s5141 + $0xc] sm:$0xf]
      %v6395 = vld [vmem:[%s5141 + $0x1c] sm:$0x8]
      %v6396 = vld [vmem:[%s5141 + $0x20] sm:$0xf]
      %v6397 = vld [vmem:[%s5141 + $0x24] sm:$0xf]
      %v6398 = vld [vmem:[%s5141 + $0x34] sm:$0x8]
      %v6399 = vld [vmem:[%s5141 + $0x38] sm:$0xf]
      %v6400 = vld [vmem:[%s5141 + $0x3c] sm:$0xf]
      %v6401 = vld [vmem:[%s5141 + $0x4c] sm:$0x8]
      %v6402 = vld [vmem:[%s5141 + $0x50] sm:$0xf]
      %v6403 = vld [vmem:[%s5141 + $0x54] sm:$0xf]
      %v6404 = vld [vmem:[%s5141 + $0x64] sm:$0x8]
      %v6405 = vld [vmem:[%s5141 + $0x68] sm:$0xf]
      %v6406 = vld [vmem:[%s5141 + $0x6c] sm:$0xf]
      %v6407 = vld [vmem:[%s5141 + $0x7c] sm:$0x8]
      %v6408 = vld [vmem:[%s5141 + $0x80] sm:$0xf]
      %v6409 = vld [vmem:[%s5141 + $0x84] sm:$0xf]
      %v6410 = vld [vmem:[%s5141 + $0x94] sm:$0x8]
      %v6411 = vld [vmem:[%s5141 + $0x98] sm:$0xf]
      %v6412 = vld [vmem:[%s5141 + $0x9c] sm:$0xf]
      %v6413 = vld [vmem:[%s5141 + $0xac] sm:$0x8]
      %v6414 = vld [vmem:[%s5141 + $0xb0] sm:$0xf]
      %v6415 = vld [vmem:[%s5141 + $0xb4] sm:$0xf]
      %v6416 = vld [vmem:[%s5141 + $0xc4] sm:$0x8]
      %v6417 = vld [vmem:[%s5141 + $0xc8] sm:$0xf]
      %v6418 = vld [vmem:[%s5141 + $0xcc] sm:$0xf]
      %v6419 = vld [vmem:[%s5141 + $0xdc] sm:$0x8]
      %v6420 = vld [vmem:[%s5141 + $0xe0] sm:$0xf]
      %v6421 = vld [vmem:[%s5141 + $0xe4] sm:$0xf]
      %v6422 = vld [vmem:[%s5141 + $0xf4] sm:$0x8]
      %v6423 = vld [vmem:[%s5141 + $0xf8] sm:$0xf]
      %v6424 = vld [vmem:[%s5141 + $0xfc] sm:$0xf]
      %v6425 = vld [vmem:[%s5141 + $0x10c] sm:$0x8]
      %v6426 = vld [vmem:[%s5141 + $0x110] sm:$0xf]
      %v6427 = vld [vmem:[%s5141 + $0x114] sm:$0xf]
      %v6428 = vld [vmem:[%s5141 + $0x124] sm:$0x8]
      %v6429 = vld [vmem:[%s5141 + $0x128] sm:$0xf]
      %v6430 = vld [vmem:[%s5141 + $0x12c] sm:$0xf]
      %v6431 = vld [vmem:[%s5141 + $0x13c] sm:$0x8]
      %v6432 = vld [vmem:[%s5141 + $0x140] sm:$0xf]
      %v6433 = vld [vmem:[%s5141 + $0x144] sm:$0xf]
      %v6434 = vld [vmem:[%s5141 + $0x154] sm:$0x8]
      %v6435 = vld [vmem:[%s5141 + $0x158] sm:$0xf]
      %v6436 = vld [vmem:[%s5141 + $0x15c] sm:$0xf]
      %v6437 = vld [vmem:[%s5141 + $0x16c] sm:$0x8]
      %v6438 = vld [vmem:[%s5141 + $0x170] sm:$0xf]
      %v6439 = vld [vmem:[%s5141 + $0x174] sm:$0xf]
      %v6441 = vshrl.u32 %v6392, 16
      %v6443 = vrot.slane %v6441, 7
      %v6444 = vrot.slane %v6443, 4
      %v6446 = vshrl.u32 %v6393, 16
      %v6448 = vrot.slane %v6446, 7
      %v6449 = vshll.u32 %v6393, 16
      %v6451 = vor.u32 %v6448, %v6449
      %v6452 = vsel %vm690, %v6444, %v6451
      %v6453 = vrot.slane %v6448, 4
      %v6455 = vshrl.u32 %v6394, 16
      %v6457 = vrot.slane %v6455, 7
      %v6458 = vshll.u32 %v6394, 16
      %v6460 = vor.u32 %v6457, %v6458
      %v6461 = vsel %vm690, %v6453, %v6460
      %v6463 = vshrl.u32 %v6395, 16
      %v6465 = vrot.slane %v6463, 7
      %v6466 = vrot.slane %v6465, 4
      %v6468 = vshrl.u32 %v6396, 16
      %v6470 = vrot.slane %v6468, 7
      %v6471 = vshll.u32 %v6396, 16
      %v6473 = vor.u32 %v6470, %v6471
      %v6474 = vsel %vm690, %v6466, %v6473
      %v6475 = vrot.slane %v6470, 4
      %v6477 = vshrl.u32 %v6397, 16
      %v6479 = vrot.slane %v6477, 7
      %v6480 = vshll.u32 %v6397, 16
      %v6482 = vor.u32 %v6479, %v6480
      %v6483 = vsel %vm690, %v6475, %v6482
      %v6485 = vshrl.u32 %v6398, 16
      %v6487 = vrot.slane %v6485, 7
      %v6488 = vrot.slane %v6487, 4
      %v6490 = vshrl.u32 %v6399, 16
      %v6492 = vrot.slane %v6490, 7
      %v6493 = vshll.u32 %v6399, 16
      %v6495 = vor.u32 %v6492, %v6493
      %v6496 = vsel %vm690, %v6488, %v6495
      %v6497 = vrot.slane %v6492, 4
      %v6499 = vshrl.u32 %v6400, 16
      %v6501 = vrot.slane %v6499, 7
      %v6502 = vshll.u32 %v6400, 16
      %v6504 = vor.u32 %v6501, %v6502
      %v6505 = vsel %vm690, %v6497, %v6504
      %v6507 = vshrl.u32 %v6401, 16
      %v6509 = vrot.slane %v6507, 7
      %v6510 = vrot.slane %v6509, 4
      %v6512 = vshrl.u32 %v6402, 16
      %v6514 = vrot.slane %v6512, 7
      %v6515 = vshll.u32 %v6402, 16
      %v6517 = vor.u32 %v6514, %v6515
      %v6518 = vsel %vm690, %v6510, %v6517
      %v6519 = vrot.slane %v6514, 4
      %v6521 = vshrl.u32 %v6403, 16
      %v6523 = vrot.slane %v6521, 7
      %v6524 = vshll.u32 %v6403, 16
      %v6526 = vor.u32 %v6523, %v6524
      %v6527 = vsel %vm690, %v6519, %v6526
      %v6529 = vshrl.u32 %v6404, 16
      %v6531 = vrot.slane %v6529, 7
      %v6532 = vrot.slane %v6531, 4
      %v6534 = vshrl.u32 %v6405, 16
      %v6536 = vrot.slane %v6534, 7
      %v6537 = vshll.u32 %v6405, 16
      %v6539 = vor.u32 %v6536, %v6537
      %v6540 = vsel %vm690, %v6532, %v6539
      %v6541 = vrot.slane %v6536, 4
      %v6543 = vshrl.u32 %v6406, 16
      %v6545 = vrot.slane %v6543, 7
      %v6546 = vshll.u32 %v6406, 16
      %v6548 = vor.u32 %v6545, %v6546
      %v6549 = vsel %vm690, %v6541, %v6548
      %v6551 = vshrl.u32 %v6407, 16
      %v6553 = vrot.slane %v6551, 7
      %v6554 = vrot.slane %v6553, 4
      %v6556 = vshrl.u32 %v6408, 16
      %v6558 = vrot.slane %v6556, 7
      %v6559 = vshll.u32 %v6408, 16
      %v6561 = vor.u32 %v6558, %v6559
      %v6562 = vsel %vm690, %v6554, %v6561
      %v6563 = vrot.slane %v6558, 4
      %v6565 = vshrl.u32 %v6409, 16
      %v6567 = vrot.slane %v6565, 7
      %v6568 = vshll.u32 %v6409, 16
      %v6570 = vor.u32 %v6567, %v6568
      %v6571 = vsel %vm690, %v6563, %v6570
      %v6573 = vshrl.u32 %v6410, 16
      %v6575 = vrot.slane %v6573, 7
      %v6576 = vrot.slane %v6575, 4
      %v6578 = vshrl.u32 %v6411, 16
      %v6580 = vrot.slane %v6578, 7
      %v6581 = vshll.u32 %v6411, 16
      %v6583 = vor.u32 %v6580, %v6581
      %v6584 = vsel %vm690, %v6576, %v6583
      %v6585 = vrot.slane %v6580, 4
      %v6587 = vshrl.u32 %v6412, 16
      %v6589 = vrot.slane %v6587, 7
      %v6590 = vshll.u32 %v6412, 16
      %v6592 = vor.u32 %v6589, %v6590
      %v6593 = vsel %vm690, %v6585, %v6592
      %v6595 = vshrl.u32 %v6413, 16
      %v6597 = vrot.slane %v6595, 7
      %v6598 = vrot.slane %v6597, 4
      %v6600 = vshrl.u32 %v6414, 16
      %v6602 = vrot.slane %v6600, 7
      %v6603 = vshll.u32 %v6414, 16
      %v6605 = vor.u32 %v6602, %v6603
      %v6606 = vsel %vm690, %v6598, %v6605
      %v6607 = vrot.slane %v6602, 4
      %v6609 = vshrl.u32 %v6415, 16
      %v6611 = vrot.slane %v6609, 7
      %v6612 = vshll.u32 %v6415, 16
      %v6614 = vor.u32 %v6611, %v6612
      %v6615 = vsel %vm690, %v6607, %v6614
      %v6617 = vshrl.u32 %v6416, 16
      %v6619 = vrot.slane %v6617, 7
      %v6620 = vrot.slane %v6619, 4
      %v6622 = vshrl.u32 %v6417, 16
      %v6624 = vrot.slane %v6622, 7
      %v6625 = vshll.u32 %v6417, 16
      %v6627 = vor.u32 %v6624, %v6625
      %v6628 = vsel %vm690, %v6620, %v6627
      %v6629 = vrot.slane %v6624, 4
      %v6631 = vshrl.u32 %v6418, 16
      %v6633 = vrot.slane %v6631, 7
      %v6634 = vshll.u32 %v6418, 16
      %v6636 = vor.u32 %v6633, %v6634
      %v6637 = vsel %vm690, %v6629, %v6636
      %v6639 = vshrl.u32 %v6419, 16
      %v6641 = vrot.slane %v6639, 7
      %v6642 = vrot.slane %v6641, 4
      %v6644 = vshrl.u32 %v6420, 16
      %v6646 = vrot.slane %v6644, 7
      %v6647 = vshll.u32 %v6420, 16
      %v6649 = vor.u32 %v6646, %v6647
      %v6650 = vsel %vm690, %v6642, %v6649
      %v6651 = vrot.slane %v6646, 4
      %v6653 = vshrl.u32 %v6421, 16
      %v6655 = vrot.slane %v6653, 7
      %v6656 = vshll.u32 %v6421, 16
      %v6658 = vor.u32 %v6655, %v6656
      %v6659 = vsel %vm690, %v6651, %v6658
      %v6661 = vshrl.u32 %v6422, 16
      %v6663 = vrot.slane %v6661, 7
      %v6664 = vrot.slane %v6663, 4
      %v6666 = vshrl.u32 %v6423, 16
      %v6668 = vrot.slane %v6666, 7
      %v6669 = vshll.u32 %v6423, 16
      %v6671 = vor.u32 %v6668, %v6669
      %v6672 = vsel %vm690, %v6664, %v6671
      %v6673 = vrot.slane %v6668, 4
      %v6675 = vshrl.u32 %v6424, 16
      %v6677 = vrot.slane %v6675, 7
      %v6678 = vshll.u32 %v6424, 16
      %v6680 = vor.u32 %v6677, %v6678
      %v6681 = vsel %vm690, %v6673, %v6680
      %v6683 = vshrl.u32 %v6425, 16
      %v6685 = vrot.slane %v6683, 7
      %v6686 = vrot.slane %v6685, 4
      %v6688 = vshrl.u32 %v6426, 16
      %v6690 = vrot.slane %v6688, 7
      %v6691 = vshll.u32 %v6426, 16
      %v6693 = vor.u32 %v6690, %v6691
      %v6694 = vsel %vm690, %v6686, %v6693
      %v6695 = vrot.slane %v6690, 4
      %v6697 = vshrl.u32 %v6427, 16
      %v6699 = vrot.slane %v6697, 7
      %v6700 = vshll.u32 %v6427, 16
      %v6702 = vor.u32 %v6699, %v6700
      %v6703 = vsel %vm690, %v6695, %v6702
      %v6705 = vshrl.u32 %v6428, 16
      %v6707 = vrot.slane %v6705, 7
      %v6708 = vrot.slane %v6707, 4
      %v6710 = vshrl.u32 %v6429, 16
      %v6712 = vrot.slane %v6710, 7
      %v6713 = vshll.u32 %v6429, 16
      %v6715 = vor.u32 %v6712, %v6713
      %v6716 = vsel %vm690, %v6708, %v6715
      %v6717 = vrot.slane %v6712, 4
      %v6719 = vshrl.u32 %v6430, 16
      %v6721 = vrot.slane %v6719, 7
      %v6722 = vshll.u32 %v6430, 16
      %v6724 = vor.u32 %v6721, %v6722
      %v6725 = vsel %vm690, %v6717, %v6724
      %v6727 = vshrl.u32 %v6431, 16
      %v6729 = vrot.slane %v6727, 7
      %v6730 = vrot.slane %v6729, 4
      %v6732 = vshrl.u32 %v6432, 16
      %v6734 = vrot.slane %v6732, 7
      %v6735 = vshll.u32 %v6432, 16
      %v6737 = vor.u32 %v6734, %v6735
      %v6738 = vsel %vm690, %v6730, %v6737
      %v6739 = vrot.slane %v6734, 4
      %v6741 = vshrl.u32 %v6433, 16
      %v6743 = vrot.slane %v6741, 7
      %v6744 = vshll.u32 %v6433, 16
      %v6746 = vor.u32 %v6743, %v6744
      %v6747 = vsel %vm690, %v6739, %v6746
      %v6749 = vshrl.u32 %v6434, 16
      %v6751 = vrot.slane %v6749, 7
      %v6752 = vrot.slane %v6751, 4
      %v6754 = vshrl.u32 %v6435, 16
      %v6756 = vrot.slane %v6754, 7
      %v6757 = vshll.u32 %v6435, 16
      %v6759 = vor.u32 %v6756, %v6757
      %v6760 = vsel %vm690, %v6752, %v6759
      %v6761 = vrot.slane %v6756, 4
      %v6763 = vshrl.u32 %v6436, 16
      %v6765 = vrot.slane %v6763, 7
      %v6766 = vshll.u32 %v6436, 16
      %v6768 = vor.u32 %v6765, %v6766
      %v6769 = vsel %vm690, %v6761, %v6768
      %v6771 = vshrl.u32 %v6437, 16
      %v6773 = vrot.slane %v6771, 7
      %v6774 = vrot.slane %v6773, 4
      %v6776 = vshrl.u32 %v6438, 16
      %v6778 = vrot.slane %v6776, 7
      %v6779 = vshll.u32 %v6438, 16
      %v6781 = vor.u32 %v6778, %v6779
      %v6782 = vsel %vm690, %v6774, %v6781
      %v6783 = vrot.slane %v6778, 4
      %v6785 = vshrl.u32 %v6439, 16
      %v6787 = vrot.slane %v6785, 7
      %v6788 = vshll.u32 %v6439, 16
      %v6790 = vor.u32 %v6787, %v6788
      %v6791 = vsel %vm690, %v6783, %v6790
      %6792 = vrot.lane.b32.xlu0 %v6452, 24
      %v6793 = vpop.permute.xlu0 %6792
      %6794 = vrot.lane.b32.xlu0 %v6461, 24
      %v6795 = vpop.permute.xlu0 %6794
      %6796 = vrot.lane.b32.xlu0 %v6474, 24
      %v6797 = vpop.permute.xlu0 %6796
      %6798 = vrot.lane.b32.xlu0 %v6483, 24
      %v6799 = vpop.permute.xlu0 %6798
      %6800 = vrot.lane.b32.xlu0 %v6496, 24
      %v6801 = vpop.permute.xlu0 %6800
      %6802 = vrot.lane.b32.xlu0 %v6505, 24
      %v6803 = vpop.permute.xlu0 %6802
      %6804 = vrot.lane.b32.xlu0 %v6518, 24
      %v6805 = vpop.permute.xlu0 %6804
      %6806 = vrot.lane.b32.xlu0 %v6527, 24
      %v6807 = vpop.permute.xlu0 %6806
      %6808 = vrot.lane.b32.xlu0 %v6540, 24
      %v6809 = vpop.permute.xlu0 %6808
      %6810 = vrot.lane.b32.xlu0 %v6549, 24
      %v6811 = vpop.permute.xlu0 %6810
      %6812 = vrot.lane.b32.xlu0 %v6562, 24
      %v6813 = vpop.permute.xlu0 %6812
      %6814 = vrot.lane.b32.xlu0 %v6571, 24
      %v6815 = vpop.permute.xlu0 %6814
      %6816 = vrot.lane.b32.xlu0 %v6584, 24
      %v6817 = vpop.permute.xlu0 %6816
      %6818 = vrot.lane.b32.xlu0 %v6593, 24
      %v6819 = vpop.permute.xlu0 %6818
      %6820 = vrot.lane.b32.xlu0 %v6606, 24
      %v6821 = vpop.permute.xlu0 %6820
      %6822 = vrot.lane.b32.xlu0 %v6615, 24
      %v6823 = vpop.permute.xlu0 %6822
      %6824 = vrot.lane.b32.xlu0 %v6628, 24
      %v6825 = vpop.permute.xlu0 %6824
      %6826 = vrot.lane.b32.xlu0 %v6637, 24
      %v6827 = vpop.permute.xlu0 %6826
      %6828 = vrot.lane.b32.xlu0 %v6650, 24
      %v6829 = vpop.permute.xlu0 %6828
      %6830 = vrot.lane.b32.xlu0 %v6659, 24
      %v6831 = vpop.permute.xlu0 %6830
      %6832 = vrot.lane.b32.xlu0 %v6672, 24
      %v6833 = vpop.permute.xlu0 %6832
      %6834 = vrot.lane.b32.xlu0 %v6681, 24
      %v6835 = vpop.permute.xlu0 %6834
      %6836 = vrot.lane.b32.xlu0 %v6694, 24
      %v6837 = vpop.permute.xlu0 %6836
      %6838 = vrot.lane.b32.xlu0 %v6703, 24
      %v6839 = vpop.permute.xlu0 %6838
      %6840 = vrot.lane.b32.xlu0 %v6716, 24
      %v6841 = vpop.permute.xlu0 %6840
      %6842 = vrot.lane.b32.xlu0 %v6725, 24
      %v6843 = vpop.permute.xlu0 %6842
      %6844 = vrot.lane.b32.xlu0 %v6738, 24
      %v6845 = vpop.permute.xlu0 %6844
      %6846 = vrot.lane.b32.xlu0 %v6747, 24
      %v6847 = vpop.permute.xlu0 %6846
      %6848 = vrot.lane.b32.xlu0 %v6760, 24
      %v6849 = vpop.permute.xlu0 %6848
      %6850 = vrot.lane.b32.xlu0 %v6769, 24
      %v6851 = vpop.permute.xlu0 %6850
      %6852 = vrot.lane.b32.xlu0 %v6782, 24
      %v6853 = vpop.permute.xlu0 %6852
      %6854 = vrot.lane.b32.xlu0 %v6791, 24
      %v6855 = vpop.permute.xlu0 %6854
      %vm6888 = vcmask 257216
      %6889 = vst.msk [vmem:[#allocation5] sm:$0xf] %vm6888, %v6793
      %6890 = vst.msk [vmem:[#allocation5 + $0x4] sm:$0xf] %vm6888, %v6795
      %6891 = vst.msk [vmem:[#allocation5 + $0x8] sm:$0xf] %vm6888, %v6797
      %6892 = vst.msk [vmem:[#allocation5 + $0xc] sm:$0xf] %vm6888, %v6799
      %6893 = vst.msk [vmem:[#allocation5 + $0x10] sm:$0xf] %vm6888, %v6801
      %6894 = vst.msk [vmem:[#allocation5 + $0x14] sm:$0xf] %vm6888, %v6803
      %6895 = vst.msk [vmem:[#allocation5 + $0x18] sm:$0xf] %vm6888, %v6805
      %6896 = vst.msk [vmem:[#allocation5 + $0x1c] sm:$0xf] %vm6888, %v6807
      %6897 = vst.msk [vmem:[#allocation5 + $0x20] sm:$0xf] %vm6888, %v6809
      %6898 = vst.msk [vmem:[#allocation5 + $0x24] sm:$0xf] %vm6888, %v6811
      %6899 = vst.msk [vmem:[#allocation5 + $0x28] sm:$0xf] %vm6888, %v6813
      %6900 = vst.msk [vmem:[#allocation5 + $0x2c] sm:$0xf] %vm6888, %v6815
      %6901 = vst.msk [vmem:[#allocation5 + $0x30] sm:$0xf] %vm6888, %v6817
      %6902 = vst.msk [vmem:[#allocation5 + $0x34] sm:$0xf] %vm6888, %v6819
      %6903 = vst.msk [vmem:[#allocation5 + $0x38] sm:$0xf] %vm6888, %v6821
      %6904 = vst.msk [vmem:[#allocation5 + $0x3c] sm:$0xf] %vm6888, %v6823
      %6905 = vst.msk [vmem:[#allocation5 + $0x40] sm:$0xf] %vm6888, %v6825
      %6906 = vst.msk [vmem:[#allocation5 + $0x44] sm:$0xf] %vm6888, %v6827
      %6907 = vst.msk [vmem:[#allocation5 + $0x48] sm:$0xf] %vm6888, %v6829
      %6908 = vst.msk [vmem:[#allocation5 + $0x4c] sm:$0xf] %vm6888, %v6831
      %6909 = vst.msk [vmem:[#allocation5 + $0x50] sm:$0xf] %vm6888, %v6833
      %6910 = vst.msk [vmem:[#allocation5 + $0x54] sm:$0xf] %vm6888, %v6835
      %6911 = vst.msk [vmem:[#allocation5 + $0x58] sm:$0xf] %vm6888, %v6837
      %6912 = vst.msk [vmem:[#allocation5 + $0x5c] sm:$0xf] %vm6888, %v6839
      %6913 = vst.msk [vmem:[#allocation5 + $0x60] sm:$0xf] %vm6888, %v6841
      %6914 = vst.msk [vmem:[#allocation5 + $0x64] sm:$0xf] %vm6888, %v6843
      %6915 = vst.msk [vmem:[#allocation5 + $0x68] sm:$0xf] %vm6888, %v6845
      %6916 = vst.msk [vmem:[#allocation5 + $0x6c] sm:$0xf] %vm6888, %v6847
      %6917 = vst.msk [vmem:[#allocation5 + $0x70] sm:$0xf] %vm6888, %v6849
      %6918 = vst.msk [vmem:[#allocation5 + $0x74] sm:$0xf] %vm6888, %v6851
      %6919 = vst.msk [vmem:[#allocation5 + $0x78] sm:$0xf] %vm6888, %v6853
      %6920 = vst.msk [vmem:[#allocation5 + $0x7c] sm:$0xf] %vm6888, %v6855
      %v6921 = vld [vmem:[%s5141 + $0x8] sm:$0xf]
      %v6922 = vld [vmem:[%s5141 + $0xc] sm:$0xf]
      %v6923 = vld [vmem:[%s5141 + $0x20] sm:$0xf]
      %v6924 = vld [vmem:[%s5141 + $0x24] sm:$0xf]
      %v6925 = vld [vmem:[%s5141 + $0x38] sm:$0xf]
      %v6926 = vld [vmem:[%s5141 + $0x3c] sm:$0xf]
      %v6927 = vld [vmem:[%s5141 + $0x50] sm:$0xf]
      %v6928 = vld [vmem:[%s5141 + $0x54] sm:$0xf]
      %v6929 = vld [vmem:[%s5141 + $0x68] sm:$0xf]
      %v6930 = vld [vmem:[%s5141 + $0x6c] sm:$0xf]
      %v6931 = vld [vmem:[%s5141 + $0x80] sm:$0xf]
      %v6932 = vld [vmem:[%s5141 + $0x84] sm:$0xf]
      %v6933 = vld [vmem:[%s5141 + $0x98] sm:$0xf]
      %v6934 = vld [vmem:[%s5141 + $0x9c] sm:$0xf]
      %v6935 = vld [vmem:[%s5141 + $0xb0] sm:$0xf]
      %v6936 = vld [vmem:[%s5141 + $0xb4] sm:$0xf]
      %v6937 = vld [vmem:[%s5141 + $0xc8] sm:$0xf]
      %v6938 = vld [vmem:[%s5141 + $0xcc] sm:$0xf]
      %v6939 = vld [vmem:[%s5141 + $0xe0] sm:$0xf]
      %v6940 = vld [vmem:[%s5141 + $0xe4] sm:$0xf]
      %v6941 = vld [vmem:[%s5141 + $0xf8] sm:$0xf]
      %v6942 = vld [vmem:[%s5141 + $0xfc] sm:$0xf]
      %v6943 = vld [vmem:[%s5141 + $0x110] sm:$0xf]
      %v6944 = vld [vmem:[%s5141 + $0x114] sm:$0xf]
      %v6945 = vld [vmem:[%s5141 + $0x128] sm:$0xf]
      %v6946 = vld [vmem:[%s5141 + $0x12c] sm:$0xf]
      %v6947 = vld [vmem:[%s5141 + $0x140] sm:$0xf]
      %v6948 = vld [vmem:[%s5141 + $0x144] sm:$0xf]
      %v6949 = vld [vmem:[%s5141 + $0x158] sm:$0xf]
      %v6950 = vld [vmem:[%s5141 + $0x15c] sm:$0xf]
      %v6951 = vld [vmem:[%s5141 + $0x170] sm:$0xf]
      %v6952 = vld [vmem:[%s5141 + $0x174] sm:$0xf]
      %6985 = vrot.lane.b32.xlu0 %v6921, 32
      %v6986 = vpop.permute.xlu0 %6985
      %6987 = vrot.lane.b32.xlu0 %v6922, 32
      %v6988 = vpop.permute.xlu0 %6987
      %6989 = vrot.lane.b32.xlu0 %v6923, 32
      %v6990 = vpop.permute.xlu0 %6989
      %6991 = vrot.lane.b32.xlu0 %v6924, 32
      %v6992 = vpop.permute.xlu0 %6991
      %6993 = vrot.lane.b32.xlu0 %v6925, 32
      %v6994 = vpop.permute.xlu0 %6993
      %6995 = vrot.lane.b32.xlu0 %v6926, 32
      %v6996 = vpop.permute.xlu0 %6995
      %6997 = vrot.lane.b32.xlu0 %v6927, 32
      %v6998 = vpop.permute.xlu0 %6997
      %6999 = vrot.lane.b32.xlu0 %v6928, 32
      %v7000 = vpop.permute.xlu0 %6999
      %7001 = vrot.lane.b32.xlu0 %v6929, 32
      %v7002 = vpop.permute.xlu0 %7001
      %7003 = vrot.lane.b32.xlu0 %v6930, 32
      %v7004 = vpop.permute.xlu0 %7003
      %7005 = vrot.lane.b32.xlu0 %v6931, 32
      %v7006 = vpop.permute.xlu0 %7005
      %7007 = vrot.lane.b32.xlu0 %v6932, 32
      %v7008 = vpop.permute.xlu0 %7007
      %7009 = vrot.lane.b32.xlu0 %v6933, 32
      %v7010 = vpop.permute.xlu0 %7009
      %7011 = vrot.lane.b32.xlu0 %v6934, 32
      %v7012 = vpop.permute.xlu0 %7011
      %7013 = vrot.lane.b32.xlu0 %v6935, 32
      %v7014 = vpop.permute.xlu0 %7013
      %7015 = vrot.lane.b32.xlu0 %v6936, 32
      %v7016 = vpop.permute.xlu0 %7015
      %7017 = vrot.lane.b32.xlu0 %v6937, 32
      %v7018 = vpop.permute.xlu0 %7017
      %7019 = vrot.lane.b32.xlu0 %v6938, 32
      %v7020 = vpop.permute.xlu0 %7019
      %7021 = vrot.lane.b32.xlu0 %v6939, 32
      %v7022 = vpop.permute.xlu0 %7021
      %7023 = vrot.lane.b32.xlu0 %v6940, 32
      %v7024 = vpop.permute.xlu0 %7023
      %7025 = vrot.lane.b32.xlu0 %v6941, 32
      %v7026 = vpop.permute.xlu0 %7025
      %7027 = vrot.lane.b32.xlu0 %v6942, 32
      %v7028 = vpop.permute.xlu0 %7027
      %7029 = vrot.lane.b32.xlu0 %v6943, 32
      %v7030 = vpop.permute.xlu0 %7029
      %7031 = vrot.lane.b32.xlu0 %v6944, 32
      %v7032 = vpop.permute.xlu0 %7031
      %7033 = vrot.lane.b32.xlu0 %v6945, 32
      %v7034 = vpop.permute.xlu0 %7033
      %7035 = vrot.lane.b32.xlu0 %v6946, 32
      %v7036 = vpop.permute.xlu0 %7035
      %7037 = vrot.lane.b32.xlu0 %v6947, 32
      %v7038 = vpop.permute.xlu0 %7037
      %7039 = vrot.lane.b32.xlu0 %v6948, 32
      %v7040 = vpop.permute.xlu0 %7039
      %7041 = vrot.lane.b32.xlu0 %v6949, 32
      %v7042 = vpop.permute.xlu0 %7041
      %7043 = vrot.lane.b32.xlu0 %v6950, 32
      %v7044 = vpop.permute.xlu0 %7043
      %7045 = vrot.lane.b32.xlu0 %v6951, 32
      %v7046 = vpop.permute.xlu0 %7045
      %7047 = vrot.lane.b32.xlu0 %v6952, 32
      %v7048 = vpop.permute.xlu0 %7047
      %vm7081 = vcmask 322816
      %7082 = vst.msk [vmem:[#allocation5] sm:$0xf] %vm7081, %v6986
      %7083 = vst.msk [vmem:[#allocation5 + $0x4] sm:$0xf] %vm7081, %v6988
      %7084 = vst.msk [vmem:[#allocation5 + $0x8] sm:$0xf] %vm7081, %v6990
      %7085 = vst.msk [vmem:[#allocation5 + $0xc] sm:$0xf] %vm7081, %v6992
      %7086 = vst.msk [vmem:[#allocation5 + $0x10] sm:$0xf] %vm7081, %v6994
      %7087 = vst.msk [vmem:[#allocation5 + $0x14] sm:$0xf] %vm7081, %v6996
      %7088 = vst.msk [vmem:[#allocation5 + $0x18] sm:$0xf] %vm7081, %v6998
      %7089 = vst.msk [vmem:[#allocation5 + $0x1c] sm:$0xf] %vm7081, %v7000
      %7090 = vst.msk [vmem:[#allocation5 + $0x20] sm:$0xf] %vm7081, %v7002
      %7091 = vst.msk [vmem:[#allocation5 + $0x24] sm:$0xf] %vm7081, %v7004
      %7092 = vst.msk [vmem:[#allocation5 + $0x28] sm:$0xf] %vm7081, %v7006
      %7093 = vst.msk [vmem:[#allocation5 + $0x2c] sm:$0xf] %vm7081, %v7008
      %7094 = vst.msk [vmem:[#allocation5 + $0x30] sm:$0xf] %vm7081, %v7010
      %7095 = vst.msk [vmem:[#allocation5 + $0x34] sm:$0xf] %vm7081, %v7012
      %7096 = vst.msk [vmem:[#allocation5 + $0x38] sm:$0xf] %vm7081, %v7014
      %7097 = vst.msk [vmem:[#allocation5 + $0x3c] sm:$0xf] %vm7081, %v7016
      %7098 = vst.msk [vmem:[#allocation5 + $0x40] sm:$0xf] %vm7081, %v7018
      %7099 = vst.msk [vmem:[#allocation5 + $0x44] sm:$0xf] %vm7081, %v7020
      %7100 = vst.msk [vmem:[#allocation5 + $0x48] sm:$0xf] %vm7081, %v7022
      %7101 = vst.msk [vmem:[#allocation5 + $0x4c] sm:$0xf] %vm7081, %v7024
      %7102 = vst.msk [vmem:[#allocation5 + $0x50] sm:$0xf] %vm7081, %v7026
      %7103 = vst.msk [vmem:[#allocation5 + $0x54] sm:$0xf] %vm7081, %v7028
      %7104 = vst.msk [vmem:[#allocation5 + $0x58] sm:$0xf] %vm7081, %v7030
      %7105 = vst.msk [vmem:[#allocation5 + $0x5c] sm:$0xf] %vm7081, %v7032
      %7106 = vst.msk [vmem:[#allocation5 + $0x60] sm:$0xf] %vm7081, %v7034
      %7107 = vst.msk [vmem:[#allocation5 + $0x64] sm:$0xf] %vm7081, %v7036
      %7108 = vst.msk [vmem:[#allocation5 + $0x68] sm:$0xf] %vm7081, %v7038
      %7109 = vst.msk [vmem:[#allocation5 + $0x6c] sm:$0xf] %vm7081, %v7040
      %7110 = vst.msk [vmem:[#allocation5 + $0x70] sm:$0xf] %vm7081, %v7042
      %7111 = vst.msk [vmem:[#allocation5 + $0x74] sm:$0xf] %vm7081, %v7044
      %7112 = vst.msk [vmem:[#allocation5 + $0x78] sm:$0xf] %vm7081, %v7046
      %7113 = vst.msk [vmem:[#allocation5 + $0x7c] sm:$0xf] %vm7081, %v7048
      %v7114 = vld [vmem:[%s5141 + $0x8] sm:$0xf]
      %v7115 = vld [vmem:[%s5141 + $0xc] sm:$0xf]
      %v7116 = vld [vmem:[%s5141 + $0x10] sm:$0x1]
      %v7117 = vld [vmem:[%s5141 + $0x20] sm:$0xf]
      %v7118 = vld [vmem:[%s5141 + $0x24] sm:$0xf]
      %v7119 = vld [vmem:[%s5141 + $0x28] sm:$0x1]
      %v7120 = vld [vmem:[%s5141 + $0x38] sm:$0xf]
      %v7121 = vld [vmem:[%s5141 + $0x3c] sm:$0xf]
      %v7122 = vld [vmem:[%s5141 + $0x40] sm:$0x1]
      %v7123 = vld [vmem:[%s5141 + $0x50] sm:$0xf]
      %v7124 = vld [vmem:[%s5141 + $0x54] sm:$0xf]
      %v7125 = vld [vmem:[%s5141 + $0x58] sm:$0x1]
      %v7126 = vld [vmem:[%s5141 + $0x68] sm:$0xf]
      %v7127 = vld [vmem:[%s5141 + $0x6c] sm:$0xf]
      %v7128 = vld [vmem:[%s5141 + $0x70] sm:$0x1]
      %v7129 = vld [vmem:[%s5141 + $0x80] sm:$0xf]
      %v7130 = vld [vmem:[%s5141 + $0x84] sm:$0xf]
      %v7131 = vld [vmem:[%s5141 + $0x88] sm:$0x1]
      %v7132 = vld [vmem:[%s5141 + $0x98] sm:$0xf]
      %v7133 = vld [vmem:[%s5141 + $0x9c] sm:$0xf]
      %v7134 = vld [vmem:[%s5141 + $0xa0] sm:$0x1]
      %v7135 = vld [vmem:[%s5141 + $0xb0] sm:$0xf]
      %v7136 = vld [vmem:[%s5141 + $0xb4] sm:$0xf]
      %v7137 = vld [vmem:[%s5141 + $0xb8] sm:$0x1]
      %v7138 = vld [vmem:[%s5141 + $0xc8] sm:$0xf]
      %v7139 = vld [vmem:[%s5141 + $0xcc] sm:$0xf]
      %v7140 = vld [vmem:[%s5141 + $0xd0] sm:$0x1]
      %v7141 = vld [vmem:[%s5141 + $0xe0] sm:$0xf]
      %v7142 = vld [vmem:[%s5141 + $0xe4] sm:$0xf]
      %v7143 = vld [vmem:[%s5141 + $0xe8] sm:$0x1]
      %v7144 = vld [vmem:[%s5141 + $0xf8] sm:$0xf]
      %v7145 = vld [vmem:[%s5141 + $0xfc] sm:$0xf]
      %v7146 = vld [vmem:[%s5141 + $0x100] sm:$0x1]
      %v7147 = vld [vmem:[%s5141 + $0x110] sm:$0xf]
      %v7148 = vld [vmem:[%s5141 + $0x114] sm:$0xf]
      %v7149 = vld [vmem:[%s5141 + $0x118] sm:$0x1]
      %v7150 = vld [vmem:[%s5141 + $0x128] sm:$0xf]
      %v7151 = vld [vmem:[%s5141 + $0x12c] sm:$0xf]
      %v7152 = vld [vmem:[%s5141 + $0x130] sm:$0x1]
      %v7153 = vld [vmem:[%s5141 + $0x140] sm:$0xf]
      %v7154 = vld [vmem:[%s5141 + $0x144] sm:$0xf]
      %v7155 = vld [vmem:[%s5141 + $0x148] sm:$0x1]
      %v7156 = vld [vmem:[%s5141 + $0x158] sm:$0xf]
      %v7157 = vld [vmem:[%s5141 + $0x15c] sm:$0xf]
      %v7158 = vld [vmem:[%s5141 + $0x160] sm:$0x1]
      %v7159 = vld [vmem:[%s5141 + $0x170] sm:$0xf]
      %v7160 = vld [vmem:[%s5141 + $0x174] sm:$0xf]
      %v7161 = vld [vmem:[%s5141 + $0x178] sm:$0x1]
      %v7163 = vshrl.u32 %v7114, 16
      %v7165 = vrot.slane %v7163, 4
      %v7166 = vshll.u32 %v7114, 16
      %v7168 = vrot.slane %v7166, 5
      %v7169 = vor.u32 %v7165, %v7168
      %v7170 = vrot.slane %v7169, 4
      %v7172 = vshll.u32 %v7115, 16
      %v7174 = vrot.slane %v7172, 5
      %v7175 = vsel %vm1350, %v7170, %v7174
      %v7176 = vshrl.u32 %v7115, 16
      %v7178 = vrot.slane %v7176, 4
      %v7179 = vor.u32 %v7178, %v7174
      %v7180 = vrot.slane %v7179, 4
      %v7182 = vshll.u32 %v7116, 16
      %v7184 = vrot.slane %v7182, 5
      %v7185 = vsel %vm1350, %v7180, %v7184
      %v7187 = vshrl.u32 %v7117, 16
      %v7189 = vrot.slane %v7187, 4
      %v7190 = vshll.u32 %v7117, 16
      %v7192 = vrot.slane %v7190, 5
      %v7193 = vor.u32 %v7189, %v7192
      %v7194 = vrot.slane %v7193, 4
      %v7196 = vshll.u32 %v7118, 16
      %v7198 = vrot.slane %v7196, 5
      %v7199 = vsel %vm1350, %v7194, %v7198
      %v7200 = vshrl.u32 %v7118, 16
      %v7202 = vrot.slane %v7200, 4
      %v7203 = vor.u32 %v7202, %v7198
      %v7204 = vrot.slane %v7203, 4
      %v7206 = vshll.u32 %v7119, 16
      %v7208 = vrot.slane %v7206, 5
      %v7209 = vsel %vm1350, %v7204, %v7208
      %v7211 = vshrl.u32 %v7120, 16
      %v7213 = vrot.slane %v7211, 4
      %v7214 = vshll.u32 %v7120, 16
      %v7216 = vrot.slane %v7214, 5
      %v7217 = vor.u32 %v7213, %v7216
      %v7218 = vrot.slane %v7217, 4
      %v7220 = vshll.u32 %v7121, 16
      %v7222 = vrot.slane %v7220, 5
      %v7223 = vsel %vm1350, %v7218, %v7222
      %v7224 = vshrl.u32 %v7121, 16
      %v7226 = vrot.slane %v7224, 4
      %v7227 = vor.u32 %v7226, %v7222
      %v7228 = vrot.slane %v7227, 4
      %v7230 = vshll.u32 %v7122, 16
      %v7232 = vrot.slane %v7230, 5
      %v7233 = vsel %vm1350, %v7228, %v7232
      %v7235 = vshrl.u32 %v7123, 16
      %v7237 = vrot.slane %v7235, 4
      %v7238 = vshll.u32 %v7123, 16
      %v7240 = vrot.slane %v7238, 5
      %v7241 = vor.u32 %v7237, %v7240
      %v7242 = vrot.slane %v7241, 4
      %v7244 = vshll.u32 %v7124, 16
      %v7246 = vrot.slane %v7244, 5
      %v7247 = vsel %vm1350, %v7242, %v7246
      %v7248 = vshrl.u32 %v7124, 16
      %v7250 = vrot.slane %v7248, 4
      %v7251 = vor.u32 %v7250, %v7246
      %v7252 = vrot.slane %v7251, 4
      %v7254 = vshll.u32 %v7125, 16
      %v7256 = vrot.slane %v7254, 5
      %v7257 = vsel %vm1350, %v7252, %v7256
      %v7259 = vshrl.u32 %v7126, 16
      %v7261 = vrot.slane %v7259, 4
      %v7262 = vshll.u32 %v7126, 16
      %v7264 = vrot.slane %v7262, 5
      %v7265 = vor.u32 %v7261, %v7264
      %v7266 = vrot.slane %v7265, 4
      %v7268 = vshll.u32 %v7127, 16
      %v7270 = vrot.slane %v7268, 5
      %v7271 = vsel %vm1350, %v7266, %v7270
      %v7272 = vshrl.u32 %v7127, 16
      %v7274 = vrot.slane %v7272, 4
      %v7275 = vor.u32 %v7274, %v7270
      %v7276 = vrot.slane %v7275, 4
      %v7278 = vshll.u32 %v7128, 16
      %v7280 = vrot.slane %v7278, 5
      %v7281 = vsel %vm1350, %v7276, %v7280
      %v7283 = vshrl.u32 %v7129, 16
      %v7285 = vrot.slane %v7283, 4
      %v7286 = vshll.u32 %v7129, 16
      %v7288 = vrot.slane %v7286, 5
      %v7289 = vor.u32 %v7285, %v7288
      %v7290 = vrot.slane %v7289, 4
      %v7292 = vshll.u32 %v7130, 16
      %v7294 = vrot.slane %v7292, 5
      %v7295 = vsel %vm1350, %v7290, %v7294
      %v7296 = vshrl.u32 %v7130, 16
      %v7298 = vrot.slane %v7296, 4
      %v7299 = vor.u32 %v7298, %v7294
      %v7300 = vrot.slane %v7299, 4
      %v7302 = vshll.u32 %v7131, 16
      %v7304 = vrot.slane %v7302, 5
      %v7305 = vsel %vm1350, %v7300, %v7304
      %v7307 = vshrl.u32 %v7132, 16
      %v7309 = vrot.slane %v7307, 4
      %v7310 = vshll.u32 %v7132, 16
      %v7312 = vrot.slane %v7310, 5
      %v7313 = vor.u32 %v7309, %v7312
      %v7314 = vrot.slane %v7313, 4
      %v7316 = vshll.u32 %v7133, 16
      %v7318 = vrot.slane %v7316, 5
      %v7319 = vsel %vm1350, %v7314, %v7318
      %v7320 = vshrl.u32 %v7133, 16
      %v7322 = vrot.slane %v7320, 4
      %v7323 = vor.u32 %v7322, %v7318
      %v7324 = vrot.slane %v7323, 4
      %v7326 = vshll.u32 %v7134, 16
      %v7328 = vrot.slane %v7326, 5
      %v7329 = vsel %vm1350, %v7324, %v7328
      %v7331 = vshrl.u32 %v7135, 16
      %v7333 = vrot.slane %v7331, 4
      %v7334 = vshll.u32 %v7135, 16
      %v7336 = vrot.slane %v7334, 5
      %v7337 = vor.u32 %v7333, %v7336
      %v7338 = vrot.slane %v7337, 4
      %v7340 = vshll.u32 %v7136, 16
      %v7342 = vrot.slane %v7340, 5
      %v7343 = vsel %vm1350, %v7338, %v7342
      %v7344 = vshrl.u32 %v7136, 16
      %v7346 = vrot.slane %v7344, 4
      %v7347 = vor.u32 %v7346, %v7342
      %v7348 = vrot.slane %v7347, 4
      %v7350 = vshll.u32 %v7137, 16
      %v7352 = vrot.slane %v7350, 5
      %v7353 = vsel %vm1350, %v7348, %v7352
      %v7355 = vshrl.u32 %v7138, 16
      %v7357 = vrot.slane %v7355, 4
      %v7358 = vshll.u32 %v7138, 16
      %v7360 = vrot.slane %v7358, 5
      %v7361 = vor.u32 %v7357, %v7360
      %v7362 = vrot.slane %v7361, 4
      %v7364 = vshll.u32 %v7139, 16
      %v7366 = vrot.slane %v7364, 5
      %v7367 = vsel %vm1350, %v7362, %v7366
      %v7368 = vshrl.u32 %v7139, 16
      %v7370 = vrot.slane %v7368, 4
      %v7371 = vor.u32 %v7370, %v7366
      %v7372 = vrot.slane %v7371, 4
      %v7374 = vshll.u32 %v7140, 16
      %v7376 = vrot.slane %v7374, 5
      %v7377 = vsel %vm1350, %v7372, %v7376
      %v7379 = vshrl.u32 %v7141, 16
      %v7381 = vrot.slane %v7379, 4
      %v7382 = vshll.u32 %v7141, 16
      %v7384 = vrot.slane %v7382, 5
      %v7385 = vor.u32 %v7381, %v7384
      %v7386 = vrot.slane %v7385, 4
      %v7388 = vshll.u32 %v7142, 16
      %v7390 = vrot.slane %v7388, 5
      %v7391 = vsel %vm1350, %v7386, %v7390
      %v7392 = vshrl.u32 %v7142, 16
      %v7394 = vrot.slane %v7392, 4
      %v7395 = vor.u32 %v7394, %v7390
      %v7396 = vrot.slane %v7395, 4
      %v7398 = vshll.u32 %v7143, 16
      %v7400 = vrot.slane %v7398, 5
      %v7401 = vsel %vm1350, %v7396, %v7400
      %v7403 = vshrl.u32 %v7144, 16
      %v7405 = vrot.slane %v7403, 4
      %v7406 = vshll.u32 %v7144, 16
      %v7408 = vrot.slane %v7406, 5
      %v7409 = vor.u32 %v7405, %v7408
      %v7410 = vrot.slane %v7409, 4
      %v7412 = vshll.u32 %v7145, 16
      %v7414 = vrot.slane %v7412, 5
      %v7415 = vsel %vm1350, %v7410, %v7414
      %v7416 = vshrl.u32 %v7145, 16
      %v7418 = vrot.slane %v7416, 4
      %v7419 = vor.u32 %v7418, %v7414
      %v7420 = vrot.slane %v7419, 4
      %v7422 = vshll.u32 %v7146, 16
      %v7424 = vrot.slane %v7422, 5
      %v7425 = vsel %vm1350, %v7420, %v7424
      %v7427 = vshrl.u32 %v7147, 16
      %v7429 = vrot.slane %v7427, 4
      %v7430 = vshll.u32 %v7147, 16
      %v7432 = vrot.slane %v7430, 5
      %v7433 = vor.u32 %v7429, %v7432
      %v7434 = vrot.slane %v7433, 4
      %v7436 = vshll.u32 %v7148, 16
      %v7438 = vrot.slane %v7436, 5
      %v7439 = vsel %vm1350, %v7434, %v7438
      %v7440 = vshrl.u32 %v7148, 16
      %v7442 = vrot.slane %v7440, 4
      %v7443 = vor.u32 %v7442, %v7438
      %v7444 = vrot.slane %v7443, 4
      %v7446 = vshll.u32 %v7149, 16
      %v7448 = vrot.slane %v7446, 5
      %v7449 = vsel %vm1350, %v7444, %v7448
      %v7451 = vshrl.u32 %v7150, 16
      %v7453 = vrot.slane %v7451, 4
      %v7454 = vshll.u32 %v7150, 16
      %v7456 = vrot.slane %v7454, 5
      %v7457 = vor.u32 %v7453, %v7456
      %v7458 = vrot.slane %v7457, 4
      %v7460 = vshll.u32 %v7151, 16
      %v7462 = vrot.slane %v7460, 5
      %v7463 = vsel %vm1350, %v7458, %v7462
      %v7464 = vshrl.u32 %v7151, 16
      %v7466 = vrot.slane %v7464, 4
      %v7467 = vor.u32 %v7466, %v7462
      %v7468 = vrot.slane %v7467, 4
      %v7470 = vshll.u32 %v7152, 16
      %v7472 = vrot.slane %v7470, 5
      %v7473 = vsel %vm1350, %v7468, %v7472
      %v7475 = vshrl.u32 %v7153, 16
      %v7477 = vrot.slane %v7475, 4
      %v7478 = vshll.u32 %v7153, 16
      %v7480 = vrot.slane %v7478, 5
      %v7481 = vor.u32 %v7477, %v7480
      %v7482 = vrot.slane %v7481, 4
      %v7484 = vshll.u32 %v7154, 16
      %v7486 = vrot.slane %v7484, 5
      %v7487 = vsel %vm1350, %v7482, %v7486
      %v7488 = vshrl.u32 %v7154, 16
      %v7490 = vrot.slane %v7488, 4
      %v7491 = vor.u32 %v7490, %v7486
      %v7492 = vrot.slane %v7491, 4
      %v7494 = vshll.u32 %v7155, 16
      %v7496 = vrot.slane %v7494, 5
      %v7497 = vsel %vm1350, %v7492, %v7496
      %v7499 = vshrl.u32 %v7156, 16
      %v7501 = vrot.slane %v7499, 4
      %v7502 = vshll.u32 %v7156, 16
      %v7504 = vrot.slane %v7502, 5
      %v7505 = vor.u32 %v7501, %v7504
      %v7506 = vrot.slane %v7505, 4
      %v7508 = vshll.u32 %v7157, 16
      %v7510 = vrot.slane %v7508, 5
      %v7511 = vsel %vm1350, %v7506, %v7510
      %v7512 = vshrl.u32 %v7157, 16
      %v7514 = vrot.slane %v7512, 4
      %v7515 = vor.u32 %v7514, %v7510
      %v7516 = vrot.slane %v7515, 4
      %v7518 = vshll.u32 %v7158, 16
      %v7520 = vrot.slane %v7518, 5
      %v7521 = vsel %vm1350, %v7516, %v7520
      %v7523 = vshrl.u32 %v7159, 16
      %v7525 = vrot.slane %v7523, 4
      %v7526 = vshll.u32 %v7159, 16
      %v7528 = vrot.slane %v7526, 5
      %v7529 = vor.u32 %v7525, %v7528
      %v7530 = vrot.slane %v7529, 4
      %v7532 = vshll.u32 %v7160, 16
      %v7534 = vrot.slane %v7532, 5
      %v7535 = vsel %vm1350, %v7530, %v7534
      %v7536 = vshrl.u32 %v7160, 16
      %v7538 = vrot.slane %v7536, 4
      %v7539 = vor.u32 %v7538, %v7534
      %v7540 = vrot.slane %v7539, 4
      %v7542 = vshll.u32 %v7161, 16
      %v7544 = vrot.slane %v7542, 5
      %v7545 = vsel %vm1350, %v7540, %v7544
      %7546 = vrot.lane.b32.xlu0 %v7175, 40
      %v7547 = vpop.permute.xlu0 %7546
      %7548 = vrot.lane.b32.xlu0 %v7185, 40
      %v7549 = vpop.permute.xlu0 %7548
      %7550 = vrot.lane.b32.xlu0 %v7199, 40
      %v7551 = vpop.permute.xlu0 %7550
      %7552 = vrot.lane.b32.xlu0 %v7209, 40
      %v7553 = vpop.permute.xlu0 %7552
      %7554 = vrot.lane.b32.xlu0 %v7223, 40
      %v7555 = vpop.permute.xlu0 %7554
      %7556 = vrot.lane.b32.xlu0 %v7233, 40
      %v7557 = vpop.permute.xlu0 %7556
      %7558 = vrot.lane.b32.xlu0 %v7247, 40
      %v7559 = vpop.permute.xlu0 %7558
      %7560 = vrot.lane.b32.xlu0 %v7257, 40
      %v7561 = vpop.permute.xlu0 %7560
      %7562 = vrot.lane.b32.xlu0 %v7271, 40
      %v7563 = vpop.permute.xlu0 %7562
      %7564 = vrot.lane.b32.xlu0 %v7281, 40
      %v7565 = vpop.permute.xlu0 %7564
      %7566 = vrot.lane.b32.xlu0 %v7295, 40
      %v7567 = vpop.permute.xlu0 %7566
      %7568 = vrot.lane.b32.xlu0 %v7305, 40
      %v7569 = vpop.permute.xlu0 %7568
      %7570 = vrot.lane.b32.xlu0 %v7319, 40
      %v7571 = vpop.permute.xlu0 %7570
      %7572 = vrot.lane.b32.xlu0 %v7329, 40
      %v7573 = vpop.permute.xlu0 %7572
      %7574 = vrot.lane.b32.xlu0 %v7343, 40
      %v7575 = vpop.permute.xlu0 %7574
      %7576 = vrot.lane.b32.xlu0 %v7353, 40
      %v7577 = vpop.permute.xlu0 %7576
      %7578 = vrot.lane.b32.xlu0 %v7367, 40
      %v7579 = vpop.permute.xlu0 %7578
      %7580 = vrot.lane.b32.xlu0 %v7377, 40
      %v7581 = vpop.permute.xlu0 %7580
      %7582 = vrot.lane.b32.xlu0 %v7391, 40
      %v7583 = vpop.permute.xlu0 %7582
      %7584 = vrot.lane.b32.xlu0 %v7401, 40
      %v7585 = vpop.permute.xlu0 %7584
      %7586 = vrot.lane.b32.xlu0 %v7415, 40
      %v7587 = vpop.permute.xlu0 %7586
      %7588 = vrot.lane.b32.xlu0 %v7425, 40
      %v7589 = vpop.permute.xlu0 %7588
      %7590 = vrot.lane.b32.xlu0 %v7439, 40
      %v7591 = vpop.permute.xlu0 %7590
      %7592 = vrot.lane.b32.xlu0 %v7449, 40
      %v7593 = vpop.permute.xlu0 %7592
      %7594 = vrot.lane.b32.xlu0 %v7463, 40
      %v7595 = vpop.permute.xlu0 %7594
      %7596 = vrot.lane.b32.xlu0 %v7473, 40
      %v7597 = vpop.permute.xlu0 %7596
      %7598 = vrot.lane.b32.xlu0 %v7487, 40
      %v7599 = vpop.permute.xlu0 %7598
      %7600 = vrot.lane.b32.xlu0 %v7497, 40
      %v7601 = vpop.permute.xlu0 %7600
      %7602 = vrot.lane.b32.xlu0 %v7511, 40
      %v7603 = vpop.permute.xlu0 %7602
      %7604 = vrot.lane.b32.xlu0 %v7521, 40
      %v7605 = vpop.permute.xlu0 %7604
      %7606 = vrot.lane.b32.xlu0 %v7535, 40
      %v7607 = vpop.permute.xlu0 %7606
      %7608 = vrot.lane.b32.xlu0 %v7545, 40
      %v7609 = vpop.permute.xlu0 %7608
      %vm7642 = vcmask 388416
      %7643 = vst.msk [vmem:[#allocation5] sm:$0xf] %vm7642, %v7547
      %7644 = vst.msk [vmem:[#allocation5 + $0x4] sm:$0xf] %vm7642, %v7549
      %7645 = vst.msk [vmem:[#allocation5 + $0x8] sm:$0xf] %vm7642, %v7551
      %7646 = vst.msk [vmem:[#allocation5 + $0xc] sm:$0xf] %vm7642, %v7553
      %7647 = vst.msk [vmem:[#allocation5 + $0x10] sm:$0xf] %vm7642, %v7555
      %7648 = vst.msk [vmem:[#allocation5 + $0x14] sm:$0xf] %vm7642, %v7557
      %7649 = vst.msk [vmem:[#allocation5 + $0x18] sm:$0xf] %vm7642, %v7559
      %7650 = vst.msk [vmem:[#allocation5 + $0x1c] sm:$0xf] %vm7642, %v7561
      %7651 = vst.msk [vmem:[#allocation5 + $0x20] sm:$0xf] %vm7642, %v7563
      %7652 = vst.msk [vmem:[#allocation5 + $0x24] sm:$0xf] %vm7642, %v7565
      %7653 = vst.msk [vmem:[#allocation5 + $0x28] sm:$0xf] %vm7642, %v7567
      %7654 = vst.msk [vmem:[#allocation5 + $0x2c] sm:$0xf] %vm7642, %v7569
      %7655 = vst.msk [vmem:[#allocation5 + $0x30] sm:$0xf] %vm7642, %v7571
      %7656 = vst.msk [vmem:[#allocation5 + $0x34] sm:$0xf] %vm7642, %v7573
      %7657 = vst.msk [vmem:[#allocation5 + $0x38] sm:$0xf] %vm7642, %v7575
      %7658 = vst.msk [vmem:[#allocation5 + $0x3c] sm:$0xf] %vm7642, %v7577
      %7659 = vst.msk [vmem:[#allocation5 + $0x40] sm:$0xf] %vm7642, %v7579
      %7660 = vst.msk [vmem:[#allocation5 + $0x44] sm:$0xf] %vm7642, %v7581
      %7661 = vst.msk [vmem:[#allocation5 + $0x48] sm:$0xf] %vm7642, %v7583
      %7662 = vst.msk [vmem:[#allocation5 + $0x4c] sm:$0xf] %vm7642, %v7585
      %7663 = vst.msk [vmem:[#allocation5 + $0x50] sm:$0xf] %vm7642, %v7587
      %7664 = vst.msk [vmem:[#allocation5 + $0x54] sm:$0xf] %vm7642, %v7589
      %7665 = vst.msk [vmem:[#allocation5 + $0x58] sm:$0xf] %vm7642, %v7591
      %7666 = vst.msk [vmem:[#allocation5 + $0x5c] sm:$0xf] %vm7642, %v7593
      %7667 = vst.msk [vmem:[#allocation5 + $0x60] sm:$0xf] %vm7642, %v7595
      %7668 = vst.msk [vmem:[#allocation5 + $0x64] sm:$0xf] %vm7642, %v7597
      %7669 = vst.msk [vmem:[#allocation5 + $0x68] sm:$0xf] %vm7642, %v7599
      %7670 = vst.msk [vmem:[#allocation5 + $0x6c] sm:$0xf] %vm7642, %v7601
      %7671 = vst.msk [vmem:[#allocation5 + $0x70] sm:$0xf] %vm7642, %v7603
      %7672 = vst.msk [vmem:[#allocation5 + $0x74] sm:$0xf] %vm7642, %v7605
      %7673 = vst.msk [vmem:[#allocation5 + $0x78] sm:$0xf] %vm7642, %v7607
      %7674 = vst.msk [vmem:[#allocation5 + $0x7c] sm:$0xf] %vm7642, %v7609
      %s7675 = scalar_lea.vmem [#allocation4], 48
      %v7676 = vld [vmem:[%s7675 + $0x4] sm:$0x8]
      %v7677 = vld [vmem:[%s7675 + $0x8] sm:$0xf]
      %v7678 = vld [vmem:[%s7675 + $0xc] sm:$0xf]
      %v7679 = vld [vmem:[%s7675 + $0x1c] sm:$0x8]
      %v7680 = vld [vmem:[%s7675 + $0x20] sm:$0xf]
      %v7681 = vld [vmem:[%s7675 + $0x24] sm:$0xf]
      %v7682 = vld [vmem:[%s7675 + $0x34] sm:$0x8]
      %v7683 = vld [vmem:[%s7675 + $0x38] sm:$0xf]
      %v7684 = vld [vmem:[%s7675 + $0x3c] sm:$0xf]
      %v7685 = vld [vmem:[%s7675 + $0x4c] sm:$0x8]
      %v7686 = vld [vmem:[%s7675 + $0x50] sm:$0xf]
      %v7687 = vld [vmem:[%s7675 + $0x54] sm:$0xf]
      %v7688 = vld [vmem:[%s7675 + $0x64] sm:$0x8]
      %v7689 = vld [vmem:[%s7675 + $0x68] sm:$0xf]
      %v7690 = vld [vmem:[%s7675 + $0x6c] sm:$0xf]
      %v7691 = vld [vmem:[%s7675 + $0x7c] sm:$0x8]
      %v7692 = vld [vmem:[%s7675 + $0x80] sm:$0xf]
      %v7693 = vld [vmem:[%s7675 + $0x84] sm:$0xf]
      %v7694 = vld [vmem:[%s7675 + $0x94] sm:$0x8]
      %v7695 = vld [vmem:[%s7675 + $0x98] sm:$0xf]
      %v7696 = vld [vmem:[%s7675 + $0x9c] sm:$0xf]
      %v7697 = vld [vmem:[%s7675 + $0xac] sm:$0x8]
      %v7698 = vld [vmem:[%s7675 + $0xb0] sm:$0xf]
      %v7699 = vld [vmem:[%s7675 + $0xb4] sm:$0xf]
      %v7700 = vld [vmem:[%s7675 + $0xc4] sm:$0x8]
      %v7701 = vld [vmem:[%s7675 + $0xc8] sm:$0xf]
      %v7702 = vld [vmem:[%s7675 + $0xcc] sm:$0xf]
      %v7703 = vld [vmem:[%s7675 + $0xdc] sm:$0x8]
      %v7704 = vld [vmem:[%s7675 + $0xe0] sm:$0xf]
      %v7705 = vld [vmem:[%s7675 + $0xe4] sm:$0xf]
      %v7706 = vld [vmem:[%s7675 + $0xf4] sm:$0x8]
      %v7707 = vld [vmem:[%s7675 + $0xf8] sm:$0xf]
      %v7708 = vld [vmem:[%s7675 + $0xfc] sm:$0xf]
      %v7709 = vld [vmem:[%s7675 + $0x10c] sm:$0x8]
      %v7710 = vld [vmem:[%s7675 + $0x110] sm:$0xf]
      %v7711 = vld [vmem:[%s7675 + $0x114] sm:$0xf]
      %v7712 = vld [vmem:[%s7675 + $0x124] sm:$0x8]
      %v7713 = vld [vmem:[%s7675 + $0x128] sm:$0xf]
      %v7714 = vld [vmem:[%s7675 + $0x12c] sm:$0xf]
      %v7715 = vld [vmem:[%s7675 + $0x13c] sm:$0x8]
      %v7716 = vld [vmem:[%s7675 + $0x140] sm:$0xf]
      %v7717 = vld [vmem:[%s7675 + $0x144] sm:$0xf]
      %v7718 = vld [vmem:[%s7675 + $0x154] sm:$0x8]
      %v7719 = vld [vmem:[%s7675 + $0x158] sm:$0xf]
      %v7720 = vld [vmem:[%s7675 + $0x15c] sm:$0xf]
      %v7721 = vld [vmem:[%s7675 + $0x16c] sm:$0x8]
      %v7722 = vld [vmem:[%s7675 + $0x170] sm:$0xf]
      %v7723 = vld [vmem:[%s7675 + $0x174] sm:$0xf]
      %v7725 = vshrl.u32 %v7676, 16
      %v7727 = vrot.slane %v7725, 7
      %v7728 = vrot.slane %v7727, 4
      %v7730 = vshrl.u32 %v7677, 16
      %v7732 = vrot.slane %v7730, 7
      %v7733 = vshll.u32 %v7677, 16
      %v7735 = vor.u32 %v7732, %v7733
      %v7736 = vsel %vm690, %v7728, %v7735
      %v7737 = vrot.slane %v7732, 4
      %v7739 = vshrl.u32 %v7678, 16
      %v7741 = vrot.slane %v7739, 7
      %v7742 = vshll.u32 %v7678, 16
      %v7744 = vor.u32 %v7741, %v7742
      %v7745 = vsel %vm690, %v7737, %v7744
      %v7747 = vshrl.u32 %v7679, 16
      %v7749 = vrot.slane %v7747, 7
      %v7750 = vrot.slane %v7749, 4
      %v7752 = vshrl.u32 %v7680, 16
      %v7754 = vrot.slane %v7752, 7
      %v7755 = vshll.u32 %v7680, 16
      %v7757 = vor.u32 %v7754, %v7755
      %v7758 = vsel %vm690, %v7750, %v7757
      %v7759 = vrot.slane %v7754, 4
      %v7761 = vshrl.u32 %v7681, 16
      %v7763 = vrot.slane %v7761, 7
      %v7764 = vshll.u32 %v7681, 16
      %v7766 = vor.u32 %v7763, %v7764
      %v7767 = vsel %vm690, %v7759, %v7766
      %v7769 = vshrl.u32 %v7682, 16
      %v7771 = vrot.slane %v7769, 7
      %v7772 = vrot.slane %v7771, 4
      %v7774 = vshrl.u32 %v7683, 16
      %v7776 = vrot.slane %v7774, 7
      %v7777 = vshll.u32 %v7683, 16
      %v7779 = vor.u32 %v7776, %v7777
      %v7780 = vsel %vm690, %v7772, %v7779
      %v7781 = vrot.slane %v7776, 4
      %v7783 = vshrl.u32 %v7684, 16
      %v7785 = vrot.slane %v7783, 7
      %v7786 = vshll.u32 %v7684, 16
      %v7788 = vor.u32 %v7785, %v7786
      %v7789 = vsel %vm690, %v7781, %v7788
      %v7791 = vshrl.u32 %v7685, 16
      %v7793 = vrot.slane %v7791, 7
      %v7794 = vrot.slane %v7793, 4
      %v7796 = vshrl.u32 %v7686, 16
      %v7798 = vrot.slane %v7796, 7
      %v7799 = vshll.u32 %v7686, 16
      %v7801 = vor.u32 %v7798, %v7799
      %v7802 = vsel %vm690, %v7794, %v7801
      %v7803 = vrot.slane %v7798, 4
      %v7805 = vshrl.u32 %v7687, 16
      %v7807 = vrot.slane %v7805, 7
      %v7808 = vshll.u32 %v7687, 16
      %v7810 = vor.u32 %v7807, %v7808
      %v7811 = vsel %vm690, %v7803, %v7810
      %v7813 = vshrl.u32 %v7688, 16
      %v7815 = vrot.slane %v7813, 7
      %v7816 = vrot.slane %v7815, 4
      %v7818 = vshrl.u32 %v7689, 16
      %v7820 = vrot.slane %v7818, 7
      %v7821 = vshll.u32 %v7689, 16
      %v7823 = vor.u32 %v7820, %v7821
      %v7824 = vsel %vm690, %v7816, %v7823
      %v7825 = vrot.slane %v7820, 4
      %v7827 = vshrl.u32 %v7690, 16
      %v7829 = vrot.slane %v7827, 7
      %v7830 = vshll.u32 %v7690, 16
      %v7832 = vor.u32 %v7829, %v7830
      %v7833 = vsel %vm690, %v7825, %v7832
      %v7835 = vshrl.u32 %v7691, 16
      %v7837 = vrot.slane %v7835, 7
      %v7838 = vrot.slane %v7837, 4
      %v7840 = vshrl.u32 %v7692, 16
      %v7842 = vrot.slane %v7840, 7
      %v7843 = vshll.u32 %v7692, 16
      %v7845 = vor.u32 %v7842, %v7843
      %v7846 = vsel %vm690, %v7838, %v7845
      %v7847 = vrot.slane %v7842, 4
      %v7849 = vshrl.u32 %v7693, 16
      %v7851 = vrot.slane %v7849, 7
      %v7852 = vshll.u32 %v7693, 16
      %v7854 = vor.u32 %v7851, %v7852
      %v7855 = vsel %vm690, %v7847, %v7854
      %v7857 = vshrl.u32 %v7694, 16
      %v7859 = vrot.slane %v7857, 7
      %v7860 = vrot.slane %v7859, 4
      %v7862 = vshrl.u32 %v7695, 16
      %v7864 = vrot.slane %v7862, 7
      %v7865 = vshll.u32 %v7695, 16
      %v7867 = vor.u32 %v7864, %v7865
      %v7868 = vsel %vm690, %v7860, %v7867
      %v7869 = vrot.slane %v7864, 4
      %v7871 = vshrl.u32 %v7696, 16
      %v7873 = vrot.slane %v7871, 7
      %v7874 = vshll.u32 %v7696, 16
      %v7876 = vor.u32 %v7873, %v7874
      %v7877 = vsel %vm690, %v7869, %v7876
      %v7879 = vshrl.u32 %v7697, 16
      %v7881 = vrot.slane %v7879, 7
      %v7882 = vrot.slane %v7881, 4
      %v7884 = vshrl.u32 %v7698, 16
      %v7886 = vrot.slane %v7884, 7
      %v7887 = vshll.u32 %v7698, 16
      %v7889 = vor.u32 %v7886, %v7887
      %v7890 = vsel %vm690, %v7882, %v7889
      %v7891 = vrot.slane %v7886, 4
      %v7893 = vshrl.u32 %v7699, 16
      %v7895 = vrot.slane %v7893, 7
      %v7896 = vshll.u32 %v7699, 16
      %v7898 = vor.u32 %v7895, %v7896
      %v7899 = vsel %vm690, %v7891, %v7898
      %v7901 = vshrl.u32 %v7700, 16
      %v7903 = vrot.slane %v7901, 7
      %v7904 = vrot.slane %v7903, 4
      %v7906 = vshrl.u32 %v7701, 16
      %v7908 = vrot.slane %v7906, 7
      %v7909 = vshll.u32 %v7701, 16
      %v7911 = vor.u32 %v7908, %v7909
      %v7912 = vsel %vm690, %v7904, %v7911
      %v7913 = vrot.slane %v7908, 4
      %v7915 = vshrl.u32 %v7702, 16
      %v7917 = vrot.slane %v7915, 7
      %v7918 = vshll.u32 %v7702, 16
      %v7920 = vor.u32 %v7917, %v7918
      %v7921 = vsel %vm690, %v7913, %v7920
      %v7923 = vshrl.u32 %v7703, 16
      %v7925 = vrot.slane %v7923, 7
      %v7926 = vrot.slane %v7925, 4
      %v7928 = vshrl.u32 %v7704, 16
      %v7930 = vrot.slane %v7928, 7
      %v7931 = vshll.u32 %v7704, 16
      %v7933 = vor.u32 %v7930, %v7931
      %v7934 = vsel %vm690, %v7926, %v7933
      %v7935 = vrot.slane %v7930, 4
      %v7937 = vshrl.u32 %v7705, 16
      %v7939 = vrot.slane %v7937, 7
      %v7940 = vshll.u32 %v7705, 16
      %v7942 = vor.u32 %v7939, %v7940
      %v7943 = vsel %vm690, %v7935, %v7942
      %v7945 = vshrl.u32 %v7706, 16
      %v7947 = vrot.slane %v7945, 7
      %v7948 = vrot.slane %v7947, 4
      %v7950 = vshrl.u32 %v7707, 16
      %v7952 = vrot.slane %v7950, 7
      %v7953 = vshll.u32 %v7707, 16
      %v7955 = vor.u32 %v7952, %v7953
      %v7956 = vsel %vm690, %v7948, %v7955
      %v7957 = vrot.slane %v7952, 4
      %v7959 = vshrl.u32 %v7708, 16
      %v7961 = vrot.slane %v7959, 7
      %v7962 = vshll.u32 %v7708, 16
      %v7964 = vor.u32 %v7961, %v7962
      %v7965 = vsel %vm690, %v7957, %v7964
      %v7967 = vshrl.u32 %v7709, 16
      %v7969 = vrot.slane %v7967, 7
      %v7970 = vrot.slane %v7969, 4
      %v7972 = vshrl.u32 %v7710, 16
      %v7974 = vrot.slane %v7972, 7
      %v7975 = vshll.u32 %v7710, 16
      %v7977 = vor.u32 %v7974, %v7975
      %v7978 = vsel %vm690, %v7970, %v7977
      %v7979 = vrot.slane %v7974, 4
      %v7981 = vshrl.u32 %v7711, 16
      %v7983 = vrot.slane %v7981, 7
      %v7984 = vshll.u32 %v7711, 16
      %v7986 = vor.u32 %v7983, %v7984
      %v7987 = vsel %vm690, %v7979, %v7986
      %v7989 = vshrl.u32 %v7712, 16
      %v7991 = vrot.slane %v7989, 7
      %v7992 = vrot.slane %v7991, 4
      %v7994 = vshrl.u32 %v7713, 16
      %v7996 = vrot.slane %v7994, 7
      %v7997 = vshll.u32 %v7713, 16
      %v7999 = vor.u32 %v7996, %v7997
      %v8000 = vsel %vm690, %v7992, %v7999
      %v8001 = vrot.slane %v7996, 4
      %v8003 = vshrl.u32 %v7714, 16
      %v8005 = vrot.slane %v8003, 7
      %v8006 = vshll.u32 %v7714, 16
      %v8008 = vor.u32 %v8005, %v8006
      %v8009 = vsel %vm690, %v8001, %v8008
      %v8011 = vshrl.u32 %v7715, 16
      %v8013 = vrot.slane %v8011, 7
      %v8014 = vrot.slane %v8013, 4
      %v8016 = vshrl.u32 %v7716, 16
      %v8018 = vrot.slane %v8016, 7
      %v8019 = vshll.u32 %v7716, 16
      %v8021 = vor.u32 %v8018, %v8019
      %v8022 = vsel %vm690, %v8014, %v8021
      %v8023 = vrot.slane %v8018, 4
      %v8025 = vshrl.u32 %v7717, 16
      %v8027 = vrot.slane %v8025, 7
      %v8028 = vshll.u32 %v7717, 16
      %v8030 = vor.u32 %v8027, %v8028
      %v8031 = vsel %vm690, %v8023, %v8030
      %v8033 = vshrl.u32 %v7718, 16
      %v8035 = vrot.slane %v8033, 7
      %v8036 = vrot.slane %v8035, 4
      %v8038 = vshrl.u32 %v7719, 16
      %v8040 = vrot.slane %v8038, 7
      %v8041 = vshll.u32 %v7719, 16
      %v8043 = vor.u32 %v8040, %v8041
      %v8044 = vsel %vm690, %v8036, %v8043
      %v8045 = vrot.slane %v8040, 4
      %v8047 = vshrl.u32 %v7720, 16
      %v8049 = vrot.slane %v8047, 7
      %v8050 = vshll.u32 %v7720, 16
      %v8052 = vor.u32 %v8049, %v8050
      %v8053 = vsel %vm690, %v8045, %v8052
      %v8055 = vshrl.u32 %v7721, 16
      %v8057 = vrot.slane %v8055, 7
      %v8058 = vrot.slane %v8057, 4
      %v8060 = vshrl.u32 %v7722, 16
      %v8062 = vrot.slane %v8060, 7
      %v8063 = vshll.u32 %v7722, 16
      %v8065 = vor.u32 %v8062, %v8063
      %v8066 = vsel %vm690, %v8058, %v8065
      %v8067 = vrot.slane %v8062, 4
      %v8069 = vshrl.u32 %v7723, 16
      %v8071 = vrot.slane %v8069, 7
      %v8072 = vshll.u32 %v7723, 16
      %v8074 = vor.u32 %v8071, %v8072
      %v8075 = vsel %vm690, %v8067, %v8074
      %8076 = vrot.lane.b32.xlu0 %v7736, 48
      %v8077 = vpop.permute.xlu0 %8076
      %8078 = vrot.lane.b32.xlu0 %v7745, 48
      %v8079 = vpop.permute.xlu0 %8078
      %8080 = vrot.lane.b32.xlu0 %v7758, 48
      %v8081 = vpop.permute.xlu0 %8080
      %8082 = vrot.lane.b32.xlu0 %v7767, 48
      %v8083 = vpop.permute.xlu0 %8082
      %8084 = vrot.lane.b32.xlu0 %v7780, 48
      %v8085 = vpop.permute.xlu0 %8084
      %8086 = vrot.lane.b32.xlu0 %v7789, 48
      %v8087 = vpop.permute.xlu0 %8086
      %8088 = vrot.lane.b32.xlu0 %v7802, 48
      %v8089 = vpop.permute.xlu0 %8088
      %8090 = vrot.lane.b32.xlu0 %v7811, 48
      %v8091 = vpop.permute.xlu0 %8090
      %8092 = vrot.lane.b32.xlu0 %v7824, 48
      %v8093 = vpop.permute.xlu0 %8092
      %8094 = vrot.lane.b32.xlu0 %v7833, 48
      %v8095 = vpop.permute.xlu0 %8094
      %8096 = vrot.lane.b32.xlu0 %v7846, 48
      %v8097 = vpop.permute.xlu0 %8096
      %8098 = vrot.lane.b32.xlu0 %v7855, 48
      %v8099 = vpop.permute.xlu0 %8098
      %8100 = vrot.lane.b32.xlu0 %v7868, 48
      %v8101 = vpop.permute.xlu0 %8100
      %8102 = vrot.lane.b32.xlu0 %v7877, 48
      %v8103 = vpop.permute.xlu0 %8102
      %8104 = vrot.lane.b32.xlu0 %v7890, 48
      %v8105 = vpop.permute.xlu0 %8104
      %8106 = vrot.lane.b32.xlu0 %v7899, 48
      %v8107 = vpop.permute.xlu0 %8106
      %8108 = vrot.lane.b32.xlu0 %v7912, 48
      %v8109 = vpop.permute.xlu0 %8108
      %8110 = vrot.lane.b32.xlu0 %v7921, 48
      %v8111 = vpop.permute.xlu0 %8110
      %8112 = vrot.lane.b32.xlu0 %v7934, 48
      %v8113 = vpop.permute.xlu0 %8112
      %8114 = vrot.lane.b32.xlu0 %v7943, 48
      %v8115 = vpop.permute.xlu0 %8114
      %8116 = vrot.lane.b32.xlu0 %v7956, 48
      %v8117 = vpop.permute.xlu0 %8116
      %8118 = vrot.lane.b32.xlu0 %v7965, 48
      %v8119 = vpop.permute.xlu0 %8118
      %8120 = vrot.lane.b32.xlu0 %v7978, 48
      %v8121 = vpop.permute.xlu0 %8120
      %8122 = vrot.lane.b32.xlu0 %v7987, 48
      %v8123 = vpop.permute.xlu0 %8122
      %8124 = vrot.lane.b32.xlu0 %v8000, 48
      %v8125 = vpop.permute.xlu0 %8124
      %8126 = vrot.lane.b32.xlu0 %v8009, 48
      %v8127 = vpop.permute.xlu0 %8126
      %8128 = vrot.lane.b32.xlu0 %v8022, 48
      %v8129 = vpop.permute.xlu0 %8128
      %8130 = vrot.lane.b32.xlu0 %v8031, 48
      %v8131 = vpop.permute.xlu0 %8130
      %8132 = vrot.lane.b32.xlu0 %v8044, 48
      %v8133 = vpop.permute.xlu0 %8132
      %8134 = vrot.lane.b32.xlu0 %v8053, 48
      %v8135 = vpop.permute.xlu0 %8134
      %8136 = vrot.lane.b32.xlu0 %v8066, 48
      %v8137 = vpop.permute.xlu0 %8136
      %8138 = vrot.lane.b32.xlu0 %v8075, 48
      %v8139 = vpop.permute.xlu0 %8138
      %vm8172 = vcmask 454016
      %8173 = vst.msk [vmem:[#allocation5] sm:$0xf] %vm8172, %v8077
      %8174 = vst.msk [vmem:[#allocation5 + $0x4] sm:$0xf] %vm8172, %v8079
      %8175 = vst.msk [vmem:[#allocation5 + $0x8] sm:$0xf] %vm8172, %v8081
      %8176 = vst.msk [vmem:[#allocation5 + $0xc] sm:$0xf] %vm8172, %v8083
      %8177 = vst.msk [vmem:[#allocation5 + $0x10] sm:$0xf] %vm8172, %v8085
      %8178 = vst.msk [vmem:[#allocation5 + $0x14] sm:$0xf] %vm8172, %v8087
      %8179 = vst.msk [vmem:[#allocation5 + $0x18] sm:$0xf] %vm8172, %v8089
      %8180 = vst.msk [vmem:[#allocation5 + $0x1c] sm:$0xf] %vm8172, %v8091
      %8181 = vst.msk [vmem:[#allocation5 + $0x20] sm:$0xf] %vm8172, %v8093
      %8182 = vst.msk [vmem:[#allocation5 + $0x24] sm:$0xf] %vm8172, %v8095
      %8183 = vst.msk [vmem:[#allocation5 + $0x28] sm:$0xf] %vm8172, %v8097
      %8184 = vst.msk [vmem:[#allocation5 + $0x2c] sm:$0xf] %vm8172, %v8099
      %8185 = vst.msk [vmem:[#allocation5 + $0x30] sm:$0xf] %vm8172, %v8101
      %8186 = vst.msk [vmem:[#allocation5 + $0x34] sm:$0xf] %vm8172, %v8103
      %8187 = vst.msk [vmem:[#allocation5 + $0x38] sm:$0xf] %vm8172, %v8105
      %8188 = vst.msk [vmem:[#allocation5 + $0x3c] sm:$0xf] %vm8172, %v8107
      %8189 = vst.msk [vmem:[#allocation5 + $0x40] sm:$0xf] %vm8172, %v8109
      %8190 = vst.msk [vmem:[#allocation5 + $0x44] sm:$0xf] %vm8172, %v8111
      %8191 = vst.msk [vmem:[#allocation5 + $0x48] sm:$0xf] %vm8172, %v8113
      %8192 = vst.msk [vmem:[#allocation5 + $0x4c] sm:$0xf] %vm8172, %v8115
      %8193 = vst.msk [vmem:[#allocation5 + $0x50] sm:$0xf] %vm8172, %v8117
      %8194 = vst.msk [vmem:[#allocation5 + $0x54] sm:$0xf] %vm8172, %v8119
      %8195 = vst.msk [vmem:[#allocation5 + $0x58] sm:$0xf] %vm8172, %v8121
      %8196 = vst.msk [vmem:[#allocation5 + $0x5c] sm:$0xf] %vm8172, %v8123
      %8197 = vst.msk [vmem:[#allocation5 + $0x60] sm:$0xf] %vm8172, %v8125
      %8198 = vst.msk [vmem:[#allocation5 + $0x64] sm:$0xf] %vm8172, %v8127
      %8199 = vst.msk [vmem:[#allocation5 + $0x68] sm:$0xf] %vm8172, %v8129
      %8200 = vst.msk [vmem:[#allocation5 + $0x6c] sm:$0xf] %vm8172, %v8131
      %8201 = vst.msk [vmem:[#allocation5 + $0x70] sm:$0xf] %vm8172, %v8133
      %8202 = vst.msk [vmem:[#allocation5 + $0x74] sm:$0xf] %vm8172, %v8135
      %8203 = vst.msk [vmem:[#allocation5 + $0x78] sm:$0xf] %vm8172, %v8137
      %8204 = vst.msk [vmem:[#allocation5 + $0x7c] sm:$0xf] %vm8172, %v8139
      %v8205 = vld [vmem:[%s7675 + $0x8] sm:$0xf]
      %v8206 = vld [vmem:[%s7675 + $0xc] sm:$0xf]
      %v8207 = vld [vmem:[%s7675 + $0x20] sm:$0xf]
      %v8208 = vld [vmem:[%s7675 + $0x24] sm:$0xf]
      %v8209 = vld [vmem:[%s7675 + $0x38] sm:$0xf]
      %v8210 = vld [vmem:[%s7675 + $0x3c] sm:$0xf]
      %v8211 = vld [vmem:[%s7675 + $0x50] sm:$0xf]
      %v8212 = vld [vmem:[%s7675 + $0x54] sm:$0xf]
      %v8213 = vld [vmem:[%s7675 + $0x68] sm:$0xf]
      %v8214 = vld [vmem:[%s7675 + $0x6c] sm:$0xf]
      %v8215 = vld [vmem:[%s7675 + $0x80] sm:$0xf]
      %v8216 = vld [vmem:[%s7675 + $0x84] sm:$0xf]
      %v8217 = vld [vmem:[%s7675 + $0x98] sm:$0xf]
      %v8218 = vld [vmem:[%s7675 + $0x9c] sm:$0xf]
      %v8219 = vld [vmem:[%s7675 + $0xb0] sm:$0xf]
      %v8220 = vld [vmem:[%s7675 + $0xb4] sm:$0xf]
      %v8221 = vld [vmem:[%s7675 + $0xc8] sm:$0xf]
      %v8222 = vld [vmem:[%s7675 + $0xcc] sm:$0xf]
      %v8223 = vld [vmem:[%s7675 + $0xe0] sm:$0xf]
      %v8224 = vld [vmem:[%s7675 + $0xe4] sm:$0xf]
      %v8225 = vld [vmem:[%s7675 + $0xf8] sm:$0xf]
      %v8226 = vld [vmem:[%s7675 + $0xfc] sm:$0xf]
      %v8227 = vld [vmem:[%s7675 + $0x110] sm:$0xf]
      %v8228 = vld [vmem:[%s7675 + $0x114] sm:$0xf]
      %v8229 = vld [vmem:[%s7675 + $0x128] sm:$0xf]
      %v8230 = vld [vmem:[%s7675 + $0x12c] sm:$0xf]
      %v8231 = vld [vmem:[%s7675 + $0x140] sm:$0xf]
      %v8232 = vld [vmem:[%s7675 + $0x144] sm:$0xf]
      %v8233 = vld [vmem:[%s7675 + $0x158] sm:$0xf]
      %v8234 = vld [vmem:[%s7675 + $0x15c] sm:$0xf]
      %v8235 = vld [vmem:[%s7675 + $0x170] sm:$0xf]
      %v8236 = vld [vmem:[%s7675 + $0x174] sm:$0xf]
      %8269 = vrot.lane.b32.xlu0 %v8205, 56
      %v8270 = vpop.permute.xlu0 %8269
      %8271 = vrot.lane.b32.xlu0 %v8206, 56
      %v8272 = vpop.permute.xlu0 %8271
      %8273 = vrot.lane.b32.xlu0 %v8207, 56
      %v8274 = vpop.permute.xlu0 %8273
      %8275 = vrot.lane.b32.xlu0 %v8208, 56
      %v8276 = vpop.permute.xlu0 %8275
      %8277 = vrot.lane.b32.xlu0 %v8209, 56
      %v8278 = vpop.permute.xlu0 %8277
      %8279 = vrot.lane.b32.xlu0 %v8210, 56
      %v8280 = vpop.permute.xlu0 %8279
      %8281 = vrot.lane.b32.xlu0 %v8211, 56
      %v8282 = vpop.permute.xlu0 %8281
      %8283 = vrot.lane.b32.xlu0 %v8212, 56
      %v8284 = vpop.permute.xlu0 %8283
      %8285 = vrot.lane.b32.xlu0 %v8213, 56
      %v8286 = vpop.permute.xlu0 %8285
      %8287 = vrot.lane.b32.xlu0 %v8214, 56
      %v8288 = vpop.permute.xlu0 %8287
      %8289 = vrot.lane.b32.xlu0 %v8215, 56
      %v8290 = vpop.permute.xlu0 %8289
      %8291 = vrot.lane.b32.xlu0 %v8216, 56
      %v8292 = vpop.permute.xlu0 %8291
      %8293 = vrot.lane.b32.xlu0 %v8217, 56
      %v8294 = vpop.permute.xlu0 %8293
      %8295 = vrot.lane.b32.xlu0 %v8218, 56
      %v8296 = vpop.permute.xlu0 %8295
      %8297 = vrot.lane.b32.xlu0 %v8219, 56
      %v8298 = vpop.permute.xlu0 %8297
      %8299 = vrot.lane.b32.xlu0 %v8220, 56
      %v8300 = vpop.permute.xlu0 %8299
      %8301 = vrot.lane.b32.xlu0 %v8221, 56
      %v8302 = vpop.permute.xlu0 %8301
      %8303 = vrot.lane.b32.xlu0 %v8222, 56
      %v8304 = vpop.permute.xlu0 %8303
      %8305 = vrot.lane.b32.xlu0 %v8223, 56
      %v8306 = vpop.permute.xlu0 %8305
      %8307 = vrot.lane.b32.xlu0 %v8224, 56
      %v8308 = vpop.permute.xlu0 %8307
      %8309 = vrot.lane.b32.xlu0 %v8225, 56
      %v8310 = vpop.permute.xlu0 %8309
      %8311 = vrot.lane.b32.xlu0 %v8226, 56
      %v8312 = vpop.permute.xlu0 %8311
      %8313 = vrot.lane.b32.xlu0 %v8227, 56
      %v8314 = vpop.permute.xlu0 %8313
      %8315 = vrot.lane.b32.xlu0 %v8228, 56
      %v8316 = vpop.permute.xlu0 %8315
      %8317 = vrot.lane.b32.xlu0 %v8229, 56
      %v8318 = vpop.permute.xlu0 %8317
      %8319 = vrot.lane.b32.xlu0 %v8230, 56
      %v8320 = vpop.permute.xlu0 %8319
      %8321 = vrot.lane.b32.xlu0 %v8231, 56
      %v8322 = vpop.permute.xlu0 %8321
      %8323 = vrot.lane.b32.xlu0 %v8232, 56
      %v8324 = vpop.permute.xlu0 %8323
      %8325 = vrot.lane.b32.xlu0 %v8233, 56
      %v8326 = vpop.permute.xlu0 %8325
      %8327 = vrot.lane.b32.xlu0 %v8234, 56
      %v8328 = vpop.permute.xlu0 %8327
      %8329 = vrot.lane.b32.xlu0 %v8235, 56
      %v8330 = vpop.permute.xlu0 %8329
      %8331 = vrot.lane.b32.xlu0 %v8236, 56
      %v8332 = vpop.permute.xlu0 %8331
      %vm8365 = vcmask 519616
      %8366 = vst.msk [vmem:[#allocation5] sm:$0xf] %vm8365, %v8270
      %8367 = vst.msk [vmem:[#allocation5 + $0x4] sm:$0xf] %vm8365, %v8272
      %8368 = vst.msk [vmem:[#allocation5 + $0x8] sm:$0xf] %vm8365, %v8274
      %8369 = vst.msk [vmem:[#allocation5 + $0xc] sm:$0xf] %vm8365, %v8276
      %8370 = vst.msk [vmem:[#allocation5 + $0x10] sm:$0xf] %vm8365, %v8278
      %8371 = vst.msk [vmem:[#allocation5 + $0x14] sm:$0xf] %vm8365, %v8280
      %8372 = vst.msk [vmem:[#allocation5 + $0x18] sm:$0xf] %vm8365, %v8282
      %8373 = vst.msk [vmem:[#allocation5 + $0x1c] sm:$0xf] %vm8365, %v8284
      %8374 = vst.msk [vmem:[#allocation5 + $0x20] sm:$0xf] %vm8365, %v8286
      %8375 = vst.msk [vmem:[#allocation5 + $0x24] sm:$0xf] %vm8365, %v8288
      %8376 = vst.msk [vmem:[#allocation5 + $0x28] sm:$0xf] %vm8365, %v8290
      %8377 = vst.msk [vmem:[#allocation5 + $0x2c] sm:$0xf] %vm8365, %v8292
      %8378 = vst.msk [vmem:[#allocation5 + $0x30] sm:$0xf] %vm8365, %v8294
      %8379 = vst.msk [vmem:[#allocation5 + $0x34] sm:$0xf] %vm8365, %v8296
      %8380 = vst.msk [vmem:[#allocation5 + $0x38] sm:$0xf] %vm8365, %v8298
      %8381 = vst.msk [vmem:[#allocation5 + $0x3c] sm:$0xf] %vm8365, %v8300
      %8382 = vst.msk [vmem:[#allocation5 + $0x40] sm:$0xf] %vm8365, %v8302
      %8383 = vst.msk [vmem:[#allocation5 + $0x44] sm:$0xf] %vm8365, %v8304
      %8384 = vst.msk [vmem:[#allocation5 + $0x48] sm:$0xf] %vm8365, %v8306
      %8385 = vst.msk [vmem:[#allocation5 + $0x4c] sm:$0xf] %vm8365, %v8308
      %8386 = vst.msk [vmem:[#allocation5 + $0x50] sm:$0xf] %vm8365, %v8310
      %8387 = vst.msk [vmem:[#allocation5 + $0x54] sm:$0xf] %vm8365, %v8312
      %8388 = vst.msk [vmem:[#allocation5 + $0x58] sm:$0xf] %vm8365, %v8314
      %8389 = vst.msk [vmem:[#allocation5 + $0x5c] sm:$0xf] %vm8365, %v8316
      %8390 = vst.msk [vmem:[#allocation5 + $0x60] sm:$0xf] %vm8365, %v8318
      %8391 = vst.msk [vmem:[#allocation5 + $0x64] sm:$0xf] %vm8365, %v8320
      %8392 = vst.msk [vmem:[#allocation5 + $0x68] sm:$0xf] %vm8365, %v8322
      %8393 = vst.msk [vmem:[#allocation5 + $0x6c] sm:$0xf] %vm8365, %v8324
      %8394 = vst.msk [vmem:[#allocation5 + $0x70] sm:$0xf] %vm8365, %v8326
      %8395 = vst.msk [vmem:[#allocation5 + $0x74] sm:$0xf] %vm8365, %v8328
      %8396 = vst.msk [vmem:[#allocation5 + $0x78] sm:$0xf] %vm8365, %v8330
      %8397 = vst.msk [vmem:[#allocation5 + $0x7c] sm:$0xf] %vm8365, %v8332
      %v8398 = vld [vmem:[%s7675 + $0x8] sm:$0xf]
      %v8399 = vld [vmem:[%s7675 + $0xc] sm:$0xf]
      %v8400 = vld [vmem:[%s7675 + $0x10] sm:$0x1]
      %v8401 = vld [vmem:[%s7675 + $0x20] sm:$0xf]
      %v8402 = vld [vmem:[%s7675 + $0x24] sm:$0xf]
      %v8403 = vld [vmem:[%s7675 + $0x28] sm:$0x1]
      %v8404 = vld [vmem:[%s7675 + $0x38] sm:$0xf]
      %v8405 = vld [vmem:[%s7675 + $0x3c] sm:$0xf]
      %v8406 = vld [vmem:[%s7675 + $0x40] sm:$0x1]
      %v8407 = vld [vmem:[%s7675 + $0x50] sm:$0xf]
      %v8408 = vld [vmem:[%s7675 + $0x54] sm:$0xf]
      %v8409 = vld [vmem:[%s7675 + $0x58] sm:$0x1]
      %v8410 = vld [vmem:[%s7675 + $0x68] sm:$0xf]
      %v8411 = vld [vmem:[%s7675 + $0x6c] sm:$0xf]
      %v8412 = vld [vmem:[%s7675 + $0x70] sm:$0x1]
      %v8413 = vld [vmem:[%s7675 + $0x80] sm:$0xf]
      %v8414 = vld [vmem:[%s7675 + $0x84] sm:$0xf]
      %v8415 = vld [vmem:[%s7675 + $0x88] sm:$0x1]
      %v8416 = vld [vmem:[%s7675 + $0x98] sm:$0xf]
      %v8417 = vld [vmem:[%s7675 + $0x9c] sm:$0xf]
      %v8418 = vld [vmem:[%s7675 + $0xa0] sm:$0x1]
      %v8419 = vld [vmem:[%s7675 + $0xb0] sm:$0xf]
      %v8420 = vld [vmem:[%s7675 + $0xb4] sm:$0xf]
      %v8421 = vld [vmem:[%s7675 + $0xb8] sm:$0x1]
      %v8422 = vld [vmem:[%s7675 + $0xc8] sm:$0xf]
      %v8423 = vld [vmem:[%s7675 + $0xcc] sm:$0xf]
      %v8424 = vld [vmem:[%s7675 + $0xd0] sm:$0x1]
      %v8425 = vld [vmem:[%s7675 + $0xe0] sm:$0xf]
      %v8426 = vld [vmem:[%s7675 + $0xe4] sm:$0xf]
      %v8427 = vld [vmem:[%s7675 + $0xe8] sm:$0x1]
      %v8428 = vld [vmem:[%s7675 + $0xf8] sm:$0xf]
      %v8429 = vld [vmem:[%s7675 + $0xfc] sm:$0xf]
      %v8430 = vld [vmem:[%s7675 + $0x100] sm:$0x1]
      %v8431 = vld [vmem:[%s7675 + $0x110] sm:$0xf]
      %v8432 = vld [vmem:[%s7675 + $0x114] sm:$0xf]
      %v8433 = vld [vmem:[%s7675 + $0x118] sm:$0x1]
      %v8434 = vld [vmem:[%s7675 + $0x128] sm:$0xf]
      %v8435 = vld [vmem:[%s7675 + $0x12c] sm:$0xf]
      %v8436 = vld [vmem:[%s7675 + $0x130] sm:$0x1]
      %v8437 = vld [vmem:[%s7675 + $0x140] sm:$0xf]
      %v8438 = vld [vmem:[%s7675 + $0x144] sm:$0xf]
      %v8439 = vld [vmem:[%s7675 + $0x148] sm:$0x1]
      %v8440 = vld [vmem:[%s7675 + $0x158] sm:$0xf]
      %v8441 = vld [vmem:[%s7675 + $0x15c] sm:$0xf]
      %v8442 = vld [vmem:[%s7675 + $0x160] sm:$0x1]
      %v8443 = vld [vmem:[%s7675 + $0x170] sm:$0xf]
      %v8444 = vld [vmem:[%s7675 + $0x174] sm:$0xf]
      %v8445 = vld [vmem:[%s7675 + $0x178] sm:$0x1]
      %v8447 = vshrl.u32 %v8398, 16
      %v8449 = vrot.slane %v8447, 4
      %v8450 = vshll.u32 %v8398, 16
      %v8452 = vrot.slane %v8450, 5
      %v8453 = vor.u32 %v8449, %v8452
      %v8454 = vrot.slane %v8453, 4
      %v8456 = vshll.u32 %v8399, 16
      %v8458 = vrot.slane %v8456, 5
      %v8459 = vsel %vm1350, %v8454, %v8458
      %v8460 = vshrl.u32 %v8399, 16
      %v8462 = vrot.slane %v8460, 4
      %v8463 = vor.u32 %v8462, %v8458
      %v8464 = vrot.slane %v8463, 4
      %v8466 = vshll.u32 %v8400, 16
      %v8468 = vrot.slane %v8466, 5
      %v8469 = vsel %vm1350, %v8464, %v8468
      %v8471 = vshrl.u32 %v8401, 16
      %v8473 = vrot.slane %v8471, 4
      %v8474 = vshll.u32 %v8401, 16
      %v8476 = vrot.slane %v8474, 5
      %v8477 = vor.u32 %v8473, %v8476
      %v8478 = vrot.slane %v8477, 4
      %v8480 = vshll.u32 %v8402, 16
      %v8482 = vrot.slane %v8480, 5
      %v8483 = vsel %vm1350, %v8478, %v8482
      %v8484 = vshrl.u32 %v8402, 16
      %v8486 = vrot.slane %v8484, 4
      %v8487 = vor.u32 %v8486, %v8482
      %v8488 = vrot.slane %v8487, 4
      %v8490 = vshll.u32 %v8403, 16
      %v8492 = vrot.slane %v8490, 5
      %v8493 = vsel %vm1350, %v8488, %v8492
      %v8495 = vshrl.u32 %v8404, 16
      %v8497 = vrot.slane %v8495, 4
      %v8498 = vshll.u32 %v8404, 16
      %v8500 = vrot.slane %v8498, 5
      %v8501 = vor.u32 %v8497, %v8500
      %v8502 = vrot.slane %v8501, 4
      %v8504 = vshll.u32 %v8405, 16
      %v8506 = vrot.slane %v8504, 5
      %v8507 = vsel %vm1350, %v8502, %v8506
      %v8508 = vshrl.u32 %v8405, 16
      %v8510 = vrot.slane %v8508, 4
      %v8511 = vor.u32 %v8510, %v8506
      %v8512 = vrot.slane %v8511, 4
      %v8514 = vshll.u32 %v8406, 16
      %v8516 = vrot.slane %v8514, 5
      %v8517 = vsel %vm1350, %v8512, %v8516
      %v8519 = vshrl.u32 %v8407, 16
      %v8521 = vrot.slane %v8519, 4
      %v8522 = vshll.u32 %v8407, 16
      %v8524 = vrot.slane %v8522, 5
      %v8525 = vor.u32 %v8521, %v8524
      %v8526 = vrot.slane %v8525, 4
      %v8528 = vshll.u32 %v8408, 16
      %v8530 = vrot.slane %v8528, 5
      %v8531 = vsel %vm1350, %v8526, %v8530
      %v8532 = vshrl.u32 %v8408, 16
      %v8534 = vrot.slane %v8532, 4
      %v8535 = vor.u32 %v8534, %v8530
      %v8536 = vrot.slane %v8535, 4
      %v8538 = vshll.u32 %v8409, 16
      %v8540 = vrot.slane %v8538, 5
      %v8541 = vsel %vm1350, %v8536, %v8540
      %v8543 = vshrl.u32 %v8410, 16
      %v8545 = vrot.slane %v8543, 4
      %v8546 = vshll.u32 %v8410, 16
      %v8548 = vrot.slane %v8546, 5
      %v8549 = vor.u32 %v8545, %v8548
      %v8550 = vrot.slane %v8549, 4
      %v8552 = vshll.u32 %v8411, 16
      %v8554 = vrot.slane %v8552, 5
      %v8555 = vsel %vm1350, %v8550, %v8554
      %v8556 = vshrl.u32 %v8411, 16
      %v8558 = vrot.slane %v8556, 4
      %v8559 = vor.u32 %v8558, %v8554
      %v8560 = vrot.slane %v8559, 4
      %v8562 = vshll.u32 %v8412, 16
      %v8564 = vrot.slane %v8562, 5
      %v8565 = vsel %vm1350, %v8560, %v8564
      %v8567 = vshrl.u32 %v8413, 16
      %v8569 = vrot.slane %v8567, 4
      %v8570 = vshll.u32 %v8413, 16
      %v8572 = vrot.slane %v8570, 5
      %v8573 = vor.u32 %v8569, %v8572
      %v8574 = vrot.slane %v8573, 4
      %v8576 = vshll.u32 %v8414, 16
      %v8578 = vrot.slane %v8576, 5
      %v8579 = vsel %vm1350, %v8574, %v8578
      %v8580 = vshrl.u32 %v8414, 16
      %v8582 = vrot.slane %v8580, 4
      %v8583 = vor.u32 %v8582, %v8578
      %v8584 = vrot.slane %v8583, 4
      %v8586 = vshll.u32 %v8415, 16
      %v8588 = vrot.slane %v8586, 5
      %v8589 = vsel %vm1350, %v8584, %v8588
      %v8591 = vshrl.u32 %v8416, 16
      %v8593 = vrot.slane %v8591, 4
      %v8594 = vshll.u32 %v8416, 16
      %v8596 = vrot.slane %v8594, 5
      %v8597 = vor.u32 %v8593, %v8596
      %v8598 = vrot.slane %v8597, 4
      %v8600 = vshll.u32 %v8417, 16
      %v8602 = vrot.slane %v8600, 5
      %v8603 = vsel %vm1350, %v8598, %v8602
      %v8604 = vshrl.u32 %v8417, 16
      %v8606 = vrot.slane %v8604, 4
      %v8607 = vor.u32 %v8606, %v8602
      %v8608 = vrot.slane %v8607, 4
      %v8610 = vshll.u32 %v8418, 16
      %v8612 = vrot.slane %v8610, 5
      %v8613 = vsel %vm1350, %v8608, %v8612
      %v8615 = vshrl.u32 %v8419, 16
      %v8617 = vrot.slane %v8615, 4
      %v8618 = vshll.u32 %v8419, 16
      %v8620 = vrot.slane %v8618, 5
      %v8621 = vor.u32 %v8617, %v8620
      %v8622 = vrot.slane %v8621, 4
      %v8624 = vshll.u32 %v8420, 16
      %v8626 = vrot.slane %v8624, 5
      %v8627 = vsel %vm1350, %v8622, %v8626
      %v8628 = vshrl.u32 %v8420, 16
      %v8630 = vrot.slane %v8628, 4
      %v8631 = vor.u32 %v8630, %v8626
      %v8632 = vrot.slane %v8631, 4
      %v8634 = vshll.u32 %v8421, 16
      %v8636 = vrot.slane %v8634, 5
      %v8637 = vsel %vm1350, %v8632, %v8636
      %v8639 = vshrl.u32 %v8422, 16
      %v8641 = vrot.slane %v8639, 4
      %v8642 = vshll.u32 %v8422, 16
      %v8644 = vrot.slane %v8642, 5
      %v8645 = vor.u32 %v8641, %v8644
      %v8646 = vrot.slane %v8645, 4
      %v8648 = vshll.u32 %v8423, 16
      %v8650 = vrot.slane %v8648, 5
      %v8651 = vsel %vm1350, %v8646, %v8650
      %v8652 = vshrl.u32 %v8423, 16
      %v8654 = vrot.slane %v8652, 4
      %v8655 = vor.u32 %v8654, %v8650
      %v8656 = vrot.slane %v8655, 4
      %v8658 = vshll.u32 %v8424, 16
      %v8660 = vrot.slane %v8658, 5
      %v8661 = vsel %vm1350, %v8656, %v8660
      %v8663 = vshrl.u32 %v8425, 16
      %v8665 = vrot.slane %v8663, 4
      %v8666 = vshll.u32 %v8425, 16
      %v8668 = vrot.slane %v8666, 5
      %v8669 = vor.u32 %v8665, %v8668
      %v8670 = vrot.slane %v8669, 4
      %v8672 = vshll.u32 %v8426, 16
      %v8674 = vrot.slane %v8672, 5
      %v8675 = vsel %vm1350, %v8670, %v8674
      %v8676 = vshrl.u32 %v8426, 16
      %v8678 = vrot.slane %v8676, 4
      %v8679 = vor.u32 %v8678, %v8674
      %v8680 = vrot.slane %v8679, 4
      %v8682 = vshll.u32 %v8427, 16
      %v8684 = vrot.slane %v8682, 5
      %v8685 = vsel %vm1350, %v8680, %v8684
      %v8687 = vshrl.u32 %v8428, 16
      %v8689 = vrot.slane %v8687, 4
      %v8690 = vshll.u32 %v8428, 16
      %v8692 = vrot.slane %v8690, 5
      %v8693 = vor.u32 %v8689, %v8692
      %v8694 = vrot.slane %v8693, 4
      %v8696 = vshll.u32 %v8429, 16
      %v8698 = vrot.slane %v8696, 5
      %v8699 = vsel %vm1350, %v8694, %v8698
      %v8700 = vshrl.u32 %v8429, 16
      %v8702 = vrot.slane %v8700, 4
      %v8703 = vor.u32 %v8702, %v8698
      %v8704 = vrot.slane %v8703, 4
      %v8706 = vshll.u32 %v8430, 16
      %v8708 = vrot.slane %v8706, 5
      %v8709 = vsel %vm1350, %v8704, %v8708
      %v8711 = vshrl.u32 %v8431, 16
      %v8713 = vrot.slane %v8711, 4
      %v8714 = vshll.u32 %v8431, 16
      %v8716 = vrot.slane %v8714, 5
      %v8717 = vor.u32 %v8713, %v8716
      %v8718 = vrot.slane %v8717, 4
      %v8720 = vshll.u32 %v8432, 16
      %v8722 = vrot.slane %v8720, 5
      %v8723 = vsel %vm1350, %v8718, %v8722
      %v8724 = vshrl.u32 %v8432, 16
      %v8726 = vrot.slane %v8724, 4
      %v8727 = vor.u32 %v8726, %v8722
      %v8728 = vrot.slane %v8727, 4
      %v8730 = vshll.u32 %v8433, 16
      %v8732 = vrot.slane %v8730, 5
      %v8733 = vsel %vm1350, %v8728, %v8732
      %v8735 = vshrl.u32 %v8434, 16
      %v8737 = vrot.slane %v8735, 4
      %v8738 = vshll.u32 %v8434, 16
      %v8740 = vrot.slane %v8738, 5
      %v8741 = vor.u32 %v8737, %v8740
      %v8742 = vrot.slane %v8741, 4
      %v8744 = vshll.u32 %v8435, 16
      %v8746 = vrot.slane %v8744, 5
      %v8747 = vsel %vm1350, %v8742, %v8746
      %v8748 = vshrl.u32 %v8435, 16
      %v8750 = vrot.slane %v8748, 4
      %v8751 = vor.u32 %v8750, %v8746
      %v8752 = vrot.slane %v8751, 4
      %v8754 = vshll.u32 %v8436, 16
      %v8756 = vrot.slane %v8754, 5
      %v8757 = vsel %vm1350, %v8752, %v8756
      %v8759 = vshrl.u32 %v8437, 16
      %v8761 = vrot.slane %v8759, 4
      %v8762 = vshll.u32 %v8437, 16
      %v8764 = vrot.slane %v8762, 5
      %v8765 = vor.u32 %v8761, %v8764
      %v8766 = vrot.slane %v8765, 4
      %v8768 = vshll.u32 %v8438, 16
      %v8770 = vrot.slane %v8768, 5
      %v8771 = vsel %vm1350, %v8766, %v8770
      %v8772 = vshrl.u32 %v8438, 16
      %v8774 = vrot.slane %v8772, 4
      %v8775 = vor.u32 %v8774, %v8770
      %v8776 = vrot.slane %v8775, 4
      %v8778 = vshll.u32 %v8439, 16
      %v8780 = vrot.slane %v8778, 5
      %v8781 = vsel %vm1350, %v8776, %v8780
      %v8783 = vshrl.u32 %v8440, 16
      %v8785 = vrot.slane %v8783, 4
      %v8786 = vshll.u32 %v8440, 16
      %v8788 = vrot.slane %v8786, 5
      %v8789 = vor.u32 %v8785, %v8788
      %v8790 = vrot.slane %v8789, 4
      %v8792 = vshll.u32 %v8441, 16
      %v8794 = vrot.slane %v8792, 5
      %v8795 = vsel %vm1350, %v8790, %v8794
      %v8796 = vshrl.u32 %v8441, 16
      %v8798 = vrot.slane %v8796, 4
      %v8799 = vor.u32 %v8798, %v8794
      %v8800 = vrot.slane %v8799, 4
      %v8802 = vshll.u32 %v8442, 16
      %v8804 = vrot.slane %v8802, 5
      %v8805 = vsel %vm1350, %v8800, %v8804
      %v8807 = vshrl.u32 %v8443, 16
      %v8809 = vrot.slane %v8807, 4
      %v8810 = vshll.u32 %v8443, 16
      %v8812 = vrot.slane %v8810, 5
      %v8813 = vor.u32 %v8809, %v8812
      %v8814 = vrot.slane %v8813, 4
      %v8816 = vshll.u32 %v8444, 16
      %v8818 = vrot.slane %v8816, 5
      %v8819 = vsel %vm1350, %v8814, %v8818
      %v8820 = vshrl.u32 %v8444, 16
      %v8822 = vrot.slane %v8820, 4
      %v8823 = vor.u32 %v8822, %v8818
      %v8824 = vrot.slane %v8823, 4
      %v8826 = vshll.u32 %v8445, 16
      %v8828 = vrot.slane %v8826, 5
      %v8829 = vsel %vm1350, %v8824, %v8828
      %8830 = vrot.lane.b32.xlu0 %v8459, 64
      %v8831 = vpop.permute.xlu0 %8830
      %8832 = vrot.lane.b32.xlu0 %v8469, 64
      %v8833 = vpop.permute.xlu0 %8832
      %8834 = vrot.lane.b32.xlu0 %v8483, 64
      %v8835 = vpop.permute.xlu0 %8834
      %8836 = vrot.lane.b32.xlu0 %v8493, 64
      %v8837 = vpop.permute.xlu0 %8836
      %8838 = vrot.lane.b32.xlu0 %v8507, 64
      %v8839 = vpop.permute.xlu0 %8838
      %8840 = vrot.lane.b32.xlu0 %v8517, 64
      %v8841 = vpop.permute.xlu0 %8840
      %8842 = vrot.lane.b32.xlu0 %v8531, 64
      %v8843 = vpop.permute.xlu0 %8842
      %8844 = vrot.lane.b32.xlu0 %v8541, 64
      %v8845 = vpop.permute.xlu0 %8844
      %8846 = vrot.lane.b32.xlu0 %v8555, 64
      %v8847 = vpop.permute.xlu0 %8846
      %8848 = vrot.lane.b32.xlu0 %v8565, 64
      %v8849 = vpop.permute.xlu0 %8848
      %8850 = vrot.lane.b32.xlu0 %v8579, 64
      %v8851 = vpop.permute.xlu0 %8850
      %8852 = vrot.lane.b32.xlu0 %v8589, 64
      %v8853 = vpop.permute.xlu0 %8852
      %8854 = vrot.lane.b32.xlu0 %v8603, 64
      %v8855 = vpop.permute.xlu0 %8854
      %8856 = vrot.lane.b32.xlu0 %v8613, 64
      %v8857 = vpop.permute.xlu0 %8856
      %8858 = vrot.lane.b32.xlu0 %v8627, 64
      %v8859 = vpop.permute.xlu0 %8858
      %8860 = vrot.lane.b32.xlu0 %v8637, 64
      %v8861 = vpop.permute.xlu0 %8860
      %8862 = vrot.lane.b32.xlu0 %v8651, 64
      %v8863 = vpop.permute.xlu0 %8862
      %8864 = vrot.lane.b32.xlu0 %v8661, 64
      %v8865 = vpop.permute.xlu0 %8864
      %8866 = vrot.lane.b32.xlu0 %v8675, 64
      %v8867 = vpop.permute.xlu0 %8866
      %8868 = vrot.lane.b32.xlu0 %v8685, 64
      %v8869 = vpop.permute.xlu0 %8868
      %8870 = vrot.lane.b32.xlu0 %v8699, 64
      %v8871 = vpop.permute.xlu0 %8870
      %8872 = vrot.lane.b32.xlu0 %v8709, 64
      %v8873 = vpop.permute.xlu0 %8872
      %8874 = vrot.lane.b32.xlu0 %v8723, 64
      %v8875 = vpop.permute.xlu0 %8874
      %8876 = vrot.lane.b32.xlu0 %v8733, 64
      %v8877 = vpop.permute.xlu0 %8876
      %8878 = vrot.lane.b32.xlu0 %v8747, 64
      %v8879 = vpop.permute.xlu0 %8878
      %8880 = vrot.lane.b32.xlu0 %v8757, 64
      %v8881 = vpop.permute.xlu0 %8880
      %8882 = vrot.lane.b32.xlu0 %v8771, 64
      %v8883 = vpop.permute.xlu0 %8882
      %8884 = vrot.lane.b32.xlu0 %v8781, 64
      %v8885 = vpop.permute.xlu0 %8884
      %8886 = vrot.lane.b32.xlu0 %v8795, 64
      %v8887 = vpop.permute.xlu0 %8886
      %8888 = vrot.lane.b32.xlu0 %v8805, 64
      %v8889 = vpop.permute.xlu0 %8888
      %8890 = vrot.lane.b32.xlu0 %v8819, 64
      %v8891 = vpop.permute.xlu0 %8890
      %8892 = vrot.lane.b32.xlu0 %v8829, 64
      %v8893 = vpop.permute.xlu0 %8892
      %vm8926 = vcmask 585216
      %8927 = vst.msk [vmem:[#allocation5] sm:$0xf] %vm8926, %v8831
      %8928 = vst.msk [vmem:[#allocation5 + $0x4] sm:$0xf] %vm8926, %v8833
      %8929 = vst.msk [vmem:[#allocation5 + $0x8] sm:$0xf] %vm8926, %v8835
      %8930 = vst.msk [vmem:[#allocation5 + $0xc] sm:$0xf] %vm8926, %v8837
      %8931 = vst.msk [vmem:[#allocation5 + $0x10] sm:$0xf] %vm8926, %v8839
      %8932 = vst.msk [vmem:[#allocation5 + $0x14] sm:$0xf] %vm8926, %v8841
      %8933 = vst.msk [vmem:[#allocation5 + $0x18] sm:$0xf] %vm8926, %v8843
      %8934 = vst.msk [vmem:[#allocation5 + $0x1c] sm:$0xf] %vm8926, %v8845
      %8935 = vst.msk [vmem:[#allocation5 + $0x20] sm:$0xf] %vm8926, %v8847
      %8936 = vst.msk [vmem:[#allocation5 + $0x24] sm:$0xf] %vm8926, %v8849
      %8937 = vst.msk [vmem:[#allocation5 + $0x28] sm:$0xf] %vm8926, %v8851
      %8938 = vst.msk [vmem:[#allocation5 + $0x2c] sm:$0xf] %vm8926, %v8853
      %8939 = vst.msk [vmem:[#allocation5 + $0x30] sm:$0xf] %vm8926, %v8855
      %8940 = vst.msk [vmem:[#allocation5 + $0x34] sm:$0xf] %vm8926, %v8857
      %8941 = vst.msk [vmem:[#allocation5 + $0x38] sm:$0xf] %vm8926, %v8859
      %8942 = vst.msk [vmem:[#allocation5 + $0x3c] sm:$0xf] %vm8926, %v8861
      %8943 = vst.msk [vmem:[#allocation5 + $0x40] sm:$0xf] %vm8926, %v8863
      %8944 = vst.msk [vmem:[#allocation5 + $0x44] sm:$0xf] %vm8926, %v8865
      %8945 = vst.msk [vmem:[#allocation5 + $0x48] sm:$0xf] %vm8926, %v8867
      %8946 = vst.msk [vmem:[#allocation5 + $0x4c] sm:$0xf] %vm8926, %v8869
      %8947 = vst.msk [vmem:[#allocation5 + $0x50] sm:$0xf] %vm8926, %v8871
      %8948 = vst.msk [vmem:[#allocation5 + $0x54] sm:$0xf] %vm8926, %v8873
      %8949 = vst.msk [vmem:[#allocation5 + $0x58] sm:$0xf] %vm8926, %v8875
      %8950 = vst.msk [vmem:[#allocation5 + $0x5c] sm:$0xf] %vm8926, %v8877
      %8951 = vst.msk [vmem:[#allocation5 + $0x60] sm:$0xf] %vm8926, %v8879
      %8952 = vst.msk [vmem:[#allocation5 + $0x64] sm:$0xf] %vm8926, %v8881
      %8953 = vst.msk [vmem:[#allocation5 + $0x68] sm:$0xf] %vm8926, %v8883
      %8954 = vst.msk [vmem:[#allocation5 + $0x6c] sm:$0xf] %vm8926, %v8885
      %8955 = vst.msk [vmem:[#allocation5 + $0x70] sm:$0xf] %vm8926, %v8887
      %8956 = vst.msk [vmem:[#allocation5 + $0x74] sm:$0xf] %vm8926, %v8889
      %8957 = vst.msk [vmem:[#allocation5 + $0x78] sm:$0xf] %vm8926, %v8891
      %8958 = vst.msk [vmem:[#allocation5 + $0x7c] sm:$0xf] %vm8926, %v8893
      %v8959 = vld [vmem:[#allocation5] sm:$0xf]
      %v8960 = vld [vmem:[#allocation5 + $0x4] sm:$0xf]
      %v8961 = vld [vmem:[#allocation5 + $0x8] sm:$0xf]
      %v8962 = vld [vmem:[#allocation5 + $0xc] sm:$0xf]
      %v8963 = vld [vmem:[#allocation5 + $0x10] sm:$0xf]
      %v8964 = vld [vmem:[#allocation5 + $0x14] sm:$0xf]
      %v8965 = vld [vmem:[#allocation5 + $0x18] sm:$0xf]
      %v8966 = vld [vmem:[#allocation5 + $0x1c] sm:$0xf]
      %v8967 = vld [vmem:[#allocation5 + $0x20] sm:$0xf]
      %v8968 = vld [vmem:[#allocation5 + $0x24] sm:$0xf]
      %v8969 = vld [vmem:[#allocation5 + $0x28] sm:$0xf]
      %v8970 = vld [vmem:[#allocation5 + $0x2c] sm:$0xf]
      %v8971 = vld [vmem:[#allocation5 + $0x30] sm:$0xf]
      %v8972 = vld [vmem:[#allocation5 + $0x34] sm:$0xf]
      %v8973 = vld [vmem:[#allocation5 + $0x38] sm:$0xf]
      %v8974 = vld [vmem:[#allocation5 + $0x3c] sm:$0xf]
      %v8975 = vld [vmem:[#allocation5 + $0x40] sm:$0xf]
      %v8976 = vld [vmem:[#allocation5 + $0x44] sm:$0xf]
      %v8977 = vld [vmem:[#allocation5 + $0x48] sm:$0xf]
      %v8978 = vld [vmem:[#allocation5 + $0x4c] sm:$0xf]
      %v8979 = vld [vmem:[#allocation5 + $0x50] sm:$0xf]
      %v8980 = vld [vmem:[#allocation5 + $0x54] sm:$0xf]
      %v8981 = vld [vmem:[#allocation5 + $0x58] sm:$0xf]
      %v8982 = vld [vmem:[#allocation5 + $0x5c] sm:$0xf]
      %v8983 = vld [vmem:[#allocation5 + $0x60] sm:$0xf]
      %v8984 = vld [vmem:[#allocation5 + $0x64] sm:$0xf]
      %v8985 = vld [vmem:[#allocation5 + $0x68] sm:$0xf]
      %v8986 = vld [vmem:[#allocation5 + $0x6c] sm:$0xf]
      %v8987 = vld [vmem:[#allocation5 + $0x70] sm:$0xf]
      %v8988 = vld [vmem:[#allocation5 + $0x74] sm:$0xf]
      %v8989 = vld [vmem:[#allocation5 + $0x78] sm:$0xf]
      %v8990 = vld [vmem:[#allocation5 + $0x7c] sm:$0xf]
      %v8991 = vld [vmem:[%s4] sm:$0xf]
      %v8992 = vld [vmem:[%s4 + $0x4] sm:$0xf]
      %v8993 = vld [vmem:[%s4 + $0x8] sm:$0xf]
      %v8994 = vld [vmem:[%s4 + $0xc] sm:$0xf]
      %v8995 = vld [vmem:[%s4 + $0x10] sm:$0xf]
      %v8996 = vld [vmem:[%s4 + $0x14] sm:$0xf]
      %v8997 = vld [vmem:[%s4 + $0x18] sm:$0xf]
      %v8998 = vld [vmem:[%s4 + $0x1c] sm:$0xf]
      %v8999 = vld [vmem:[%s4 + $0x20] sm:$0xf]
      %v9032 = vunpack.c.l.b16 %v8959
      %v9033 = vunpack.c.l.b16 %v8960
      %v9034 = vunpack.c.l.b16 %v8961
      %v9035 = vunpack.c.l.b16 %v8962
      %v9036 = vunpack.c.l.b16 %v8963
      %v9037 = vunpack.c.l.b16 %v8964
      %v9038 = vunpack.c.l.b16 %v8965
      %v9039 = vunpack.c.l.b16 %v8966
      %v9040 = vunpack.c.l.b16 %v8967
      %v9041 = vunpack.c.l.b16 %v8968
      %v9042 = vunpack.c.l.b16 %v8969
      %v9043 = vunpack.c.l.b16 %v8970
      %v9044 = vunpack.c.l.b16 %v8971
      %v9045 = vunpack.c.l.b16 %v8972
      %v9046 = vunpack.c.l.b16 %v8973
      %v9047 = vunpack.c.l.b16 %v8974
      %v9048 = vunpack.c.l.b16 %v8975
      %v9049 = vunpack.c.l.b16 %v8976
      %v9050 = vunpack.c.l.b16 %v8977
      %v9051 = vunpack.c.l.b16 %v8978
      %v9052 = vunpack.c.l.b16 %v8979
      %v9053 = vunpack.c.l.b16 %v8980
      %v9054 = vunpack.c.l.b16 %v8981
      %v9055 = vunpack.c.l.b16 %v8982
      %v9056 = vunpack.c.l.b16 %v8983
      %v9057 = vunpack.c.l.b16 %v8984
      %v9058 = vunpack.c.l.b16 %v8985
      %v9059 = vunpack.c.l.b16 %v8986
      %v9060 = vunpack.c.l.b16 %v8987
      %v9061 = vunpack.c.l.b16 %v8988
      %v9062 = vunpack.c.l.b16 %v8989
      %v9063 = vunpack.c.l.b16 %v8990
      %v9064 = vpack.c.b16 %v9033, %v9032
      %v9065 = vpack.c.b16 %v9035, %v9034
      %v9066 = vpack.c.b16 %v9037, %v9036
      %v9067 = vpack.c.b16 %v9039, %v9038
      %v9068 = vpack.c.b16 %v9041, %v9040
      %v9069 = vpack.c.b16 %v9043, %v9042
      %v9070 = vpack.c.b16 %v9045, %v9044
      %v9071 = vpack.c.b16 %v9047, %v9046
      %v9072 = vpack.c.b16 %v9049, %v9048
      %v9073 = vpack.c.b16 %v9051, %v9050
      %v9074 = vpack.c.b16 %v9053, %v9052
      %v9075 = vpack.c.b16 %v9055, %v9054
      %v9076 = vpack.c.b16 %v9057, %v9056
      %v9077 = vpack.c.b16 %v9059, %v9058
      %v9078 = vpack.c.b16 %v9061, %v9060
      %v9079 = vpack.c.b16 %v9063, %v9062
      %v9089 = vunpack.c.l.b16 %v8991
      %v9090 = vunpack.c.l.b16 %v8992
      %v9091 = vunpack.c.l.b16 %v8993
      %v9092 = vunpack.c.l.b16 %v8994
      %v9093 = vunpack.c.l.b16 %v8995
      %v9094 = vunpack.c.l.b16 %v8996
      %v9095 = vunpack.c.l.b16 %v8997
      %v9096 = vunpack.c.l.b16 %v8998
      %v9097 = vunpack.c.l.b16 %v8999
      %v9098 = vpack.c.b16 %v9090, %v9089
      %v9099 = vpack.c.b16 %v9092, %v9091
      %v9100 = vpack.c.b16 %v9094, %v9093
      %v9101 = vpack.c.b16 %v9096, %v9095
      %v9102 = vpack.c.b16 %v9097, %v9097
      %vm9107 = vcmask 588800
      %v9109 = vsel %vm9107, %v9064, 0
      %v9112 = vsel %vm9107, %v9065, 0
      %v9115 = vsel %vm9107, %v9066, 0
      %v9118 = vsel %vm9107, %v9067, 0
      %v9121 = vsel %vm9107, %v9068, 0
      %v9124 = vsel %vm9107, %v9069, 0
      %v9127 = vsel %vm9107, %v9070, 0
      %v9130 = vsel %vm9107, %v9071, 0
      %v9133 = vsel %vm9107, %v9072, 0
      %v9136 = vsel %vm9107, %v9073, 0
      %v9139 = vsel %vm9107, %v9074, 0
      %v9142 = vsel %vm9107, %v9075, 0
      %v9145 = vsel %vm9107, %v9076, 0
      %v9148 = vsel %vm9107, %v9077, 0
      %v9151 = vsel %vm9107, %v9078, 0
      %v9154 = vsel %vm9107, %v9079, 0
      %vm9156 = vcmask 1043456
      %v9158 = vsel %vm9156, %v9102, 0
      %9160 = vmatprep.subr.bf16.mxu0 0
      %9161 = vmatpush1.bf16.msra.mxu0 0
      %9162 = vmatprep.subr.bf16.mxu0 0
      %9163 = vmatpush1.bf16.msra.mxu0 0
      %9164 = vmatprep.subr.bf16.mxu0 0
      %9165 = vmatpush1.bf16.msra.mxu0 0
      %9166 = vmatprep.subr.bf16.mxu0 0
      %9167 = vmatpush1.bf16.msra.mxu0 %v9158
      %9168 = vmatprep.subr.bf16.mxu0 0
      %9169 = vmatpush1.bf16.msra.mxu0 %v9101
      %9170 = vmatprep.subr.bf16.mxu0 0
      %9171 = vmatpush1.bf16.msra.mxu0 %v9100
      %9172 = vmatprep.subr.bf16.mxu0 0
      %9173 = vmatpush1.bf16.msra.mxu0 %v9099
      %9174 = vmatprep.subr.bf16.mxu0 0
      %9175 = vmatpush1.bf16.msra.mxu0 %v9098
      %9176 = vmatprep.subr.bf16.mxu0 0
      %9177 = vmatpush2.bf16.msra.mxu0 0
      %9178 = vmatprep.subr.bf16.mxu0 0
      %9179 = vmatpush2.bf16.msra.mxu0 0
      %9180 = vmatprep.subr.bf16.mxu0 0
      %9181 = vmatpush2.bf16.msra.mxu0 0
      %9182 = vmatprep.subr.bf16.mxu0 0
      %9183 = vmatpush2.bf16.msra.mxu0 0
      %9184 = vmatprep.subr.bf16.mxu0 0
      %9185 = vmatpush2.bf16.msra.mxu0 0
      %9186 = vmatprep.subr.bf16.mxu0 0
      %9187 = vmatpush2.bf16.msra.mxu0 0
      %9188 = vmatprep.subr.bf16.mxu0 0
      %9189 = vmatpush2.bf16.msra.mxu0 0
      %9190 = vmatprep.subr.bf16.mxu0 0
      %9191 = vmatpush2.bf16.msra.mxu0 0
      %9192 = vmatprep.mubr.bf16.mxu0 0
      %9193 = vmatmul.mubr.bf16.gmra.mxu0 %v9109
      %v9194 = vpop.f32.mrf.mxu0
      %v9195 = vadd.f32 0.0, %v9194
      %v9196 = vpop.f32.mrf.mxu0
      %v9197 = vpop.f32.mrf.mxu0
      %v9198 = vadd.f32 0.0, %v9197
      %v9199 = vpop.f32.mrf.mxu0
      %9200 = vmatprep.mubr.bf16.mxu0 0
      %9201 = vmatmul.mubr.bf16.gmra.mxu0 %v9112
      %v9202 = vpop.f32.mrf.mxu0
      %v9203 = vadd.f32 0.0, %v9202
      %v9204 = vpop.f32.mrf.mxu0
      %v9205 = vpop.f32.mrf.mxu0
      %v9206 = vadd.f32 0.0, %v9205
      %v9207 = vpop.f32.mrf.mxu0
      %9208 = vmatprep.mubr.bf16.mxu0 0
      %9209 = vmatmul.mubr.bf16.gmra.mxu0 %v9115
      %v9210 = vpop.f32.mrf.mxu0
      %v9211 = vadd.f32 0.0, %v9210
      %v9212 = vpop.f32.mrf.mxu0
      %v9213 = vpop.f32.mrf.mxu0
      %v9214 = vadd.f32 0.0, %v9213
      %v9215 = vpop.f32.mrf.mxu0
      %9216 = vmatprep.mubr.bf16.mxu0 0
      %9217 = vmatmul.mubr.bf16.gmra.mxu0 %v9118
      %v9218 = vpop.f32.mrf.mxu0
      %v9219 = vadd.f32 0.0, %v9218
      %v9220 = vpop.f32.mrf.mxu0
      %v9221 = vpop.f32.mrf.mxu0
      %v9222 = vadd.f32 0.0, %v9221
      %v9223 = vpop.f32.mrf.mxu0
      %9224 = vmatprep.mubr.bf16.mxu0 0
      %9225 = vmatmul.mubr.bf16.gmra.mxu0 %v9121
      %v9226 = vpop.f32.mrf.mxu0
      %v9227 = vadd.f32 0.0, %v9226
      %v9228 = vpop.f32.mrf.mxu0
      %v9229 = vpop.f32.mrf.mxu0
      %v9230 = vadd.f32 0.0, %v9229
      %v9231 = vpop.f32.mrf.mxu0
      %9232 = vmatprep.mubr.bf16.mxu0 0
      %9233 = vmatmul.mubr.bf16.gmra.mxu0 %v9124
      %v9234 = vpop.f32.mrf.mxu0
      %v9235 = vadd.f32 0.0, %v9234
      %v9236 = vpop.f32.mrf.mxu0
      %v9237 = vpop.f32.mrf.mxu0
      %v9238 = vadd.f32 0.0, %v9237
      %v9239 = vpop.f32.mrf.mxu0
      %9240 = vmatprep.mubr.bf16.mxu0 0
      %9241 = vmatmul.mubr.bf16.gmra.mxu0 %v9127
      %v9242 = vpop.f32.mrf.mxu0
      %v9243 = vadd.f32 0.0, %v9242
      %v9244 = vpop.f32.mrf.mxu0
      %v9245 = vpop.f32.mrf.mxu0
      %v9246 = vadd.f32 0.0, %v9245
      %v9247 = vpop.f32.mrf.mxu0
      %9248 = vmatprep.mubr.bf16.mxu0 0
      %9249 = vmatmul.mubr.bf16.gmra.mxu0 %v9130
      %v9250 = vpop.f32.mrf.mxu0
      %v9251 = vadd.f32 0.0, %v9250
      %v9252 = vpop.f32.mrf.mxu0
      %v9253 = vpop.f32.mrf.mxu0
      %v9254 = vadd.f32 0.0, %v9253
      %v9255 = vpop.f32.mrf.mxu0
      %9256 = vmatprep.mubr.bf16.mxu0 0
      %9257 = vmatmul.mubr.bf16.gmra.mxu0 %v9133
      %v9258 = vpop.f32.mrf.mxu0
      %v9259 = vadd.f32 0.0, %v9258
      %v9260 = vpop.f32.mrf.mxu0
      %v9261 = vpop.f32.mrf.mxu0
      %v9262 = vadd.f32 0.0, %v9261
      %v9263 = vpop.f32.mrf.mxu0
      %9264 = vmatprep.mubr.bf16.mxu0 0
      %9265 = vmatmul.mubr.bf16.gmra.mxu0 %v9136
      %v9266 = vpop.f32.mrf.mxu0
      %v9267 = vadd.f32 0.0, %v9266
      %v9268 = vpop.f32.mrf.mxu0
      %v9269 = vpop.f32.mrf.mxu0
      %v9270 = vadd.f32 0.0, %v9269
      %v9271 = vpop.f32.mrf.mxu0
      %9272 = vmatprep.mubr.bf16.mxu0 0
      %9273 = vmatmul.mubr.bf16.gmra.mxu0 %v9139
      %v9274 = vpop.f32.mrf.mxu0
      %v9275 = vadd.f32 0.0, %v9274
      %v9276 = vpop.f32.mrf.mxu0
      %v9277 = vpop.f32.mrf.mxu0
      %v9278 = vadd.f32 0.0, %v9277
      %v9279 = vpop.f32.mrf.mxu0
      %9280 = vmatprep.mubr.bf16.mxu0 0
      %9281 = vmatmul.mubr.bf16.gmra.mxu0 %v9142
      %v9282 = vpop.f32.mrf.mxu0
      %v9283 = vadd.f32 0.0, %v9282
      %v9284 = vpop.f32.mrf.mxu0
      %v9285 = vpop.f32.mrf.mxu0
      %v9286 = vadd.f32 0.0, %v9285
      %v9287 = vpop.f32.mrf.mxu0
      %9288 = vmatprep.mubr.bf16.mxu0 0
      %9289 = vmatmul.mubr.bf16.gmra.mxu0 %v9145
      %v9290 = vpop.f32.mrf.mxu0
      %v9291 = vadd.f32 0.0, %v9290
      %v9292 = vpop.f32.mrf.mxu0
      %v9293 = vpop.f32.mrf.mxu0
      %v9294 = vadd.f32 0.0, %v9293
      %v9295 = vpop.f32.mrf.mxu0
      %9296 = vmatprep.mubr.bf16.mxu0 0
      %9297 = vmatmul.mubr.bf16.gmra.mxu0 %v9148
      %v9298 = vpop.f32.mrf.mxu0
      %v9299 = vadd.f32 0.0, %v9298
      %v9300 = vpop.f32.mrf.mxu0
      %v9301 = vpop.f32.mrf.mxu0
      %v9302 = vadd.f32 0.0, %v9301
      %v9303 = vpop.f32.mrf.mxu0
      %9304 = vmatprep.mubr.bf16.mxu0 0
      %9305 = vmatmul.mubr.bf16.gmra.mxu0 %v9151
      %v9306 = vpop.f32.mrf.mxu0
      %v9307 = vadd.f32 0.0, %v9306
      %v9308 = vpop.f32.mrf.mxu0
      %v9309 = vpop.f32.mrf.mxu0
      %v9310 = vadd.f32 0.0, %v9309
      %v9311 = vpop.f32.mrf.mxu0
      %9312 = vmatprep.mubr.bf16.mxu0 0
      %9313 = vmatmul.mubr.bf16.gmra.mxu0 %v9154
      %v9314 = vpop.f32.mrf.mxu0
      %v9315 = vadd.f32 0.0, %v9314
      %v9316 = vpop.f32.mrf.mxu0
      %v9317 = vpop.f32.mrf.mxu0
      %v9318 = vadd.f32 0.0, %v9317
      %v9319 = vpop.f32.mrf.mxu0
      %9320 = vdwg.mxu0
      %v9321 = vld [vmem:[%s5] sm:$0x1]
      %v9323 = vlaneseq
      %v9324 = vshrl.u32 %v9323, 7
      %v9325 = vsub.s32 0, %v9324
      %v9326 = vrot.slane %v9321, %v9325
      %v9328 = vmul.f32 %v9195, %v9326
      %v9329 = vmul.f32 %v9198, %v9326
      %v9330 = vmul.f32 %v9203, %v9326
      %v9331 = vmul.f32 %v9206, %v9326
      %v9332 = vmul.f32 %v9211, %v9326
      %v9333 = vmul.f32 %v9214, %v9326
      %v9334 = vmul.f32 %v9219, %v9326
      %v9335 = vmul.f32 %v9222, %v9326
      %v9336 = vmul.f32 %v9227, %v9326
      %v9337 = vmul.f32 %v9230, %v9326
      %v9338 = vmul.f32 %v9235, %v9326
      %v9339 = vmul.f32 %v9238, %v9326
      %v9340 = vmul.f32 %v9243, %v9326
      %v9341 = vmul.f32 %v9246, %v9326
      %v9342 = vmul.f32 %v9251, %v9326
      %v9343 = vmul.f32 %v9254, %v9326
      %v9344 = vmul.f32 %v9259, %v9326
      %v9345 = vmul.f32 %v9262, %v9326
      %v9346 = vmul.f32 %v9267, %v9326
      %v9347 = vmul.f32 %v9270, %v9326
      %v9348 = vmul.f32 %v9275, %v9326
      %v9349 = vmul.f32 %v9278, %v9326
      %v9350 = vmul.f32 %v9283, %v9326
      %v9351 = vmul.f32 %v9286, %v9326
      %v9352 = vmul.f32 %v9291, %v9326
      %v9353 = vmul.f32 %v9294, %v9326
      %v9354 = vmul.f32 %v9299, %v9326
      %v9355 = vmul.f32 %v9302, %v9326
      %v9356 = vmul.f32 %v9307, %v9326
      %v9357 = vmul.f32 %v9310, %v9326
      %v9358 = vmul.f32 %v9315, %v9326
      %v9359 = vmul.f32 %v9318, %v9326
      %v9360 = vld [vmem:[%s6] sm:$0x1]
      %v9362 = vlaneseq
      %v9363 = vshrl.u32 %v9362, 7
      %v9364 = vsub.s32 0, %v9363
      %v9365 = vrot.slane %v9360, %v9364
      %v9367 = vadd.f32 %v9328, %v9365
      %v9368 = vadd.f32 %v9329, %v9365
      %v9369 = vadd.f32 %v9330, %v9365
      %v9370 = vadd.f32 %v9331, %v9365
      %v9371 = vadd.f32 %v9332, %v9365
      %v9372 = vadd.f32 %v9333, %v9365
      %v9373 = vadd.f32 %v9334, %v9365
      %v9374 = vadd.f32 %v9335, %v9365
      %v9375 = vadd.f32 %v9336, %v9365
      %v9376 = vadd.f32 %v9337, %v9365
      %v9377 = vadd.f32 %v9338, %v9365
      %v9378 = vadd.f32 %v9339, %v9365
      %v9379 = vadd.f32 %v9340, %v9365
      %v9380 = vadd.f32 %v9341, %v9365
      %v9381 = vadd.f32 %v9342, %v9365
      %v9382 = vadd.f32 %v9343, %v9365
      %v9383 = vadd.f32 %v9344, %v9365
      %v9384 = vadd.f32 %v9345, %v9365
      %v9385 = vadd.f32 %v9346, %v9365
      %v9386 = vadd.f32 %v9347, %v9365
      %v9387 = vadd.f32 %v9348, %v9365
      %v9388 = vadd.f32 %v9349, %v9365
      %v9389 = vadd.f32 %v9350, %v9365
      %v9390 = vadd.f32 %v9351, %v9365
      %v9391 = vadd.f32 %v9352, %v9365
      %v9392 = vadd.f32 %v9353, %v9365
      %v9393 = vadd.f32 %v9354, %v9365
      %v9394 = vadd.f32 %v9355, %v9365
      %v9395 = vadd.f32 %v9356, %v9365
      %v9396 = vadd.f32 %v9357, %v9365
      %v9397 = vadd.f32 %v9358, %v9365
      %v9398 = vadd.f32 %v9359, %v9365
      %v9399 = vmax.f32 %v9367, 0.0
      %v9400 = vmax.f32 %v9368, 0.0
      %v9401 = vmax.f32 %v9369, 0.0
      %v9402 = vmax.f32 %v9370, 0.0
      %v9403 = vmax.f32 %v9371, 0.0
      %v9404 = vmax.f32 %v9372, 0.0
      %v9405 = vmax.f32 %v9373, 0.0
      %v9406 = vmax.f32 %v9374, 0.0
      %v9407 = vmax.f32 %v9375, 0.0
      %v9408 = vmax.f32 %v9376, 0.0
      %v9409 = vmax.f32 %v9377, 0.0
      %v9410 = vmax.f32 %v9378, 0.0
      %v9411 = vmax.f32 %v9379, 0.0
      %v9412 = vmax.f32 %v9380, 0.0
      %v9413 = vmax.f32 %v9381, 0.0
      %v9414 = vmax.f32 %v9382, 0.0
      %v9415 = vmax.f32 %v9383, 0.0
      %v9416 = vmax.f32 %v9384, 0.0
      %v9417 = vmax.f32 %v9385, 0.0
      %v9418 = vmax.f32 %v9386, 0.0
      %v9419 = vmax.f32 %v9387, 0.0
      %v9420 = vmax.f32 %v9388, 0.0
      %v9421 = vmax.f32 %v9389, 0.0
      %v9422 = vmax.f32 %v9390, 0.0
      %v9423 = vmax.f32 %v9391, 0.0
      %v9424 = vmax.f32 %v9392, 0.0
      %v9425 = vmax.f32 %v9393, 0.0
      %v9426 = vmax.f32 %v9394, 0.0
      %v9427 = vmax.f32 %v9395, 0.0
      %v9428 = vmax.f32 %v9396, 0.0
      %v9429 = vmax.f32 %v9397, 0.0
      %v9430 = vmax.f32 %v9398, 0.0
      %vm9431 = vcmask 64512
      %9432 = vst.msk [vmem:[#allocation6] sm:$0xff] %vm9431, %v9399
      %9433 = vst.msk [vmem:[#allocation6 + $0x8] sm:$0xff] %vm9431, %v9400
      %9434 = vst.msk [vmem:[#allocation6 + $0x10] sm:$0xff] %vm9431, %v9401
      %9435 = vst.msk [vmem:[#allocation6 + $0x18] sm:$0xff] %vm9431, %v9402
      %9436 = vst.msk [vmem:[#allocation6 + $0x20] sm:$0xff] %vm9431, %v9403
      %9437 = vst.msk [vmem:[#allocation6 + $0x28] sm:$0xff] %vm9431, %v9404
      %9438 = vst.msk [vmem:[#allocation6 + $0x30] sm:$0xff] %vm9431, %v9405
      %9439 = vst.msk [vmem:[#allocation6 + $0x38] sm:$0xff] %vm9431, %v9406
      %9440 = vst.msk [vmem:[#allocation6 + $0x40] sm:$0xff] %vm9431, %v9407
      %9441 = vst.msk [vmem:[#allocation6 + $0x48] sm:$0xff] %vm9431, %v9408
      %9442 = vst.msk [vmem:[#allocation6 + $0x50] sm:$0xff] %vm9431, %v9409
      %9443 = vst.msk [vmem:[#allocation6 + $0x58] sm:$0xff] %vm9431, %v9410
      %9444 = vst.msk [vmem:[#allocation6 + $0x60] sm:$0xff] %vm9431, %v9411
      %9445 = vst.msk [vmem:[#allocation6 + $0x68] sm:$0xff] %vm9431, %v9412
      %9446 = vst.msk [vmem:[#allocation6 + $0x70] sm:$0xff] %vm9431, %v9413
      %9447 = vst.msk [vmem:[#allocation6 + $0x78] sm:$0xff] %vm9431, %v9414
      %9448 = vst.msk [vmem:[#allocation6 + $0x80] sm:$0xff] %vm9431, %v9415
      %9449 = vst.msk [vmem:[#allocation6 + $0x88] sm:$0xff] %vm9431, %v9416
      %9450 = vst.msk [vmem:[#allocation6 + $0x90] sm:$0xff] %vm9431, %v9417
      %9451 = vst.msk [vmem:[#allocation6 + $0x98] sm:$0xff] %vm9431, %v9418
      %9452 = vst.msk [vmem:[#allocation6 + $0xa0] sm:$0xff] %vm9431, %v9419
      %9453 = vst.msk [vmem:[#allocation6 + $0xa8] sm:$0xff] %vm9431, %v9420
      %9454 = vst.msk [vmem:[#allocation6 + $0xb0] sm:$0xff] %vm9431, %v9421
      %9455 = vst.msk [vmem:[#allocation6 + $0xb8] sm:$0xff] %vm9431, %v9422
      %9456 = vst.msk [vmem:[#allocation6 + $0xc0] sm:$0xff] %vm9431, %v9423
      %9457 = vst.msk [vmem:[#allocation6 + $0xc8] sm:$0xff] %vm9431, %v9424
      %9458 = vst.msk [vmem:[#allocation6 + $0xd0] sm:$0xff] %vm9431, %v9425
      %9459 = vst.msk [vmem:[#allocation6 + $0xd8] sm:$0xff] %vm9431, %v9426
      %9460 = vst.msk [vmem:[#allocation6 + $0xe0] sm:$0xff] %vm9431, %v9427
      %9461 = vst.msk [vmem:[#allocation6 + $0xe8] sm:$0xff] %vm9431, %v9428
      %9462 = vst.msk [vmem:[#allocation6 + $0xf0] sm:$0xff] %vm9431, %v9429
      %9463 = vst.msk [vmem:[#allocation6 + $0xf8] sm:$0xff] %vm9431, %v9430
      %v9464 = vld [vmem:[#allocation6] ss:$2 sm:$0xff]
      %s9465 = scalar_lea.vmem [#allocation6], 16
      %v9466 = vld [vmem:[%s9465] ss:$2 sm:$0xff]
      %s9467 = scalar_lea.vmem [#allocation6], 32
      %v9468 = vld [vmem:[%s9467] ss:$2 sm:$0xff]
      %s9469 = scalar_lea.vmem [#allocation6], 48
      %v9470 = vld [vmem:[%s9469] ss:$2 sm:$0xff]
      %s9471 = scalar_lea.vmem [#allocation6], 64
      %v9472 = vld [vmem:[%s9471] ss:$2 sm:$0xff]
      %s9473 = scalar_lea.vmem [#allocation6], 80
      %v9474 = vld [vmem:[%s9473] ss:$2 sm:$0xff]
      %s9475 = scalar_lea.vmem [#allocation6], 96
      %v9476 = vld [vmem:[%s9475] ss:$2 sm:$0xff]
      %s9477 = scalar_lea.vmem [#allocation6], 112
      %v9478 = vld [vmem:[%s9477] ss:$2 sm:$0xff]
      %s9479 = scalar_lea.vmem [#allocation6], 128
      %v9480 = vld [vmem:[%s9479] ss:$2 sm:$0xff]
      %s9481 = scalar_lea.vmem [#allocation6], 144
      %v9482 = vld [vmem:[%s9481] ss:$2 sm:$0xff]
      %s9483 = scalar_lea.vmem [#allocation6], 160
      %v9484 = vld [vmem:[%s9483] ss:$2 sm:$0xff]
      %s9485 = scalar_lea.vmem [#allocation6], 176
      %v9486 = vld [vmem:[%s9485] ss:$2 sm:$0xff]
      %s9487 = scalar_lea.vmem [#allocation6], 192
      %v9488 = vld [vmem:[%s9487] ss:$2 sm:$0xff]
      %s9489 = scalar_lea.vmem [#allocation6], 208
      %v9490 = vld [vmem:[%s9489] ss:$2 sm:$0xff]
      %s9491 = scalar_lea.vmem [#allocation6], 224
      %v9492 = vld [vmem:[%s9491] ss:$2 sm:$0xff]
      %s9493 = scalar_lea.vmem [#allocation6], 240
      %v9494 = vld [vmem:[%s9493] ss:$2 sm:$0xff]
      %s9495 = scalar_lea.vmem [#allocation6], 1
      %v9496 = vld [vmem:[%s9495] ss:$2 sm:$0xff]
      %s9497 = scalar_lea.vmem [#allocation6], 17
      %v9498 = vld [vmem:[%s9497] ss:$2 sm:$0xff]
      %s9499 = scalar_lea.vmem [#allocation6], 33
      %v9500 = vld [vmem:[%s9499] ss:$2 sm:$0xff]
      %s9501 = scalar_lea.vmem [#allocation6], 49
      %v9502 = vld [vmem:[%s9501] ss:$2 sm:$0xff]
      %s9503 = scalar_lea.vmem [#allocation6], 65
      %v9504 = vld [vmem:[%s9503] ss:$2 sm:$0xff]
      %s9505 = scalar_lea.vmem [#allocation6], 81
      %v9506 = vld [vmem:[%s9505] ss:$2 sm:$0xff]
      %s9507 = scalar_lea.vmem [#allocation6], 97
      %v9508 = vld [vmem:[%s9507] ss:$2 sm:$0xff]
      %s9509 = scalar_lea.vmem [#allocation6], 113
      %v9510 = vld [vmem:[%s9509] ss:$2 sm:$0xff]
      %s9511 = scalar_lea.vmem [#allocation6], 129
      %v9512 = vld [vmem:[%s9511] ss:$2 sm:$0xff]
      %s9513 = scalar_lea.vmem [#allocation6], 145
      %v9514 = vld [vmem:[%s9513] ss:$2 sm:$0xff]
      %s9515 = scalar_lea.vmem [#allocation6], 161
      %v9516 = vld [vmem:[%s9515] ss:$2 sm:$0xff]
      %s9517 = scalar_lea.vmem [#allocation6], 177
      %v9518 = vld [vmem:[%s9517] ss:$2 sm:$0xff]
      %s9519 = scalar_lea.vmem [#allocation6], 193
      %v9520 = vld [vmem:[%s9519] ss:$2 sm:$0xff]
      %s9521 = scalar_lea.vmem [#allocation6], 209
      %v9522 = vld [vmem:[%s9521] ss:$2 sm:$0xff]
      %s9523 = scalar_lea.vmem [#allocation6], 225
      %v9524 = vld [vmem:[%s9523] ss:$2 sm:$0xff]
      %s9525 = scalar_lea.vmem [#allocation6], 241
      %v9526 = vld [vmem:[%s9525] ss:$2 sm:$0xff]
      %v9527 = vlaneseq
      %v9528 = vshrl.u32 %v9527, 7
      %v9529 = vmul.u32 %v9528, 2
      %v9530 = vadd.s32 %v9529, 16
      %v9531 = vadd.s32 %v9529, 32
      %v9532 = vadd.s32 %v9529, 48
      %v9533 = vadd.s32 %v9529, 64
      %v9534 = vadd.s32 %v9529, 80
      %v9535 = vadd.s32 %v9529, 96
      %v9536 = vadd.s32 %v9529, 112
      %v9537 = vadd.s32 %v9529, 128
      %v9538 = vadd.s32 %v9529, 144
      %v9539 = vadd.s32 %v9529, 160
      %v9540 = vadd.s32 %v9529, 176
      %v9541 = vadd.s32 %v9529, 192
      %v9542 = vadd.s32 %v9529, 208
      %v9543 = vadd.s32 %v9529, 224
      %v9544 = vadd.s32 %v9529, 240
      %vm9545 = vcmp.gt.f32.partialorder %v9496, %v9464
      %vm9546 = vcmp.gt.f32.partialorder %v9498, %v9466
      %vm9547 = vcmp.gt.f32.partialorder %v9500, %v9468
      %vm9548 = vcmp.gt.f32.partialorder %v9502, %v9470
      %vm9549 = vcmp.gt.f32.partialorder %v9504, %v9472
      %vm9550 = vcmp.gt.f32.partialorder %v9506, %v9474
      %vm9551 = vcmp.gt.f32.partialorder %v9508, %v9476
      %vm9552 = vcmp.gt.f32.partialorder %v9510, %v9478
      %vm9553 = vcmp.gt.f32.partialorder %v9512, %v9480
      %vm9554 = vcmp.gt.f32.partialorder %v9514, %v9482
      %vm9555 = vcmp.gt.f32.partialorder %v9516, %v9484
      %vm9556 = vcmp.gt.f32.partialorder %v9518, %v9486
      %vm9557 = vcmp.gt.f32.partialorder %v9520, %v9488
      %vm9558 = vcmp.gt.f32.partialorder %v9522, %v9490
      %vm9559 = vcmp.gt.f32.partialorder %v9524, %v9492
      %vm9560 = vcmp.gt.f32.partialorder %v9526, %v9494
      %v9561 = vsel %vm9545, %v9496, %v9464
      %v9562 = vsel %vm9546, %v9498, %v9466
      %v9563 = vsel %vm9547, %v9500, %v9468
      %v9564 = vsel %vm9548, %v9502, %v9470
      %v9565 = vsel %vm9549, %v9504, %v9472
      %v9566 = vsel %vm9550, %v9506, %v9474
      %v9567 = vsel %vm9551, %v9508, %v9476
      %v9568 = vsel %vm9552, %v9510, %v9478
      %v9569 = vsel %vm9553, %v9512, %v9480
      %v9570 = vsel %vm9554, %v9514, %v9482
      %v9571 = vsel %vm9555, %v9516, %v9484
      %v9572 = vsel %vm9556, %v9518, %v9486
      %v9573 = vsel %vm9557, %v9520, %v9488
      %v9574 = vsel %vm9558, %v9522, %v9490
      %v9575 = vsel %vm9559, %v9524, %v9492
      %v9576 = vsel %vm9560, %v9526, %v9494
      %v9577 = vadd.s32 %v9529, 1
      %v9578 = vadd.s32 %v9530, 1
      %v9579 = vadd.s32 %v9531, 1
      %v9580 = vadd.s32 %v9532, 1
      %v9581 = vadd.s32 %v9533, 1
      %v9582 = vadd.s32 %v9534, 1
      %v9583 = vadd.s32 %v9535, 1
      %v9584 = vadd.s32 %v9536, 1
      %v9585 = vadd.s32 %v9537, 1
      %v9586 = vadd.s32 %v9538, 1
      %v9587 = vadd.s32 %v9539, 1
      %v9588 = vadd.s32 %v9540, 1
      %v9589 = vadd.s32 %v9541, 1
      %v9590 = vadd.s32 %v9542, 1
      %v9591 = vadd.s32 %v9543, 1
      %v9592 = vadd.s32 %v9544, 1
      %v9593 = vsel %vm9545, %v9577, %v9529
      %v9594 = vsel %vm9546, %v9578, %v9530
      %v9595 = vsel %vm9547, %v9579, %v9531
      %v9596 = vsel %vm9548, %v9580, %v9532
      %v9597 = vsel %vm9549, %v9581, %v9533
      %v9598 = vsel %vm9550, %v9582, %v9534
      %v9599 = vsel %vm9551, %v9583, %v9535
      %v9600 = vsel %vm9552, %v9584, %v9536
      %v9601 = vsel %vm9553, %v9585, %v9537
      %v9602 = vsel %vm9554, %v9586, %v9538
      %v9603 = vsel %vm9555, %v9587, %v9539
      %v9604 = vsel %vm9556, %v9588, %v9540
      %v9605 = vsel %vm9557, %v9589, %v9541
      %v9606 = vsel %vm9558, %v9590, %v9542
      %v9607 = vsel %vm9559, %v9591, %v9543
      %v9608 = vsel %vm9560, %v9592, %v9544
      %vm9609 = vcmp.gt.f32.partialorder %v9562, %v9561
      %vm9610 = vcmp.gt.f32.partialorder %v9564, %v9563
      %vm9611 = vcmp.gt.f32.partialorder %v9566, %v9565
      %vm9612 = vcmp.gt.f32.partialorder %v9568, %v9567
      %vm9613 = vcmp.gt.f32.partialorder %v9570, %v9569
      %vm9614 = vcmp.gt.f32.partialorder %v9572, %v9571
      %vm9615 = vcmp.gt.f32.partialorder %v9574, %v9573
      %vm9616 = vcmp.gt.f32.partialorder %v9576, %v9575
      %v9617 = vsel %vm9609, %v9562, %v9561
      %v9618 = vsel %vm9610, %v9564, %v9563
      %v9619 = vsel %vm9611, %v9566, %v9565
      %v9620 = vsel %vm9612, %v9568, %v9567
      %v9621 = vsel %vm9613, %v9570, %v9569
      %v9622 = vsel %vm9614, %v9572, %v9571
      %v9623 = vsel %vm9615, %v9574, %v9573
      %v9624 = vsel %vm9616, %v9576, %v9575
      %9625 = vst.msk [vmem:[%s313] sm:$0xff] %vm9431, %v9617
      %9626 = vst.msk [vmem:[%s313 + $0x8] sm:$0xff] %vm9431, %v9618
      %9627 = vst.msk [vmem:[%s313 + $0x10] sm:$0xff] %vm9431, %v9619
      %9628 = vst.msk [vmem:[%s313 + $0x18] sm:$0xff] %vm9431, %v9620
      %9629 = vst.msk [vmem:[%s313 + $0x20] sm:$0xff] %vm9431, %v9621
      %9630 = vst.msk [vmem:[%s313 + $0x28] sm:$0xff] %vm9431, %v9622
      %9631 = vst.msk [vmem:[%s313 + $0x30] sm:$0xff] %vm9431, %v9623
      %9632 = vst.msk [vmem:[%s313 + $0x38] sm:$0xff] %vm9431, %v9624
      %v9633 = vsel %vm9609, %v9594, %v9593
      %v9634 = vsel %vm9610, %v9596, %v9595
      %v9635 = vsel %vm9611, %v9598, %v9597
      %v9636 = vsel %vm9612, %v9600, %v9599
      %v9637 = vsel %vm9613, %v9602, %v9601
      %v9638 = vsel %vm9614, %v9604, %v9603
      %v9639 = vsel %vm9615, %v9606, %v9605
      %v9640 = vsel %vm9616, %v9608, %v9607
      %9641 = vst.msk [vmem:[%s318] sm:$0xff] %vm9431, %v9633
      %9642 = vst.msk [vmem:[%s318 + $0x8] sm:$0xff] %vm9431, %v9634
      %9643 = vst.msk [vmem:[%s318 + $0x10] sm:$0xff] %vm9431, %v9635
      %9644 = vst.msk [vmem:[%s318 + $0x18] sm:$0xff] %vm9431, %v9636
      %9645 = vst.msk [vmem:[%s318 + $0x20] sm:$0xff] %vm9431, %v9637
      %9646 = vst.msk [vmem:[%s318 + $0x28] sm:$0xff] %vm9431, %v9638
      %9647 = vst.msk [vmem:[%s318 + $0x30] sm:$0xff] %vm9431, %v9639
      %9648 = vst.msk [vmem:[%s318 + $0x38] sm:$0xff] %vm9431, %v9640
      %p9649 = scmp.lt.s32.totalorder %s20, 1
      %s9650 = scalar_select %p9649, %s20, 1
      %s9651 = smul.addr %s9650, 8
      %s9652 = smul.addr %s9651, 8
      %s9653 = scalar_lea.vmem %s7, %s9652
      %p9654 = scmp.lt.s32.totalorder %s20, 1
      %s9655 = scalar_select %p9654, %s20, 1
      %s9656 = smul.addr %s9655, 8
      %s9657 = smul.addr %s9656, 8
      %s9658 = scalar_lea.vmem %s8, %s9657
      // Predicated region
      $region49: #{fwd.1} parent=47 // pred_check
        %p9659 = pneg %p190
      $region50: #{fwd.1} parent=47 // pred_check_branch
        %9661 = sbr.rel (%p9659) target = $region52
      $region51: #{fwd.1} parent=47 // pred_region
        _
      $region52: #{fwd.1} parent=47 // pred_fallthru
        _
      // Predicated region
      $region53: #{fwd.1} parent=47 // pred_check
        %p9662 = pneg %p216
      $region54: #{fwd.1} parent=47 // pred_check_branch
        %9664 = sbr.rel (%p9662) target = $region56
      $region55: #{fwd.1} parent=47 // pred_region
        _
      $region56: #{fwd.1} parent=47 // pred_fallthru
        _
    $region48: #{fwd.1} parent=5 // pred_fallthru
      _
    %p9665 = scmp.le.s32.totalorder 2, %s15
    // Predicated region
    $region57: #{fwd.1} parent=5 // pred_check
      %p9666 = pneg %p9665
    $region58: #{fwd.1} parent=5 // pred_check_branch
      %9668 = sbr.rel (%p9666) target = $region60
    $region59: #{fwd.1} parent=5 // pred_region
      %s9669 = ssub.s32 %s15, 2
      // Predicated region
      $region61: #{fwd.1} parent=59 // pred_check
        %p9670 = pneg %p196
      $region62: #{fwd.1} parent=59 // pred_check_branch
        %9672 = sbr.rel (%p9670) target = $region64
      $region63: #{fwd.1} parent=59 // pred_region
        %p9673 = scmp.lt.s32.totalorder %s21, 1
        %s9674 = scalar_select %p9673, %s21, 1
        %s9675 = smul.addr %s9674, 8
        %s9676 = smul.addr %s9675, 8
        %s9677 = scalar_lea.vmem %s7, %s9676
      $region64: #{fwd.1} parent=59 // pred_fallthru
        _
      // Predicated region
      $region65: #{fwd.1} parent=59 // pred_check
        %p9678 = pneg %p222
      $region66: #{fwd.1} parent=59 // pred_check_branch
        %9680 = sbr.rel (%p9678) target = $region68
      $region67: #{fwd.1} parent=59 // pred_region
        %p9681 = scmp.lt.s32.totalorder %s21, 1
        %s9682 = scalar_select %p9681, %s21, 1
        %s9683 = smul.addr %s9682, 8
        %s9684 = smul.addr %s9683, 8
        %s9685 = scalar_lea.vmem %s8, %s9684
      $region68: #{fwd.1} parent=59 // pred_fallthru
        _
    $region60: #{fwd.1} parent=5 // pred_fallthru
      _
  $region6: #{fwd.1} parent=0 // loop_footer
    %s19 = sadd.s32 1, %s15
  $region7: #{fwd.1} parent=0 // loop_footer_branch
    %14 = sbr.rel target = $region3
  $region8: #{fwd.1} parent=0 // loop_exit
    _

</llo_original>
